<compile_context>
chip_gen: v6e
topology: v6e:2x2x1
jax: 0.10.0
libtpu: 0.0.40
codegen_flags: <defaults>
</compile_context>

<pallas_src>
import functools

import jax
import jax.numpy as jnp
from jax.experimental import pallas as pl
from jax.experimental.pallas import tpu as pltpu

HID = 16                 # hidden_sizes = [16, 16, 16]
H2 = HID * HID           # 256
IMG = 224                # input_size hard-wired into fc1 = Linear(224*224, .)
K_IN = IMG * IMG         # 50176
NUM_CLASSES = 2


# ----------------------------------------------------------------------------
# Fused kernel: K-tiled  x (M, K) @ W1^T (K, 256)  accumulated in the VMEM
# output block, with the (tiny) fc2 / fc3 epilogue fused into the last step.
# ----------------------------------------------------------------------------
def fc123_kernel(x_ref, w1t_ref, b1_ref, w2t_ref, b2_ref, w3t_ref, b3_ref,
                 o_ref):
    k = pl.program_id(0)

    @pl.when(k == 0)
    def _():
        o_ref[...] = jnp.zeros_like(o_ref)

    # (M, tk) @ (tk, 256) -> accumulate into the resident (M, 256) output.
    o_ref[...] += jnp.dot(x_ref[...], w1t_ref[...],
                          preferred_element_type=jnp.float32)

    @pl.when(k == pl.num_programs(0) - 1)
    def _():
        h = o_ref[...] + b1_ref[...]                                  # fc1 bias
        h = jnp.dot(h, w2t_ref[...],
                    preferred_element_type=jnp.float32) + b2_ref[...]  # fc2
        h = jnp.dot(h, w3t_ref[...],
                    preferred_element_type=jnp.float32) + b3_ref[...]  # fc3
        o_ref[...] = h


def fc123_fused(x_flat, w1t, b1, w2t, b2, w3t, b3, *, tk=12544):
    """Returns fc3(fc2(fc1(x_flat))) as an (M, 256) float32 array."""
    M, K = x_flat.shape
    Kw, N1 = w1t.shape
    assert Kw == K and K % tk == 0 and tk % 128 == 0
    nk = K // tk
    return pl.pallas_call(
        fc123_kernel,
        out_shape=jax.ShapeDtypeStruct((M, N1), jnp.float32),
        grid_spec=pltpu.PrefetchScalarGridSpec(
            num_scalar_prefetch=0,
            grid=(nk,),
            in_specs=[
                pl.BlockSpec((M, tk), lambda k: (0, k)),    # x tile
                pl.BlockSpec((tk, N1), lambda k: (k, 0)),   # W1^T tile (contig)
                pl.BlockSpec((1, N1), lambda k: (0, 0)),    # b1   (resident)
                pl.BlockSpec((N1, N1), lambda k: (0, 0)),   # W2^T (resident)
                pl.BlockSpec((1, N1), lambda k: (0, 0)),    # b2   (resident)
                pl.BlockSpec((N1, N1), lambda k: (0, 0)),   # W3^T (resident)
                pl.BlockSpec((1, N1), lambda k: (0, 0)),    # b3   (resident)
            ],
            out_specs=pl.BlockSpec((M, N1), lambda k: (0, 0)),
        ),
        compiler_params=pltpu.CompilerParams(
            dimension_semantics=("arbitrary",),
            vmem_limit_bytes=40 * 1024 * 1024,
        ),
    )(x_flat, w1t, b1, w2t, b2, w3t, b3)


# ----------------------------------------------------------------------------
# Group transforms (pure data movement -> plain-JAX glue)
# ----------------------------------------------------------------------------
def group_transformed_input(x, symmetry_group):
    if symmetry_group is None:
        return [x]
    elif symmetry_group == "rot90":
        return [jnp.rot90(x, k=i, axes=(2, 3)) for i in range(4)]
    else:
        # TODO(synk): hflip / vflip / rot90_hflip / rot90_vflip variants not wired up.
        raise NotImplementedError


def inverse_group_transformed_hidden_output(x5, symmetry_group):
    if symmetry_group is None:
        # Mirrors the reference: returns [x_list] (the full stacked tensor).
        return [x5]
    elif symmetry_group == "rot90":
        return [jnp.rot90(x5[i], k=4 - i, axes=(2, 3)) for i in range(4)]
    else:
        raise NotImplementedError


# ----------------------------------------------------------------------------
# Full forward
# ----------------------------------------------------------------------------
@functools.partial(jax.jit, static_argnames=("symmetry_group",))
def equi_fnn_forward(x, prep_params, symmetry_group=None):
    w1t, b1, w2t, b2, w3t, b3, w4, b4 = prep_params
    xg = jnp.stack(group_transformed_input(x, symmetry_group), axis=0)
    G, B, C, H, W = xg.shape
    x_flat = xg.reshape(G * B * C, H * W)

    # fc1 (51 MB W1 stream) + fused fc2/fc3 epilogue in one Pallas kernel.
    h = fc123_fused(x_flat, w1t, b1, w2t, b2, w3t, b3)   # (M, 256)

    x5 = h.reshape(G, B, C, HID, HID)
    inv = inverse_group_transformed_hidden_output(x5, symmetry_group)
    xm = jnp.mean(jnp.stack(inv, axis=0), axis=0)
    feat = xm.reshape(B, C * HID * HID)

    m = jnp.mean(feat, axis=1, keepdims=True)            # (B, 1)
    out = m @ w4.T + b4[None, :]                         # fc4 head (tiny, XLA)
    return out.reshape(B, NUM_CLASSES)


# ----------------------------------------------------------------------------
# Deterministic parameter init (PyTorch nn.Linear default: U(-1/sqrt(in), +))
# ----------------------------------------------------------------------------
def init_linear(key, in_f, out_f):
    kw, kb = jax.random.split(key)
    bound = 1.0 / (in_f ** 0.5)
    w = jax.random.uniform(kw, (out_f, in_f), jnp.float32, -bound, bound)
    b = jax.random.uniform(kb, (out_f,), jnp.float32, -bound, bound)
    return w, b


def init_params(key):
    k1, k2, k3, k4 = jax.random.split(key, 4)
    w1, b1 = init_linear(k1, K_IN, H2)
    w2, b2 = init_linear(k2, H2, H2)
    w3, b3 = init_linear(k3, H2, H2)
    w4, b4 = init_linear(k4, 1, NUM_CLASSES)
    return (w1, b1, w2, b2, w3, b3, w4, b4)


def prepare_params(params):
    """One-time (outside-jit) layout prep: pre-transpose W1/W2/W3, 2-D biases."""
    w1, b1, w2, b2, w3, b3, w4, b4 = params
    return (jnp.asarray(w1.T), b1.reshape(1, H2),
            jnp.asarray(w2.T), b2.reshape(1, H2),
            jnp.asarray(w3.T), b3.reshape(1, H2),
            w4, b4)


def reference_forward(x, params, symmetry_group=None):
    """Pure-JAX reference mirroring the PyTorch module."""
    w1, b1, w2, b2, w3, b3, w4, b4 = params
    xg = jnp.stack(group_transformed_input(x, symmetry_group), axis=0)
    G, B, C, H, W = xg.shape
    xf = xg.reshape(G * B * C, H * W)
    h = xf @ w1.T + b1
    h = h @ w2.T + b2
    h = h @ w3.T + b3
    x5 = h.reshape(G, B, C, HID, HID)
    inv = inverse_group_transformed_hidden_output(x5, symmetry_group)
    xm = jnp.mean(jnp.stack(inv, axis=0), axis=0)
    feat = xm.reshape(B, C * HID * HID)
    m = jnp.mean(feat, axis=1, keepdims=True)
    return (m @ w4.T + b4).reshape(B, NUM_CLASSES)


if __name__ == "__main__":
    key = jax.random.PRNGKey(0)
    kx, kp = jax.random.split(key)

    B, C = 2, 1                                   # small batch / channels
    x = jax.random.normal(kx, (B, C, IMG, IMG), jnp.float32)  # 224 forced by fc1
    params = init_params(kp)
    prep = prepare_params(params)                 # one-time transpose, outside jit

    # Identity group path.
    out = equi_fnn_forward(x, prep, symmetry_group=None)
    out = jax.block_until_ready(out)
    ref = reference_forward(x, params, symmetry_group=None)
    assert out.shape == (B, NUM_CLASSES)
    assert jnp.allclose(out, ref, atol=1e-3, rtol=1e-3), (out, ref)

    # rot90 group path.
    out_r = equi_fnn_forward(x, prep, symmetry_group="rot90")
    out_r = jax.block_until_ready(out_r)
    ref_r = reference_forward(x, params, symmetry_group="rot90")
    assert out_r.shape == (B, NUM_CLASSES)
    assert jnp.allclose(out_r, ref_r, atol=1e-3, rtol=1e-3), (out_r, ref_r)

    print("KERNEL_OK")
</pallas_src>

<mosaic_0001>
module attributes {stable_mosaic.version = 11 : i64} {
  func.func @fc123_kernel(%arg0: i32, %arg1: memref<2x12544xf32, #tpu.memory_space<vmem>>, %arg2: memref<12544x256xf32, #tpu.memory_space<vmem>>, %arg3: memref<1x256xf32, #tpu.memory_space<vmem>>, %arg4: memref<256x256xf32, #tpu.memory_space<vmem>>, %arg5: memref<1x256xf32, #tpu.memory_space<vmem>>, %arg6: memref<256x256xf32, #tpu.memory_space<vmem>>, %arg7: memref<1x256xf32, #tpu.memory_space<vmem>>, %arg8: memref<2x256xf32, #tpu.memory_space<vmem>>) attributes {dimension_semantics = [#tpu.dimension_semantics<arbitrary>], iteration_bounds = array<i64: 4>, scalar_prefetch = 0 : i64, scratch_operands = 0 : i64, tpu.core_type = #tpu.core_type<tc>, window_params = [{transform_indices = @transform_0, window_bounds = array<i64: 2, 12544>}, {transform_indices = @transform_1, window_bounds = array<i64: 12544, 256>}, {pipeline_mode = #tpu.pipeline_mode<synchronous>, transform_indices = @transform_2, window_bounds = array<i64: 1, 256>}, {pipeline_mode = #tpu.pipeline_mode<synchronous>, transform_indices = @transform_3, window_bounds = array<i64: 256, 256>}, {pipeline_mode = #tpu.pipeline_mode<synchronous>, transform_indices = @transform_4, window_bounds = array<i64: 1, 256>}, {pipeline_mode = #tpu.pipeline_mode<synchronous>, transform_indices = @transform_5, window_bounds = array<i64: 256, 256>}, {pipeline_mode = #tpu.pipeline_mode<synchronous>, transform_indices = @transform_6, window_bounds = array<i64: 1, 256>}, {pipeline_mode = #tpu.pipeline_mode<synchronous>, transform_indices = @transform_7, window_bounds = array<i64: 2, 256>}]} {
    %c0_i32 = arith.constant 0 : i32
    %0 = arith.cmpi eq, %arg0, %c0_i32 : i32
    %1 = arith.extui %0 : i1 to i32
    %c0_i32_0 = arith.constant 0 : i32
    %2 = arith.cmpi ne, %1, %c0_i32_0 : i32
    scf.if %2 {
      %cst_9 = arith.constant 0.000000e+00 : f32
      %12 = vector.broadcast %cst_9 : f32 to vector<2x256xf32>
      %c0_10 = arith.constant 0 : index
      %c0_11 = arith.constant 0 : index
      %13 = vector.load %arg8[%c0_10, %c0_11] : memref<2x256xf32, #tpu.memory_space<vmem>>, vector<2x256xf32>
      tpu.vector_store %arg8[%c0_10, %c0_11], %12 {strides = array<i32>} : memref<2x256xf32, #tpu.memory_space<vmem>>, vector<2x256xf32>,
    } else {
    }
    %c0 = arith.constant 0 : index
    %c0_1 = arith.constant 0 : index
    %3 = vector.load %arg8[%c0, %c0_1] : memref<2x256xf32, #tpu.memory_space<vmem>>, vector<2x256xf32>
    %c0_2 = arith.constant 0 : index
    %c0_3 = arith.constant 0 : index
    %4 = vector.load %arg1[%c0_2, %c0_3] : memref<2x12544xf32, #tpu.memory_space<vmem>>, vector<2x12544xf32>
    %c0_4 = arith.constant 0 : index
    %c0_5 = arith.constant 0 : index
    %5 = vector.load %arg2[%c0_4, %c0_5] : memref<12544x256xf32, #tpu.memory_space<vmem>>, vector<12544x256xf32>
    %cst = arith.constant dense<0.000000e+00> : vector<2x256xf32>
    %6 = tpu.matmul %4, %5, %cst {dimension_numbers = #tpu.dot_dimension_numbers<[1], [0], [0], [1], [0, 0, 1, 1], [], []>} : vector<2x12544xf32>, vector<12544x256xf32>, vector<2x256xf32> -> vector<2x256xf32>
    %7 = arith.addf %3, %6 : vector<2x256xf32>
    %c0_6 = arith.constant 0 : index
    %c0_7 = arith.constant 0 : index
    %8 = vector.load %arg8[%c0_6, %c0_7] : memref<2x256xf32, #tpu.memory_space<vmem>>, vector<2x256xf32>
    tpu.vector_store %arg8[%c0_6, %c0_7], %7 {strides = array<i32>} : memref<2x256xf32, #tpu.memory_space<vmem>>, vector<2x256xf32>,
    %c3_i32 = arith.constant 3 : i32
    %9 = arith.cmpi eq, %arg0, %c3_i32 : i32
    %10 = arith.extui %9 : i1 to i32
    %c0_i32_8 = arith.constant 0 : i32
    %11 = arith.cmpi ne, %10, %c0_i32_8 : i32
    scf.if %11 {
      %c0_9 = arith.constant 0 : index
      %c0_10 = arith.constant 0 : index
      %12 = vector.load %arg8[%c0_9, %c0_10] : memref<2x256xf32, #tpu.memory_space<vmem>>, vector<2x256xf32>
      %c0_11 = arith.constant 0 : index
      %c0_12 = arith.constant 0 : index
      %13 = vector.load %arg3[%c0_11, %c0_12] : memref<1x256xf32, #tpu.memory_space<vmem>>, vector<1x256xf32>
      %14 = vector.broadcast %13 : vector<1x256xf32> to vector<2x256xf32>
      %15 = arith.addf %12, %14 : vector<2x256xf32>
      %c0_13 = arith.constant 0 : index
      %c0_14 = arith.constant 0 : index
      %16 = vector.load %arg4[%c0_13, %c0_14] : memref<256x256xf32, #tpu.memory_space<vmem>>, vector<256x256xf32>
      %cst_15 = arith.constant dense<0.000000e+00> : vector<2x256xf32>
      %17 = tpu.matmul %15, %16, %cst_15 {dimension_numbers = #tpu.dot_dimension_numbers<[1], [0], [0], [1], [0, 0, 1, 1], [], []>} : vector<2x256xf32>, vector<256x256xf32>, vector<2x256xf32> -> vector<2x256xf32>
      %c0_16 = arith.constant 0 : index
      %c0_17 = arith.constant 0 : index
      %18 = vector.load %arg5[%c0_16, %c0_17] : memref<1x256xf32, #tpu.memory_space<vmem>>, vector<1x256xf32>
      %19 = vector.broadcast %18 : vector<1x256xf32> to vector<2x256xf32>
      %20 = arith.addf %17, %19 : vector<2x256xf32>
      %c0_18 = arith.constant 0 : index
      %c0_19 = arith.constant 0 : index
      %21 = vector.load %arg6[%c0_18, %c0_19] : memref<256x256xf32, #tpu.memory_space<vmem>>, vector<256x256xf32>
      %cst_20 = arith.constant dense<0.000000e+00> : vector<2x256xf32>
      %22 = tpu.matmul %20, %21, %cst_20 {dimension_numbers = #tpu.dot_dimension_numbers<[1], [0], [0], [1], [0, 0, 1, 1], [], []>} : vector<2x256xf32>, vector<256x256xf32>, vector<2x256xf32> -> vector<2x256xf32>
      %c0_21 = arith.constant 0 : index
      %c0_22 = arith.constant 0 : index
      %23 = vector.load %arg7[%c0_21, %c0_22] : memref<1x256xf32, #tpu.memory_space<vmem>>, vector<1x256xf32>
      %24 = vector.broadcast %23 : vector<1x256xf32> to vector<2x256xf32>
      %25 = arith.addf %22, %24 : vector<2x256xf32>
      %c0_23 = arith.constant 0 : index
      %c0_24 = arith.constant 0 : index
      %26 = vector.load %arg8[%c0_23, %c0_24] : memref<2x256xf32, #tpu.memory_space<vmem>>, vector<2x256xf32>
      tpu.vector_store %arg8[%c0_23, %c0_24], %25 {strides = array<i32>} : memref<2x256xf32, #tpu.memory_space<vmem>>, vector<2x256xf32>,
    } else {
    }
    return
  }
  func.func @transform_0(%arg0: i32) -> (i32, i32) {
    %c0_i32 = arith.constant 0 : i32
    %c0_i32_0 = arith.constant 0 : i32
    return %c0_i32, %arg0 : i32, i32
  }
  func.func @transform_1(%arg0: i32) -> (i32, i32) {
    %c0_i32 = arith.constant 0 : i32
    %c0_i32_0 = arith.constant 0 : i32
    return %arg0, %c0_i32 : i32, i32
  }
  func.func @transform_2(%arg0: i32) -> (i32, i32) {
    %c0_i32 = arith.constant 0 : i32
    %c0_i32_0 = arith.constant 0 : i32
    %c0_i32_1 = arith.constant 0 : i32
    return %c0_i32, %c0_i32_0 : i32, i32
  }
  func.func @transform_3(%arg0: i32) -> (i32, i32) {
    %c0_i32 = arith.constant 0 : i32
    %c0_i32_0 = arith.constant 0 : i32
    %c0_i32_1 = arith.constant 0 : i32
    return %c0_i32, %c0_i32_0 : i32, i32
  }
  func.func @transform_4(%arg0: i32) -> (i32, i32) {
    %c0_i32 = arith.constant 0 : i32
    %c0_i32_0 = arith.constant 0 : i32
    %c0_i32_1 = arith.constant 0 : i32
    return %c0_i32, %c0_i32_0 : i32, i32
  }
  func.func @transform_5(%arg0: i32) -> (i32, i32) {
    %c0_i32 = arith.constant 0 : i32
    %c0_i32_0 = arith.constant 0 : i32
    %c0_i32_1 = arith.constant 0 : i32
    return %c0_i32, %c0_i32_0 : i32, i32
  }
  func.func @transform_6(%arg0: i32) -> (i32, i32) {
    %c0_i32 = arith.constant 0 : i32
    %c0_i32_0 = arith.constant 0 : i32
    %c0_i32_1 = arith.constant 0 : i32
    return %c0_i32, %c0_i32_0 : i32, i32
  }
  func.func @transform_7(%arg0: i32) -> (i32, i32) {
    %c0_i32 = arith.constant 0 : i32
    %c0_i32_0 = arith.constant 0 : i32
    %c0_i32_1 = arith.constant 0 : i32
    return %c0_i32, %c0_i32_0 : i32, i32
  }
}

</mosaic_0001>

<llo_original>
// kernel: equi_fnn_forward.1
$region0: #{equi_fnn_forward.1}
  #allocation0 [shape = 'u32[]', space=smem, size = 0x4, offset = 0x4, fixed_abs, tag = 'smem constant byte address 0x4 - core index']
  #allocation1 [shape = 'u32[144,128]{1,0:T(1,128)}', space=vmem, size = 0x12000, scoped, tag = 'internal scratch']
  %s0 = inlined_call_operand.vmem [shape: f32[2,50176], index: 0, kind: input, shape index: {}]
  %s1 = inlined_call_operand.hbm [shape: f32[50176,256], index: 1, kind: input, shape index: {}]
  %s2 = inlined_call_operand.hbm [shape: f32[1,256], index: 2, kind: input, shape index: {}]
  %s3 = inlined_call_operand.hbm [shape: f32[256,256], index: 3, kind: input, shape index: {}]
  %s4 = inlined_call_operand.hbm [shape: f32[1,256], index: 4, kind: input, shape index: {}]
  %s5 = inlined_call_operand.hbm [shape: f32[256,256], index: 5, kind: input, shape index: {}]
  %s6 = inlined_call_operand.hbm [shape: f32[1,256], index: 6, kind: input, shape index: {}]
  %s7 = inlined_call_operand.vmem [shape: f32[2,256], index: 7, kind: output, shape index: {}]
  %s8 = sld [smem:[#allocation0]]
  $region93: #{equi_fnn_forward.1} parent=0
    _
  %s10 = ssub.s32 1, %s8
  %s11 = scalar_select 0, %s10, %s8
  $region1: #{equi_fnn_forward.1} parent=0
    #allocation2 [shape = 'u8[25690112]{0}', space=vmem, size = 0x1880000, scoped, tag = 'input window, operand 1']
    #allocation3 [shape = 's32[2]{0}', space=sflag, size = 0x8, scoped, tag = 'scoped memory for equi_fnn_forward.1']
    #allocation4 [shape = 'u8[1024]{0}', space=vmem, size = 0x400, scoped, tag = 'input window, operand 2, single buffered']
    #allocation5 [shape = 's32[1]{0}', space=sflag, size = 0x4, scoped, tag = 'scoped memory for equi_fnn_forward.1']
    #allocation6 [shape = 'u8[262144]{0}', space=vmem, size = 0x40000, scoped, tag = 'input window, operand 3, single buffered']
    #allocation7 [shape = 'u8[1024]{0}', space=vmem, size = 0x400, scoped, tag = 'input window, operand 4, single buffered']
    #allocation8 [shape = 's32[1]{0}', space=sflag, size = 0x4, scoped, tag = 'scoped memory for equi_fnn_forward.1']
    #allocation9 [shape = 'u8[262144]{0}', space=vmem, size = 0x40000, scoped, tag = 'input window, operand 5, single buffered']
    #allocation10 [shape = 'u8[1024]{0}', space=vmem, size = 0x400, scoped, tag = 'input window, operand 6, single buffered']
    #allocation11 [shape = 's32[1]{0}', space=sflag, size = 0x4, scoped, tag = 'scoped memory for equi_fnn_forward.1']
    %12 = vsyncpa [#allocation3], 0
    %s13 = scalar_lea.sflag [#allocation3], 1
    %14 = vsyncpa %s13, 0
    %15 = vsyncpa [#allocation5], 0
    %16 = vsyncpa [#allocation8], 0
    %17 = vsyncpa [#allocation11], 0
    loop: start=0, step=1, limit=6
    $region2: #{equi_fnn_forward.1} parent=1 // loop_pre_header
      _
    $region3: #{equi_fnn_forward.1} parent=1 // loop_header
      %s19 = sphi 0, %s23
      %p20 = scmp.ge.s32.totalorder %s19, 6
      %s29 = sphi 0, %s31
      %s32 = sphi 0, %s29
      %s33 = sphi 0, %s32
      %s49 = sphi 0, %s33
      %s55 = sphi 0, %s57
      %s58 = sphi 0, %s55
      %s59 = sphi 0, %s58
      %s75 = sphi 0, %s59
      %s79 = sphi 0, %s79
      %s81 = sphi 0, %s79
      %s82 = sphi 0, %s81
      %s96 = sphi 0, %s82
      %s100 = sphi 0, %s100
      %s102 = sphi 0, %s100
      %s103 = sphi 0, %s102
      %s117 = sphi 0, %s103
      %s121 = sphi 0, %s121
      %s123 = sphi 0, %s121
      %s124 = sphi 0, %s123
      %s138 = sphi 0, %s124
      %s142 = sphi 0, %s142
      %s144 = sphi 0, %s142
      %s145 = sphi 0, %s144
      %s159 = sphi 0, %s145
      %s163 = sphi 0, %s163
      %s165 = sphi 0, %s163
      %s166 = sphi 0, %s165
      %s180 = sphi 0, %s166
      %s184 = sphi 0, %s184
      %s186 = sphi 0, %s184
      %s187 = sphi 0, %s186
      %s201 = sphi 0, %s187
    $region4: #{equi_fnn_forward.1} parent=1 // loop_header_branch
      %22 = sbr.rel (%p20) target = $region8
    $region5: #{equi_fnn_forward.1} parent=1 // loop_body
      %s24 = ssub.s32 %s19, 1
      %s25 = ssub.s32 %s19, 2
      %s26 = sadd.s32 %s19, 1
      %s27 = ssub.s32 %s19, %s26
      %p28 = scmp.eq.s32.totalorder %s27, 0
      %s30 = sadd.s32 %s29, 1
      %s31 = scalar_select %p28, %s29, %s30
      %p34 = pneg %p28
      %p35 = scmp.eq.s32.totalorder %s19, 3
      %p36 = por %p34, %p35
      %p37 = scmp.ne.s32.totalorder %s29, %s32
      %p38 = scmp.eq.s32.totalorder %s19, 0
      %p39 = por %p37, %p38
      %p40 = scmp.ne.s32.totalorder %s29, %s32
      %p41 = scmp.eq.s32.totalorder %s24, 3
      %p42 = por %p40, %p41
      %p43 = scmp.ne.s32.totalorder %s32, %s33
      %p44 = scmp.eq.s32.totalorder %s24, 0
      %p45 = por %p43, %p44
      %p46 = scmp.ne.s32.totalorder %s32, %s33
      %p47 = scmp.eq.s32.totalorder %s25, 3
      %p48 = por %p46, %p47
      %p50 = scmp.ne.s32.totalorder %s33, %s49
      %p51 = scmp.eq.s32.totalorder %s25, 0
      %p52 = por %p50, %p51
      %s53 = ssub.s32 %s19, %s26
      %p54 = scmp.eq.s32.totalorder %s53, 0
      %s56 = sadd.s32 %s55, 1
      %s57 = scalar_select %p54, %s55, %s56
      %p60 = pneg %p54
      %p61 = scmp.eq.s32.totalorder %s19, 3
      %p62 = por %p60, %p61
      %p63 = scmp.ne.s32.totalorder %s55, %s58
      %p64 = scmp.eq.s32.totalorder %s19, 0
      %p65 = por %p63, %p64
      %p66 = scmp.ne.s32.totalorder %s55, %s58
      %p67 = scmp.eq.s32.totalorder %s24, 3
      %p68 = por %p66, %p67
      %p69 = scmp.ne.s32.totalorder %s58, %s59
      %p70 = scmp.eq.s32.totalorder %s24, 0
      %p71 = por %p69, %p70
      %p72 = scmp.ne.s32.totalorder %s58, %s59
      %p73 = scmp.eq.s32.totalorder %s25, 3
      %p74 = por %p72, %p73
      %p76 = scmp.ne.s32.totalorder %s59, %s75
      %p77 = scmp.eq.s32.totalorder %s25, 0
      %p78 = por %p76, %p77
      %s80 = sadd.s32 %s79, 1
      %p83 = scmp.eq.s32.totalorder %s19, 3
      %p84 = scmp.ne.s32.totalorder %s79, %s81
      %p85 = scmp.eq.s32.totalorder %s19, 0
      %p86 = por %p84, %p85
      %p87 = scmp.ne.s32.totalorder %s79, %s81
      %p88 = scmp.eq.s32.totalorder %s24, 3
      %p89 = por %p87, %p88
      %p90 = scmp.ne.s32.totalorder %s81, %s82
      %p91 = scmp.eq.s32.totalorder %s24, 0
      %p92 = por %p90, %p91
      %p93 = scmp.ne.s32.totalorder %s81, %s82
      %p94 = scmp.eq.s32.totalorder %s25, 3
      %p95 = por %p93, %p94
      %p97 = scmp.ne.s32.totalorder %s82, %s96
      %p98 = scmp.eq.s32.totalorder %s25, 0
      %p99 = por %p97, %p98
      %s101 = sadd.s32 %s100, 1
      %p104 = scmp.eq.s32.totalorder %s19, 3
      %p105 = scmp.ne.s32.totalorder %s100, %s102
      %p106 = scmp.eq.s32.totalorder %s19, 0
      %p107 = por %p105, %p106
      %p108 = scmp.ne.s32.totalorder %s100, %s102
      %p109 = scmp.eq.s32.totalorder %s24, 3
      %p110 = por %p108, %p109
      %p111 = scmp.ne.s32.totalorder %s102, %s103
      %p112 = scmp.eq.s32.totalorder %s24, 0
      %p113 = por %p111, %p112
      %p114 = scmp.ne.s32.totalorder %s102, %s103
      %p115 = scmp.eq.s32.totalorder %s25, 3
      %p116 = por %p114, %p115
      %p118 = scmp.ne.s32.totalorder %s103, %s117
      %p119 = scmp.eq.s32.totalorder %s25, 0
      %p120 = por %p118, %p119
      %s122 = sadd.s32 %s121, 1
      %p125 = scmp.eq.s32.totalorder %s19, 3
      %p126 = scmp.ne.s32.totalorder %s121, %s123
      %p127 = scmp.eq.s32.totalorder %s19, 0
      %p128 = por %p126, %p127
      %p129 = scmp.ne.s32.totalorder %s121, %s123
      %p130 = scmp.eq.s32.totalorder %s24, 3
      %p131 = por %p129, %p130
      %p132 = scmp.ne.s32.totalorder %s123, %s124
      %p133 = scmp.eq.s32.totalorder %s24, 0
      %p134 = por %p132, %p133
      %p135 = scmp.ne.s32.totalorder %s123, %s124
      %p136 = scmp.eq.s32.totalorder %s25, 3
      %p137 = por %p135, %p136
      %p139 = scmp.ne.s32.totalorder %s124, %s138
      %p140 = scmp.eq.s32.totalorder %s25, 0
      %p141 = por %p139, %p140
      %s143 = sadd.s32 %s142, 1
      %p146 = scmp.eq.s32.totalorder %s19, 3
      %p147 = scmp.ne.s32.totalorder %s142, %s144
      %p148 = scmp.eq.s32.totalorder %s19, 0
      %p149 = por %p147, %p148
      %p150 = scmp.ne.s32.totalorder %s142, %s144
      %p151 = scmp.eq.s32.totalorder %s24, 3
      %p152 = por %p150, %p151
      %p153 = scmp.ne.s32.totalorder %s144, %s145
      %p154 = scmp.eq.s32.totalorder %s24, 0
      %p155 = por %p153, %p154
      %p156 = scmp.ne.s32.totalorder %s144, %s145
      %p157 = scmp.eq.s32.totalorder %s25, 3
      %p158 = por %p156, %p157
      %p160 = scmp.ne.s32.totalorder %s145, %s159
      %p161 = scmp.eq.s32.totalorder %s25, 0
      %p162 = por %p160, %p161
      %s164 = sadd.s32 %s163, 1
      %p167 = scmp.eq.s32.totalorder %s19, 3
      %p168 = scmp.ne.s32.totalorder %s163, %s165
      %p169 = scmp.eq.s32.totalorder %s19, 0
      %p170 = por %p168, %p169
      %p171 = scmp.ne.s32.totalorder %s163, %s165
      %p172 = scmp.eq.s32.totalorder %s24, 3
      %p173 = por %p171, %p172
      %p174 = scmp.ne.s32.totalorder %s165, %s166
      %p175 = scmp.eq.s32.totalorder %s24, 0
      %p176 = por %p174, %p175
      %p177 = scmp.ne.s32.totalorder %s165, %s166
      %p178 = scmp.eq.s32.totalorder %s25, 3
      %p179 = por %p177, %p178
      %p181 = scmp.ne.s32.totalorder %s166, %s180
      %p182 = scmp.eq.s32.totalorder %s25, 0
      %p183 = por %p181, %p182
      %s185 = sadd.s32 %s184, 1
      %p188 = scmp.eq.s32.totalorder %s19, 3
      %p189 = scmp.ne.s32.totalorder %s184, %s186
      %p190 = scmp.eq.s32.totalorder %s19, 0
      %p191 = por %p189, %p190
      %p192 = scmp.ne.s32.totalorder %s184, %s186
      %p193 = scmp.eq.s32.totalorder %s24, 3
      %p194 = por %p192, %p193
      %p195 = scmp.ne.s32.totalorder %s186, %s187
      %p196 = scmp.eq.s32.totalorder %s24, 0
      %p197 = por %p195, %p196
      %p198 = scmp.ne.s32.totalorder %s186, %s187
      %p199 = scmp.eq.s32.totalorder %s25, 3
      %p200 = por %p198, %p199
      %p202 = scmp.ne.s32.totalorder %s187, %s201
      %p203 = scmp.eq.s32.totalorder %s25, 0
      %p204 = por %p202, %p203
      %p205 = scmp.le.s32.totalorder 1, %s19
      %p206 = scmp.lt.s32.totalorder %s19, 5
      %p207 = pnand %p205, %p206
      %p208 = pneg %p207
      // Predicated region
      $region9: #{equi_fnn_forward.1} parent=5 // pred_check
        _
      $region10: #{equi_fnn_forward.1} parent=5 // pred_check_branch
        %210 = sbr.rel (%p207) target = $region12
      $region11: #{equi_fnn_forward.1} parent=5 // pred_region
        %s211 = ssub.s32 %s19, 1
        // Predicated region
        $region13: #{equi_fnn_forward.1} parent=11 // pred_check
          %p212 = pneg %p92
        $region14: #{equi_fnn_forward.1} parent=11 // pred_check_branch
          %214 = sbr.rel (%p212) target = $region16
        $region15: #{equi_fnn_forward.1} parent=11 // pred_region
          %s216 = ssub.s32 32, 32
          %217 = vsyncadd [#allocation5], %s216
          %s219 = sshll.u32 [#allocation4], 4
          %s220 = int_to_ptr.vmem [resolvable:$true] %s219
          %222 = dma.hbm_to_vmem [thread:$0]  %s2, 32, %s220, [#allocation5]
        $region16: #{equi_fnn_forward.1} parent=11 // pred_fallthru
          _
        // Predicated region
        $region17: #{equi_fnn_forward.1} parent=11 // pred_check
          %p223 = pneg %p113
        $region18: #{equi_fnn_forward.1} parent=11 // pred_check_branch
          %225 = sbr.rel (%p223) target = $region20
        $region19: #{equi_fnn_forward.1} parent=11 // pred_region
          %s227 = ssub.s32 8192, 8192
          %228 = vsyncadd [#allocation5], %s227
          %s229 = sshll.u32 [#allocation6], 4
          %s230 = int_to_ptr.vmem [resolvable:$true] %s229
          %235 = dma.hbm_to_vmem [thread:$0]  %s3, 8192, %s230, [#allocation5], 256, 256, 16
        $region20: #{equi_fnn_forward.1} parent=11 // pred_fallthru
          _
        // Predicated region
        $region21: #{equi_fnn_forward.1} parent=11 // pred_check
          %p236 = pneg %p134
        $region22: #{equi_fnn_forward.1} parent=11 // pred_check_branch
          %238 = sbr.rel (%p236) target = $region24
        $region23: #{equi_fnn_forward.1} parent=11 // pred_region
          %s240 = ssub.s32 32, 32
          %241 = vsyncadd [#allocation8], %s240
          %s243 = sshll.u32 [#allocation7], 4
          %s244 = int_to_ptr.vmem [resolvable:$true] %s243
          %246 = dma.hbm_to_vmem [thread:$0]  %s4, 32, %s244, [#allocation8]
        $region24: #{equi_fnn_forward.1} parent=11 // pred_fallthru
          _
        // Predicated region
        $region25: #{equi_fnn_forward.1} parent=11 // pred_check
          %p247 = pneg %p155
        $region26: #{equi_fnn_forward.1} parent=11 // pred_check_branch
          %249 = sbr.rel (%p247) target = $region28
        $region27: #{equi_fnn_forward.1} parent=11 // pred_region
          %s251 = ssub.s32 8192, 8192
          %252 = vsyncadd [#allocation8], %s251
          %s253 = sshll.u32 [#allocation9], 4
          %s254 = int_to_ptr.vmem [resolvable:$true] %s253
          %259 = dma.hbm_to_vmem [thread:$0]  %s5, 8192, %s254, [#allocation8], 256, 256, 16
        $region28: #{equi_fnn_forward.1} parent=11 // pred_fallthru
          _
        // Predicated region
        $region29: #{equi_fnn_forward.1} parent=11 // pred_check
          %p260 = pneg %p176
        $region30: #{equi_fnn_forward.1} parent=11 // pred_check_branch
          %262 = sbr.rel (%p260) target = $region32
        $region31: #{equi_fnn_forward.1} parent=11 // pred_region
          %s264 = ssub.s32 32, 32
          %265 = vsyncadd [#allocation11], %s264
          %s267 = sshll.u32 [#allocation10], 4
          %s268 = int_to_ptr.vmem [resolvable:$true] %s267
          %270 = dma.hbm_to_vmem [thread:$0]  %s6, 32, %s268, [#allocation11]
        $region32: #{equi_fnn_forward.1} parent=11 // pred_fallthru
          _
      $region12: #{equi_fnn_forward.1} parent=5 // pred_fallthru
        _
      %p271 = scmp.lt.s32.totalorder %s19, 4
      // Predicated region
      $region33: #{equi_fnn_forward.1} parent=5 // pred_check
        %p272 = pneg %p271
      $region34: #{equi_fnn_forward.1} parent=5 // pred_check_branch
        %274 = sbr.rel (%p272) target = $region36
      $region35: #{equi_fnn_forward.1} parent=5 // pred_region
        // Predicated region
        $region37: #{equi_fnn_forward.1} parent=35 // pred_check
          %p275 = pneg %p39
        $region38: #{equi_fnn_forward.1} parent=35 // pred_check_branch
          %277 = sbr.rel (%p275) target = $region40
        $region39: #{equi_fnn_forward.1} parent=35 // pred_region
          %s278 = smul.u32 98, %s19
          %p279 = scmp.lt.s32.totalorder %s278, 391
          %s280 = scalar_select %p279, %s278, 391
          %s281 = smul.addr %s280, 2
          %s282 = scalar_lea.vmem %s0, %s281
          %s283 = smul.u32 98, %s19
        $region40: #{equi_fnn_forward.1} parent=35 // pred_fallthru
          _
        // Predicated region
        $region41: #{equi_fnn_forward.1} parent=35 // pred_check
          %p284 = pneg %p65
        $region42: #{equi_fnn_forward.1} parent=35 // pred_check_branch
          %286 = sbr.rel (%p284) target = $region44
        $region43: #{equi_fnn_forward.1} parent=35 // pred_region
          %s287 = sand.u32 %s55, 1
          %s288 = scalar_lea.sflag [#allocation3], %s287
          %s289 = sand.u32 %s55, 1
          %s290 = smul.addr %s289, 25088
          %s291 = scalar_lea.vmem [#allocation2], %s290
          %s292 = smul.u32 1568, %s19
          %s294 = ssub.s32 401408, 401408
          %295 = vsyncadd %s288, %s294
          %s296 = smul.addr %s292, 2
          %s297 = smul.addr %s296, 128
          %s298 = scalar_lea.hbm %s1, %s297
          %s299 = sshll.u32 %s291, 4
          %s300 = int_to_ptr.vmem [resolvable:$true] %s299
          %305 = dma.hbm_to_vmem [thread:$0]  %s298, 401408, %s300, %s288, 256, 256, 16
        $region44: #{equi_fnn_forward.1} parent=35 // pred_fallthru
          _
      $region36: #{equi_fnn_forward.1} parent=5 // pred_fallthru
        _
      %p306 = scmp.le.s32.totalorder 1, %s19
      %p307 = scmp.lt.s32.totalorder %s19, 5
      %p308 = pnand %p306, %p307
      %p309 = pneg %p308
      // Predicated region
      $region45: #{equi_fnn_forward.1} parent=5 // pred_check
        _
      $region46: #{equi_fnn_forward.1} parent=5 // pred_check_branch
        %311 = sbr.rel (%p308) target = $region48
      $region47: #{equi_fnn_forward.1} parent=5 // pred_region
        %s312 = ssub.s32 %s19, 1
        %s313 = sand.u32 %s58, 1
        %s314 = scalar_lea.sflag [#allocation3], %s313
        %s315 = sand.u32 %s58, 1
        %s316 = smul.addr %s315, 25088
        %s317 = scalar_lea.vmem [#allocation2], %s316
        // Predicated region
        $region49: #{equi_fnn_forward.1} parent=47 // pred_check
          %p318 = pneg %p71
        $region50: #{equi_fnn_forward.1} parent=47 // pred_check_branch
          %320 = sbr.rel (%p318) target = $region52
        $region51: #{equi_fnn_forward.1} parent=47 // pred_region
          %321 = dma.done %s314, 401408
        $region52: #{equi_fnn_forward.1} parent=47 // pred_fallthru
          _
        // Predicated region
        $region53: #{equi_fnn_forward.1} parent=47 // pred_check
          %p322 = pneg %p92
        $region54: #{equi_fnn_forward.1} parent=47 // pred_check_branch
          %324 = sbr.rel (%p322) target = $region56
        $region55: #{equi_fnn_forward.1} parent=47 // pred_region
          %325 = dma.done [#allocation5], 32
        $region56: #{equi_fnn_forward.1} parent=47 // pred_fallthru
          _
        // Predicated region
        $region57: #{equi_fnn_forward.1} parent=47 // pred_check
          %p326 = pneg %p113
        $region58: #{equi_fnn_forward.1} parent=47 // pred_check_branch
          %328 = sbr.rel (%p326) target = $region60
        $region59: #{equi_fnn_forward.1} parent=47 // pred_region
          %329 = dma.done [#allocation5], 8192
        $region60: #{equi_fnn_forward.1} parent=47 // pred_fallthru
          _
        // Predicated region
        $region61: #{equi_fnn_forward.1} parent=47 // pred_check
          %p330 = pneg %p134
        $region62: #{equi_fnn_forward.1} parent=47 // pred_check_branch
          %332 = sbr.rel (%p330) target = $region64
        $region63: #{equi_fnn_forward.1} parent=47 // pred_region
          %333 = dma.done [#allocation8], 32
        $region64: #{equi_fnn_forward.1} parent=47 // pred_fallthru
          _
        // Predicated region
        $region65: #{equi_fnn_forward.1} parent=47 // pred_check
          %p334 = pneg %p155
        $region66: #{equi_fnn_forward.1} parent=47 // pred_check_branch
          %336 = sbr.rel (%p334) target = $region68
        $region67: #{equi_fnn_forward.1} parent=47 // pred_region
          %337 = dma.done [#allocation8], 8192
        $region68: #{equi_fnn_forward.1} parent=47 // pred_fallthru
          _
        // Predicated region
        $region69: #{equi_fnn_forward.1} parent=47 // pred_check
          %p338 = pneg %p176
        $region70: #{equi_fnn_forward.1} parent=47 // pred_check_branch
          %340 = sbr.rel (%p338) target = $region72
        $region71: #{equi_fnn_forward.1} parent=47 // pred_region
          %341 = dma.done [#allocation11], 32
        $region72: #{equi_fnn_forward.1} parent=47 // pred_fallthru
          _
        %s342 = smul.u32 98, %s24
        %p343 = scmp.lt.s32.totalorder %s342, 391
        %s344 = scalar_select %p343, %s342, 391
        %s345 = smul.addr %s344, 2
        %s346 = scalar_lea.vmem %s0, %s345
        %p347 = pneg %p45
        %p348 = pneg %p42
        %s349 = sand.u32 %s58, 1
        %s350 = scalar_lea.sflag [#allocation3], %s349
        %s351 = sand.u32 %s58, 1
        %s352 = smul.addr %s351, 25088
        %s353 = scalar_lea.vmem [#allocation2], %s352
        %p354 = pneg %p71
        %p355 = pneg %p68
        %p356 = pneg %p92
        %p357 = pneg %p89
        %p358 = pneg %p113
        %p359 = pneg %p110
        %p360 = pneg %p134
        %p361 = pneg %p131
        %p362 = pneg %p155
        %p363 = pneg %p152
        %p364 = pneg %p176
        %p365 = pneg %p173
        %p366 = pneg %p197
        %p367 = pneg %p194
        %s368 = smul.u32 98, %s24
        %p369 = scmp.lt.s32.totalorder %s368, 391
        %s370 = scalar_select %p369, %s368, 391
        %s371 = smul.addr %s370, 2
        %s372 = scalar_lea.vmem %s0, %s371
        %s373 = smul.u32 98, %s24
        %s374 = smul.u32 1568, %s24
        %p375 = scmp.eq.s32.totalorder %s24, 0
        // Predicated region
        $region73: #{equi_fnn_forward.1} parent=47 // pred_check
          %p376 = pneg %p375
        $region74: #{equi_fnn_forward.1} parent=47 // pred_check_branch
          %378 = sbr.rel (%p376) target = $region76
        $region75: #{equi_fnn_forward.1} parent=47 // pred_region
          %379 = vst [vmem:[%s7] sm:$0xf] 0.0
        $region76: #{equi_fnn_forward.1} parent=47 // pred_fallthru
          _
        %v380 = vld [vmem:[%s7] sm:$0xf]
        %v381 = vld [vmem:[%s372] sm:$0xff]
        %v382 = vld [vmem:[%s372 + $0x8] sm:$0xff]
        %v383 = vld [vmem:[%s372 + $0x10] sm:$0xff]
        %v384 = vld [vmem:[%s372 + $0x18] sm:$0xff]
        %v385 = vld [vmem:[%s372 + $0x20] sm:$0xff]
        %v386 = vld [vmem:[%s372 + $0x28] sm:$0xff]
        %v387 = vld [vmem:[%s372 + $0x30] sm:$0xff]
        %v388 = vld [vmem:[%s372 + $0x38] sm:$0xff]
        %v389 = vld [vmem:[%s372 + $0x40] sm:$0xff]
        %v390 = vld [vmem:[%s372 + $0x48] sm:$0xff]
        %v391 = vld [vmem:[%s372 + $0x50] sm:$0xff]
        %v392 = vld [vmem:[%s372 + $0x58] sm:$0xff]
        %v393 = vld [vmem:[%s372 + $0x60] sm:$0xff]
        %v394 = vld [vmem:[%s372 + $0x68] sm:$0xff]
        %v395 = vld [vmem:[%s372 + $0x70] sm:$0xff]
        %v396 = vld [vmem:[%s372 + $0x78] sm:$0xff]
        %v397 = vld [vmem:[%s372 + $0x80] sm:$0xff]
        %v398 = vld [vmem:[%s372 + $0x88] sm:$0xff]
        %v399 = vld [vmem:[%s372 + $0x90] sm:$0xff]
        %v400 = vld [vmem:[%s372 + $0x98] sm:$0xff]
        %v401 = vld [vmem:[%s372 + $0xa0] sm:$0xff]
        %v402 = vld [vmem:[%s372 + $0xa8] sm:$0xff]
        %v403 = vld [vmem:[%s372 + $0xb0] sm:$0xff]
        %v404 = vld [vmem:[%s372 + $0xb8] sm:$0xff]
        %v405 = vld [vmem:[%s372 + $0xc0] sm:$0xf]
        %v406 = vld [vmem:[%s317] sm:$0xff]
        %v407 = vld [vmem:[%s317 + $0x8] sm:$0xff]
        %v408 = vld [vmem:[%s317 + $0x10] sm:$0xff]
        %v409 = vld [vmem:[%s317 + $0x18] sm:$0xff]
        %v410 = vld [vmem:[%s317 + $0x20] sm:$0xff]
        %v411 = vld [vmem:[%s317 + $0x28] sm:$0xff]
        %v412 = vld [vmem:[%s317 + $0x30] sm:$0xff]
        %v413 = vld [vmem:[%s317 + $0x38] sm:$0xff]
        %v414 = vld [vmem:[%s317 + $0x40] sm:$0xff]
        %v415 = vld [vmem:[%s317 + $0x48] sm:$0xff]
        %v416 = vld [vmem:[%s317 + $0x50] sm:$0xff]
        %v417 = vld [vmem:[%s317 + $0x58] sm:$0xff]
        %v418 = vld [vmem:[%s317 + $0x60] sm:$0xff]
        %v419 = vld [vmem:[%s317 + $0x68] sm:$0xff]
        %v420 = vld [vmem:[%s317 + $0x70] sm:$0xff]
        %v421 = vld [vmem:[%s317 + $0x78] sm:$0xff]
        %v422 = vld [vmem:[%s317 + $0x80] sm:$0xff]
        %v423 = vld [vmem:[%s317 + $0x88] sm:$0xff]
        %v424 = vld [vmem:[%s317 + $0x90] sm:$0xff]
        %v425 = vld [vmem:[%s317 + $0x98] sm:$0xff]
        %v426 = vld [vmem:[%s317 + $0xa0] sm:$0xff]
        %v427 = vld [vmem:[%s317 + $0xa8] sm:$0xff]
        %v428 = vld [vmem:[%s317 + $0xb0] sm:$0xff]
        %v429 = vld [vmem:[%s317 + $0xb8] sm:$0xff]
        %v430 = vld [vmem:[%s317 + $0xc0] sm:$0xff]
        %v431 = vld [vmem:[%s317 + $0xc8] sm:$0xff]
        %v432 = vld [vmem:[%s317 + $0xd0] sm:$0xff]
        %v433 = vld [vmem:[%s317 + $0xd8] sm:$0xff]
        %v434 = vld [vmem:[%s317 + $0xe0] sm:$0xff]
        %v435 = vld [vmem:[%s317 + $0xe8] sm:$0xff]
        %v436 = vld [vmem:[%s317 + $0xf0] sm:$0xff]
        %v437 = vld [vmem:[%s317 + $0xf8] sm:$0xff]
        %v438 = vld [vmem:[%s317 + $0x100] sm:$0xff]
        %v439 = vld [vmem:[%s317 + $0x108] sm:$0xff]
        %v440 = vld [vmem:[%s317 + $0x110] sm:$0xff]
        %v441 = vld [vmem:[%s317 + $0x118] sm:$0xff]
        %v442 = vld [vmem:[%s317 + $0x120] sm:$0xff]
        %v443 = vld [vmem:[%s317 + $0x128] sm:$0xff]
        %v444 = vld [vmem:[%s317 + $0x130] sm:$0xff]
        %v445 = vld [vmem:[%s317 + $0x138] sm:$0xff]
        %v446 = vld [vmem:[%s317 + $0x140] sm:$0xff]
        %v447 = vld [vmem:[%s317 + $0x148] sm:$0xff]
        %v448 = vld [vmem:[%s317 + $0x150] sm:$0xff]
        %v449 = vld [vmem:[%s317 + $0x158] sm:$0xff]
        %v450 = vld [vmem:[%s317 + $0x160] sm:$0xff]
        %v451 = vld [vmem:[%s317 + $0x168] sm:$0xff]
        %v452 = vld [vmem:[%s317 + $0x170] sm:$0xff]
        %v453 = vld [vmem:[%s317 + $0x178] sm:$0xff]
        %v454 = vld [vmem:[%s317 + $0x180] sm:$0xff]
        %v455 = vld [vmem:[%s317 + $0x188] sm:$0xff]
        %v456 = vld [vmem:[%s317 + $0x190] sm:$0xff]
        %v457 = vld [vmem:[%s317 + $0x198] sm:$0xff]
        %v458 = vld [vmem:[%s317 + $0x1a0] sm:$0xff]
        %v459 = vld [vmem:[%s317 + $0x1a8] sm:$0xff]
        %v460 = vld [vmem:[%s317 + $0x1b0] sm:$0xff]
        %v461 = vld [vmem:[%s317 + $0x1b8] sm:$0xff]
        %v462 = vld [vmem:[%s317 + $0x1c0] sm:$0xff]
        %v463 = vld [vmem:[%s317 + $0x1c8] sm:$0xff]
        %v464 = vld [vmem:[%s317 + $0x1d0] sm:$0xff]
        %v465 = vld [vmem:[%s317 + $0x1d8] sm:$0xff]
        %v466 = vld [vmem:[%s317 + $0x1e0] sm:$0xff]
        %v467 = vld [vmem:[%s317 + $0x1e8] sm:$0xff]
        %v468 = vld [vmem:[%s317 + $0x1f0] sm:$0xff]
        %v469 = vld [vmem:[%s317 + $0x1f8] sm:$0xff]
        %v470 = vld [vmem:[%s317 + $0x200] sm:$0xff]
        %v471 = vld [vmem:[%s317 + $0x208] sm:$0xff]
        %v472 = vld [vmem:[%s317 + $0x210] sm:$0xff]
        %v473 = vld [vmem:[%s317 + $0x218] sm:$0xff]
        %v474 = vld [vmem:[%s317 + $0x220] sm:$0xff]
        %v475 = vld [vmem:[%s317 + $0x228] sm:$0xff]
        %v476 = vld [vmem:[%s317 + $0x230] sm:$0xff]
        %v477 = vld [vmem:[%s317 + $0x238] sm:$0xff]
        %v478 = vld [vmem:[%s317 + $0x240] sm:$0xff]
        %v479 = vld [vmem:[%s317 + $0x248] sm:$0xff]
        %v480 = vld [vmem:[%s317 + $0x250] sm:$0xff]
        %v481 = vld [vmem:[%s317 + $0x258] sm:$0xff]
        %v482 = vld [vmem:[%s317 + $0x260] sm:$0xff]
        %v483 = vld [vmem:[%s317 + $0x268] sm:$0xff]
        %v484 = vld [vmem:[%s317 + $0x270] sm:$0xff]
        %v485 = vld [vmem:[%s317 + $0x278] sm:$0xff]
        %v486 = vld [vmem:[%s317 + $0x280] sm:$0xff]
        %v487 = vld [vmem:[%s317 + $0x288] sm:$0xff]
        %v488 = vld [vmem:[%s317 + $0x290] sm:$0xff]
        %v489 = vld [vmem:[%s317 + $0x298] sm:$0xff]
        %v490 = vld [vmem:[%s317 + $0x2a0] sm:$0xff]
        %v491 = vld [vmem:[%s317 + $0x2a8] sm:$0xff]
        %v492 = vld [vmem:[%s317 + $0x2b0] sm:$0xff]
        %v493 = vld [vmem:[%s317 + $0x2b8] sm:$0xff]
        %v494 = vld [vmem:[%s317 + $0x2c0] sm:$0xff]
        %v495 = vld [vmem:[%s317 + $0x2c8] sm:$0xff]
        %v496 = vld [vmem:[%s317 + $0x2d0] sm:$0xff]
        %v497 = vld [vmem:[%s317 + $0x2d8] sm:$0xff]
        %v498 = vld [vmem:[%s317 + $0x2e0] sm:$0xff]
        %v499 = vld [vmem:[%s317 + $0x2e8] sm:$0xff]
        %v500 = vld [vmem:[%s317 + $0x2f0] sm:$0xff]
        %v501 = vld [vmem:[%s317 + $0x2f8] sm:$0xff]
        %v502 = vld [vmem:[%s317 + $0x300] sm:$0xff]
        %v503 = vld [vmem:[%s317 + $0x308] sm:$0xff]
        %v504 = vld [vmem:[%s317 + $0x310] sm:$0xff]
        %v505 = vld [vmem:[%s317 + $0x318] sm:$0xff]
        %v506 = vld [vmem:[%s317 + $0x320] sm:$0xff]
        %v507 = vld [vmem:[%s317 + $0x328] sm:$0xff]
        %v508 = vld [vmem:[%s317 + $0x330] sm:$0xff]
        %v509 = vld [vmem:[%s317 + $0x338] sm:$0xff]
        %v510 = vld [vmem:[%s317 + $0x340] sm:$0xff]
        %v511 = vld [vmem:[%s317 + $0x348] sm:$0xff]
        %v512 = vld [vmem:[%s317 + $0x350] sm:$0xff]
        %v513 = vld [vmem:[%s317 + $0x358] sm:$0xff]
        %v514 = vld [vmem:[%s317 + $0x360] sm:$0xff]
        %v515 = vld [vmem:[%s317 + $0x368] sm:$0xff]
        %v516 = vld [vmem:[%s317 + $0x370] sm:$0xff]
        %v517 = vld [vmem:[%s317 + $0x378] sm:$0xff]
        %v518 = vld [vmem:[%s317 + $0x380] sm:$0xff]
        %v519 = vld [vmem:[%s317 + $0x388] sm:$0xff]
        %v520 = vld [vmem:[%s317 + $0x390] sm:$0xff]
        %v521 = vld [vmem:[%s317 + $0x398] sm:$0xff]
        %v522 = vld [vmem:[%s317 + $0x3a0] sm:$0xff]
        %v523 = vld [vmem:[%s317 + $0x3a8] sm:$0xff]
        %v524 = vld [vmem:[%s317 + $0x3b0] sm:$0xff]
        %v525 = vld [vmem:[%s317 + $0x3b8] sm:$0xff]
        %v526 = vld [vmem:[%s317 + $0x3c0] sm:$0xff]
        %v527 = vld [vmem:[%s317 + $0x3c8] sm:$0xff]
        %v528 = vld [vmem:[%s317 + $0x3d0] sm:$0xff]
        %v529 = vld [vmem:[%s317 + $0x3d8] sm:$0xff]
        %v530 = vld [vmem:[%s317 + $0x3e0] sm:$0xff]
        %v531 = vld [vmem:[%s317 + $0x3e8] sm:$0xff]
        %v532 = vld [vmem:[%s317 + $0x3f0] sm:$0xff]
        %v533 = vld [vmem:[%s317 + $0x3f8] sm:$0xff]
        %v534 = vld [vmem:[%s317 + $0x400] sm:$0xff]
        %v535 = vld [vmem:[%s317 + $0x408] sm:$0xff]
        %v536 = vld [vmem:[%s317 + $0x410] sm:$0xff]
        %v537 = vld [vmem:[%s317 + $0x418] sm:$0xff]
        %v538 = vld [vmem:[%s317 + $0x420] sm:$0xff]
        %v539 = vld [vmem:[%s317 + $0x428] sm:$0xff]
        %v540 = vld [vmem:[%s317 + $0x430] sm:$0xff]
        %v541 = vld [vmem:[%s317 + $0x438] sm:$0xff]
        %v542 = vld [vmem:[%s317 + $0x440] sm:$0xff]
        %v543 = vld [vmem:[%s317 + $0x448] sm:$0xff]
        %v544 = vld [vmem:[%s317 + $0x450] sm:$0xff]
        %v545 = vld [vmem:[%s317 + $0x458] sm:$0xff]
        %v546 = vld [vmem:[%s317 + $0x460] sm:$0xff]
        %v547 = vld [vmem:[%s317 + $0x468] sm:$0xff]
        %v548 = vld [vmem:[%s317 + $0x470] sm:$0xff]
        %v549 = vld [vmem:[%s317 + $0x478] sm:$0xff]
        %v550 = vld [vmem:[%s317 + $0x480] sm:$0xff]
        %v551 = vld [vmem:[%s317 + $0x488] sm:$0xff]
        %v552 = vld [vmem:[%s317 + $0x490] sm:$0xff]
        %v553 = vld [vmem:[%s317 + $0x498] sm:$0xff]
        %v554 = vld [vmem:[%s317 + $0x4a0] sm:$0xff]
        %v555 = vld [vmem:[%s317 + $0x4a8] sm:$0xff]
        %v556 = vld [vmem:[%s317 + $0x4b0] sm:$0xff]
        %v557 = vld [vmem:[%s317 + $0x4b8] sm:$0xff]
        %v558 = vld [vmem:[%s317 + $0x4c0] sm:$0xff]
        %v559 = vld [vmem:[%s317 + $0x4c8] sm:$0xff]
        %v560 = vld [vmem:[%s317 + $0x4d0] sm:$0xff]
        %v561 = vld [vmem:[%s317 + $0x4d8] sm:$0xff]
        %v562 = vld [vmem:[%s317 + $0x4e0] sm:$0xff]
        %v563 = vld [vmem:[%s317 + $0x4e8] sm:$0xff]
        %v564 = vld [vmem:[%s317 + $0x4f0] sm:$0xff]
        %v565 = vld [vmem:[%s317 + $0x4f8] sm:$0xff]
        %v566 = vld [vmem:[%s317 + $0x500] sm:$0xff]
        %v567 = vld [vmem:[%s317 + $0x508] sm:$0xff]
        %v568 = vld [vmem:[%s317 + $0x510] sm:$0xff]
        %v569 = vld [vmem:[%s317 + $0x518] sm:$0xff]
        %v570 = vld [vmem:[%s317 + $0x520] sm:$0xff]
        %v571 = vld [vmem:[%s317 + $0x528] sm:$0xff]
        %v572 = vld [vmem:[%s317 + $0x530] sm:$0xff]
        %v573 = vld [vmem:[%s317 + $0x538] sm:$0xff]
        %v574 = vld [vmem:[%s317 + $0x540] sm:$0xff]
        %v575 = vld [vmem:[%s317 + $0x548] sm:$0xff]
        %v576 = vld [vmem:[%s317 + $0x550] sm:$0xff]
        %v577 = vld [vmem:[%s317 + $0x558] sm:$0xff]
        %v578 = vld [vmem:[%s317 + $0x560] sm:$0xff]
        %v579 = vld [vmem:[%s317 + $0x568] sm:$0xff]
        %v580 = vld [vmem:[%s317 + $0x570] sm:$0xff]
        %v581 = vld [vmem:[%s317 + $0x578] sm:$0xff]
        %v582 = vld [vmem:[%s317 + $0x580] sm:$0xff]
        %v583 = vld [vmem:[%s317 + $0x588] sm:$0xff]
        %v584 = vld [vmem:[%s317 + $0x590] sm:$0xff]
        %v585 = vld [vmem:[%s317 + $0x598] sm:$0xff]
        %v586 = vld [vmem:[%s317 + $0x5a0] sm:$0xff]
        %v587 = vld [vmem:[%s317 + $0x5a8] sm:$0xff]
        %v588 = vld [vmem:[%s317 + $0x5b0] sm:$0xff]
        %v589 = vld [vmem:[%s317 + $0x5b8] sm:$0xff]
        %v590 = vld [vmem:[%s317 + $0x5c0] sm:$0xff]
        %v591 = vld [vmem:[%s317 + $0x5c8] sm:$0xff]
        %v592 = vld [vmem:[%s317 + $0x5d0] sm:$0xff]
        %v593 = vld [vmem:[%s317 + $0x5d8] sm:$0xff]
        %v594 = vld [vmem:[%s317 + $0x5e0] sm:$0xff]
        %v595 = vld [vmem:[%s317 + $0x5e8] sm:$0xff]
        %v596 = vld [vmem:[%s317 + $0x5f0] sm:$0xff]
        %v597 = vld [vmem:[%s317 + $0x5f8] sm:$0xff]
        %v598 = vld [vmem:[%s317 + $0x600] sm:$0xff]
        %v599 = vld [vmem:[%s317 + $0x608] sm:$0xff]
        %v600 = vld [vmem:[%s317 + $0x610] sm:$0xff]
        %v601 = vld [vmem:[%s317 + $0x618] sm:$0xff]
        %v602 = vld [vmem:[%s317 + $0x620] sm:$0xff]
        %v603 = vld [vmem:[%s317 + $0x628] sm:$0xff]
        %v604 = vld [vmem:[%s317 + $0x630] sm:$0xff]
        %v605 = vld [vmem:[%s317 + $0x638] sm:$0xff]
        %v606 = vld [vmem:[%s317 + $0x640] sm:$0xff]
        %v607 = vld [vmem:[%s317 + $0x648] sm:$0xff]
        %v608 = vld [vmem:[%s317 + $0x650] sm:$0xff]
        %v609 = vld [vmem:[%s317 + $0x658] sm:$0xff]
        %v610 = vld [vmem:[%s317 + $0x660] sm:$0xff]
        %v611 = vld [vmem:[%s317 + $0x668] sm:$0xff]
        %v612 = vld [vmem:[%s317 + $0x670] sm:$0xff]
        %v613 = vld [vmem:[%s317 + $0x678] sm:$0xff]
        %v614 = vld [vmem:[%s317 + $0x680] sm:$0xff]
        %v615 = vld [vmem:[%s317 + $0x688] sm:$0xff]
        %v616 = vld [vmem:[%s317 + $0x690] sm:$0xff]
        %v617 = vld [vmem:[%s317 + $0x698] sm:$0xff]
        %v618 = vld [vmem:[%s317 + $0x6a0] sm:$0xff]
        %v619 = vld [vmem:[%s317 + $0x6a8] sm:$0xff]
        %v620 = vld [vmem:[%s317 + $0x6b0] sm:$0xff]
        %v621 = vld [vmem:[%s317 + $0x6b8] sm:$0xff]
        %v622 = vld [vmem:[%s317 + $0x6c0] sm:$0xff]
        %v623 = vld [vmem:[%s317 + $0x6c8] sm:$0xff]
        %v624 = vld [vmem:[%s317 + $0x6d0] sm:$0xff]
        %v625 = vld [vmem:[%s317 + $0x6d8] sm:$0xff]
        %v626 = vld [vmem:[%s317 + $0x6e0] sm:$0xff]
        %v627 = vld [vmem:[%s317 + $0x6e8] sm:$0xff]
        %v628 = vld [vmem:[%s317 + $0x6f0] sm:$0xff]
        %v629 = vld [vmem:[%s317 + $0x6f8] sm:$0xff]
        %v630 = vld [vmem:[%s317 + $0x700] sm:$0xff]
        %v631 = vld [vmem:[%s317 + $0x708] sm:$0xff]
        %v632 = vld [vmem:[%s317 + $0x710] sm:$0xff]
        %v633 = vld [vmem:[%s317 + $0x718] sm:$0xff]
        %v634 = vld [vmem:[%s317 + $0x720] sm:$0xff]
        %v635 = vld [vmem:[%s317 + $0x728] sm:$0xff]
        %v636 = vld [vmem:[%s317 + $0x730] sm:$0xff]
        %v637 = vld [vmem:[%s317 + $0x738] sm:$0xff]
        %v638 = vld [vmem:[%s317 + $0x740] sm:$0xff]
        %v639 = vld [vmem:[%s317 + $0x748] sm:$0xff]
        %v640 = vld [vmem:[%s317 + $0x750] sm:$0xff]
        %v641 = vld [vmem:[%s317 + $0x758] sm:$0xff]
        %v642 = vld [vmem:[%s317 + $0x760] sm:$0xff]
        %v643 = vld [vmem:[%s317 + $0x768] sm:$0xff]
        %v644 = vld [vmem:[%s317 + $0x770] sm:$0xff]
        %v645 = vld [vmem:[%s317 + $0x778] sm:$0xff]
        %v646 = vld [vmem:[%s317 + $0x780] sm:$0xff]
        %v647 = vld [vmem:[%s317 + $0x788] sm:$0xff]
        %v648 = vld [vmem:[%s317 + $0x790] sm:$0xff]
        %v649 = vld [vmem:[%s317 + $0x798] sm:$0xff]
        %v650 = vld [vmem:[%s317 + $0x7a0] sm:$0xff]
        %v651 = vld [vmem:[%s317 + $0x7a8] sm:$0xff]
        %v652 = vld [vmem:[%s317 + $0x7b0] sm:$0xff]
        %v653 = vld [vmem:[%s317 + $0x7b8] sm:$0xff]
        %v654 = vld [vmem:[%s317 + $0x7c0] sm:$0xff]
        %v655 = vld [vmem:[%s317 + $0x7c8] sm:$0xff]
        %v656 = vld [vmem:[%s317 + $0x7d0] sm:$0xff]
        %v657 = vld [vmem:[%s317 + $0x7d8] sm:$0xff]
        %v658 = vld [vmem:[%s317 + $0x7e0] sm:$0xff]
        %v659 = vld [vmem:[%s317 + $0x7e8] sm:$0xff]
        %v660 = vld [vmem:[%s317 + $0x7f0] sm:$0xff]
        %v661 = vld [vmem:[%s317 + $0x7f8] sm:$0xff]
        %v662 = vld [vmem:[%s317 + $0x800] sm:$0xff]
        %v663 = vld [vmem:[%s317 + $0x808] sm:$0xff]
        %v664 = vld [vmem:[%s317 + $0x810] sm:$0xff]
        %v665 = vld [vmem:[%s317 + $0x818] sm:$0xff]
        %v666 = vld [vmem:[%s317 + $0x820] sm:$0xff]
        %v667 = vld [vmem:[%s317 + $0x828] sm:$0xff]
        %v668 = vld [vmem:[%s317 + $0x830] sm:$0xff]
        %v669 = vld [vmem:[%s317 + $0x838] sm:$0xff]
        %v670 = vld [vmem:[%s317 + $0x840] sm:$0xff]
        %v671 = vld [vmem:[%s317 + $0x848] sm:$0xff]
        %v672 = vld [vmem:[%s317 + $0x850] sm:$0xff]
        %v673 = vld [vmem:[%s317 + $0x858] sm:$0xff]
        %v674 = vld [vmem:[%s317 + $0x860] sm:$0xff]
        %v675 = vld [vmem:[%s317 + $0x868] sm:$0xff]
        %v676 = vld [vmem:[%s317 + $0x870] sm:$0xff]
        %v677 = vld [vmem:[%s317 + $0x878] sm:$0xff]
        %v678 = vld [vmem:[%s317 + $0x880] sm:$0xff]
        %v679 = vld [vmem:[%s317 + $0x888] sm:$0xff]
        %v680 = vld [vmem:[%s317 + $0x890] sm:$0xff]
        %v681 = vld [vmem:[%s317 + $0x898] sm:$0xff]
        %v682 = vld [vmem:[%s317 + $0x8a0] sm:$0xff]
        %v683 = vld [vmem:[%s317 + $0x8a8] sm:$0xff]
        %v684 = vld [vmem:[%s317 + $0x8b0] sm:$0xff]
        %v685 = vld [vmem:[%s317 + $0x8b8] sm:$0xff]
        %v686 = vld [vmem:[%s317 + $0x8c0] sm:$0xff]
        %v687 = vld [vmem:[%s317 + $0x8c8] sm:$0xff]
        %v688 = vld [vmem:[%s317 + $0x8d0] sm:$0xff]
        %v689 = vld [vmem:[%s317 + $0x8d8] sm:$0xff]
        %v690 = vld [vmem:[%s317 + $0x8e0] sm:$0xff]
        %v691 = vld [vmem:[%s317 + $0x8e8] sm:$0xff]
        %v692 = vld [vmem:[%s317 + $0x8f0] sm:$0xff]
        %v693 = vld [vmem:[%s317 + $0x8f8] sm:$0xff]
        %v694 = vld [vmem:[%s317 + $0x900] sm:$0xff]
        %v695 = vld [vmem:[%s317 + $0x908] sm:$0xff]
        %v696 = vld [vmem:[%s317 + $0x910] sm:$0xff]
        %v697 = vld [vmem:[%s317 + $0x918] sm:$0xff]
        %v698 = vld [vmem:[%s317 + $0x920] sm:$0xff]
        %v699 = vld [vmem:[%s317 + $0x928] sm:$0xff]
        %v700 = vld [vmem:[%s317 + $0x930] sm:$0xff]
        %v701 = vld [vmem:[%s317 + $0x938] sm:$0xff]
        %v702 = vld [vmem:[%s317 + $0x940] sm:$0xff]
        %v703 = vld [vmem:[%s317 + $0x948] sm:$0xff]
        %v704 = vld [vmem:[%s317 + $0x950] sm:$0xff]
        %v705 = vld [vmem:[%s317 + $0x958] sm:$0xff]
        %v706 = vld [vmem:[%s317 + $0x960] sm:$0xff]
        %v707 = vld [vmem:[%s317 + $0x968] sm:$0xff]
        %v708 = vld [vmem:[%s317 + $0x970] sm:$0xff]
        %v709 = vld [vmem:[%s317 + $0x978] sm:$0xff]
        %v710 = vld [vmem:[%s317 + $0x980] sm:$0xff]
        %v711 = vld [vmem:[%s317 + $0x988] sm:$0xff]
        %v712 = vld [vmem:[%s317 + $0x990] sm:$0xff]
        %v713 = vld [vmem:[%s317 + $0x998] sm:$0xff]
        %v714 = vld [vmem:[%s317 + $0x9a0] sm:$0xff]
        %v715 = vld [vmem:[%s317 + $0x9a8] sm:$0xff]
        %v716 = vld [vmem:[%s317 + $0x9b0] sm:$0xff]
        %v717 = vld [vmem:[%s317 + $0x9b8] sm:$0xff]
        %v718 = vld [vmem:[%s317 + $0x9c0] sm:$0xff]
        %v719 = vld [vmem:[%s317 + $0x9c8] sm:$0xff]
        %v720 = vld [vmem:[%s317 + $0x9d0] sm:$0xff]
        %v721 = vld [vmem:[%s317 + $0x9d8] sm:$0xff]
        %v722 = vld [vmem:[%s317 + $0x9e0] sm:$0xff]
        %v723 = vld [vmem:[%s317 + $0x9e8] sm:$0xff]
        %v724 = vld [vmem:[%s317 + $0x9f0] sm:$0xff]
        %v725 = vld [vmem:[%s317 + $0x9f8] sm:$0xff]
        %v726 = vld [vmem:[%s317 + $0xa00] sm:$0xff]
        %v727 = vld [vmem:[%s317 + $0xa08] sm:$0xff]
        %v728 = vld [vmem:[%s317 + $0xa10] sm:$0xff]
        %v729 = vld [vmem:[%s317 + $0xa18] sm:$0xff]
        %v730 = vld [vmem:[%s317 + $0xa20] sm:$0xff]
        %v731 = vld [vmem:[%s317 + $0xa28] sm:$0xff]
        %v732 = vld [vmem:[%s317 + $0xa30] sm:$0xff]
        %v733 = vld [vmem:[%s317 + $0xa38] sm:$0xff]
        %v734 = vld [vmem:[%s317 + $0xa40] sm:$0xff]
        %v735 = vld [vmem:[%s317 + $0xa48] sm:$0xff]
        %v736 = vld [vmem:[%s317 + $0xa50] sm:$0xff]
        %v737 = vld [vmem:[%s317 + $0xa58] sm:$0xff]
        %v738 = vld [vmem:[%s317 + $0xa60] sm:$0xff]
        %v739 = vld [vmem:[%s317 + $0xa68] sm:$0xff]
        %v740 = vld [vmem:[%s317 + $0xa70] sm:$0xff]
        %v741 = vld [vmem:[%s317 + $0xa78] sm:$0xff]
        %v742 = vld [vmem:[%s317 + $0xa80] sm:$0xff]
        %v743 = vld [vmem:[%s317 + $0xa88] sm:$0xff]
        %v744 = vld [vmem:[%s317 + $0xa90] sm:$0xff]
        %v745 = vld [vmem:[%s317 + $0xa98] sm:$0xff]
        %v746 = vld [vmem:[%s317 + $0xaa0] sm:$0xff]
        %v747 = vld [vmem:[%s317 + $0xaa8] sm:$0xff]
        %v748 = vld [vmem:[%s317 + $0xab0] sm:$0xff]
        %v749 = vld [vmem:[%s317 + $0xab8] sm:$0xff]
        %v750 = vld [vmem:[%s317 + $0xac0] sm:$0xff]
        %v751 = vld [vmem:[%s317 + $0xac8] sm:$0xff]
        %v752 = vld [vmem:[%s317 + $0xad0] sm:$0xff]
        %v753 = vld [vmem:[%s317 + $0xad8] sm:$0xff]
        %v754 = vld [vmem:[%s317 + $0xae0] sm:$0xff]
        %v755 = vld [vmem:[%s317 + $0xae8] sm:$0xff]
        %v756 = vld [vmem:[%s317 + $0xaf0] sm:$0xff]
        %v757 = vld [vmem:[%s317 + $0xaf8] sm:$0xff]
        %v758 = vld [vmem:[%s317 + $0xb00] sm:$0xff]
        %v759 = vld [vmem:[%s317 + $0xb08] sm:$0xff]
        %v760 = vld [vmem:[%s317 + $0xb10] sm:$0xff]
        %v761 = vld [vmem:[%s317 + $0xb18] sm:$0xff]
        %v762 = vld [vmem:[%s317 + $0xb20] sm:$0xff]
        %v763 = vld [vmem:[%s317 + $0xb28] sm:$0xff]
        %v764 = vld [vmem:[%s317 + $0xb30] sm:$0xff]
        %v765 = vld [vmem:[%s317 + $0xb38] sm:$0xff]
        %v766 = vld [vmem:[%s317 + $0xb40] sm:$0xff]
        %v767 = vld [vmem:[%s317 + $0xb48] sm:$0xff]
        %v768 = vld [vmem:[%s317 + $0xb50] sm:$0xff]
        %v769 = vld [vmem:[%s317 + $0xb58] sm:$0xff]
        %v770 = vld [vmem:[%s317 + $0xb60] sm:$0xff]
        %v771 = vld [vmem:[%s317 + $0xb68] sm:$0xff]
        %v772 = vld [vmem:[%s317 + $0xb70] sm:$0xff]
        %v773 = vld [vmem:[%s317 + $0xb78] sm:$0xff]
        %v774 = vld [vmem:[%s317 + $0xb80] sm:$0xff]
        %v775 = vld [vmem:[%s317 + $0xb88] sm:$0xff]
        %v776 = vld [vmem:[%s317 + $0xb90] sm:$0xff]
        %v777 = vld [vmem:[%s317 + $0xb98] sm:$0xff]
        %v778 = vld [vmem:[%s317 + $0xba0] sm:$0xff]
        %v779 = vld [vmem:[%s317 + $0xba8] sm:$0xff]
        %v780 = vld [vmem:[%s317 + $0xbb0] sm:$0xff]
        %v781 = vld [vmem:[%s317 + $0xbb8] sm:$0xff]
        %v782 = vld [vmem:[%s317 + $0xbc0] sm:$0xff]
        %v783 = vld [vmem:[%s317 + $0xbc8] sm:$0xff]
        %v784 = vld [vmem:[%s317 + $0xbd0] sm:$0xff]
        %v785 = vld [vmem:[%s317 + $0xbd8] sm:$0xff]
        %v786 = vld [vmem:[%s317 + $0xbe0] sm:$0xff]
        %v787 = vld [vmem:[%s317 + $0xbe8] sm:$0xff]
        %v788 = vld [vmem:[%s317 + $0xbf0] sm:$0xff]
        %v789 = vld [vmem:[%s317 + $0xbf8] sm:$0xff]
        %v790 = vld [vmem:[%s317 + $0xc00] sm:$0xff]
        %v791 = vld [vmem:[%s317 + $0xc08] sm:$0xff]
        %v792 = vld [vmem:[%s317 + $0xc10] sm:$0xff]
        %v793 = vld [vmem:[%s317 + $0xc18] sm:$0xff]
        %v794 = vld [vmem:[%s317 + $0xc20] sm:$0xff]
        %v795 = vld [vmem:[%s317 + $0xc28] sm:$0xff]
        %v796 = vld [vmem:[%s317 + $0xc30] sm:$0xff]
        %v797 = vld [vmem:[%s317 + $0xc38] sm:$0xff]
        %v798 = vld [vmem:[%s317 + $0xc40] sm:$0xff]
        %v799 = vld [vmem:[%s317 + $0xc48] sm:$0xff]
        %v800 = vld [vmem:[%s317 + $0xc50] sm:$0xff]
        %v801 = vld [vmem:[%s317 + $0xc58] sm:$0xff]
        %v802 = vld [vmem:[%s317 + $0xc60] sm:$0xff]
        %v803 = vld [vmem:[%s317 + $0xc68] sm:$0xff]
        %v804 = vld [vmem:[%s317 + $0xc70] sm:$0xff]
        %v805 = vld [vmem:[%s317 + $0xc78] sm:$0xff]
        %v806 = vld [vmem:[%s317 + $0xc80] sm:$0xff]
        %v807 = vld [vmem:[%s317 + $0xc88] sm:$0xff]
        %v808 = vld [vmem:[%s317 + $0xc90] sm:$0xff]
        %v809 = vld [vmem:[%s317 + $0xc98] sm:$0xff]
        %v810 = vld [vmem:[%s317 + $0xca0] sm:$0xff]
        %v811 = vld [vmem:[%s317 + $0xca8] sm:$0xff]
        %v812 = vld [vmem:[%s317 + $0xcb0] sm:$0xff]
        %v813 = vld [vmem:[%s317 + $0xcb8] sm:$0xff]
        %v814 = vld [vmem:[%s317 + $0xcc0] sm:$0xff]
        %v815 = vld [vmem:[%s317 + $0xcc8] sm:$0xff]
        %v816 = vld [vmem:[%s317 + $0xcd0] sm:$0xff]
        %v817 = vld [vmem:[%s317 + $0xcd8] sm:$0xff]
        %v818 = vld [vmem:[%s317 + $0xce0] sm:$0xff]
        %v819 = vld [vmem:[%s317 + $0xce8] sm:$0xff]
        %v820 = vld [vmem:[%s317 + $0xcf0] sm:$0xff]
        %v821 = vld [vmem:[%s317 + $0xcf8] sm:$0xff]
        %v822 = vld [vmem:[%s317 + $0xd00] sm:$0xff]
        %v823 = vld [vmem:[%s317 + $0xd08] sm:$0xff]
        %v824 = vld [vmem:[%s317 + $0xd10] sm:$0xff]
        %v825 = vld [vmem:[%s317 + $0xd18] sm:$0xff]
        %v826 = vld [vmem:[%s317 + $0xd20] sm:$0xff]
        %v827 = vld [vmem:[%s317 + $0xd28] sm:$0xff]
        %v828 = vld [vmem:[%s317 + $0xd30] sm:$0xff]
        %v829 = vld [vmem:[%s317 + $0xd38] sm:$0xff]
        %v830 = vld [vmem:[%s317 + $0xd40] sm:$0xff]
        %v831 = vld [vmem:[%s317 + $0xd48] sm:$0xff]
        %v832 = vld [vmem:[%s317 + $0xd50] sm:$0xff]
        %v833 = vld [vmem:[%s317 + $0xd58] sm:$0xff]
        %v834 = vld [vmem:[%s317 + $0xd60] sm:$0xff]
        %v835 = vld [vmem:[%s317 + $0xd68] sm:$0xff]
        %v836 = vld [vmem:[%s317 + $0xd70] sm:$0xff]
        %v837 = vld [vmem:[%s317 + $0xd78] sm:$0xff]
        %v838 = vld [vmem:[%s317 + $0xd80] sm:$0xff]
        %v839 = vld [vmem:[%s317 + $0xd88] sm:$0xff]
        %v840 = vld [vmem:[%s317 + $0xd90] sm:$0xff]
        %v841 = vld [vmem:[%s317 + $0xd98] sm:$0xff]
        %v842 = vld [vmem:[%s317 + $0xda0] sm:$0xff]
        %v843 = vld [vmem:[%s317 + $0xda8] sm:$0xff]
        %v844 = vld [vmem:[%s317 + $0xdb0] sm:$0xff]
        %v845 = vld [vmem:[%s317 + $0xdb8] sm:$0xff]
        %v846 = vld [vmem:[%s317 + $0xdc0] sm:$0xff]
        %v847 = vld [vmem:[%s317 + $0xdc8] sm:$0xff]
        %v848 = vld [vmem:[%s317 + $0xdd0] sm:$0xff]
        %v849 = vld [vmem:[%s317 + $0xdd8] sm:$0xff]
        %v850 = vld [vmem:[%s317 + $0xde0] sm:$0xff]
        %v851 = vld [vmem:[%s317 + $0xde8] sm:$0xff]
        %v852 = vld [vmem:[%s317 + $0xdf0] sm:$0xff]
        %v853 = vld [vmem:[%s317 + $0xdf8] sm:$0xff]
        %v854 = vld [vmem:[%s317 + $0xe00] sm:$0xff]
        %v855 = vld [vmem:[%s317 + $0xe08] sm:$0xff]
        %v856 = vld [vmem:[%s317 + $0xe10] sm:$0xff]
        %v857 = vld [vmem:[%s317 + $0xe18] sm:$0xff]
        %v858 = vld [vmem:[%s317 + $0xe20] sm:$0xff]
        %v859 = vld [vmem:[%s317 + $0xe28] sm:$0xff]
        %v860 = vld [vmem:[%s317 + $0xe30] sm:$0xff]
        %v861 = vld [vmem:[%s317 + $0xe38] sm:$0xff]
        %v862 = vld [vmem:[%s317 + $0xe40] sm:$0xff]
        %v863 = vld [vmem:[%s317 + $0xe48] sm:$0xff]
        %v864 = vld [vmem:[%s317 + $0xe50] sm:$0xff]
        %v865 = vld [vmem:[%s317 + $0xe58] sm:$0xff]
        %v866 = vld [vmem:[%s317 + $0xe60] sm:$0xff]
        %v867 = vld [vmem:[%s317 + $0xe68] sm:$0xff]
        %v868 = vld [vmem:[%s317 + $0xe70] sm:$0xff]
        %v869 = vld [vmem:[%s317 + $0xe78] sm:$0xff]
        %v870 = vld [vmem:[%s317 + $0xe80] sm:$0xff]
        %v871 = vld [vmem:[%s317 + $0xe88] sm:$0xff]
        %v872 = vld [vmem:[%s317 + $0xe90] sm:$0xff]
        %v873 = vld [vmem:[%s317 + $0xe98] sm:$0xff]
        %v874 = vld [vmem:[%s317 + $0xea0] sm:$0xff]
        %v875 = vld [vmem:[%s317 + $0xea8] sm:$0xff]
        %v876 = vld [vmem:[%s317 + $0xeb0] sm:$0xff]
        %v877 = vld [vmem:[%s317 + $0xeb8] sm:$0xff]
        %v878 = vld [vmem:[%s317 + $0xec0] sm:$0xff]
        %v879 = vld [vmem:[%s317 + $0xec8] sm:$0xff]
        %v880 = vld [vmem:[%s317 + $0xed0] sm:$0xff]
        %v881 = vld [vmem:[%s317 + $0xed8] sm:$0xff]
        %v882 = vld [vmem:[%s317 + $0xee0] sm:$0xff]
        %v883 = vld [vmem:[%s317 + $0xee8] sm:$0xff]
        %v884 = vld [vmem:[%s317 + $0xef0] sm:$0xff]
        %v885 = vld [vmem:[%s317 + $0xef8] sm:$0xff]
        %v886 = vld [vmem:[%s317 + $0xf00] sm:$0xff]
        %v887 = vld [vmem:[%s317 + $0xf08] sm:$0xff]
        %v888 = vld [vmem:[%s317 + $0xf10] sm:$0xff]
        %v889 = vld [vmem:[%s317 + $0xf18] sm:$0xff]
        %v890 = vld [vmem:[%s317 + $0xf20] sm:$0xff]
        %v891 = vld [vmem:[%s317 + $0xf28] sm:$0xff]
        %v892 = vld [vmem:[%s317 + $0xf30] sm:$0xff]
        %v893 = vld [vmem:[%s317 + $0xf38] sm:$0xff]
        %v894 = vld [vmem:[%s317 + $0xf40] sm:$0xff]
        %v895 = vld [vmem:[%s317 + $0xf48] sm:$0xff]
        %v896 = vld [vmem:[%s317 + $0xf50] sm:$0xff]
        %v897 = vld [vmem:[%s317 + $0xf58] sm:$0xff]
        %v898 = vld [vmem:[%s317 + $0xf60] sm:$0xff]
        %v899 = vld [vmem:[%s317 + $0xf68] sm:$0xff]
        %v900 = vld [vmem:[%s317 + $0xf70] sm:$0xff]
        %v901 = vld [vmem:[%s317 + $0xf78] sm:$0xff]
        %v902 = vld [vmem:[%s317 + $0xf80] sm:$0xff]
        %v903 = vld [vmem:[%s317 + $0xf88] sm:$0xff]
        %v904 = vld [vmem:[%s317 + $0xf90] sm:$0xff]
        %v905 = vld [vmem:[%s317 + $0xf98] sm:$0xff]
        %v906 = vld [vmem:[%s317 + $0xfa0] sm:$0xff]
        %v907 = vld [vmem:[%s317 + $0xfa8] sm:$0xff]
        %v908 = vld [vmem:[%s317 + $0xfb0] sm:$0xff]
        %v909 = vld [vmem:[%s317 + $0xfb8] sm:$0xff]
        %v910 = vld [vmem:[%s317 + $0xfc0] sm:$0xff]
        %v911 = vld [vmem:[%s317 + $0xfc8] sm:$0xff]
        %v912 = vld [vmem:[%s317 + $0xfd0] sm:$0xff]
        %v913 = vld [vmem:[%s317 + $0xfd8] sm:$0xff]
        %v914 = vld [vmem:[%s317 + $0xfe0] sm:$0xff]
        %v915 = vld [vmem:[%s317 + $0xfe8] sm:$0xff]
        %v916 = vld [vmem:[%s317 + $0xff0] sm:$0xff]
        %v917 = vld [vmem:[%s317 + $0xff8] sm:$0xff]
        %v918 = vld [vmem:[%s317 + $0x1000] sm:$0xff]
        %v919 = vld [vmem:[%s317 + $0x1008] sm:$0xff]
        %v920 = vld [vmem:[%s317 + $0x1010] sm:$0xff]
        %v921 = vld [vmem:[%s317 + $0x1018] sm:$0xff]
        %v922 = vld [vmem:[%s317 + $0x1020] sm:$0xff]
        %v923 = vld [vmem:[%s317 + $0x1028] sm:$0xff]
        %v924 = vld [vmem:[%s317 + $0x1030] sm:$0xff]
        %v925 = vld [vmem:[%s317 + $0x1038] sm:$0xff]
        %v926 = vld [vmem:[%s317 + $0x1040] sm:$0xff]
        %v927 = vld [vmem:[%s317 + $0x1048] sm:$0xff]
        %v928 = vld [vmem:[%s317 + $0x1050] sm:$0xff]
        %v929 = vld [vmem:[%s317 + $0x1058] sm:$0xff]
        %v930 = vld [vmem:[%s317 + $0x1060] sm:$0xff]
        %v931 = vld [vmem:[%s317 + $0x1068] sm:$0xff]
        %v932 = vld [vmem:[%s317 + $0x1070] sm:$0xff]
        %v933 = vld [vmem:[%s317 + $0x1078] sm:$0xff]
        %v934 = vld [vmem:[%s317 + $0x1080] sm:$0xff]
        %v935 = vld [vmem:[%s317 + $0x1088] sm:$0xff]
        %v936 = vld [vmem:[%s317 + $0x1090] sm:$0xff]
        %v937 = vld [vmem:[%s317 + $0x1098] sm:$0xff]
        %v938 = vld [vmem:[%s317 + $0x10a0] sm:$0xff]
        %v939 = vld [vmem:[%s317 + $0x10a8] sm:$0xff]
        %v940 = vld [vmem:[%s317 + $0x10b0] sm:$0xff]
        %v941 = vld [vmem:[%s317 + $0x10b8] sm:$0xff]
        %v942 = vld [vmem:[%s317 + $0x10c0] sm:$0xff]
        %v943 = vld [vmem:[%s317 + $0x10c8] sm:$0xff]
        %v944 = vld [vmem:[%s317 + $0x10d0] sm:$0xff]
        %v945 = vld [vmem:[%s317 + $0x10d8] sm:$0xff]
        %v946 = vld [vmem:[%s317 + $0x10e0] sm:$0xff]
        %v947 = vld [vmem:[%s317 + $0x10e8] sm:$0xff]
        %v948 = vld [vmem:[%s317 + $0x10f0] sm:$0xff]
        %v949 = vld [vmem:[%s317 + $0x10f8] sm:$0xff]
        %v950 = vld [vmem:[%s317 + $0x1100] sm:$0xff]
        %v951 = vld [vmem:[%s317 + $0x1108] sm:$0xff]
        %v952 = vld [vmem:[%s317 + $0x1110] sm:$0xff]
        %v953 = vld [vmem:[%s317 + $0x1118] sm:$0xff]
        %v954 = vld [vmem:[%s317 + $0x1120] sm:$0xff]
        %v955 = vld [vmem:[%s317 + $0x1128] sm:$0xff]
        %v956 = vld [vmem:[%s317 + $0x1130] sm:$0xff]
        %v957 = vld [vmem:[%s317 + $0x1138] sm:$0xff]
        %v958 = vld [vmem:[%s317 + $0x1140] sm:$0xff]
        %v959 = vld [vmem:[%s317 + $0x1148] sm:$0xff]
        %v960 = vld [vmem:[%s317 + $0x1150] sm:$0xff]
        %v961 = vld [vmem:[%s317 + $0x1158] sm:$0xff]
        %v962 = vld [vmem:[%s317 + $0x1160] sm:$0xff]
        %v963 = vld [vmem:[%s317 + $0x1168] sm:$0xff]
        %v964 = vld [vmem:[%s317 + $0x1170] sm:$0xff]
        %v965 = vld [vmem:[%s317 + $0x1178] sm:$0xff]
        %v966 = vld [vmem:[%s317 + $0x1180] sm:$0xff]
        %v967 = vld [vmem:[%s317 + $0x1188] sm:$0xff]
        %v968 = vld [vmem:[%s317 + $0x1190] sm:$0xff]
        %v969 = vld [vmem:[%s317 + $0x1198] sm:$0xff]
        %v970 = vld [vmem:[%s317 + $0x11a0] sm:$0xff]
        %v971 = vld [vmem:[%s317 + $0x11a8] sm:$0xff]
        %v972 = vld [vmem:[%s317 + $0x11b0] sm:$0xff]
        %v973 = vld [vmem:[%s317 + $0x11b8] sm:$0xff]
        %v974 = vld [vmem:[%s317 + $0x11c0] sm:$0xff]
        %v975 = vld [vmem:[%s317 + $0x11c8] sm:$0xff]
        %v976 = vld [vmem:[%s317 + $0x11d0] sm:$0xff]
        %v977 = vld [vmem:[%s317 + $0x11d8] sm:$0xff]
        %v978 = vld [vmem:[%s317 + $0x11e0] sm:$0xff]
        %v979 = vld [vmem:[%s317 + $0x11e8] sm:$0xff]
        %v980 = vld [vmem:[%s317 + $0x11f0] sm:$0xff]
        %v981 = vld [vmem:[%s317 + $0x11f8] sm:$0xff]
        %v982 = vld [vmem:[%s317 + $0x1200] sm:$0xff]
        %v983 = vld [vmem:[%s317 + $0x1208] sm:$0xff]
        %v984 = vld [vmem:[%s317 + $0x1210] sm:$0xff]
        %v985 = vld [vmem:[%s317 + $0x1218] sm:$0xff]
        %v986 = vld [vmem:[%s317 + $0x1220] sm:$0xff]
        %v987 = vld [vmem:[%s317 + $0x1228] sm:$0xff]
        %v988 = vld [vmem:[%s317 + $0x1230] sm:$0xff]
        %v989 = vld [vmem:[%s317 + $0x1238] sm:$0xff]
        %v990 = vld [vmem:[%s317 + $0x1240] sm:$0xff]
        %v991 = vld [vmem:[%s317 + $0x1248] sm:$0xff]
        %v992 = vld [vmem:[%s317 + $0x1250] sm:$0xff]
        %v993 = vld [vmem:[%s317 + $0x1258] sm:$0xff]
        %v994 = vld [vmem:[%s317 + $0x1260] sm:$0xff]
        %v995 = vld [vmem:[%s317 + $0x1268] sm:$0xff]
        %v996 = vld [vmem:[%s317 + $0x1270] sm:$0xff]
        %v997 = vld [vmem:[%s317 + $0x1278] sm:$0xff]
        %v998 = vld [vmem:[%s317 + $0x1280] sm:$0xff]
        %v999 = vld [vmem:[%s317 + $0x1288] sm:$0xff]
        %v1000 = vld [vmem:[%s317 + $0x1290] sm:$0xff]
        %v1001 = vld [vmem:[%s317 + $0x1298] sm:$0xff]
        %v1002 = vld [vmem:[%s317 + $0x12a0] sm:$0xff]
        %v1003 = vld [vmem:[%s317 + $0x12a8] sm:$0xff]
        %v1004 = vld [vmem:[%s317 + $0x12b0] sm:$0xff]
        %v1005 = vld [vmem:[%s317 + $0x12b8] sm:$0xff]
        %v1006 = vld [vmem:[%s317 + $0x12c0] sm:$0xff]
        %v1007 = vld [vmem:[%s317 + $0x12c8] sm:$0xff]
        %v1008 = vld [vmem:[%s317 + $0x12d0] sm:$0xff]
        %v1009 = vld [vmem:[%s317 + $0x12d8] sm:$0xff]
        %v1010 = vld [vmem:[%s317 + $0x12e0] sm:$0xff]
        %v1011 = vld [vmem:[%s317 + $0x12e8] sm:$0xff]
        %v1012 = vld [vmem:[%s317 + $0x12f0] sm:$0xff]
        %v1013 = vld [vmem:[%s317 + $0x12f8] sm:$0xff]
        %v1014 = vld [vmem:[%s317 + $0x1300] sm:$0xff]
        %v1015 = vld [vmem:[%s317 + $0x1308] sm:$0xff]
        %v1016 = vld [vmem:[%s317 + $0x1310] sm:$0xff]
        %v1017 = vld [vmem:[%s317 + $0x1318] sm:$0xff]
        %v1018 = vld [vmem:[%s317 + $0x1320] sm:$0xff]
        %v1019 = vld [vmem:[%s317 + $0x1328] sm:$0xff]
        %v1020 = vld [vmem:[%s317 + $0x1330] sm:$0xff]
        %v1021 = vld [vmem:[%s317 + $0x1338] sm:$0xff]
        %v1022 = vld [vmem:[%s317 + $0x1340] sm:$0xff]
        %v1023 = vld [vmem:[%s317 + $0x1348] sm:$0xff]
        %v1024 = vld [vmem:[%s317 + $0x1350] sm:$0xff]
        %v1025 = vld [vmem:[%s317 + $0x1358] sm:$0xff]
        %v1026 = vld [vmem:[%s317 + $0x1360] sm:$0xff]
        %v1027 = vld [vmem:[%s317 + $0x1368] sm:$0xff]
        %v1028 = vld [vmem:[%s317 + $0x1370] sm:$0xff]
        %v1029 = vld [vmem:[%s317 + $0x1378] sm:$0xff]
        %v1030 = vld [vmem:[%s317 + $0x1380] sm:$0xff]
        %v1031 = vld [vmem:[%s317 + $0x1388] sm:$0xff]
        %v1032 = vld [vmem:[%s317 + $0x1390] sm:$0xff]
        %v1033 = vld [vmem:[%s317 + $0x1398] sm:$0xff]
        %v1034 = vld [vmem:[%s317 + $0x13a0] sm:$0xff]
        %v1035 = vld [vmem:[%s317 + $0x13a8] sm:$0xff]
        %v1036 = vld [vmem:[%s317 + $0x13b0] sm:$0xff]
        %v1037 = vld [vmem:[%s317 + $0x13b8] sm:$0xff]
        %v1038 = vld [vmem:[%s317 + $0x13c0] sm:$0xff]
        %v1039 = vld [vmem:[%s317 + $0x13c8] sm:$0xff]
        %v1040 = vld [vmem:[%s317 + $0x13d0] sm:$0xff]
        %v1041 = vld [vmem:[%s317 + $0x13d8] sm:$0xff]
        %v1042 = vld [vmem:[%s317 + $0x13e0] sm:$0xff]
        %v1043 = vld [vmem:[%s317 + $0x13e8] sm:$0xff]
        %v1044 = vld [vmem:[%s317 + $0x13f0] sm:$0xff]
        %v1045 = vld [vmem:[%s317 + $0x13f8] sm:$0xff]
        %v1046 = vld [vmem:[%s317 + $0x1400] sm:$0xff]
        %v1047 = vld [vmem:[%s317 + $0x1408] sm:$0xff]
        %v1048 = vld [vmem:[%s317 + $0x1410] sm:$0xff]
        %v1049 = vld [vmem:[%s317 + $0x1418] sm:$0xff]
        %v1050 = vld [vmem:[%s317 + $0x1420] sm:$0xff]
        %v1051 = vld [vmem:[%s317 + $0x1428] sm:$0xff]
        %v1052 = vld [vmem:[%s317 + $0x1430] sm:$0xff]
        %v1053 = vld [vmem:[%s317 + $0x1438] sm:$0xff]
        %v1054 = vld [vmem:[%s317 + $0x1440] sm:$0xff]
        %v1055 = vld [vmem:[%s317 + $0x1448] sm:$0xff]
        %v1056 = vld [vmem:[%s317 + $0x1450] sm:$0xff]
        %v1057 = vld [vmem:[%s317 + $0x1458] sm:$0xff]
        %v1058 = vld [vmem:[%s317 + $0x1460] sm:$0xff]
        %v1059 = vld [vmem:[%s317 + $0x1468] sm:$0xff]
        %v1060 = vld [vmem:[%s317 + $0x1470] sm:$0xff]
        %v1061 = vld [vmem:[%s317 + $0x1478] sm:$0xff]
        %v1062 = vld [vmem:[%s317 + $0x1480] sm:$0xff]
        %v1063 = vld [vmem:[%s317 + $0x1488] sm:$0xff]
        %v1064 = vld [vmem:[%s317 + $0x1490] sm:$0xff]
        %v1065 = vld [vmem:[%s317 + $0x1498] sm:$0xff]
        %v1066 = vld [vmem:[%s317 + $0x14a0] sm:$0xff]
        %v1067 = vld [vmem:[%s317 + $0x14a8] sm:$0xff]
        %v1068 = vld [vmem:[%s317 + $0x14b0] sm:$0xff]
        %v1069 = vld [vmem:[%s317 + $0x14b8] sm:$0xff]
        %v1070 = vld [vmem:[%s317 + $0x14c0] sm:$0xff]
        %v1071 = vld [vmem:[%s317 + $0x14c8] sm:$0xff]
        %v1072 = vld [vmem:[%s317 + $0x14d0] sm:$0xff]
        %v1073 = vld [vmem:[%s317 + $0x14d8] sm:$0xff]
        %v1074 = vld [vmem:[%s317 + $0x14e0] sm:$0xff]
        %v1075 = vld [vmem:[%s317 + $0x14e8] sm:$0xff]
        %v1076 = vld [vmem:[%s317 + $0x14f0] sm:$0xff]
        %v1077 = vld [vmem:[%s317 + $0x14f8] sm:$0xff]
        %v1078 = vld [vmem:[%s317 + $0x1500] sm:$0xff]
        %v1079 = vld [vmem:[%s317 + $0x1508] sm:$0xff]
        %v1080 = vld [vmem:[%s317 + $0x1510] sm:$0xff]
        %v1081 = vld [vmem:[%s317 + $0x1518] sm:$0xff]
        %v1082 = vld [vmem:[%s317 + $0x1520] sm:$0xff]
        %v1083 = vld [vmem:[%s317 + $0x1528] sm:$0xff]
        %v1084 = vld [vmem:[%s317 + $0x1530] sm:$0xff]
        %v1085 = vld [vmem:[%s317 + $0x1538] sm:$0xff]
        %v1086 = vld [vmem:[%s317 + $0x1540] sm:$0xff]
        %v1087 = vld [vmem:[%s317 + $0x1548] sm:$0xff]
        %v1088 = vld [vmem:[%s317 + $0x1550] sm:$0xff]
        %v1089 = vld [vmem:[%s317 + $0x1558] sm:$0xff]
        %v1090 = vld [vmem:[%s317 + $0x1560] sm:$0xff]
        %v1091 = vld [vmem:[%s317 + $0x1568] sm:$0xff]
        %v1092 = vld [vmem:[%s317 + $0x1570] sm:$0xff]
        %v1093 = vld [vmem:[%s317 + $0x1578] sm:$0xff]
        %v1094 = vld [vmem:[%s317 + $0x1580] sm:$0xff]
        %v1095 = vld [vmem:[%s317 + $0x1588] sm:$0xff]
        %v1096 = vld [vmem:[%s317 + $0x1590] sm:$0xff]
        %v1097 = vld [vmem:[%s317 + $0x1598] sm:$0xff]
        %v1098 = vld [vmem:[%s317 + $0x15a0] sm:$0xff]
        %v1099 = vld [vmem:[%s317 + $0x15a8] sm:$0xff]
        %v1100 = vld [vmem:[%s317 + $0x15b0] sm:$0xff]
        %v1101 = vld [vmem:[%s317 + $0x15b8] sm:$0xff]
        %v1102 = vld [vmem:[%s317 + $0x15c0] sm:$0xff]
        %v1103 = vld [vmem:[%s317 + $0x15c8] sm:$0xff]
        %v1104 = vld [vmem:[%s317 + $0x15d0] sm:$0xff]
        %v1105 = vld [vmem:[%s317 + $0x15d8] sm:$0xff]
        %v1106 = vld [vmem:[%s317 + $0x15e0] sm:$0xff]
        %v1107 = vld [vmem:[%s317 + $0x15e8] sm:$0xff]
        %v1108 = vld [vmem:[%s317 + $0x15f0] sm:$0xff]
        %v1109 = vld [vmem:[%s317 + $0x15f8] sm:$0xff]
        %v1110 = vld [vmem:[%s317 + $0x1600] sm:$0xff]
        %v1111 = vld [vmem:[%s317 + $0x1608] sm:$0xff]
        %v1112 = vld [vmem:[%s317 + $0x1610] sm:$0xff]
        %v1113 = vld [vmem:[%s317 + $0x1618] sm:$0xff]
        %v1114 = vld [vmem:[%s317 + $0x1620] sm:$0xff]
        %v1115 = vld [vmem:[%s317 + $0x1628] sm:$0xff]
        %v1116 = vld [vmem:[%s317 + $0x1630] sm:$0xff]
        %v1117 = vld [vmem:[%s317 + $0x1638] sm:$0xff]
        %v1118 = vld [vmem:[%s317 + $0x1640] sm:$0xff]
        %v1119 = vld [vmem:[%s317 + $0x1648] sm:$0xff]
        %v1120 = vld [vmem:[%s317 + $0x1650] sm:$0xff]
        %v1121 = vld [vmem:[%s317 + $0x1658] sm:$0xff]
        %v1122 = vld [vmem:[%s317 + $0x1660] sm:$0xff]
        %v1123 = vld [vmem:[%s317 + $0x1668] sm:$0xff]
        %v1124 = vld [vmem:[%s317 + $0x1670] sm:$0xff]
        %v1125 = vld [vmem:[%s317 + $0x1678] sm:$0xff]
        %v1126 = vld [vmem:[%s317 + $0x1680] sm:$0xff]
        %v1127 = vld [vmem:[%s317 + $0x1688] sm:$0xff]
        %v1128 = vld [vmem:[%s317 + $0x1690] sm:$0xff]
        %v1129 = vld [vmem:[%s317 + $0x1698] sm:$0xff]
        %v1130 = vld [vmem:[%s317 + $0x16a0] sm:$0xff]
        %v1131 = vld [vmem:[%s317 + $0x16a8] sm:$0xff]
        %v1132 = vld [vmem:[%s317 + $0x16b0] sm:$0xff]
        %v1133 = vld [vmem:[%s317 + $0x16b8] sm:$0xff]
        %v1134 = vld [vmem:[%s317 + $0x16c0] sm:$0xff]
        %v1135 = vld [vmem:[%s317 + $0x16c8] sm:$0xff]
        %v1136 = vld [vmem:[%s317 + $0x16d0] sm:$0xff]
        %v1137 = vld [vmem:[%s317 + $0x16d8] sm:$0xff]
        %v1138 = vld [vmem:[%s317 + $0x16e0] sm:$0xff]
        %v1139 = vld [vmem:[%s317 + $0x16e8] sm:$0xff]
        %v1140 = vld [vmem:[%s317 + $0x16f0] sm:$0xff]
        %v1141 = vld [vmem:[%s317 + $0x16f8] sm:$0xff]
        %v1142 = vld [vmem:[%s317 + $0x1700] sm:$0xff]
        %v1143 = vld [vmem:[%s317 + $0x1708] sm:$0xff]
        %v1144 = vld [vmem:[%s317 + $0x1710] sm:$0xff]
        %v1145 = vld [vmem:[%s317 + $0x1718] sm:$0xff]
        %v1146 = vld [vmem:[%s317 + $0x1720] sm:$0xff]
        %v1147 = vld [vmem:[%s317 + $0x1728] sm:$0xff]
        %v1148 = vld [vmem:[%s317 + $0x1730] sm:$0xff]
        %v1149 = vld [vmem:[%s317 + $0x1738] sm:$0xff]
        %v1150 = vld [vmem:[%s317 + $0x1740] sm:$0xff]
        %v1151 = vld [vmem:[%s317 + $0x1748] sm:$0xff]
        %v1152 = vld [vmem:[%s317 + $0x1750] sm:$0xff]
        %v1153 = vld [vmem:[%s317 + $0x1758] sm:$0xff]
        %v1154 = vld [vmem:[%s317 + $0x1760] sm:$0xff]
        %v1155 = vld [vmem:[%s317 + $0x1768] sm:$0xff]
        %v1156 = vld [vmem:[%s317 + $0x1770] sm:$0xff]
        %v1157 = vld [vmem:[%s317 + $0x1778] sm:$0xff]
        %v1158 = vld [vmem:[%s317 + $0x1780] sm:$0xff]
        %v1159 = vld [vmem:[%s317 + $0x1788] sm:$0xff]
        %v1160 = vld [vmem:[%s317 + $0x1790] sm:$0xff]
        %v1161 = vld [vmem:[%s317 + $0x1798] sm:$0xff]
        %v1162 = vld [vmem:[%s317 + $0x17a0] sm:$0xff]
        %v1163 = vld [vmem:[%s317 + $0x17a8] sm:$0xff]
        %v1164 = vld [vmem:[%s317 + $0x17b0] sm:$0xff]
        %v1165 = vld [vmem:[%s317 + $0x17b8] sm:$0xff]
        %v1166 = vld [vmem:[%s317 + $0x17c0] sm:$0xff]
        %v1167 = vld [vmem:[%s317 + $0x17c8] sm:$0xff]
        %v1168 = vld [vmem:[%s317 + $0x17d0] sm:$0xff]
        %v1169 = vld [vmem:[%s317 + $0x17d8] sm:$0xff]
        %v1170 = vld [vmem:[%s317 + $0x17e0] sm:$0xff]
        %v1171 = vld [vmem:[%s317 + $0x17e8] sm:$0xff]
        %v1172 = vld [vmem:[%s317 + $0x17f0] sm:$0xff]
        %v1173 = vld [vmem:[%s317 + $0x17f8] sm:$0xff]
        %v1174 = vld [vmem:[%s317 + $0x1800] sm:$0xff]
        %v1175 = vld [vmem:[%s317 + $0x1808] sm:$0xff]
        %v1176 = vld [vmem:[%s317 + $0x1810] sm:$0xff]
        %v1177 = vld [vmem:[%s317 + $0x1818] sm:$0xff]
        %v1178 = vld [vmem:[%s317 + $0x1820] sm:$0xff]
        %v1179 = vld [vmem:[%s317 + $0x1828] sm:$0xff]
        %v1180 = vld [vmem:[%s317 + $0x1830] sm:$0xff]
        %v1181 = vld [vmem:[%s317 + $0x1838] sm:$0xff]
        %v1182 = vld [vmem:[%s317 + $0x1840] sm:$0xff]
        %v1183 = vld [vmem:[%s317 + $0x1848] sm:$0xff]
        %v1184 = vld [vmem:[%s317 + $0x1850] sm:$0xff]
        %v1185 = vld [vmem:[%s317 + $0x1858] sm:$0xff]
        %v1186 = vld [vmem:[%s317 + $0x1860] sm:$0xff]
        %v1187 = vld [vmem:[%s317 + $0x1868] sm:$0xff]
        %v1188 = vld [vmem:[%s317 + $0x1870] sm:$0xff]
        %v1189 = vld [vmem:[%s317 + $0x1878] sm:$0xff]
        %v1190 = vld [vmem:[%s317 + $0x1880] sm:$0xff]
        %v1191 = vld [vmem:[%s317 + $0x1888] sm:$0xff]
        %v1192 = vld [vmem:[%s317 + $0x1890] sm:$0xff]
        %v1193 = vld [vmem:[%s317 + $0x1898] sm:$0xff]
        %v1194 = vld [vmem:[%s317 + $0x18a0] sm:$0xff]
        %v1195 = vld [vmem:[%s317 + $0x18a8] sm:$0xff]
        %v1196 = vld [vmem:[%s317 + $0x18b0] sm:$0xff]
        %v1197 = vld [vmem:[%s317 + $0x18b8] sm:$0xff]
        %v1198 = vld [vmem:[%s317 + $0x18c0] sm:$0xff]
        %v1199 = vld [vmem:[%s317 + $0x18c8] sm:$0xff]
        %v1200 = vld [vmem:[%s317 + $0x18d0] sm:$0xff]
        %v1201 = vld [vmem:[%s317 + $0x18d8] sm:$0xff]
        %v1202 = vld [vmem:[%s317 + $0x18e0] sm:$0xff]
        %v1203 = vld [vmem:[%s317 + $0x18e8] sm:$0xff]
        %v1204 = vld [vmem:[%s317 + $0x18f0] sm:$0xff]
        %v1205 = vld [vmem:[%s317 + $0x18f8] sm:$0xff]
        %v1206 = vld [vmem:[%s317 + $0x1900] sm:$0xff]
        %v1207 = vld [vmem:[%s317 + $0x1908] sm:$0xff]
        %v1208 = vld [vmem:[%s317 + $0x1910] sm:$0xff]
        %v1209 = vld [vmem:[%s317 + $0x1918] sm:$0xff]
        %v1210 = vld [vmem:[%s317 + $0x1920] sm:$0xff]
        %v1211 = vld [vmem:[%s317 + $0x1928] sm:$0xff]
        %v1212 = vld [vmem:[%s317 + $0x1930] sm:$0xff]
        %v1213 = vld [vmem:[%s317 + $0x1938] sm:$0xff]
        %v1214 = vld [vmem:[%s317 + $0x1940] sm:$0xff]
        %v1215 = vld [vmem:[%s317 + $0x1948] sm:$0xff]
        %v1216 = vld [vmem:[%s317 + $0x1950] sm:$0xff]
        %v1217 = vld [vmem:[%s317 + $0x1958] sm:$0xff]
        %v1218 = vld [vmem:[%s317 + $0x1960] sm:$0xff]
        %v1219 = vld [vmem:[%s317 + $0x1968] sm:$0xff]
        %v1220 = vld [vmem:[%s317 + $0x1970] sm:$0xff]
        %v1221 = vld [vmem:[%s317 + $0x1978] sm:$0xff]
        %v1222 = vld [vmem:[%s317 + $0x1980] sm:$0xff]
        %v1223 = vld [vmem:[%s317 + $0x1988] sm:$0xff]
        %v1224 = vld [vmem:[%s317 + $0x1990] sm:$0xff]
        %v1225 = vld [vmem:[%s317 + $0x1998] sm:$0xff]
        %v1226 = vld [vmem:[%s317 + $0x19a0] sm:$0xff]
        %v1227 = vld [vmem:[%s317 + $0x19a8] sm:$0xff]
        %v1228 = vld [vmem:[%s317 + $0x19b0] sm:$0xff]
        %v1229 = vld [vmem:[%s317 + $0x19b8] sm:$0xff]
        %v1230 = vld [vmem:[%s317 + $0x19c0] sm:$0xff]
        %v1231 = vld [vmem:[%s317 + $0x19c8] sm:$0xff]
        %v1232 = vld [vmem:[%s317 + $0x19d0] sm:$0xff]
        %v1233 = vld [vmem:[%s317 + $0x19d8] sm:$0xff]
        %v1234 = vld [vmem:[%s317 + $0x19e0] sm:$0xff]
        %v1235 = vld [vmem:[%s317 + $0x19e8] sm:$0xff]
        %v1236 = vld [vmem:[%s317 + $0x19f0] sm:$0xff]
        %v1237 = vld [vmem:[%s317 + $0x19f8] sm:$0xff]
        %v1238 = vld [vmem:[%s317 + $0x1a00] sm:$0xff]
        %v1239 = vld [vmem:[%s317 + $0x1a08] sm:$0xff]
        %v1240 = vld [vmem:[%s317 + $0x1a10] sm:$0xff]
        %v1241 = vld [vmem:[%s317 + $0x1a18] sm:$0xff]
        %v1242 = vld [vmem:[%s317 + $0x1a20] sm:$0xff]
        %v1243 = vld [vmem:[%s317 + $0x1a28] sm:$0xff]
        %v1244 = vld [vmem:[%s317 + $0x1a30] sm:$0xff]
        %v1245 = vld [vmem:[%s317 + $0x1a38] sm:$0xff]
        %v1246 = vld [vmem:[%s317 + $0x1a40] sm:$0xff]
        %v1247 = vld [vmem:[%s317 + $0x1a48] sm:$0xff]
        %v1248 = vld [vmem:[%s317 + $0x1a50] sm:$0xff]
        %v1249 = vld [vmem:[%s317 + $0x1a58] sm:$0xff]
        %v1250 = vld [vmem:[%s317 + $0x1a60] sm:$0xff]
        %v1251 = vld [vmem:[%s317 + $0x1a68] sm:$0xff]
        %v1252 = vld [vmem:[%s317 + $0x1a70] sm:$0xff]
        %v1253 = vld [vmem:[%s317 + $0x1a78] sm:$0xff]
        %v1254 = vld [vmem:[%s317 + $0x1a80] sm:$0xff]
        %v1255 = vld [vmem:[%s317 + $0x1a88] sm:$0xff]
        %v1256 = vld [vmem:[%s317 + $0x1a90] sm:$0xff]
        %v1257 = vld [vmem:[%s317 + $0x1a98] sm:$0xff]
        %v1258 = vld [vmem:[%s317 + $0x1aa0] sm:$0xff]
        %v1259 = vld [vmem:[%s317 + $0x1aa8] sm:$0xff]
        %v1260 = vld [vmem:[%s317 + $0x1ab0] sm:$0xff]
        %v1261 = vld [vmem:[%s317 + $0x1ab8] sm:$0xff]
        %v1262 = vld [vmem:[%s317 + $0x1ac0] sm:$0xff]
        %v1263 = vld [vmem:[%s317 + $0x1ac8] sm:$0xff]
        %v1264 = vld [vmem:[%s317 + $0x1ad0] sm:$0xff]
        %v1265 = vld [vmem:[%s317 + $0x1ad8] sm:$0xff]
        %v1266 = vld [vmem:[%s317 + $0x1ae0] sm:$0xff]
        %v1267 = vld [vmem:[%s317 + $0x1ae8] sm:$0xff]
        %v1268 = vld [vmem:[%s317 + $0x1af0] sm:$0xff]
        %v1269 = vld [vmem:[%s317 + $0x1af8] sm:$0xff]
        %v1270 = vld [vmem:[%s317 + $0x1b00] sm:$0xff]
        %v1271 = vld [vmem:[%s317 + $0x1b08] sm:$0xff]
        %v1272 = vld [vmem:[%s317 + $0x1b10] sm:$0xff]
        %v1273 = vld [vmem:[%s317 + $0x1b18] sm:$0xff]
        %v1274 = vld [vmem:[%s317 + $0x1b20] sm:$0xff]
        %v1275 = vld [vmem:[%s317 + $0x1b28] sm:$0xff]
        %v1276 = vld [vmem:[%s317 + $0x1b30] sm:$0xff]
        %v1277 = vld [vmem:[%s317 + $0x1b38] sm:$0xff]
        %v1278 = vld [vmem:[%s317 + $0x1b40] sm:$0xff]
        %v1279 = vld [vmem:[%s317 + $0x1b48] sm:$0xff]
        %v1280 = vld [vmem:[%s317 + $0x1b50] sm:$0xff]
        %v1281 = vld [vmem:[%s317 + $0x1b58] sm:$0xff]
        %v1282 = vld [vmem:[%s317 + $0x1b60] sm:$0xff]
        %v1283 = vld [vmem:[%s317 + $0x1b68] sm:$0xff]
        %v1284 = vld [vmem:[%s317 + $0x1b70] sm:$0xff]
        %v1285 = vld [vmem:[%s317 + $0x1b78] sm:$0xff]
        %v1286 = vld [vmem:[%s317 + $0x1b80] sm:$0xff]
        %v1287 = vld [vmem:[%s317 + $0x1b88] sm:$0xff]
        %v1288 = vld [vmem:[%s317 + $0x1b90] sm:$0xff]
        %v1289 = vld [vmem:[%s317 + $0x1b98] sm:$0xff]
        %v1290 = vld [vmem:[%s317 + $0x1ba0] sm:$0xff]
        %v1291 = vld [vmem:[%s317 + $0x1ba8] sm:$0xff]
        %v1292 = vld [vmem:[%s317 + $0x1bb0] sm:$0xff]
        %v1293 = vld [vmem:[%s317 + $0x1bb8] sm:$0xff]
        %v1294 = vld [vmem:[%s317 + $0x1bc0] sm:$0xff]
        %v1295 = vld [vmem:[%s317 + $0x1bc8] sm:$0xff]
        %v1296 = vld [vmem:[%s317 + $0x1bd0] sm:$0xff]
        %v1297 = vld [vmem:[%s317 + $0x1bd8] sm:$0xff]
        %v1298 = vld [vmem:[%s317 + $0x1be0] sm:$0xff]
        %v1299 = vld [vmem:[%s317 + $0x1be8] sm:$0xff]
        %v1300 = vld [vmem:[%s317 + $0x1bf0] sm:$0xff]
        %v1301 = vld [vmem:[%s317 + $0x1bf8] sm:$0xff]
        %v1302 = vld [vmem:[%s317 + $0x1c00] sm:$0xff]
        %v1303 = vld [vmem:[%s317 + $0x1c08] sm:$0xff]
        %v1304 = vld [vmem:[%s317 + $0x1c10] sm:$0xff]
        %v1305 = vld [vmem:[%s317 + $0x1c18] sm:$0xff]
        %v1306 = vld [vmem:[%s317 + $0x1c20] sm:$0xff]
        %v1307 = vld [vmem:[%s317 + $0x1c28] sm:$0xff]
        %v1308 = vld [vmem:[%s317 + $0x1c30] sm:$0xff]
        %v1309 = vld [vmem:[%s317 + $0x1c38] sm:$0xff]
        %v1310 = vld [vmem:[%s317 + $0x1c40] sm:$0xff]
        %v1311 = vld [vmem:[%s317 + $0x1c48] sm:$0xff]
        %v1312 = vld [vmem:[%s317 + $0x1c50] sm:$0xff]
        %v1313 = vld [vmem:[%s317 + $0x1c58] sm:$0xff]
        %v1314 = vld [vmem:[%s317 + $0x1c60] sm:$0xff]
        %v1315 = vld [vmem:[%s317 + $0x1c68] sm:$0xff]
        %v1316 = vld [vmem:[%s317 + $0x1c70] sm:$0xff]
        %v1317 = vld [vmem:[%s317 + $0x1c78] sm:$0xff]
        %v1318 = vld [vmem:[%s317 + $0x1c80] sm:$0xff]
        %v1319 = vld [vmem:[%s317 + $0x1c88] sm:$0xff]
        %v1320 = vld [vmem:[%s317 + $0x1c90] sm:$0xff]
        %v1321 = vld [vmem:[%s317 + $0x1c98] sm:$0xff]
        %v1322 = vld [vmem:[%s317 + $0x1ca0] sm:$0xff]
        %v1323 = vld [vmem:[%s317 + $0x1ca8] sm:$0xff]
        %v1324 = vld [vmem:[%s317 + $0x1cb0] sm:$0xff]
        %v1325 = vld [vmem:[%s317 + $0x1cb8] sm:$0xff]
        %v1326 = vld [vmem:[%s317 + $0x1cc0] sm:$0xff]
        %v1327 = vld [vmem:[%s317 + $0x1cc8] sm:$0xff]
        %v1328 = vld [vmem:[%s317 + $0x1cd0] sm:$0xff]
        %v1329 = vld [vmem:[%s317 + $0x1cd8] sm:$0xff]
        %v1330 = vld [vmem:[%s317 + $0x1ce0] sm:$0xff]
        %v1331 = vld [vmem:[%s317 + $0x1ce8] sm:$0xff]
        %v1332 = vld [vmem:[%s317 + $0x1cf0] sm:$0xff]
        %v1333 = vld [vmem:[%s317 + $0x1cf8] sm:$0xff]
        %v1334 = vld [vmem:[%s317 + $0x1d00] sm:$0xff]
        %v1335 = vld [vmem:[%s317 + $0x1d08] sm:$0xff]
        %v1336 = vld [vmem:[%s317 + $0x1d10] sm:$0xff]
        %v1337 = vld [vmem:[%s317 + $0x1d18] sm:$0xff]
        %v1338 = vld [vmem:[%s317 + $0x1d20] sm:$0xff]
        %v1339 = vld [vmem:[%s317 + $0x1d28] sm:$0xff]
        %v1340 = vld [vmem:[%s317 + $0x1d30] sm:$0xff]
        %v1341 = vld [vmem:[%s317 + $0x1d38] sm:$0xff]
        %v1342 = vld [vmem:[%s317 + $0x1d40] sm:$0xff]
        %v1343 = vld [vmem:[%s317 + $0x1d48] sm:$0xff]
        %v1344 = vld [vmem:[%s317 + $0x1d50] sm:$0xff]
        %v1345 = vld [vmem:[%s317 + $0x1d58] sm:$0xff]
        %v1346 = vld [vmem:[%s317 + $0x1d60] sm:$0xff]
        %v1347 = vld [vmem:[%s317 + $0x1d68] sm:$0xff]
        %v1348 = vld [vmem:[%s317 + $0x1d70] sm:$0xff]
        %v1349 = vld [vmem:[%s317 + $0x1d78] sm:$0xff]
        %v1350 = vld [vmem:[%s317 + $0x1d80] sm:$0xff]
        %v1351 = vld [vmem:[%s317 + $0x1d88] sm:$0xff]
        %v1352 = vld [vmem:[%s317 + $0x1d90] sm:$0xff]
        %v1353 = vld [vmem:[%s317 + $0x1d98] sm:$0xff]
        %v1354 = vld [vmem:[%s317 + $0x1da0] sm:$0xff]
        %v1355 = vld [vmem:[%s317 + $0x1da8] sm:$0xff]
        %v1356 = vld [vmem:[%s317 + $0x1db0] sm:$0xff]
        %v1357 = vld [vmem:[%s317 + $0x1db8] sm:$0xff]
        %v1358 = vld [vmem:[%s317 + $0x1dc0] sm:$0xff]
        %v1359 = vld [vmem:[%s317 + $0x1dc8] sm:$0xff]
        %v1360 = vld [vmem:[%s317 + $0x1dd0] sm:$0xff]
        %v1361 = vld [vmem:[%s317 + $0x1dd8] sm:$0xff]
        %v1362 = vld [vmem:[%s317 + $0x1de0] sm:$0xff]
        %v1363 = vld [vmem:[%s317 + $0x1de8] sm:$0xff]
        %v1364 = vld [vmem:[%s317 + $0x1df0] sm:$0xff]
        %v1365 = vld [vmem:[%s317 + $0x1df8] sm:$0xff]
        %v1366 = vld [vmem:[%s317 + $0x1e00] sm:$0xff]
        %v1367 = vld [vmem:[%s317 + $0x1e08] sm:$0xff]
        %v1368 = vld [vmem:[%s317 + $0x1e10] sm:$0xff]
        %v1369 = vld [vmem:[%s317 + $0x1e18] sm:$0xff]
        %v1370 = vld [vmem:[%s317 + $0x1e20] sm:$0xff]
        %v1371 = vld [vmem:[%s317 + $0x1e28] sm:$0xff]
        %v1372 = vld [vmem:[%s317 + $0x1e30] sm:$0xff]
        %v1373 = vld [vmem:[%s317 + $0x1e38] sm:$0xff]
        %v1374 = vld [vmem:[%s317 + $0x1e40] sm:$0xff]
        %v1375 = vld [vmem:[%s317 + $0x1e48] sm:$0xff]
        %v1376 = vld [vmem:[%s317 + $0x1e50] sm:$0xff]
        %v1377 = vld [vmem:[%s317 + $0x1e58] sm:$0xff]
        %v1378 = vld [vmem:[%s317 + $0x1e60] sm:$0xff]
        %v1379 = vld [vmem:[%s317 + $0x1e68] sm:$0xff]
        %v1380 = vld [vmem:[%s317 + $0x1e70] sm:$0xff]
        %v1381 = vld [vmem:[%s317 + $0x1e78] sm:$0xff]
        %v1382 = vld [vmem:[%s317 + $0x1e80] sm:$0xff]
        %v1383 = vld [vmem:[%s317 + $0x1e88] sm:$0xff]
        %v1384 = vld [vmem:[%s317 + $0x1e90] sm:$0xff]
        %v1385 = vld [vmem:[%s317 + $0x1e98] sm:$0xff]
        %v1386 = vld [vmem:[%s317 + $0x1ea0] sm:$0xff]
        %v1387 = vld [vmem:[%s317 + $0x1ea8] sm:$0xff]
        %v1388 = vld [vmem:[%s317 + $0x1eb0] sm:$0xff]
        %v1389 = vld [vmem:[%s317 + $0x1eb8] sm:$0xff]
        %v1390 = vld [vmem:[%s317 + $0x1ec0] sm:$0xff]
        %v1391 = vld [vmem:[%s317 + $0x1ec8] sm:$0xff]
        %v1392 = vld [vmem:[%s317 + $0x1ed0] sm:$0xff]
        %v1393 = vld [vmem:[%s317 + $0x1ed8] sm:$0xff]
        %v1394 = vld [vmem:[%s317 + $0x1ee0] sm:$0xff]
        %v1395 = vld [vmem:[%s317 + $0x1ee8] sm:$0xff]
        %v1396 = vld [vmem:[%s317 + $0x1ef0] sm:$0xff]
        %v1397 = vld [vmem:[%s317 + $0x1ef8] sm:$0xff]
        %v1398 = vld [vmem:[%s317 + $0x1f00] sm:$0xff]
        %v1399 = vld [vmem:[%s317 + $0x1f08] sm:$0xff]
        %v1400 = vld [vmem:[%s317 + $0x1f10] sm:$0xff]
        %v1401 = vld [vmem:[%s317 + $0x1f18] sm:$0xff]
        %v1402 = vld [vmem:[%s317 + $0x1f20] sm:$0xff]
        %v1403 = vld [vmem:[%s317 + $0x1f28] sm:$0xff]
        %v1404 = vld [vmem:[%s317 + $0x1f30] sm:$0xff]
        %v1405 = vld [vmem:[%s317 + $0x1f38] sm:$0xff]
        %v1406 = vld [vmem:[%s317 + $0x1f40] sm:$0xff]
        %v1407 = vld [vmem:[%s317 + $0x1f48] sm:$0xff]
        %v1408 = vld [vmem:[%s317 + $0x1f50] sm:$0xff]
        %v1409 = vld [vmem:[%s317 + $0x1f58] sm:$0xff]
        %v1410 = vld [vmem:[%s317 + $0x1f60] sm:$0xff]
        %v1411 = vld [vmem:[%s317 + $0x1f68] sm:$0xff]
        %v1412 = vld [vmem:[%s317 + $0x1f70] sm:$0xff]
        %v1413 = vld [vmem:[%s317 + $0x1f78] sm:$0xff]
        %v1414 = vld [vmem:[%s317 + $0x1f80] sm:$0xff]
        %v1415 = vld [vmem:[%s317 + $0x1f88] sm:$0xff]
        %v1416 = vld [vmem:[%s317 + $0x1f90] sm:$0xff]
        %v1417 = vld [vmem:[%s317 + $0x1f98] sm:$0xff]
        %v1418 = vld [vmem:[%s317 + $0x1fa0] sm:$0xff]
        %v1419 = vld [vmem:[%s317 + $0x1fa8] sm:$0xff]
        %v1420 = vld [vmem:[%s317 + $0x1fb0] sm:$0xff]
        %v1421 = vld [vmem:[%s317 + $0x1fb8] sm:$0xff]
        %v1422 = vld [vmem:[%s317 + $0x1fc0] sm:$0xff]
        %v1423 = vld [vmem:[%s317 + $0x1fc8] sm:$0xff]
        %v1424 = vld [vmem:[%s317 + $0x1fd0] sm:$0xff]
        %v1425 = vld [vmem:[%s317 + $0x1fd8] sm:$0xff]
        %v1426 = vld [vmem:[%s317 + $0x1fe0] sm:$0xff]
        %v1427 = vld [vmem:[%s317 + $0x1fe8] sm:$0xff]
        %v1428 = vld [vmem:[%s317 + $0x1ff0] sm:$0xff]
        %v1429 = vld [vmem:[%s317 + $0x1ff8] sm:$0xff]
        %v1430 = vld [vmem:[%s317 + $0x2000] sm:$0xff]
        %v1431 = vld [vmem:[%s317 + $0x2008] sm:$0xff]
        %v1432 = vld [vmem:[%s317 + $0x2010] sm:$0xff]
        %v1433 = vld [vmem:[%s317 + $0x2018] sm:$0xff]
        %v1434 = vld [vmem:[%s317 + $0x2020] sm:$0xff]
        %v1435 = vld [vmem:[%s317 + $0x2028] sm:$0xff]
        %v1436 = vld [vmem:[%s317 + $0x2030] sm:$0xff]
        %v1437 = vld [vmem:[%s317 + $0x2038] sm:$0xff]
        %v1438 = vld [vmem:[%s317 + $0x2040] sm:$0xff]
        %v1439 = vld [vmem:[%s317 + $0x2048] sm:$0xff]
        %v1440 = vld [vmem:[%s317 + $0x2050] sm:$0xff]
        %v1441 = vld [vmem:[%s317 + $0x2058] sm:$0xff]
        %v1442 = vld [vmem:[%s317 + $0x2060] sm:$0xff]
        %v1443 = vld [vmem:[%s317 + $0x2068] sm:$0xff]
        %v1444 = vld [vmem:[%s317 + $0x2070] sm:$0xff]
        %v1445 = vld [vmem:[%s317 + $0x2078] sm:$0xff]
        %v1446 = vld [vmem:[%s317 + $0x2080] sm:$0xff]
        %v1447 = vld [vmem:[%s317 + $0x2088] sm:$0xff]
        %v1448 = vld [vmem:[%s317 + $0x2090] sm:$0xff]
        %v1449 = vld [vmem:[%s317 + $0x2098] sm:$0xff]
        %v1450 = vld [vmem:[%s317 + $0x20a0] sm:$0xff]
        %v1451 = vld [vmem:[%s317 + $0x20a8] sm:$0xff]
        %v1452 = vld [vmem:[%s317 + $0x20b0] sm:$0xff]
        %v1453 = vld [vmem:[%s317 + $0x20b8] sm:$0xff]
        %v1454 = vld [vmem:[%s317 + $0x20c0] sm:$0xff]
        %v1455 = vld [vmem:[%s317 + $0x20c8] sm:$0xff]
        %v1456 = vld [vmem:[%s317 + $0x20d0] sm:$0xff]
        %v1457 = vld [vmem:[%s317 + $0x20d8] sm:$0xff]
        %v1458 = vld [vmem:[%s317 + $0x20e0] sm:$0xff]
        %v1459 = vld [vmem:[%s317 + $0x20e8] sm:$0xff]
        %v1460 = vld [vmem:[%s317 + $0x20f0] sm:$0xff]
        %v1461 = vld [vmem:[%s317 + $0x20f8] sm:$0xff]
        %v1462 = vld [vmem:[%s317 + $0x2100] sm:$0xff]
        %v1463 = vld [vmem:[%s317 + $0x2108] sm:$0xff]
        %v1464 = vld [vmem:[%s317 + $0x2110] sm:$0xff]
        %v1465 = vld [vmem:[%s317 + $0x2118] sm:$0xff]
        %v1466 = vld [vmem:[%s317 + $0x2120] sm:$0xff]
        %v1467 = vld [vmem:[%s317 + $0x2128] sm:$0xff]
        %v1468 = vld [vmem:[%s317 + $0x2130] sm:$0xff]
        %v1469 = vld [vmem:[%s317 + $0x2138] sm:$0xff]
        %v1470 = vld [vmem:[%s317 + $0x2140] sm:$0xff]
        %v1471 = vld [vmem:[%s317 + $0x2148] sm:$0xff]
        %v1472 = vld [vmem:[%s317 + $0x2150] sm:$0xff]
        %v1473 = vld [vmem:[%s317 + $0x2158] sm:$0xff]
        %v1474 = vld [vmem:[%s317 + $0x2160] sm:$0xff]
        %v1475 = vld [vmem:[%s317 + $0x2168] sm:$0xff]
        %v1476 = vld [vmem:[%s317 + $0x2170] sm:$0xff]
        %v1477 = vld [vmem:[%s317 + $0x2178] sm:$0xff]
        %v1478 = vld [vmem:[%s317 + $0x2180] sm:$0xff]
        %v1479 = vld [vmem:[%s317 + $0x2188] sm:$0xff]
        %v1480 = vld [vmem:[%s317 + $0x2190] sm:$0xff]
        %v1481 = vld [vmem:[%s317 + $0x2198] sm:$0xff]
        %v1482 = vld [vmem:[%s317 + $0x21a0] sm:$0xff]
        %v1483 = vld [vmem:[%s317 + $0x21a8] sm:$0xff]
        %v1484 = vld [vmem:[%s317 + $0x21b0] sm:$0xff]
        %v1485 = vld [vmem:[%s317 + $0x21b8] sm:$0xff]
        %v1486 = vld [vmem:[%s317 + $0x21c0] sm:$0xff]
        %v1487 = vld [vmem:[%s317 + $0x21c8] sm:$0xff]
        %v1488 = vld [vmem:[%s317 + $0x21d0] sm:$0xff]
        %v1489 = vld [vmem:[%s317 + $0x21d8] sm:$0xff]
        %v1490 = vld [vmem:[%s317 + $0x21e0] sm:$0xff]
        %v1491 = vld [vmem:[%s317 + $0x21e8] sm:$0xff]
        %v1492 = vld [vmem:[%s317 + $0x21f0] sm:$0xff]
        %v1493 = vld [vmem:[%s317 + $0x21f8] sm:$0xff]
        %v1494 = vld [vmem:[%s317 + $0x2200] sm:$0xff]
        %v1495 = vld [vmem:[%s317 + $0x2208] sm:$0xff]
        %v1496 = vld [vmem:[%s317 + $0x2210] sm:$0xff]
        %v1497 = vld [vmem:[%s317 + $0x2218] sm:$0xff]
        %v1498 = vld [vmem:[%s317 + $0x2220] sm:$0xff]
        %v1499 = vld [vmem:[%s317 + $0x2228] sm:$0xff]
        %v1500 = vld [vmem:[%s317 + $0x2230] sm:$0xff]
        %v1501 = vld [vmem:[%s317 + $0x2238] sm:$0xff]
        %v1502 = vld [vmem:[%s317 + $0x2240] sm:$0xff]
        %v1503 = vld [vmem:[%s317 + $0x2248] sm:$0xff]
        %v1504 = vld [vmem:[%s317 + $0x2250] sm:$0xff]
        %v1505 = vld [vmem:[%s317 + $0x2258] sm:$0xff]
        %v1506 = vld [vmem:[%s317 + $0x2260] sm:$0xff]
        %v1507 = vld [vmem:[%s317 + $0x2268] sm:$0xff]
        %v1508 = vld [vmem:[%s317 + $0x2270] sm:$0xff]
        %v1509 = vld [vmem:[%s317 + $0x2278] sm:$0xff]
        %v1510 = vld [vmem:[%s317 + $0x2280] sm:$0xff]
        %v1511 = vld [vmem:[%s317 + $0x2288] sm:$0xff]
        %v1512 = vld [vmem:[%s317 + $0x2290] sm:$0xff]
        %v1513 = vld [vmem:[%s317 + $0x2298] sm:$0xff]
        %v1514 = vld [vmem:[%s317 + $0x22a0] sm:$0xff]
        %v1515 = vld [vmem:[%s317 + $0x22a8] sm:$0xff]
        %v1516 = vld [vmem:[%s317 + $0x22b0] sm:$0xff]
        %v1517 = vld [vmem:[%s317 + $0x22b8] sm:$0xff]
        %v1518 = vld [vmem:[%s317 + $0x22c0] sm:$0xff]
        %v1519 = vld [vmem:[%s317 + $0x22c8] sm:$0xff]
        %v1520 = vld [vmem:[%s317 + $0x22d0] sm:$0xff]
        %v1521 = vld [vmem:[%s317 + $0x22d8] sm:$0xff]
        %v1522 = vld [vmem:[%s317 + $0x22e0] sm:$0xff]
        %v1523 = vld [vmem:[%s317 + $0x22e8] sm:$0xff]
        %v1524 = vld [vmem:[%s317 + $0x22f0] sm:$0xff]
        %v1525 = vld [vmem:[%s317 + $0x22f8] sm:$0xff]
        %v1526 = vld [vmem:[%s317 + $0x2300] sm:$0xff]
        %v1527 = vld [vmem:[%s317 + $0x2308] sm:$0xff]
        %v1528 = vld [vmem:[%s317 + $0x2310] sm:$0xff]
        %v1529 = vld [vmem:[%s317 + $0x2318] sm:$0xff]
        %v1530 = vld [vmem:[%s317 + $0x2320] sm:$0xff]
        %v1531 = vld [vmem:[%s317 + $0x2328] sm:$0xff]
        %v1532 = vld [vmem:[%s317 + $0x2330] sm:$0xff]
        %v1533 = vld [vmem:[%s317 + $0x2338] sm:$0xff]
        %v1534 = vld [vmem:[%s317 + $0x2340] sm:$0xff]
        %v1535 = vld [vmem:[%s317 + $0x2348] sm:$0xff]
        %v1536 = vld [vmem:[%s317 + $0x2350] sm:$0xff]
        %v1537 = vld [vmem:[%s317 + $0x2358] sm:$0xff]
        %v1538 = vld [vmem:[%s317 + $0x2360] sm:$0xff]
        %v1539 = vld [vmem:[%s317 + $0x2368] sm:$0xff]
        %v1540 = vld [vmem:[%s317 + $0x2370] sm:$0xff]
        %v1541 = vld [vmem:[%s317 + $0x2378] sm:$0xff]
        %v1542 = vld [vmem:[%s317 + $0x2380] sm:$0xff]
        %v1543 = vld [vmem:[%s317 + $0x2388] sm:$0xff]
        %v1544 = vld [vmem:[%s317 + $0x2390] sm:$0xff]
        %v1545 = vld [vmem:[%s317 + $0x2398] sm:$0xff]
        %v1546 = vld [vmem:[%s317 + $0x23a0] sm:$0xff]
        %v1547 = vld [vmem:[%s317 + $0x23a8] sm:$0xff]
        %v1548 = vld [vmem:[%s317 + $0x23b0] sm:$0xff]
        %v1549 = vld [vmem:[%s317 + $0x23b8] sm:$0xff]
        %v1550 = vld [vmem:[%s317 + $0x23c0] sm:$0xff]
        %v1551 = vld [vmem:[%s317 + $0x23c8] sm:$0xff]
        %v1552 = vld [vmem:[%s317 + $0x23d0] sm:$0xff]
        %v1553 = vld [vmem:[%s317 + $0x23d8] sm:$0xff]
        %v1554 = vld [vmem:[%s317 + $0x23e0] sm:$0xff]
        %v1555 = vld [vmem:[%s317 + $0x23e8] sm:$0xff]
        %v1556 = vld [vmem:[%s317 + $0x23f0] sm:$0xff]
        %v1557 = vld [vmem:[%s317 + $0x23f8] sm:$0xff]
        %v1558 = vld [vmem:[%s317 + $0x2400] sm:$0xff]
        %v1559 = vld [vmem:[%s317 + $0x2408] sm:$0xff]
        %v1560 = vld [vmem:[%s317 + $0x2410] sm:$0xff]
        %v1561 = vld [vmem:[%s317 + $0x2418] sm:$0xff]
        %v1562 = vld [vmem:[%s317 + $0x2420] sm:$0xff]
        %v1563 = vld [vmem:[%s317 + $0x2428] sm:$0xff]
        %v1564 = vld [vmem:[%s317 + $0x2430] sm:$0xff]
        %v1565 = vld [vmem:[%s317 + $0x2438] sm:$0xff]
        %v1566 = vld [vmem:[%s317 + $0x2440] sm:$0xff]
        %v1567 = vld [vmem:[%s317 + $0x2448] sm:$0xff]
        %v1568 = vld [vmem:[%s317 + $0x2450] sm:$0xff]
        %v1569 = vld [vmem:[%s317 + $0x2458] sm:$0xff]
        %v1570 = vld [vmem:[%s317 + $0x2460] sm:$0xff]
        %v1571 = vld [vmem:[%s317 + $0x2468] sm:$0xff]
        %v1572 = vld [vmem:[%s317 + $0x2470] sm:$0xff]
        %v1573 = vld [vmem:[%s317 + $0x2478] sm:$0xff]
        %v1574 = vld [vmem:[%s317 + $0x2480] sm:$0xff]
        %v1575 = vld [vmem:[%s317 + $0x2488] sm:$0xff]
        %v1576 = vld [vmem:[%s317 + $0x2490] sm:$0xff]
        %v1577 = vld [vmem:[%s317 + $0x2498] sm:$0xff]
        %v1578 = vld [vmem:[%s317 + $0x24a0] sm:$0xff]
        %v1579 = vld [vmem:[%s317 + $0x24a8] sm:$0xff]
        %v1580 = vld [vmem:[%s317 + $0x24b0] sm:$0xff]
        %v1581 = vld [vmem:[%s317 + $0x24b8] sm:$0xff]
        %v1582 = vld [vmem:[%s317 + $0x24c0] sm:$0xff]
        %v1583 = vld [vmem:[%s317 + $0x24c8] sm:$0xff]
        %v1584 = vld [vmem:[%s317 + $0x24d0] sm:$0xff]
        %v1585 = vld [vmem:[%s317 + $0x24d8] sm:$0xff]
        %v1586 = vld [vmem:[%s317 + $0x24e0] sm:$0xff]
        %v1587 = vld [vmem:[%s317 + $0x24e8] sm:$0xff]
        %v1588 = vld [vmem:[%s317 + $0x24f0] sm:$0xff]
        %v1589 = vld [vmem:[%s317 + $0x24f8] sm:$0xff]
        %v1590 = vld [vmem:[%s317 + $0x2500] sm:$0xff]
        %v1591 = vld [vmem:[%s317 + $0x2508] sm:$0xff]
        %v1592 = vld [vmem:[%s317 + $0x2510] sm:$0xff]
        %v1593 = vld [vmem:[%s317 + $0x2518] sm:$0xff]
        %v1594 = vld [vmem:[%s317 + $0x2520] sm:$0xff]
        %v1595 = vld [vmem:[%s317 + $0x2528] sm:$0xff]
        %v1596 = vld [vmem:[%s317 + $0x2530] sm:$0xff]
        %v1597 = vld [vmem:[%s317 + $0x2538] sm:$0xff]
        %v1598 = vld [vmem:[%s317 + $0x2540] sm:$0xff]
        %v1599 = vld [vmem:[%s317 + $0x2548] sm:$0xff]
        %v1600 = vld [vmem:[%s317 + $0x2550] sm:$0xff]
        %v1601 = vld [vmem:[%s317 + $0x2558] sm:$0xff]
        %v1602 = vld [vmem:[%s317 + $0x2560] sm:$0xff]
        %v1603 = vld [vmem:[%s317 + $0x2568] sm:$0xff]
        %v1604 = vld [vmem:[%s317 + $0x2570] sm:$0xff]
        %v1605 = vld [vmem:[%s317 + $0x2578] sm:$0xff]
        %v1606 = vld [vmem:[%s317 + $0x2580] sm:$0xff]
        %v1607 = vld [vmem:[%s317 + $0x2588] sm:$0xff]
        %v1608 = vld [vmem:[%s317 + $0x2590] sm:$0xff]
        %v1609 = vld [vmem:[%s317 + $0x2598] sm:$0xff]
        %v1610 = vld [vmem:[%s317 + $0x25a0] sm:$0xff]
        %v1611 = vld [vmem:[%s317 + $0x25a8] sm:$0xff]
        %v1612 = vld [vmem:[%s317 + $0x25b0] sm:$0xff]
        %v1613 = vld [vmem:[%s317 + $0x25b8] sm:$0xff]
        %v1614 = vld [vmem:[%s317 + $0x25c0] sm:$0xff]
        %v1615 = vld [vmem:[%s317 + $0x25c8] sm:$0xff]
        %v1616 = vld [vmem:[%s317 + $0x25d0] sm:$0xff]
        %v1617 = vld [vmem:[%s317 + $0x25d8] sm:$0xff]
        %v1618 = vld [vmem:[%s317 + $0x25e0] sm:$0xff]
        %v1619 = vld [vmem:[%s317 + $0x25e8] sm:$0xff]
        %v1620 = vld [vmem:[%s317 + $0x25f0] sm:$0xff]
        %v1621 = vld [vmem:[%s317 + $0x25f8] sm:$0xff]
        %v1622 = vld [vmem:[%s317 + $0x2600] sm:$0xff]
        %v1623 = vld [vmem:[%s317 + $0x2608] sm:$0xff]
        %v1624 = vld [vmem:[%s317 + $0x2610] sm:$0xff]
        %v1625 = vld [vmem:[%s317 + $0x2618] sm:$0xff]
        %v1626 = vld [vmem:[%s317 + $0x2620] sm:$0xff]
        %v1627 = vld [vmem:[%s317 + $0x2628] sm:$0xff]
        %v1628 = vld [vmem:[%s317 + $0x2630] sm:$0xff]
        %v1629 = vld [vmem:[%s317 + $0x2638] sm:$0xff]
        %v1630 = vld [vmem:[%s317 + $0x2640] sm:$0xff]
        %v1631 = vld [vmem:[%s317 + $0x2648] sm:$0xff]
        %v1632 = vld [vmem:[%s317 + $0x2650] sm:$0xff]
        %v1633 = vld [vmem:[%s317 + $0x2658] sm:$0xff]
        %v1634 = vld [vmem:[%s317 + $0x2660] sm:$0xff]
        %v1635 = vld [vmem:[%s317 + $0x2668] sm:$0xff]
        %v1636 = vld [vmem:[%s317 + $0x2670] sm:$0xff]
        %v1637 = vld [vmem:[%s317 + $0x2678] sm:$0xff]
        %v1638 = vld [vmem:[%s317 + $0x2680] sm:$0xff]
        %v1639 = vld [vmem:[%s317 + $0x2688] sm:$0xff]
        %v1640 = vld [vmem:[%s317 + $0x2690] sm:$0xff]
        %v1641 = vld [vmem:[%s317 + $0x2698] sm:$0xff]
        %v1642 = vld [vmem:[%s317 + $0x26a0] sm:$0xff]
        %v1643 = vld [vmem:[%s317 + $0x26a8] sm:$0xff]
        %v1644 = vld [vmem:[%s317 + $0x26b0] sm:$0xff]
        %v1645 = vld [vmem:[%s317 + $0x26b8] sm:$0xff]
        %v1646 = vld [vmem:[%s317 + $0x26c0] sm:$0xff]
        %v1647 = vld [vmem:[%s317 + $0x26c8] sm:$0xff]
        %v1648 = vld [vmem:[%s317 + $0x26d0] sm:$0xff]
        %v1649 = vld [vmem:[%s317 + $0x26d8] sm:$0xff]
        %v1650 = vld [vmem:[%s317 + $0x26e0] sm:$0xff]
        %v1651 = vld [vmem:[%s317 + $0x26e8] sm:$0xff]
        %v1652 = vld [vmem:[%s317 + $0x26f0] sm:$0xff]
        %v1653 = vld [vmem:[%s317 + $0x26f8] sm:$0xff]
        %v1654 = vld [vmem:[%s317 + $0x2700] sm:$0xff]
        %v1655 = vld [vmem:[%s317 + $0x2708] sm:$0xff]
        %v1656 = vld [vmem:[%s317 + $0x2710] sm:$0xff]
        %v1657 = vld [vmem:[%s317 + $0x2718] sm:$0xff]
        %v1658 = vld [vmem:[%s317 + $0x2720] sm:$0xff]
        %v1659 = vld [vmem:[%s317 + $0x2728] sm:$0xff]
        %v1660 = vld [vmem:[%s317 + $0x2730] sm:$0xff]
        %v1661 = vld [vmem:[%s317 + $0x2738] sm:$0xff]
        %v1662 = vld [vmem:[%s317 + $0x2740] sm:$0xff]
        %v1663 = vld [vmem:[%s317 + $0x2748] sm:$0xff]
        %v1664 = vld [vmem:[%s317 + $0x2750] sm:$0xff]
        %v1665 = vld [vmem:[%s317 + $0x2758] sm:$0xff]
        %v1666 = vld [vmem:[%s317 + $0x2760] sm:$0xff]
        %v1667 = vld [vmem:[%s317 + $0x2768] sm:$0xff]
        %v1668 = vld [vmem:[%s317 + $0x2770] sm:$0xff]
        %v1669 = vld [vmem:[%s317 + $0x2778] sm:$0xff]
        %v1670 = vld [vmem:[%s317 + $0x2780] sm:$0xff]
        %v1671 = vld [vmem:[%s317 + $0x2788] sm:$0xff]
        %v1672 = vld [vmem:[%s317 + $0x2790] sm:$0xff]
        %v1673 = vld [vmem:[%s317 + $0x2798] sm:$0xff]
        %v1674 = vld [vmem:[%s317 + $0x27a0] sm:$0xff]
        %v1675 = vld [vmem:[%s317 + $0x27a8] sm:$0xff]
        %v1676 = vld [vmem:[%s317 + $0x27b0] sm:$0xff]
        %v1677 = vld [vmem:[%s317 + $0x27b8] sm:$0xff]
        %v1678 = vld [vmem:[%s317 + $0x27c0] sm:$0xff]
        %v1679 = vld [vmem:[%s317 + $0x27c8] sm:$0xff]
        %v1680 = vld [vmem:[%s317 + $0x27d0] sm:$0xff]
        %v1681 = vld [vmem:[%s317 + $0x27d8] sm:$0xff]
        %v1682 = vld [vmem:[%s317 + $0x27e0] sm:$0xff]
        %v1683 = vld [vmem:[%s317 + $0x27e8] sm:$0xff]
        %v1684 = vld [vmem:[%s317 + $0x27f0] sm:$0xff]
        %v1685 = vld [vmem:[%s317 + $0x27f8] sm:$0xff]
        %v1686 = vld [vmem:[%s317 + $0x2800] sm:$0xff]
        %v1687 = vld [vmem:[%s317 + $0x2808] sm:$0xff]
        %v1688 = vld [vmem:[%s317 + $0x2810] sm:$0xff]
        %v1689 = vld [vmem:[%s317 + $0x2818] sm:$0xff]
        %v1690 = vld [vmem:[%s317 + $0x2820] sm:$0xff]
        %v1691 = vld [vmem:[%s317 + $0x2828] sm:$0xff]
        %v1692 = vld [vmem:[%s317 + $0x2830] sm:$0xff]
        %v1693 = vld [vmem:[%s317 + $0x2838] sm:$0xff]
        %v1694 = vld [vmem:[%s317 + $0x2840] sm:$0xff]
        %v1695 = vld [vmem:[%s317 + $0x2848] sm:$0xff]
        %v1696 = vld [vmem:[%s317 + $0x2850] sm:$0xff]
        %v1697 = vld [vmem:[%s317 + $0x2858] sm:$0xff]
        %v1698 = vld [vmem:[%s317 + $0x2860] sm:$0xff]
        %v1699 = vld [vmem:[%s317 + $0x2868] sm:$0xff]
        %v1700 = vld [vmem:[%s317 + $0x2870] sm:$0xff]
        %v1701 = vld [vmem:[%s317 + $0x2878] sm:$0xff]
        %v1702 = vld [vmem:[%s317 + $0x2880] sm:$0xff]
        %v1703 = vld [vmem:[%s317 + $0x2888] sm:$0xff]
        %v1704 = vld [vmem:[%s317 + $0x2890] sm:$0xff]
        %v1705 = vld [vmem:[%s317 + $0x2898] sm:$0xff]
        %v1706 = vld [vmem:[%s317 + $0x28a0] sm:$0xff]
        %v1707 = vld [vmem:[%s317 + $0x28a8] sm:$0xff]
        %v1708 = vld [vmem:[%s317 + $0x28b0] sm:$0xff]
        %v1709 = vld [vmem:[%s317 + $0x28b8] sm:$0xff]
        %v1710 = vld [vmem:[%s317 + $0x28c0] sm:$0xff]
        %v1711 = vld [vmem:[%s317 + $0x28c8] sm:$0xff]
        %v1712 = vld [vmem:[%s317 + $0x28d0] sm:$0xff]
        %v1713 = vld [vmem:[%s317 + $0x28d8] sm:$0xff]
        %v1714 = vld [vmem:[%s317 + $0x28e0] sm:$0xff]
        %v1715 = vld [vmem:[%s317 + $0x28e8] sm:$0xff]
        %v1716 = vld [vmem:[%s317 + $0x28f0] sm:$0xff]
        %v1717 = vld [vmem:[%s317 + $0x28f8] sm:$0xff]
        %v1718 = vld [vmem:[%s317 + $0x2900] sm:$0xff]
        %v1719 = vld [vmem:[%s317 + $0x2908] sm:$0xff]
        %v1720 = vld [vmem:[%s317 + $0x2910] sm:$0xff]
        %v1721 = vld [vmem:[%s317 + $0x2918] sm:$0xff]
        %v1722 = vld [vmem:[%s317 + $0x2920] sm:$0xff]
        %v1723 = vld [vmem:[%s317 + $0x2928] sm:$0xff]
        %v1724 = vld [vmem:[%s317 + $0x2930] sm:$0xff]
        %v1725 = vld [vmem:[%s317 + $0x2938] sm:$0xff]
        %v1726 = vld [vmem:[%s317 + $0x2940] sm:$0xff]
        %v1727 = vld [vmem:[%s317 + $0x2948] sm:$0xff]
        %v1728 = vld [vmem:[%s317 + $0x2950] sm:$0xff]
        %v1729 = vld [vmem:[%s317 + $0x2958] sm:$0xff]
        %v1730 = vld [vmem:[%s317 + $0x2960] sm:$0xff]
        %v1731 = vld [vmem:[%s317 + $0x2968] sm:$0xff]
        %v1732 = vld [vmem:[%s317 + $0x2970] sm:$0xff]
        %v1733 = vld [vmem:[%s317 + $0x2978] sm:$0xff]
        %v1734 = vld [vmem:[%s317 + $0x2980] sm:$0xff]
        %v1735 = vld [vmem:[%s317 + $0x2988] sm:$0xff]
        %v1736 = vld [vmem:[%s317 + $0x2990] sm:$0xff]
        %v1737 = vld [vmem:[%s317 + $0x2998] sm:$0xff]
        %v1738 = vld [vmem:[%s317 + $0x29a0] sm:$0xff]
        %v1739 = vld [vmem:[%s317 + $0x29a8] sm:$0xff]
        %v1740 = vld [vmem:[%s317 + $0x29b0] sm:$0xff]
        %v1741 = vld [vmem:[%s317 + $0x29b8] sm:$0xff]
        %v1742 = vld [vmem:[%s317 + $0x29c0] sm:$0xff]
        %v1743 = vld [vmem:[%s317 + $0x29c8] sm:$0xff]
        %v1744 = vld [vmem:[%s317 + $0x29d0] sm:$0xff]
        %v1745 = vld [vmem:[%s317 + $0x29d8] sm:$0xff]
        %v1746 = vld [vmem:[%s317 + $0x29e0] sm:$0xff]
        %v1747 = vld [vmem:[%s317 + $0x29e8] sm:$0xff]
        %v1748 = vld [vmem:[%s317 + $0x29f0] sm:$0xff]
        %v1749 = vld [vmem:[%s317 + $0x29f8] sm:$0xff]
        %v1750 = vld [vmem:[%s317 + $0x2a00] sm:$0xff]
        %v1751 = vld [vmem:[%s317 + $0x2a08] sm:$0xff]
        %v1752 = vld [vmem:[%s317 + $0x2a10] sm:$0xff]
        %v1753 = vld [vmem:[%s317 + $0x2a18] sm:$0xff]
        %v1754 = vld [vmem:[%s317 + $0x2a20] sm:$0xff]
        %v1755 = vld [vmem:[%s317 + $0x2a28] sm:$0xff]
        %v1756 = vld [vmem:[%s317 + $0x2a30] sm:$0xff]
        %v1757 = vld [vmem:[%s317 + $0x2a38] sm:$0xff]
        %v1758 = vld [vmem:[%s317 + $0x2a40] sm:$0xff]
        %v1759 = vld [vmem:[%s317 + $0x2a48] sm:$0xff]
        %v1760 = vld [vmem:[%s317 + $0x2a50] sm:$0xff]
        %v1761 = vld [vmem:[%s317 + $0x2a58] sm:$0xff]
        %v1762 = vld [vmem:[%s317 + $0x2a60] sm:$0xff]
        %v1763 = vld [vmem:[%s317 + $0x2a68] sm:$0xff]
        %v1764 = vld [vmem:[%s317 + $0x2a70] sm:$0xff]
        %v1765 = vld [vmem:[%s317 + $0x2a78] sm:$0xff]
        %v1766 = vld [vmem:[%s317 + $0x2a80] sm:$0xff]
        %v1767 = vld [vmem:[%s317 + $0x2a88] sm:$0xff]
        %v1768 = vld [vmem:[%s317 + $0x2a90] sm:$0xff]
        %v1769 = vld [vmem:[%s317 + $0x2a98] sm:$0xff]
        %v1770 = vld [vmem:[%s317 + $0x2aa0] sm:$0xff]
        %v1771 = vld [vmem:[%s317 + $0x2aa8] sm:$0xff]
        %v1772 = vld [vmem:[%s317 + $0x2ab0] sm:$0xff]
        %v1773 = vld [vmem:[%s317 + $0x2ab8] sm:$0xff]
        %v1774 = vld [vmem:[%s317 + $0x2ac0] sm:$0xff]
        %v1775 = vld [vmem:[%s317 + $0x2ac8] sm:$0xff]
        %v1776 = vld [vmem:[%s317 + $0x2ad0] sm:$0xff]
        %v1777 = vld [vmem:[%s317 + $0x2ad8] sm:$0xff]
        %v1778 = vld [vmem:[%s317 + $0x2ae0] sm:$0xff]
        %v1779 = vld [vmem:[%s317 + $0x2ae8] sm:$0xff]
        %v1780 = vld [vmem:[%s317 + $0x2af0] sm:$0xff]
        %v1781 = vld [vmem:[%s317 + $0x2af8] sm:$0xff]
        %v1782 = vld [vmem:[%s317 + $0x2b00] sm:$0xff]
        %v1783 = vld [vmem:[%s317 + $0x2b08] sm:$0xff]
        %v1784 = vld [vmem:[%s317 + $0x2b10] sm:$0xff]
        %v1785 = vld [vmem:[%s317 + $0x2b18] sm:$0xff]
        %v1786 = vld [vmem:[%s317 + $0x2b20] sm:$0xff]
        %v1787 = vld [vmem:[%s317 + $0x2b28] sm:$0xff]
        %v1788 = vld [vmem:[%s317 + $0x2b30] sm:$0xff]
        %v1789 = vld [vmem:[%s317 + $0x2b38] sm:$0xff]
        %v1790 = vld [vmem:[%s317 + $0x2b40] sm:$0xff]
        %v1791 = vld [vmem:[%s317 + $0x2b48] sm:$0xff]
        %v1792 = vld [vmem:[%s317 + $0x2b50] sm:$0xff]
        %v1793 = vld [vmem:[%s317 + $0x2b58] sm:$0xff]
        %v1794 = vld [vmem:[%s317 + $0x2b60] sm:$0xff]
        %v1795 = vld [vmem:[%s317 + $0x2b68] sm:$0xff]
        %v1796 = vld [vmem:[%s317 + $0x2b70] sm:$0xff]
        %v1797 = vld [vmem:[%s317 + $0x2b78] sm:$0xff]
        %v1798 = vld [vmem:[%s317 + $0x2b80] sm:$0xff]
        %v1799 = vld [vmem:[%s317 + $0x2b88] sm:$0xff]
        %v1800 = vld [vmem:[%s317 + $0x2b90] sm:$0xff]
        %v1801 = vld [vmem:[%s317 + $0x2b98] sm:$0xff]
        %v1802 = vld [vmem:[%s317 + $0x2ba0] sm:$0xff]
        %v1803 = vld [vmem:[%s317 + $0x2ba8] sm:$0xff]
        %v1804 = vld [vmem:[%s317 + $0x2bb0] sm:$0xff]
        %v1805 = vld [vmem:[%s317 + $0x2bb8] sm:$0xff]
        %v1806 = vld [vmem:[%s317 + $0x2bc0] sm:$0xff]
        %v1807 = vld [vmem:[%s317 + $0x2bc8] sm:$0xff]
        %v1808 = vld [vmem:[%s317 + $0x2bd0] sm:$0xff]
        %v1809 = vld [vmem:[%s317 + $0x2bd8] sm:$0xff]
        %v1810 = vld [vmem:[%s317 + $0x2be0] sm:$0xff]
        %v1811 = vld [vmem:[%s317 + $0x2be8] sm:$0xff]
        %v1812 = vld [vmem:[%s317 + $0x2bf0] sm:$0xff]
        %v1813 = vld [vmem:[%s317 + $0x2bf8] sm:$0xff]
        %v1814 = vld [vmem:[%s317 + $0x2c00] sm:$0xff]
        %v1815 = vld [vmem:[%s317 + $0x2c08] sm:$0xff]
        %v1816 = vld [vmem:[%s317 + $0x2c10] sm:$0xff]
        %v1817 = vld [vmem:[%s317 + $0x2c18] sm:$0xff]
        %v1818 = vld [vmem:[%s317 + $0x2c20] sm:$0xff]
        %v1819 = vld [vmem:[%s317 + $0x2c28] sm:$0xff]
        %v1820 = vld [vmem:[%s317 + $0x2c30] sm:$0xff]
        %v1821 = vld [vmem:[%s317 + $0x2c38] sm:$0xff]
        %v1822 = vld [vmem:[%s317 + $0x2c40] sm:$0xff]
        %v1823 = vld [vmem:[%s317 + $0x2c48] sm:$0xff]
        %v1824 = vld [vmem:[%s317 + $0x2c50] sm:$0xff]
        %v1825 = vld [vmem:[%s317 + $0x2c58] sm:$0xff]
        %v1826 = vld [vmem:[%s317 + $0x2c60] sm:$0xff]
        %v1827 = vld [vmem:[%s317 + $0x2c68] sm:$0xff]
        %v1828 = vld [vmem:[%s317 + $0x2c70] sm:$0xff]
        %v1829 = vld [vmem:[%s317 + $0x2c78] sm:$0xff]
        %v1830 = vld [vmem:[%s317 + $0x2c80] sm:$0xff]
        %v1831 = vld [vmem:[%s317 + $0x2c88] sm:$0xff]
        %v1832 = vld [vmem:[%s317 + $0x2c90] sm:$0xff]
        %v1833 = vld [vmem:[%s317 + $0x2c98] sm:$0xff]
        %v1834 = vld [vmem:[%s317 + $0x2ca0] sm:$0xff]
        %v1835 = vld [vmem:[%s317 + $0x2ca8] sm:$0xff]
        %v1836 = vld [vmem:[%s317 + $0x2cb0] sm:$0xff]
        %v1837 = vld [vmem:[%s317 + $0x2cb8] sm:$0xff]
        %v1838 = vld [vmem:[%s317 + $0x2cc0] sm:$0xff]
        %v1839 = vld [vmem:[%s317 + $0x2cc8] sm:$0xff]
        %v1840 = vld [vmem:[%s317 + $0x2cd0] sm:$0xff]
        %v1841 = vld [vmem:[%s317 + $0x2cd8] sm:$0xff]
        %v1842 = vld [vmem:[%s317 + $0x2ce0] sm:$0xff]
        %v1843 = vld [vmem:[%s317 + $0x2ce8] sm:$0xff]
        %v1844 = vld [vmem:[%s317 + $0x2cf0] sm:$0xff]
        %v1845 = vld [vmem:[%s317 + $0x2cf8] sm:$0xff]
        %v1846 = vld [vmem:[%s317 + $0x2d00] sm:$0xff]
        %v1847 = vld [vmem:[%s317 + $0x2d08] sm:$0xff]
        %v1848 = vld [vmem:[%s317 + $0x2d10] sm:$0xff]
        %v1849 = vld [vmem:[%s317 + $0x2d18] sm:$0xff]
        %v1850 = vld [vmem:[%s317 + $0x2d20] sm:$0xff]
        %v1851 = vld [vmem:[%s317 + $0x2d28] sm:$0xff]
        %v1852 = vld [vmem:[%s317 + $0x2d30] sm:$0xff]
        %v1853 = vld [vmem:[%s317 + $0x2d38] sm:$0xff]
        %v1854 = vld [vmem:[%s317 + $0x2d40] sm:$0xff]
        %v1855 = vld [vmem:[%s317 + $0x2d48] sm:$0xff]
        %v1856 = vld [vmem:[%s317 + $0x2d50] sm:$0xff]
        %v1857 = vld [vmem:[%s317 + $0x2d58] sm:$0xff]
        %v1858 = vld [vmem:[%s317 + $0x2d60] sm:$0xff]
        %v1859 = vld [vmem:[%s317 + $0x2d68] sm:$0xff]
        %v1860 = vld [vmem:[%s317 + $0x2d70] sm:$0xff]
        %v1861 = vld [vmem:[%s317 + $0x2d78] sm:$0xff]
        %v1862 = vld [vmem:[%s317 + $0x2d80] sm:$0xff]
        %v1863 = vld [vmem:[%s317 + $0x2d88] sm:$0xff]
        %v1864 = vld [vmem:[%s317 + $0x2d90] sm:$0xff]
        %v1865 = vld [vmem:[%s317 + $0x2d98] sm:$0xff]
        %v1866 = vld [vmem:[%s317 + $0x2da0] sm:$0xff]
        %v1867 = vld [vmem:[%s317 + $0x2da8] sm:$0xff]
        %v1868 = vld [vmem:[%s317 + $0x2db0] sm:$0xff]
        %v1869 = vld [vmem:[%s317 + $0x2db8] sm:$0xff]
        %v1870 = vld [vmem:[%s317 + $0x2dc0] sm:$0xff]
        %v1871 = vld [vmem:[%s317 + $0x2dc8] sm:$0xff]
        %v1872 = vld [vmem:[%s317 + $0x2dd0] sm:$0xff]
        %v1873 = vld [vmem:[%s317 + $0x2dd8] sm:$0xff]
        %v1874 = vld [vmem:[%s317 + $0x2de0] sm:$0xff]
        %v1875 = vld [vmem:[%s317 + $0x2de8] sm:$0xff]
        %v1876 = vld [vmem:[%s317 + $0x2df0] sm:$0xff]
        %v1877 = vld [vmem:[%s317 + $0x2df8] sm:$0xff]
        %v1878 = vld [vmem:[%s317 + $0x2e00] sm:$0xff]
        %v1879 = vld [vmem:[%s317 + $0x2e08] sm:$0xff]
        %v1880 = vld [vmem:[%s317 + $0x2e10] sm:$0xff]
        %v1881 = vld [vmem:[%s317 + $0x2e18] sm:$0xff]
        %v1882 = vld [vmem:[%s317 + $0x2e20] sm:$0xff]
        %v1883 = vld [vmem:[%s317 + $0x2e28] sm:$0xff]
        %v1884 = vld [vmem:[%s317 + $0x2e30] sm:$0xff]
        %v1885 = vld [vmem:[%s317 + $0x2e38] sm:$0xff]
        %v1886 = vld [vmem:[%s317 + $0x2e40] sm:$0xff]
        %v1887 = vld [vmem:[%s317 + $0x2e48] sm:$0xff]
        %v1888 = vld [vmem:[%s317 + $0x2e50] sm:$0xff]
        %v1889 = vld [vmem:[%s317 + $0x2e58] sm:$0xff]
        %v1890 = vld [vmem:[%s317 + $0x2e60] sm:$0xff]
        %v1891 = vld [vmem:[%s317 + $0x2e68] sm:$0xff]
        %v1892 = vld [vmem:[%s317 + $0x2e70] sm:$0xff]
        %v1893 = vld [vmem:[%s317 + $0x2e78] sm:$0xff]
        %v1894 = vld [vmem:[%s317 + $0x2e80] sm:$0xff]
        %v1895 = vld [vmem:[%s317 + $0x2e88] sm:$0xff]
        %v1896 = vld [vmem:[%s317 + $0x2e90] sm:$0xff]
        %v1897 = vld [vmem:[%s317 + $0x2e98] sm:$0xff]
        %v1898 = vld [vmem:[%s317 + $0x2ea0] sm:$0xff]
        %v1899 = vld [vmem:[%s317 + $0x2ea8] sm:$0xff]
        %v1900 = vld [vmem:[%s317 + $0x2eb0] sm:$0xff]
        %v1901 = vld [vmem:[%s317 + $0x2eb8] sm:$0xff]
        %v1902 = vld [vmem:[%s317 + $0x2ec0] sm:$0xff]
        %v1903 = vld [vmem:[%s317 + $0x2ec8] sm:$0xff]
        %v1904 = vld [vmem:[%s317 + $0x2ed0] sm:$0xff]
        %v1905 = vld [vmem:[%s317 + $0x2ed8] sm:$0xff]
        %v1906 = vld [vmem:[%s317 + $0x2ee0] sm:$0xff]
        %v1907 = vld [vmem:[%s317 + $0x2ee8] sm:$0xff]
        %v1908 = vld [vmem:[%s317 + $0x2ef0] sm:$0xff]
        %v1909 = vld [vmem:[%s317 + $0x2ef8] sm:$0xff]
        %v1910 = vld [vmem:[%s317 + $0x2f00] sm:$0xff]
        %v1911 = vld [vmem:[%s317 + $0x2f08] sm:$0xff]
        %v1912 = vld [vmem:[%s317 + $0x2f10] sm:$0xff]
        %v1913 = vld [vmem:[%s317 + $0x2f18] sm:$0xff]
        %v1914 = vld [vmem:[%s317 + $0x2f20] sm:$0xff]
        %v1915 = vld [vmem:[%s317 + $0x2f28] sm:$0xff]
        %v1916 = vld [vmem:[%s317 + $0x2f30] sm:$0xff]
        %v1917 = vld [vmem:[%s317 + $0x2f38] sm:$0xff]
        %v1918 = vld [vmem:[%s317 + $0x2f40] sm:$0xff]
        %v1919 = vld [vmem:[%s317 + $0x2f48] sm:$0xff]
        %v1920 = vld [vmem:[%s317 + $0x2f50] sm:$0xff]
        %v1921 = vld [vmem:[%s317 + $0x2f58] sm:$0xff]
        %v1922 = vld [vmem:[%s317 + $0x2f60] sm:$0xff]
        %v1923 = vld [vmem:[%s317 + $0x2f68] sm:$0xff]
        %v1924 = vld [vmem:[%s317 + $0x2f70] sm:$0xff]
        %v1925 = vld [vmem:[%s317 + $0x2f78] sm:$0xff]
        %v1926 = vld [vmem:[%s317 + $0x2f80] sm:$0xff]
        %v1927 = vld [vmem:[%s317 + $0x2f88] sm:$0xff]
        %v1928 = vld [vmem:[%s317 + $0x2f90] sm:$0xff]
        %v1929 = vld [vmem:[%s317 + $0x2f98] sm:$0xff]
        %v1930 = vld [vmem:[%s317 + $0x2fa0] sm:$0xff]
        %v1931 = vld [vmem:[%s317 + $0x2fa8] sm:$0xff]
        %v1932 = vld [vmem:[%s317 + $0x2fb0] sm:$0xff]
        %v1933 = vld [vmem:[%s317 + $0x2fb8] sm:$0xff]
        %v1934 = vld [vmem:[%s317 + $0x2fc0] sm:$0xff]
        %v1935 = vld [vmem:[%s317 + $0x2fc8] sm:$0xff]
        %v1936 = vld [vmem:[%s317 + $0x2fd0] sm:$0xff]
        %v1937 = vld [vmem:[%s317 + $0x2fd8] sm:$0xff]
        %v1938 = vld [vmem:[%s317 + $0x2fe0] sm:$0xff]
        %v1939 = vld [vmem:[%s317 + $0x2fe8] sm:$0xff]
        %v1940 = vld [vmem:[%s317 + $0x2ff0] sm:$0xff]
        %v1941 = vld [vmem:[%s317 + $0x2ff8] sm:$0xff]
        %v1942 = vld [vmem:[%s317 + $0x3000] sm:$0xff]
        %v1943 = vld [vmem:[%s317 + $0x3008] sm:$0xff]
        %v1944 = vld [vmem:[%s317 + $0x3010] sm:$0xff]
        %v1945 = vld [vmem:[%s317 + $0x3018] sm:$0xff]
        %v1946 = vld [vmem:[%s317 + $0x3020] sm:$0xff]
        %v1947 = vld [vmem:[%s317 + $0x3028] sm:$0xff]
        %v1948 = vld [vmem:[%s317 + $0x3030] sm:$0xff]
        %v1949 = vld [vmem:[%s317 + $0x3038] sm:$0xff]
        %v1950 = vld [vmem:[%s317 + $0x3040] sm:$0xff]
        %v1951 = vld [vmem:[%s317 + $0x3048] sm:$0xff]
        %v1952 = vld [vmem:[%s317 + $0x3050] sm:$0xff]
        %v1953 = vld [vmem:[%s317 + $0x3058] sm:$0xff]
        %v1954 = vld [vmem:[%s317 + $0x3060] sm:$0xff]
        %v1955 = vld [vmem:[%s317 + $0x3068] sm:$0xff]
        %v1956 = vld [vmem:[%s317 + $0x3070] sm:$0xff]
        %v1957 = vld [vmem:[%s317 + $0x3078] sm:$0xff]
        %v1958 = vld [vmem:[%s317 + $0x3080] sm:$0xff]
        %v1959 = vld [vmem:[%s317 + $0x3088] sm:$0xff]
        %v1960 = vld [vmem:[%s317 + $0x3090] sm:$0xff]
        %v1961 = vld [vmem:[%s317 + $0x3098] sm:$0xff]
        %v1962 = vld [vmem:[%s317 + $0x30a0] sm:$0xff]
        %v1963 = vld [vmem:[%s317 + $0x30a8] sm:$0xff]
        %v1964 = vld [vmem:[%s317 + $0x30b0] sm:$0xff]
        %v1965 = vld [vmem:[%s317 + $0x30b8] sm:$0xff]
        %v1966 = vld [vmem:[%s317 + $0x30c0] sm:$0xff]
        %v1967 = vld [vmem:[%s317 + $0x30c8] sm:$0xff]
        %v1968 = vld [vmem:[%s317 + $0x30d0] sm:$0xff]
        %v1969 = vld [vmem:[%s317 + $0x30d8] sm:$0xff]
        %v1970 = vld [vmem:[%s317 + $0x30e0] sm:$0xff]
        %v1971 = vld [vmem:[%s317 + $0x30e8] sm:$0xff]
        %v1972 = vld [vmem:[%s317 + $0x30f0] sm:$0xff]
        %v1973 = vld [vmem:[%s317 + $0x30f8] sm:$0xff]
        %v1974 = vld [vmem:[%s317 + $0x3100] sm:$0xff]
        %v1975 = vld [vmem:[%s317 + $0x3108] sm:$0xff]
        %v1976 = vld [vmem:[%s317 + $0x3110] sm:$0xff]
        %v1977 = vld [vmem:[%s317 + $0x3118] sm:$0xff]
        %v1978 = vld [vmem:[%s317 + $0x3120] sm:$0xff]
        %v1979 = vld [vmem:[%s317 + $0x3128] sm:$0xff]
        %v1980 = vld [vmem:[%s317 + $0x3130] sm:$0xff]
        %v1981 = vld [vmem:[%s317 + $0x3138] sm:$0xff]
        %v1982 = vld [vmem:[%s317 + $0x3140] sm:$0xff]
        %v1983 = vld [vmem:[%s317 + $0x3148] sm:$0xff]
        %v1984 = vld [vmem:[%s317 + $0x3150] sm:$0xff]
        %v1985 = vld [vmem:[%s317 + $0x3158] sm:$0xff]
        %v1986 = vld [vmem:[%s317 + $0x3160] sm:$0xff]
        %v1987 = vld [vmem:[%s317 + $0x3168] sm:$0xff]
        %v1988 = vld [vmem:[%s317 + $0x3170] sm:$0xff]
        %v1989 = vld [vmem:[%s317 + $0x3178] sm:$0xff]
        %v1990 = vld [vmem:[%s317 + $0x3180] sm:$0xff]
        %v1991 = vld [vmem:[%s317 + $0x3188] sm:$0xff]
        %v1992 = vld [vmem:[%s317 + $0x3190] sm:$0xff]
        %v1993 = vld [vmem:[%s317 + $0x3198] sm:$0xff]
        %v1994 = vld [vmem:[%s317 + $0x31a0] sm:$0xff]
        %v1995 = vld [vmem:[%s317 + $0x31a8] sm:$0xff]
        %v1996 = vld [vmem:[%s317 + $0x31b0] sm:$0xff]
        %v1997 = vld [vmem:[%s317 + $0x31b8] sm:$0xff]
        %v1998 = vld [vmem:[%s317 + $0x31c0] sm:$0xff]
        %v1999 = vld [vmem:[%s317 + $0x31c8] sm:$0xff]
        %v2000 = vld [vmem:[%s317 + $0x31d0] sm:$0xff]
        %v2001 = vld [vmem:[%s317 + $0x31d8] sm:$0xff]
        %v2002 = vld [vmem:[%s317 + $0x31e0] sm:$0xff]
        %v2003 = vld [vmem:[%s317 + $0x31e8] sm:$0xff]
        %v2004 = vld [vmem:[%s317 + $0x31f0] sm:$0xff]
        %v2005 = vld [vmem:[%s317 + $0x31f8] sm:$0xff]
        %v2006 = vld [vmem:[%s317 + $0x3200] sm:$0xff]
        %v2007 = vld [vmem:[%s317 + $0x3208] sm:$0xff]
        %v2008 = vld [vmem:[%s317 + $0x3210] sm:$0xff]
        %v2009 = vld [vmem:[%s317 + $0x3218] sm:$0xff]
        %v2010 = vld [vmem:[%s317 + $0x3220] sm:$0xff]
        %v2011 = vld [vmem:[%s317 + $0x3228] sm:$0xff]
        %v2012 = vld [vmem:[%s317 + $0x3230] sm:$0xff]
        %v2013 = vld [vmem:[%s317 + $0x3238] sm:$0xff]
        %v2014 = vld [vmem:[%s317 + $0x3240] sm:$0xff]
        %v2015 = vld [vmem:[%s317 + $0x3248] sm:$0xff]
        %v2016 = vld [vmem:[%s317 + $0x3250] sm:$0xff]
        %v2017 = vld [vmem:[%s317 + $0x3258] sm:$0xff]
        %v2018 = vld [vmem:[%s317 + $0x3260] sm:$0xff]
        %v2019 = vld [vmem:[%s317 + $0x3268] sm:$0xff]
        %v2020 = vld [vmem:[%s317 + $0x3270] sm:$0xff]
        %v2021 = vld [vmem:[%s317 + $0x3278] sm:$0xff]
        %v2022 = vld [vmem:[%s317 + $0x3280] sm:$0xff]
        %v2023 = vld [vmem:[%s317 + $0x3288] sm:$0xff]
        %v2024 = vld [vmem:[%s317 + $0x3290] sm:$0xff]
        %v2025 = vld [vmem:[%s317 + $0x3298] sm:$0xff]
        %v2026 = vld [vmem:[%s317 + $0x32a0] sm:$0xff]
        %v2027 = vld [vmem:[%s317 + $0x32a8] sm:$0xff]
        %v2028 = vld [vmem:[%s317 + $0x32b0] sm:$0xff]
        %v2029 = vld [vmem:[%s317 + $0x32b8] sm:$0xff]
        %v2030 = vld [vmem:[%s317 + $0x32c0] sm:$0xff]
        %v2031 = vld [vmem:[%s317 + $0x32c8] sm:$0xff]
        %v2032 = vld [vmem:[%s317 + $0x32d0] sm:$0xff]
        %v2033 = vld [vmem:[%s317 + $0x32d8] sm:$0xff]
        %v2034 = vld [vmem:[%s317 + $0x32e0] sm:$0xff]
        %v2035 = vld [vmem:[%s317 + $0x32e8] sm:$0xff]
        %v2036 = vld [vmem:[%s317 + $0x32f0] sm:$0xff]
        %v2037 = vld [vmem:[%s317 + $0x32f8] sm:$0xff]
        %v2038 = vld [vmem:[%s317 + $0x3300] sm:$0xff]
        %v2039 = vld [vmem:[%s317 + $0x3308] sm:$0xff]
        %v2040 = vld [vmem:[%s317 + $0x3310] sm:$0xff]
        %v2041 = vld [vmem:[%s317 + $0x3318] sm:$0xff]
        %v2042 = vld [vmem:[%s317 + $0x3320] sm:$0xff]
        %v2043 = vld [vmem:[%s317 + $0x3328] sm:$0xff]
        %v2044 = vld [vmem:[%s317 + $0x3330] sm:$0xff]
        %v2045 = vld [vmem:[%s317 + $0x3338] sm:$0xff]
        %v2046 = vld [vmem:[%s317 + $0x3340] sm:$0xff]
        %v2047 = vld [vmem:[%s317 + $0x3348] sm:$0xff]
        %v2048 = vld [vmem:[%s317 + $0x3350] sm:$0xff]
        %v2049 = vld [vmem:[%s317 + $0x3358] sm:$0xff]
        %v2050 = vld [vmem:[%s317 + $0x3360] sm:$0xff]
        %v2051 = vld [vmem:[%s317 + $0x3368] sm:$0xff]
        %v2052 = vld [vmem:[%s317 + $0x3370] sm:$0xff]
        %v2053 = vld [vmem:[%s317 + $0x3378] sm:$0xff]
        %v2054 = vld [vmem:[%s317 + $0x3380] sm:$0xff]
        %v2055 = vld [vmem:[%s317 + $0x3388] sm:$0xff]
        %v2056 = vld [vmem:[%s317 + $0x3390] sm:$0xff]
        %v2057 = vld [vmem:[%s317 + $0x3398] sm:$0xff]
        %v2058 = vld [vmem:[%s317 + $0x33a0] sm:$0xff]
        %v2059 = vld [vmem:[%s317 + $0x33a8] sm:$0xff]
        %v2060 = vld [vmem:[%s317 + $0x33b0] sm:$0xff]
        %v2061 = vld [vmem:[%s317 + $0x33b8] sm:$0xff]
        %v2062 = vld [vmem:[%s317 + $0x33c0] sm:$0xff]
        %v2063 = vld [vmem:[%s317 + $0x33c8] sm:$0xff]
        %v2064 = vld [vmem:[%s317 + $0x33d0] sm:$0xff]
        %v2065 = vld [vmem:[%s317 + $0x33d8] sm:$0xff]
        %v2066 = vld [vmem:[%s317 + $0x33e0] sm:$0xff]
        %v2067 = vld [vmem:[%s317 + $0x33e8] sm:$0xff]
        %v2068 = vld [vmem:[%s317 + $0x33f0] sm:$0xff]
        %v2069 = vld [vmem:[%s317 + $0x33f8] sm:$0xff]
        %v2070 = vld [vmem:[%s317 + $0x3400] sm:$0xff]
        %v2071 = vld [vmem:[%s317 + $0x3408] sm:$0xff]
        %v2072 = vld [vmem:[%s317 + $0x3410] sm:$0xff]
        %v2073 = vld [vmem:[%s317 + $0x3418] sm:$0xff]
        %v2074 = vld [vmem:[%s317 + $0x3420] sm:$0xff]
        %v2075 = vld [vmem:[%s317 + $0x3428] sm:$0xff]
        %v2076 = vld [vmem:[%s317 + $0x3430] sm:$0xff]
        %v2077 = vld [vmem:[%s317 + $0x3438] sm:$0xff]
        %v2078 = vld [vmem:[%s317 + $0x3440] sm:$0xff]
        %v2079 = vld [vmem:[%s317 + $0x3448] sm:$0xff]
        %v2080 = vld [vmem:[%s317 + $0x3450] sm:$0xff]
        %v2081 = vld [vmem:[%s317 + $0x3458] sm:$0xff]
        %v2082 = vld [vmem:[%s317 + $0x3460] sm:$0xff]
        %v2083 = vld [vmem:[%s317 + $0x3468] sm:$0xff]
        %v2084 = vld [vmem:[%s317 + $0x3470] sm:$0xff]
        %v2085 = vld [vmem:[%s317 + $0x3478] sm:$0xff]
        %v2086 = vld [vmem:[%s317 + $0x3480] sm:$0xff]
        %v2087 = vld [vmem:[%s317 + $0x3488] sm:$0xff]
        %v2088 = vld [vmem:[%s317 + $0x3490] sm:$0xff]
        %v2089 = vld [vmem:[%s317 + $0x3498] sm:$0xff]
        %v2090 = vld [vmem:[%s317 + $0x34a0] sm:$0xff]
        %v2091 = vld [vmem:[%s317 + $0x34a8] sm:$0xff]
        %v2092 = vld [vmem:[%s317 + $0x34b0] sm:$0xff]
        %v2093 = vld [vmem:[%s317 + $0x34b8] sm:$0xff]
        %v2094 = vld [vmem:[%s317 + $0x34c0] sm:$0xff]
        %v2095 = vld [vmem:[%s317 + $0x34c8] sm:$0xff]
        %v2096 = vld [vmem:[%s317 + $0x34d0] sm:$0xff]
        %v2097 = vld [vmem:[%s317 + $0x34d8] sm:$0xff]
        %v2098 = vld [vmem:[%s317 + $0x34e0] sm:$0xff]
        %v2099 = vld [vmem:[%s317 + $0x34e8] sm:$0xff]
        %v2100 = vld [vmem:[%s317 + $0x34f0] sm:$0xff]
        %v2101 = vld [vmem:[%s317 + $0x34f8] sm:$0xff]
        %v2102 = vld [vmem:[%s317 + $0x3500] sm:$0xff]
        %v2103 = vld [vmem:[%s317 + $0x3508] sm:$0xff]
        %v2104 = vld [vmem:[%s317 + $0x3510] sm:$0xff]
        %v2105 = vld [vmem:[%s317 + $0x3518] sm:$0xff]
        %v2106 = vld [vmem:[%s317 + $0x3520] sm:$0xff]
        %v2107 = vld [vmem:[%s317 + $0x3528] sm:$0xff]
        %v2108 = vld [vmem:[%s317 + $0x3530] sm:$0xff]
        %v2109 = vld [vmem:[%s317 + $0x3538] sm:$0xff]
        %v2110 = vld [vmem:[%s317 + $0x3540] sm:$0xff]
        %v2111 = vld [vmem:[%s317 + $0x3548] sm:$0xff]
        %v2112 = vld [vmem:[%s317 + $0x3550] sm:$0xff]
        %v2113 = vld [vmem:[%s317 + $0x3558] sm:$0xff]
        %v2114 = vld [vmem:[%s317 + $0x3560] sm:$0xff]
        %v2115 = vld [vmem:[%s317 + $0x3568] sm:$0xff]
        %v2116 = vld [vmem:[%s317 + $0x3570] sm:$0xff]
        %v2117 = vld [vmem:[%s317 + $0x3578] sm:$0xff]
        %v2118 = vld [vmem:[%s317 + $0x3580] sm:$0xff]
        %v2119 = vld [vmem:[%s317 + $0x3588] sm:$0xff]
        %v2120 = vld [vmem:[%s317 + $0x3590] sm:$0xff]
        %v2121 = vld [vmem:[%s317 + $0x3598] sm:$0xff]
        %v2122 = vld [vmem:[%s317 + $0x35a0] sm:$0xff]
        %v2123 = vld [vmem:[%s317 + $0x35a8] sm:$0xff]
        %v2124 = vld [vmem:[%s317 + $0x35b0] sm:$0xff]
        %v2125 = vld [vmem:[%s317 + $0x35b8] sm:$0xff]
        %v2126 = vld [vmem:[%s317 + $0x35c0] sm:$0xff]
        %v2127 = vld [vmem:[%s317 + $0x35c8] sm:$0xff]
        %v2128 = vld [vmem:[%s317 + $0x35d0] sm:$0xff]
        %v2129 = vld [vmem:[%s317 + $0x35d8] sm:$0xff]
        %v2130 = vld [vmem:[%s317 + $0x35e0] sm:$0xff]
        %v2131 = vld [vmem:[%s317 + $0x35e8] sm:$0xff]
        %v2132 = vld [vmem:[%s317 + $0x35f0] sm:$0xff]
        %v2133 = vld [vmem:[%s317 + $0x35f8] sm:$0xff]
        %v2134 = vld [vmem:[%s317 + $0x3600] sm:$0xff]
        %v2135 = vld [vmem:[%s317 + $0x3608] sm:$0xff]
        %v2136 = vld [vmem:[%s317 + $0x3610] sm:$0xff]
        %v2137 = vld [vmem:[%s317 + $0x3618] sm:$0xff]
        %v2138 = vld [vmem:[%s317 + $0x3620] sm:$0xff]
        %v2139 = vld [vmem:[%s317 + $0x3628] sm:$0xff]
        %v2140 = vld [vmem:[%s317 + $0x3630] sm:$0xff]
        %v2141 = vld [vmem:[%s317 + $0x3638] sm:$0xff]
        %v2142 = vld [vmem:[%s317 + $0x3640] sm:$0xff]
        %v2143 = vld [vmem:[%s317 + $0x3648] sm:$0xff]
        %v2144 = vld [vmem:[%s317 + $0x3650] sm:$0xff]
        %v2145 = vld [vmem:[%s317 + $0x3658] sm:$0xff]
        %v2146 = vld [vmem:[%s317 + $0x3660] sm:$0xff]
        %v2147 = vld [vmem:[%s317 + $0x3668] sm:$0xff]
        %v2148 = vld [vmem:[%s317 + $0x3670] sm:$0xff]
        %v2149 = vld [vmem:[%s317 + $0x3678] sm:$0xff]
        %v2150 = vld [vmem:[%s317 + $0x3680] sm:$0xff]
        %v2151 = vld [vmem:[%s317 + $0x3688] sm:$0xff]
        %v2152 = vld [vmem:[%s317 + $0x3690] sm:$0xff]
        %v2153 = vld [vmem:[%s317 + $0x3698] sm:$0xff]
        %v2154 = vld [vmem:[%s317 + $0x36a0] sm:$0xff]
        %v2155 = vld [vmem:[%s317 + $0x36a8] sm:$0xff]
        %v2156 = vld [vmem:[%s317 + $0x36b0] sm:$0xff]
        %v2157 = vld [vmem:[%s317 + $0x36b8] sm:$0xff]
        %v2158 = vld [vmem:[%s317 + $0x36c0] sm:$0xff]
        %v2159 = vld [vmem:[%s317 + $0x36c8] sm:$0xff]
        %v2160 = vld [vmem:[%s317 + $0x36d0] sm:$0xff]
        %v2161 = vld [vmem:[%s317 + $0x36d8] sm:$0xff]
        %v2162 = vld [vmem:[%s317 + $0x36e0] sm:$0xff]
        %v2163 = vld [vmem:[%s317 + $0x36e8] sm:$0xff]
        %v2164 = vld [vmem:[%s317 + $0x36f0] sm:$0xff]
        %v2165 = vld [vmem:[%s317 + $0x36f8] sm:$0xff]
        %v2166 = vld [vmem:[%s317 + $0x3700] sm:$0xff]
        %v2167 = vld [vmem:[%s317 + $0x3708] sm:$0xff]
        %v2168 = vld [vmem:[%s317 + $0x3710] sm:$0xff]
        %v2169 = vld [vmem:[%s317 + $0x3718] sm:$0xff]
        %v2170 = vld [vmem:[%s317 + $0x3720] sm:$0xff]
        %v2171 = vld [vmem:[%s317 + $0x3728] sm:$0xff]
        %v2172 = vld [vmem:[%s317 + $0x3730] sm:$0xff]
        %v2173 = vld [vmem:[%s317 + $0x3738] sm:$0xff]
        %v2174 = vld [vmem:[%s317 + $0x3740] sm:$0xff]
        %v2175 = vld [vmem:[%s317 + $0x3748] sm:$0xff]
        %v2176 = vld [vmem:[%s317 + $0x3750] sm:$0xff]
        %v2177 = vld [vmem:[%s317 + $0x3758] sm:$0xff]
        %v2178 = vld [vmem:[%s317 + $0x3760] sm:$0xff]
        %v2179 = vld [vmem:[%s317 + $0x3768] sm:$0xff]
        %v2180 = vld [vmem:[%s317 + $0x3770] sm:$0xff]
        %v2181 = vld [vmem:[%s317 + $0x3778] sm:$0xff]
        %v2182 = vld [vmem:[%s317 + $0x3780] sm:$0xff]
        %v2183 = vld [vmem:[%s317 + $0x3788] sm:$0xff]
        %v2184 = vld [vmem:[%s317 + $0x3790] sm:$0xff]
        %v2185 = vld [vmem:[%s317 + $0x3798] sm:$0xff]
        %v2186 = vld [vmem:[%s317 + $0x37a0] sm:$0xff]
        %v2187 = vld [vmem:[%s317 + $0x37a8] sm:$0xff]
        %v2188 = vld [vmem:[%s317 + $0x37b0] sm:$0xff]
        %v2189 = vld [vmem:[%s317 + $0x37b8] sm:$0xff]
        %v2190 = vld [vmem:[%s317 + $0x37c0] sm:$0xff]
        %v2191 = vld [vmem:[%s317 + $0x37c8] sm:$0xff]
        %v2192 = vld [vmem:[%s317 + $0x37d0] sm:$0xff]
        %v2193 = vld [vmem:[%s317 + $0x37d8] sm:$0xff]
        %v2194 = vld [vmem:[%s317 + $0x37e0] sm:$0xff]
        %v2195 = vld [vmem:[%s317 + $0x37e8] sm:$0xff]
        %v2196 = vld [vmem:[%s317 + $0x37f0] sm:$0xff]
        %v2197 = vld [vmem:[%s317 + $0x37f8] sm:$0xff]
        %v2198 = vld [vmem:[%s317 + $0x3800] sm:$0xff]
        %v2199 = vld [vmem:[%s317 + $0x3808] sm:$0xff]
        %v2200 = vld [vmem:[%s317 + $0x3810] sm:$0xff]
        %v2201 = vld [vmem:[%s317 + $0x3818] sm:$0xff]
        %v2202 = vld [vmem:[%s317 + $0x3820] sm:$0xff]
        %v2203 = vld [vmem:[%s317 + $0x3828] sm:$0xff]
        %v2204 = vld [vmem:[%s317 + $0x3830] sm:$0xff]
        %v2205 = vld [vmem:[%s317 + $0x3838] sm:$0xff]
        %v2206 = vld [vmem:[%s317 + $0x3840] sm:$0xff]
        %v2207 = vld [vmem:[%s317 + $0x3848] sm:$0xff]
        %v2208 = vld [vmem:[%s317 + $0x3850] sm:$0xff]
        %v2209 = vld [vmem:[%s317 + $0x3858] sm:$0xff]
        %v2210 = vld [vmem:[%s317 + $0x3860] sm:$0xff]
        %v2211 = vld [vmem:[%s317 + $0x3868] sm:$0xff]
        %v2212 = vld [vmem:[%s317 + $0x3870] sm:$0xff]
        %v2213 = vld [vmem:[%s317 + $0x3878] sm:$0xff]
        %v2214 = vld [vmem:[%s317 + $0x3880] sm:$0xff]
        %v2215 = vld [vmem:[%s317 + $0x3888] sm:$0xff]
        %v2216 = vld [vmem:[%s317 + $0x3890] sm:$0xff]
        %v2217 = vld [vmem:[%s317 + $0x3898] sm:$0xff]
        %v2218 = vld [vmem:[%s317 + $0x38a0] sm:$0xff]
        %v2219 = vld [vmem:[%s317 + $0x38a8] sm:$0xff]
        %v2220 = vld [vmem:[%s317 + $0x38b0] sm:$0xff]
        %v2221 = vld [vmem:[%s317 + $0x38b8] sm:$0xff]
        %v2222 = vld [vmem:[%s317 + $0x38c0] sm:$0xff]
        %v2223 = vld [vmem:[%s317 + $0x38c8] sm:$0xff]
        %v2224 = vld [vmem:[%s317 + $0x38d0] sm:$0xff]
        %v2225 = vld [vmem:[%s317 + $0x38d8] sm:$0xff]
        %v2226 = vld [vmem:[%s317 + $0x38e0] sm:$0xff]
        %v2227 = vld [vmem:[%s317 + $0x38e8] sm:$0xff]
        %v2228 = vld [vmem:[%s317 + $0x38f0] sm:$0xff]
        %v2229 = vld [vmem:[%s317 + $0x38f8] sm:$0xff]
        %v2230 = vld [vmem:[%s317 + $0x3900] sm:$0xff]
        %v2231 = vld [vmem:[%s317 + $0x3908] sm:$0xff]
        %v2232 = vld [vmem:[%s317 + $0x3910] sm:$0xff]
        %v2233 = vld [vmem:[%s317 + $0x3918] sm:$0xff]
        %v2234 = vld [vmem:[%s317 + $0x3920] sm:$0xff]
        %v2235 = vld [vmem:[%s317 + $0x3928] sm:$0xff]
        %v2236 = vld [vmem:[%s317 + $0x3930] sm:$0xff]
        %v2237 = vld [vmem:[%s317 + $0x3938] sm:$0xff]
        %v2238 = vld [vmem:[%s317 + $0x3940] sm:$0xff]
        %v2239 = vld [vmem:[%s317 + $0x3948] sm:$0xff]
        %v2240 = vld [vmem:[%s317 + $0x3950] sm:$0xff]
        %v2241 = vld [vmem:[%s317 + $0x3958] sm:$0xff]
        %v2242 = vld [vmem:[%s317 + $0x3960] sm:$0xff]
        %v2243 = vld [vmem:[%s317 + $0x3968] sm:$0xff]
        %v2244 = vld [vmem:[%s317 + $0x3970] sm:$0xff]
        %v2245 = vld [vmem:[%s317 + $0x3978] sm:$0xff]
        %v2246 = vld [vmem:[%s317 + $0x3980] sm:$0xff]
        %v2247 = vld [vmem:[%s317 + $0x3988] sm:$0xff]
        %v2248 = vld [vmem:[%s317 + $0x3990] sm:$0xff]
        %v2249 = vld [vmem:[%s317 + $0x3998] sm:$0xff]
        %v2250 = vld [vmem:[%s317 + $0x39a0] sm:$0xff]
        %v2251 = vld [vmem:[%s317 + $0x39a8] sm:$0xff]
        %v2252 = vld [vmem:[%s317 + $0x39b0] sm:$0xff]
        %v2253 = vld [vmem:[%s317 + $0x39b8] sm:$0xff]
        %v2254 = vld [vmem:[%s317 + $0x39c0] sm:$0xff]
        %v2255 = vld [vmem:[%s317 + $0x39c8] sm:$0xff]
        %v2256 = vld [vmem:[%s317 + $0x39d0] sm:$0xff]
        %v2257 = vld [vmem:[%s317 + $0x39d8] sm:$0xff]
        %v2258 = vld [vmem:[%s317 + $0x39e0] sm:$0xff]
        %v2259 = vld [vmem:[%s317 + $0x39e8] sm:$0xff]
        %v2260 = vld [vmem:[%s317 + $0x39f0] sm:$0xff]
        %v2261 = vld [vmem:[%s317 + $0x39f8] sm:$0xff]
        %v2262 = vld [vmem:[%s317 + $0x3a00] sm:$0xff]
        %v2263 = vld [vmem:[%s317 + $0x3a08] sm:$0xff]
        %v2264 = vld [vmem:[%s317 + $0x3a10] sm:$0xff]
        %v2265 = vld [vmem:[%s317 + $0x3a18] sm:$0xff]
        %v2266 = vld [vmem:[%s317 + $0x3a20] sm:$0xff]
        %v2267 = vld [vmem:[%s317 + $0x3a28] sm:$0xff]
        %v2268 = vld [vmem:[%s317 + $0x3a30] sm:$0xff]
        %v2269 = vld [vmem:[%s317 + $0x3a38] sm:$0xff]
        %v2270 = vld [vmem:[%s317 + $0x3a40] sm:$0xff]
        %v2271 = vld [vmem:[%s317 + $0x3a48] sm:$0xff]
        %v2272 = vld [vmem:[%s317 + $0x3a50] sm:$0xff]
        %v2273 = vld [vmem:[%s317 + $0x3a58] sm:$0xff]
        %v2274 = vld [vmem:[%s317 + $0x3a60] sm:$0xff]
        %v2275 = vld [vmem:[%s317 + $0x3a68] sm:$0xff]
        %v2276 = vld [vmem:[%s317 + $0x3a70] sm:$0xff]
        %v2277 = vld [vmem:[%s317 + $0x3a78] sm:$0xff]
        %v2278 = vld [vmem:[%s317 + $0x3a80] sm:$0xff]
        %v2279 = vld [vmem:[%s317 + $0x3a88] sm:$0xff]
        %v2280 = vld [vmem:[%s317 + $0x3a90] sm:$0xff]
        %v2281 = vld [vmem:[%s317 + $0x3a98] sm:$0xff]
        %v2282 = vld [vmem:[%s317 + $0x3aa0] sm:$0xff]
        %v2283 = vld [vmem:[%s317 + $0x3aa8] sm:$0xff]
        %v2284 = vld [vmem:[%s317 + $0x3ab0] sm:$0xff]
        %v2285 = vld [vmem:[%s317 + $0x3ab8] sm:$0xff]
        %v2286 = vld [vmem:[%s317 + $0x3ac0] sm:$0xff]
        %v2287 = vld [vmem:[%s317 + $0x3ac8] sm:$0xff]
        %v2288 = vld [vmem:[%s317 + $0x3ad0] sm:$0xff]
        %v2289 = vld [vmem:[%s317 + $0x3ad8] sm:$0xff]
        %v2290 = vld [vmem:[%s317 + $0x3ae0] sm:$0xff]
        %v2291 = vld [vmem:[%s317 + $0x3ae8] sm:$0xff]
        %v2292 = vld [vmem:[%s317 + $0x3af0] sm:$0xff]
        %v2293 = vld [vmem:[%s317 + $0x3af8] sm:$0xff]
        %v2294 = vld [vmem:[%s317 + $0x3b00] sm:$0xff]
        %v2295 = vld [vmem:[%s317 + $0x3b08] sm:$0xff]
        %v2296 = vld [vmem:[%s317 + $0x3b10] sm:$0xff]
        %v2297 = vld [vmem:[%s317 + $0x3b18] sm:$0xff]
        %v2298 = vld [vmem:[%s317 + $0x3b20] sm:$0xff]
        %v2299 = vld [vmem:[%s317 + $0x3b28] sm:$0xff]
        %v2300 = vld [vmem:[%s317 + $0x3b30] sm:$0xff]
        %v2301 = vld [vmem:[%s317 + $0x3b38] sm:$0xff]
        %v2302 = vld [vmem:[%s317 + $0x3b40] sm:$0xff]
        %v2303 = vld [vmem:[%s317 + $0x3b48] sm:$0xff]
        %v2304 = vld [vmem:[%s317 + $0x3b50] sm:$0xff]
        %v2305 = vld [vmem:[%s317 + $0x3b58] sm:$0xff]
        %v2306 = vld [vmem:[%s317 + $0x3b60] sm:$0xff]
        %v2307 = vld [vmem:[%s317 + $0x3b68] sm:$0xff]
        %v2308 = vld [vmem:[%s317 + $0x3b70] sm:$0xff]
        %v2309 = vld [vmem:[%s317 + $0x3b78] sm:$0xff]
        %v2310 = vld [vmem:[%s317 + $0x3b80] sm:$0xff]
        %v2311 = vld [vmem:[%s317 + $0x3b88] sm:$0xff]
        %v2312 = vld [vmem:[%s317 + $0x3b90] sm:$0xff]
        %v2313 = vld [vmem:[%s317 + $0x3b98] sm:$0xff]
        %v2314 = vld [vmem:[%s317 + $0x3ba0] sm:$0xff]
        %v2315 = vld [vmem:[%s317 + $0x3ba8] sm:$0xff]
        %v2316 = vld [vmem:[%s317 + $0x3bb0] sm:$0xff]
        %v2317 = vld [vmem:[%s317 + $0x3bb8] sm:$0xff]
        %v2318 = vld [vmem:[%s317 + $0x3bc0] sm:$0xff]
        %v2319 = vld [vmem:[%s317 + $0x3bc8] sm:$0xff]
        %v2320 = vld [vmem:[%s317 + $0x3bd0] sm:$0xff]
        %v2321 = vld [vmem:[%s317 + $0x3bd8] sm:$0xff]
        %v2322 = vld [vmem:[%s317 + $0x3be0] sm:$0xff]
        %v2323 = vld [vmem:[%s317 + $0x3be8] sm:$0xff]
        %v2324 = vld [vmem:[%s317 + $0x3bf0] sm:$0xff]
        %v2325 = vld [vmem:[%s317 + $0x3bf8] sm:$0xff]
        %v2326 = vld [vmem:[%s317 + $0x3c00] sm:$0xff]
        %v2327 = vld [vmem:[%s317 + $0x3c08] sm:$0xff]
        %v2328 = vld [vmem:[%s317 + $0x3c10] sm:$0xff]
        %v2329 = vld [vmem:[%s317 + $0x3c18] sm:$0xff]
        %v2330 = vld [vmem:[%s317 + $0x3c20] sm:$0xff]
        %v2331 = vld [vmem:[%s317 + $0x3c28] sm:$0xff]
        %v2332 = vld [vmem:[%s317 + $0x3c30] sm:$0xff]
        %v2333 = vld [vmem:[%s317 + $0x3c38] sm:$0xff]
        %v2334 = vld [vmem:[%s317 + $0x3c40] sm:$0xff]
        %v2335 = vld [vmem:[%s317 + $0x3c48] sm:$0xff]
        %v2336 = vld [vmem:[%s317 + $0x3c50] sm:$0xff]
        %v2337 = vld [vmem:[%s317 + $0x3c58] sm:$0xff]
        %v2338 = vld [vmem:[%s317 + $0x3c60] sm:$0xff]
        %v2339 = vld [vmem:[%s317 + $0x3c68] sm:$0xff]
        %v2340 = vld [vmem:[%s317 + $0x3c70] sm:$0xff]
        %v2341 = vld [vmem:[%s317 + $0x3c78] sm:$0xff]
        %v2342 = vld [vmem:[%s317 + $0x3c80] sm:$0xff]
        %v2343 = vld [vmem:[%s317 + $0x3c88] sm:$0xff]
        %v2344 = vld [vmem:[%s317 + $0x3c90] sm:$0xff]
        %v2345 = vld [vmem:[%s317 + $0x3c98] sm:$0xff]
        %v2346 = vld [vmem:[%s317 + $0x3ca0] sm:$0xff]
        %v2347 = vld [vmem:[%s317 + $0x3ca8] sm:$0xff]
        %v2348 = vld [vmem:[%s317 + $0x3cb0] sm:$0xff]
        %v2349 = vld [vmem:[%s317 + $0x3cb8] sm:$0xff]
        %v2350 = vld [vmem:[%s317 + $0x3cc0] sm:$0xff]
        %v2351 = vld [vmem:[%s317 + $0x3cc8] sm:$0xff]
        %v2352 = vld [vmem:[%s317 + $0x3cd0] sm:$0xff]
        %v2353 = vld [vmem:[%s317 + $0x3cd8] sm:$0xff]
        %v2354 = vld [vmem:[%s317 + $0x3ce0] sm:$0xff]
        %v2355 = vld [vmem:[%s317 + $0x3ce8] sm:$0xff]
        %v2356 = vld [vmem:[%s317 + $0x3cf0] sm:$0xff]
        %v2357 = vld [vmem:[%s317 + $0x3cf8] sm:$0xff]
        %v2358 = vld [vmem:[%s317 + $0x3d00] sm:$0xff]
        %v2359 = vld [vmem:[%s317 + $0x3d08] sm:$0xff]
        %v2360 = vld [vmem:[%s317 + $0x3d10] sm:$0xff]
        %v2361 = vld [vmem:[%s317 + $0x3d18] sm:$0xff]
        %v2362 = vld [vmem:[%s317 + $0x3d20] sm:$0xff]
        %v2363 = vld [vmem:[%s317 + $0x3d28] sm:$0xff]
        %v2364 = vld [vmem:[%s317 + $0x3d30] sm:$0xff]
        %v2365 = vld [vmem:[%s317 + $0x3d38] sm:$0xff]
        %v2366 = vld [vmem:[%s317 + $0x3d40] sm:$0xff]
        %v2367 = vld [vmem:[%s317 + $0x3d48] sm:$0xff]
        %v2368 = vld [vmem:[%s317 + $0x3d50] sm:$0xff]
        %v2369 = vld [vmem:[%s317 + $0x3d58] sm:$0xff]
        %v2370 = vld [vmem:[%s317 + $0x3d60] sm:$0xff]
        %v2371 = vld [vmem:[%s317 + $0x3d68] sm:$0xff]
        %v2372 = vld [vmem:[%s317 + $0x3d70] sm:$0xff]
        %v2373 = vld [vmem:[%s317 + $0x3d78] sm:$0xff]
        %v2374 = vld [vmem:[%s317 + $0x3d80] sm:$0xff]
        %v2375 = vld [vmem:[%s317 + $0x3d88] sm:$0xff]
        %v2376 = vld [vmem:[%s317 + $0x3d90] sm:$0xff]
        %v2377 = vld [vmem:[%s317 + $0x3d98] sm:$0xff]
        %v2378 = vld [vmem:[%s317 + $0x3da0] sm:$0xff]
        %v2379 = vld [vmem:[%s317 + $0x3da8] sm:$0xff]
        %v2380 = vld [vmem:[%s317 + $0x3db0] sm:$0xff]
        %v2381 = vld [vmem:[%s317 + $0x3db8] sm:$0xff]
        %v2382 = vld [vmem:[%s317 + $0x3dc0] sm:$0xff]
        %v2383 = vld [vmem:[%s317 + $0x3dc8] sm:$0xff]
        %v2384 = vld [vmem:[%s317 + $0x3dd0] sm:$0xff]
        %v2385 = vld [vmem:[%s317 + $0x3dd8] sm:$0xff]
        %v2386 = vld [vmem:[%s317 + $0x3de0] sm:$0xff]
        %v2387 = vld [vmem:[%s317 + $0x3de8] sm:$0xff]
        %v2388 = vld [vmem:[%s317 + $0x3df0] sm:$0xff]
        %v2389 = vld [vmem:[%s317 + $0x3df8] sm:$0xff]
        %v2390 = vld [vmem:[%s317 + $0x3e00] sm:$0xff]
        %v2391 = vld [vmem:[%s317 + $0x3e08] sm:$0xff]
        %v2392 = vld [vmem:[%s317 + $0x3e10] sm:$0xff]
        %v2393 = vld [vmem:[%s317 + $0x3e18] sm:$0xff]
        %v2394 = vld [vmem:[%s317 + $0x3e20] sm:$0xff]
        %v2395 = vld [vmem:[%s317 + $0x3e28] sm:$0xff]
        %v2396 = vld [vmem:[%s317 + $0x3e30] sm:$0xff]
        %v2397 = vld [vmem:[%s317 + $0x3e38] sm:$0xff]
        %v2398 = vld [vmem:[%s317 + $0x3e40] sm:$0xff]
        %v2399 = vld [vmem:[%s317 + $0x3e48] sm:$0xff]
        %v2400 = vld [vmem:[%s317 + $0x3e50] sm:$0xff]
        %v2401 = vld [vmem:[%s317 + $0x3e58] sm:$0xff]
        %v2402 = vld [vmem:[%s317 + $0x3e60] sm:$0xff]
        %v2403 = vld [vmem:[%s317 + $0x3e68] sm:$0xff]
        %v2404 = vld [vmem:[%s317 + $0x3e70] sm:$0xff]
        %v2405 = vld [vmem:[%s317 + $0x3e78] sm:$0xff]
        %v2406 = vld [vmem:[%s317 + $0x3e80] sm:$0xff]
        %v2407 = vld [vmem:[%s317 + $0x3e88] sm:$0xff]
        %v2408 = vld [vmem:[%s317 + $0x3e90] sm:$0xff]
        %v2409 = vld [vmem:[%s317 + $0x3e98] sm:$0xff]
        %v2410 = vld [vmem:[%s317 + $0x3ea0] sm:$0xff]
        %v2411 = vld [vmem:[%s317 + $0x3ea8] sm:$0xff]
        %v2412 = vld [vmem:[%s317 + $0x3eb0] sm:$0xff]
        %v2413 = vld [vmem:[%s317 + $0x3eb8] sm:$0xff]
        %v2414 = vld [vmem:[%s317 + $0x3ec0] sm:$0xff]
        %v2415 = vld [vmem:[%s317 + $0x3ec8] sm:$0xff]
        %v2416 = vld [vmem:[%s317 + $0x3ed0] sm:$0xff]
        %v2417 = vld [vmem:[%s317 + $0x3ed8] sm:$0xff]
        %v2418 = vld [vmem:[%s317 + $0x3ee0] sm:$0xff]
        %v2419 = vld [vmem:[%s317 + $0x3ee8] sm:$0xff]
        %v2420 = vld [vmem:[%s317 + $0x3ef0] sm:$0xff]
        %v2421 = vld [vmem:[%s317 + $0x3ef8] sm:$0xff]
        %v2422 = vld [vmem:[%s317 + $0x3f00] sm:$0xff]
        %v2423 = vld [vmem:[%s317 + $0x3f08] sm:$0xff]
        %v2424 = vld [vmem:[%s317 + $0x3f10] sm:$0xff]
        %v2425 = vld [vmem:[%s317 + $0x3f18] sm:$0xff]
        %v2426 = vld [vmem:[%s317 + $0x3f20] sm:$0xff]
        %v2427 = vld [vmem:[%s317 + $0x3f28] sm:$0xff]
        %v2428 = vld [vmem:[%s317 + $0x3f30] sm:$0xff]
        %v2429 = vld [vmem:[%s317 + $0x3f38] sm:$0xff]
        %v2430 = vld [vmem:[%s317 + $0x3f40] sm:$0xff]
        %v2431 = vld [vmem:[%s317 + $0x3f48] sm:$0xff]
        %v2432 = vld [vmem:[%s317 + $0x3f50] sm:$0xff]
        %v2433 = vld [vmem:[%s317 + $0x3f58] sm:$0xff]
        %v2434 = vld [vmem:[%s317 + $0x3f60] sm:$0xff]
        %v2435 = vld [vmem:[%s317 + $0x3f68] sm:$0xff]
        %v2436 = vld [vmem:[%s317 + $0x3f70] sm:$0xff]
        %v2437 = vld [vmem:[%s317 + $0x3f78] sm:$0xff]
        %v2438 = vld [vmem:[%s317 + $0x3f80] sm:$0xff]
        %v2439 = vld [vmem:[%s317 + $0x3f88] sm:$0xff]
        %v2440 = vld [vmem:[%s317 + $0x3f90] sm:$0xff]
        %v2441 = vld [vmem:[%s317 + $0x3f98] sm:$0xff]
        %v2442 = vld [vmem:[%s317 + $0x3fa0] sm:$0xff]
        %v2443 = vld [vmem:[%s317 + $0x3fa8] sm:$0xff]
        %v2444 = vld [vmem:[%s317 + $0x3fb0] sm:$0xff]
        %v2445 = vld [vmem:[%s317 + $0x3fb8] sm:$0xff]
        %v2446 = vld [vmem:[%s317 + $0x3fc0] sm:$0xff]
        %v2447 = vld [vmem:[%s317 + $0x3fc8] sm:$0xff]
        %v2448 = vld [vmem:[%s317 + $0x3fd0] sm:$0xff]
        %v2449 = vld [vmem:[%s317 + $0x3fd8] sm:$0xff]
        %v2450 = vld [vmem:[%s317 + $0x3fe0] sm:$0xff]
        %v2451 = vld [vmem:[%s317 + $0x3fe8] sm:$0xff]
        %v2452 = vld [vmem:[%s317 + $0x3ff0] sm:$0xff]
        %v2453 = vld [vmem:[%s317 + $0x3ff8] sm:$0xff]
        %v2454 = vld [vmem:[%s317 + $0x4000] sm:$0xff]
        %v2455 = vld [vmem:[%s317 + $0x4008] sm:$0xff]
        %v2456 = vld [vmem:[%s317 + $0x4010] sm:$0xff]
        %v2457 = vld [vmem:[%s317 + $0x4018] sm:$0xff]
        %v2458 = vld [vmem:[%s317 + $0x4020] sm:$0xff]
        %v2459 = vld [vmem:[%s317 + $0x4028] sm:$0xff]
        %v2460 = vld [vmem:[%s317 + $0x4030] sm:$0xff]
        %v2461 = vld [vmem:[%s317 + $0x4038] sm:$0xff]
        %v2462 = vld [vmem:[%s317 + $0x4040] sm:$0xff]
        %v2463 = vld [vmem:[%s317 + $0x4048] sm:$0xff]
        %v2464 = vld [vmem:[%s317 + $0x4050] sm:$0xff]
        %v2465 = vld [vmem:[%s317 + $0x4058] sm:$0xff]
        %v2466 = vld [vmem:[%s317 + $0x4060] sm:$0xff]
        %v2467 = vld [vmem:[%s317 + $0x4068] sm:$0xff]
        %v2468 = vld [vmem:[%s317 + $0x4070] sm:$0xff]
        %v2469 = vld [vmem:[%s317 + $0x4078] sm:$0xff]
        %v2470 = vld [vmem:[%s317 + $0x4080] sm:$0xff]
        %v2471 = vld [vmem:[%s317 + $0x4088] sm:$0xff]
        %v2472 = vld [vmem:[%s317 + $0x4090] sm:$0xff]
        %v2473 = vld [vmem:[%s317 + $0x4098] sm:$0xff]
        %v2474 = vld [vmem:[%s317 + $0x40a0] sm:$0xff]
        %v2475 = vld [vmem:[%s317 + $0x40a8] sm:$0xff]
        %v2476 = vld [vmem:[%s317 + $0x40b0] sm:$0xff]
        %v2477 = vld [vmem:[%s317 + $0x40b8] sm:$0xff]
        %v2478 = vld [vmem:[%s317 + $0x40c0] sm:$0xff]
        %v2479 = vld [vmem:[%s317 + $0x40c8] sm:$0xff]
        %v2480 = vld [vmem:[%s317 + $0x40d0] sm:$0xff]
        %v2481 = vld [vmem:[%s317 + $0x40d8] sm:$0xff]
        %v2482 = vld [vmem:[%s317 + $0x40e0] sm:$0xff]
        %v2483 = vld [vmem:[%s317 + $0x40e8] sm:$0xff]
        %v2484 = vld [vmem:[%s317 + $0x40f0] sm:$0xff]
        %v2485 = vld [vmem:[%s317 + $0x40f8] sm:$0xff]
        %v2486 = vld [vmem:[%s317 + $0x4100] sm:$0xff]
        %v2487 = vld [vmem:[%s317 + $0x4108] sm:$0xff]
        %v2488 = vld [vmem:[%s317 + $0x4110] sm:$0xff]
        %v2489 = vld [vmem:[%s317 + $0x4118] sm:$0xff]
        %v2490 = vld [vmem:[%s317 + $0x4120] sm:$0xff]
        %v2491 = vld [vmem:[%s317 + $0x4128] sm:$0xff]
        %v2492 = vld [vmem:[%s317 + $0x4130] sm:$0xff]
        %v2493 = vld [vmem:[%s317 + $0x4138] sm:$0xff]
        %v2494 = vld [vmem:[%s317 + $0x4140] sm:$0xff]
        %v2495 = vld [vmem:[%s317 + $0x4148] sm:$0xff]
        %v2496 = vld [vmem:[%s317 + $0x4150] sm:$0xff]
        %v2497 = vld [vmem:[%s317 + $0x4158] sm:$0xff]
        %v2498 = vld [vmem:[%s317 + $0x4160] sm:$0xff]
        %v2499 = vld [vmem:[%s317 + $0x4168] sm:$0xff]
        %v2500 = vld [vmem:[%s317 + $0x4170] sm:$0xff]
        %v2501 = vld [vmem:[%s317 + $0x4178] sm:$0xff]
        %v2502 = vld [vmem:[%s317 + $0x4180] sm:$0xff]
        %v2503 = vld [vmem:[%s317 + $0x4188] sm:$0xff]
        %v2504 = vld [vmem:[%s317 + $0x4190] sm:$0xff]
        %v2505 = vld [vmem:[%s317 + $0x4198] sm:$0xff]
        %v2506 = vld [vmem:[%s317 + $0x41a0] sm:$0xff]
        %v2507 = vld [vmem:[%s317 + $0x41a8] sm:$0xff]
        %v2508 = vld [vmem:[%s317 + $0x41b0] sm:$0xff]
        %v2509 = vld [vmem:[%s317 + $0x41b8] sm:$0xff]
        %v2510 = vld [vmem:[%s317 + $0x41c0] sm:$0xff]
        %v2511 = vld [vmem:[%s317 + $0x41c8] sm:$0xff]
        %v2512 = vld [vmem:[%s317 + $0x41d0] sm:$0xff]
        %v2513 = vld [vmem:[%s317 + $0x41d8] sm:$0xff]
        %v2514 = vld [vmem:[%s317 + $0x41e0] sm:$0xff]
        %v2515 = vld [vmem:[%s317 + $0x41e8] sm:$0xff]
        %v2516 = vld [vmem:[%s317 + $0x41f0] sm:$0xff]
        %v2517 = vld [vmem:[%s317 + $0x41f8] sm:$0xff]
        %v2518 = vld [vmem:[%s317 + $0x4200] sm:$0xff]
        %v2519 = vld [vmem:[%s317 + $0x4208] sm:$0xff]
        %v2520 = vld [vmem:[%s317 + $0x4210] sm:$0xff]
        %v2521 = vld [vmem:[%s317 + $0x4218] sm:$0xff]
        %v2522 = vld [vmem:[%s317 + $0x4220] sm:$0xff]
        %v2523 = vld [vmem:[%s317 + $0x4228] sm:$0xff]
        %v2524 = vld [vmem:[%s317 + $0x4230] sm:$0xff]
        %v2525 = vld [vmem:[%s317 + $0x4238] sm:$0xff]
        %v2526 = vld [vmem:[%s317 + $0x4240] sm:$0xff]
        %v2527 = vld [vmem:[%s317 + $0x4248] sm:$0xff]
        %v2528 = vld [vmem:[%s317 + $0x4250] sm:$0xff]
        %v2529 = vld [vmem:[%s317 + $0x4258] sm:$0xff]
        %v2530 = vld [vmem:[%s317 + $0x4260] sm:$0xff]
        %v2531 = vld [vmem:[%s317 + $0x4268] sm:$0xff]
        %v2532 = vld [vmem:[%s317 + $0x4270] sm:$0xff]
        %v2533 = vld [vmem:[%s317 + $0x4278] sm:$0xff]
        %v2534 = vld [vmem:[%s317 + $0x4280] sm:$0xff]
        %v2535 = vld [vmem:[%s317 + $0x4288] sm:$0xff]
        %v2536 = vld [vmem:[%s317 + $0x4290] sm:$0xff]
        %v2537 = vld [vmem:[%s317 + $0x4298] sm:$0xff]
        %v2538 = vld [vmem:[%s317 + $0x42a0] sm:$0xff]
        %v2539 = vld [vmem:[%s317 + $0x42a8] sm:$0xff]
        %v2540 = vld [vmem:[%s317 + $0x42b0] sm:$0xff]
        %v2541 = vld [vmem:[%s317 + $0x42b8] sm:$0xff]
        %v2542 = vld [vmem:[%s317 + $0x42c0] sm:$0xff]
        %v2543 = vld [vmem:[%s317 + $0x42c8] sm:$0xff]
        %v2544 = vld [vmem:[%s317 + $0x42d0] sm:$0xff]
        %v2545 = vld [vmem:[%s317 + $0x42d8] sm:$0xff]
        %v2546 = vld [vmem:[%s317 + $0x42e0] sm:$0xff]
        %v2547 = vld [vmem:[%s317 + $0x42e8] sm:$0xff]
        %v2548 = vld [vmem:[%s317 + $0x42f0] sm:$0xff]
        %v2549 = vld [vmem:[%s317 + $0x42f8] sm:$0xff]
        %v2550 = vld [vmem:[%s317 + $0x4300] sm:$0xff]
        %v2551 = vld [vmem:[%s317 + $0x4308] sm:$0xff]
        %v2552 = vld [vmem:[%s317 + $0x4310] sm:$0xff]
        %v2553 = vld [vmem:[%s317 + $0x4318] sm:$0xff]
        %v2554 = vld [vmem:[%s317 + $0x4320] sm:$0xff]
        %v2555 = vld [vmem:[%s317 + $0x4328] sm:$0xff]
        %v2556 = vld [vmem:[%s317 + $0x4330] sm:$0xff]
        %v2557 = vld [vmem:[%s317 + $0x4338] sm:$0xff]
        %v2558 = vld [vmem:[%s317 + $0x4340] sm:$0xff]
        %v2559 = vld [vmem:[%s317 + $0x4348] sm:$0xff]
        %v2560 = vld [vmem:[%s317 + $0x4350] sm:$0xff]
        %v2561 = vld [vmem:[%s317 + $0x4358] sm:$0xff]
        %v2562 = vld [vmem:[%s317 + $0x4360] sm:$0xff]
        %v2563 = vld [vmem:[%s317 + $0x4368] sm:$0xff]
        %v2564 = vld [vmem:[%s317 + $0x4370] sm:$0xff]
        %v2565 = vld [vmem:[%s317 + $0x4378] sm:$0xff]
        %v2566 = vld [vmem:[%s317 + $0x4380] sm:$0xff]
        %v2567 = vld [vmem:[%s317 + $0x4388] sm:$0xff]
        %v2568 = vld [vmem:[%s317 + $0x4390] sm:$0xff]
        %v2569 = vld [vmem:[%s317 + $0x4398] sm:$0xff]
        %v2570 = vld [vmem:[%s317 + $0x43a0] sm:$0xff]
        %v2571 = vld [vmem:[%s317 + $0x43a8] sm:$0xff]
        %v2572 = vld [vmem:[%s317 + $0x43b0] sm:$0xff]
        %v2573 = vld [vmem:[%s317 + $0x43b8] sm:$0xff]
        %v2574 = vld [vmem:[%s317 + $0x43c0] sm:$0xff]
        %v2575 = vld [vmem:[%s317 + $0x43c8] sm:$0xff]
        %v2576 = vld [vmem:[%s317 + $0x43d0] sm:$0xff]
        %v2577 = vld [vmem:[%s317 + $0x43d8] sm:$0xff]
        %v2578 = vld [vmem:[%s317 + $0x43e0] sm:$0xff]
        %v2579 = vld [vmem:[%s317 + $0x43e8] sm:$0xff]
        %v2580 = vld [vmem:[%s317 + $0x43f0] sm:$0xff]
        %v2581 = vld [vmem:[%s317 + $0x43f8] sm:$0xff]
        %v2582 = vld [vmem:[%s317 + $0x4400] sm:$0xff]
        %v2583 = vld [vmem:[%s317 + $0x4408] sm:$0xff]
        %v2584 = vld [vmem:[%s317 + $0x4410] sm:$0xff]
        %v2585 = vld [vmem:[%s317 + $0x4418] sm:$0xff]
        %v2586 = vld [vmem:[%s317 + $0x4420] sm:$0xff]
        %v2587 = vld [vmem:[%s317 + $0x4428] sm:$0xff]
        %v2588 = vld [vmem:[%s317 + $0x4430] sm:$0xff]
        %v2589 = vld [vmem:[%s317 + $0x4438] sm:$0xff]
        %v2590 = vld [vmem:[%s317 + $0x4440] sm:$0xff]
        %v2591 = vld [vmem:[%s317 + $0x4448] sm:$0xff]
        %v2592 = vld [vmem:[%s317 + $0x4450] sm:$0xff]
        %v2593 = vld [vmem:[%s317 + $0x4458] sm:$0xff]
        %v2594 = vld [vmem:[%s317 + $0x4460] sm:$0xff]
        %v2595 = vld [vmem:[%s317 + $0x4468] sm:$0xff]
        %v2596 = vld [vmem:[%s317 + $0x4470] sm:$0xff]
        %v2597 = vld [vmem:[%s317 + $0x4478] sm:$0xff]
        %v2598 = vld [vmem:[%s317 + $0x4480] sm:$0xff]
        %v2599 = vld [vmem:[%s317 + $0x4488] sm:$0xff]
        %v2600 = vld [vmem:[%s317 + $0x4490] sm:$0xff]
        %v2601 = vld [vmem:[%s317 + $0x4498] sm:$0xff]
        %v2602 = vld [vmem:[%s317 + $0x44a0] sm:$0xff]
        %v2603 = vld [vmem:[%s317 + $0x44a8] sm:$0xff]
        %v2604 = vld [vmem:[%s317 + $0x44b0] sm:$0xff]
        %v2605 = vld [vmem:[%s317 + $0x44b8] sm:$0xff]
        %v2606 = vld [vmem:[%s317 + $0x44c0] sm:$0xff]
        %v2607 = vld [vmem:[%s317 + $0x44c8] sm:$0xff]
        %v2608 = vld [vmem:[%s317 + $0x44d0] sm:$0xff]
        %v2609 = vld [vmem:[%s317 + $0x44d8] sm:$0xff]
        %v2610 = vld [vmem:[%s317 + $0x44e0] sm:$0xff]
        %v2611 = vld [vmem:[%s317 + $0x44e8] sm:$0xff]
        %v2612 = vld [vmem:[%s317 + $0x44f0] sm:$0xff]
        %v2613 = vld [vmem:[%s317 + $0x44f8] sm:$0xff]
        %v2614 = vld [vmem:[%s317 + $0x4500] sm:$0xff]
        %v2615 = vld [vmem:[%s317 + $0x4508] sm:$0xff]
        %v2616 = vld [vmem:[%s317 + $0x4510] sm:$0xff]
        %v2617 = vld [vmem:[%s317 + $0x4518] sm:$0xff]
        %v2618 = vld [vmem:[%s317 + $0x4520] sm:$0xff]
        %v2619 = vld [vmem:[%s317 + $0x4528] sm:$0xff]
        %v2620 = vld [vmem:[%s317 + $0x4530] sm:$0xff]
        %v2621 = vld [vmem:[%s317 + $0x4538] sm:$0xff]
        %v2622 = vld [vmem:[%s317 + $0x4540] sm:$0xff]
        %v2623 = vld [vmem:[%s317 + $0x4548] sm:$0xff]
        %v2624 = vld [vmem:[%s317 + $0x4550] sm:$0xff]
        %v2625 = vld [vmem:[%s317 + $0x4558] sm:$0xff]
        %v2626 = vld [vmem:[%s317 + $0x4560] sm:$0xff]
        %v2627 = vld [vmem:[%s317 + $0x4568] sm:$0xff]
        %v2628 = vld [vmem:[%s317 + $0x4570] sm:$0xff]
        %v2629 = vld [vmem:[%s317 + $0x4578] sm:$0xff]
        %v2630 = vld [vmem:[%s317 + $0x4580] sm:$0xff]
        %v2631 = vld [vmem:[%s317 + $0x4588] sm:$0xff]
        %v2632 = vld [vmem:[%s317 + $0x4590] sm:$0xff]
        %v2633 = vld [vmem:[%s317 + $0x4598] sm:$0xff]
        %v2634 = vld [vmem:[%s317 + $0x45a0] sm:$0xff]
        %v2635 = vld [vmem:[%s317 + $0x45a8] sm:$0xff]
        %v2636 = vld [vmem:[%s317 + $0x45b0] sm:$0xff]
        %v2637 = vld [vmem:[%s317 + $0x45b8] sm:$0xff]
        %v2638 = vld [vmem:[%s317 + $0x45c0] sm:$0xff]
        %v2639 = vld [vmem:[%s317 + $0x45c8] sm:$0xff]
        %v2640 = vld [vmem:[%s317 + $0x45d0] sm:$0xff]
        %v2641 = vld [vmem:[%s317 + $0x45d8] sm:$0xff]
        %v2642 = vld [vmem:[%s317 + $0x45e0] sm:$0xff]
        %v2643 = vld [vmem:[%s317 + $0x45e8] sm:$0xff]
        %v2644 = vld [vmem:[%s317 + $0x45f0] sm:$0xff]
        %v2645 = vld [vmem:[%s317 + $0x45f8] sm:$0xff]
        %v2646 = vld [vmem:[%s317 + $0x4600] sm:$0xff]
        %v2647 = vld [vmem:[%s317 + $0x4608] sm:$0xff]
        %v2648 = vld [vmem:[%s317 + $0x4610] sm:$0xff]
        %v2649 = vld [vmem:[%s317 + $0x4618] sm:$0xff]
        %v2650 = vld [vmem:[%s317 + $0x4620] sm:$0xff]
        %v2651 = vld [vmem:[%s317 + $0x4628] sm:$0xff]
        %v2652 = vld [vmem:[%s317 + $0x4630] sm:$0xff]
        %v2653 = vld [vmem:[%s317 + $0x4638] sm:$0xff]
        %v2654 = vld [vmem:[%s317 + $0x4640] sm:$0xff]
        %v2655 = vld [vmem:[%s317 + $0x4648] sm:$0xff]
        %v2656 = vld [vmem:[%s317 + $0x4650] sm:$0xff]
        %v2657 = vld [vmem:[%s317 + $0x4658] sm:$0xff]
        %v2658 = vld [vmem:[%s317 + $0x4660] sm:$0xff]
        %v2659 = vld [vmem:[%s317 + $0x4668] sm:$0xff]
        %v2660 = vld [vmem:[%s317 + $0x4670] sm:$0xff]
        %v2661 = vld [vmem:[%s317 + $0x4678] sm:$0xff]
        %v2662 = vld [vmem:[%s317 + $0x4680] sm:$0xff]
        %v2663 = vld [vmem:[%s317 + $0x4688] sm:$0xff]
        %v2664 = vld [vmem:[%s317 + $0x4690] sm:$0xff]
        %v2665 = vld [vmem:[%s317 + $0x4698] sm:$0xff]
        %v2666 = vld [vmem:[%s317 + $0x46a0] sm:$0xff]
        %v2667 = vld [vmem:[%s317 + $0x46a8] sm:$0xff]
        %v2668 = vld [vmem:[%s317 + $0x46b0] sm:$0xff]
        %v2669 = vld [vmem:[%s317 + $0x46b8] sm:$0xff]
        %v2670 = vld [vmem:[%s317 + $0x46c0] sm:$0xff]
        %v2671 = vld [vmem:[%s317 + $0x46c8] sm:$0xff]
        %v2672 = vld [vmem:[%s317 + $0x46d0] sm:$0xff]
        %v2673 = vld [vmem:[%s317 + $0x46d8] sm:$0xff]
        %v2674 = vld [vmem:[%s317 + $0x46e0] sm:$0xff]
        %v2675 = vld [vmem:[%s317 + $0x46e8] sm:$0xff]
        %v2676 = vld [vmem:[%s317 + $0x46f0] sm:$0xff]
        %v2677 = vld [vmem:[%s317 + $0x46f8] sm:$0xff]
        %v2678 = vld [vmem:[%s317 + $0x4700] sm:$0xff]
        %v2679 = vld [vmem:[%s317 + $0x4708] sm:$0xff]
        %v2680 = vld [vmem:[%s317 + $0x4710] sm:$0xff]
        %v2681 = vld [vmem:[%s317 + $0x4718] sm:$0xff]
        %v2682 = vld [vmem:[%s317 + $0x4720] sm:$0xff]
        %v2683 = vld [vmem:[%s317 + $0x4728] sm:$0xff]
        %v2684 = vld [vmem:[%s317 + $0x4730] sm:$0xff]
        %v2685 = vld [vmem:[%s317 + $0x4738] sm:$0xff]
        %v2686 = vld [vmem:[%s317 + $0x4740] sm:$0xff]
        %v2687 = vld [vmem:[%s317 + $0x4748] sm:$0xff]
        %v2688 = vld [vmem:[%s317 + $0x4750] sm:$0xff]
        %v2689 = vld [vmem:[%s317 + $0x4758] sm:$0xff]
        %v2690 = vld [vmem:[%s317 + $0x4760] sm:$0xff]
        %v2691 = vld [vmem:[%s317 + $0x4768] sm:$0xff]
        %v2692 = vld [vmem:[%s317 + $0x4770] sm:$0xff]
        %v2693 = vld [vmem:[%s317 + $0x4778] sm:$0xff]
        %v2694 = vld [vmem:[%s317 + $0x4780] sm:$0xff]
        %v2695 = vld [vmem:[%s317 + $0x4788] sm:$0xff]
        %v2696 = vld [vmem:[%s317 + $0x4790] sm:$0xff]
        %v2697 = vld [vmem:[%s317 + $0x4798] sm:$0xff]
        %v2698 = vld [vmem:[%s317 + $0x47a0] sm:$0xff]
        %v2699 = vld [vmem:[%s317 + $0x47a8] sm:$0xff]
        %v2700 = vld [vmem:[%s317 + $0x47b0] sm:$0xff]
        %v2701 = vld [vmem:[%s317 + $0x47b8] sm:$0xff]
        %v2702 = vld [vmem:[%s317 + $0x47c0] sm:$0xff]
        %v2703 = vld [vmem:[%s317 + $0x47c8] sm:$0xff]
        %v2704 = vld [vmem:[%s317 + $0x47d0] sm:$0xff]
        %v2705 = vld [vmem:[%s317 + $0x47d8] sm:$0xff]
        %v2706 = vld [vmem:[%s317 + $0x47e0] sm:$0xff]
        %v2707 = vld [vmem:[%s317 + $0x47e8] sm:$0xff]
        %v2708 = vld [vmem:[%s317 + $0x47f0] sm:$0xff]
        %v2709 = vld [vmem:[%s317 + $0x47f8] sm:$0xff]
        %v2710 = vld [vmem:[%s317 + $0x4800] sm:$0xff]
        %v2711 = vld [vmem:[%s317 + $0x4808] sm:$0xff]
        %v2712 = vld [vmem:[%s317 + $0x4810] sm:$0xff]
        %v2713 = vld [vmem:[%s317 + $0x4818] sm:$0xff]
        %v2714 = vld [vmem:[%s317 + $0x4820] sm:$0xff]
        %v2715 = vld [vmem:[%s317 + $0x4828] sm:$0xff]
        %v2716 = vld [vmem:[%s317 + $0x4830] sm:$0xff]
        %v2717 = vld [vmem:[%s317 + $0x4838] sm:$0xff]
        %v2718 = vld [vmem:[%s317 + $0x4840] sm:$0xff]
        %v2719 = vld [vmem:[%s317 + $0x4848] sm:$0xff]
        %v2720 = vld [vmem:[%s317 + $0x4850] sm:$0xff]
        %v2721 = vld [vmem:[%s317 + $0x4858] sm:$0xff]
        %v2722 = vld [vmem:[%s317 + $0x4860] sm:$0xff]
        %v2723 = vld [vmem:[%s317 + $0x4868] sm:$0xff]
        %v2724 = vld [vmem:[%s317 + $0x4870] sm:$0xff]
        %v2725 = vld [vmem:[%s317 + $0x4878] sm:$0xff]
        %v2726 = vld [vmem:[%s317 + $0x4880] sm:$0xff]
        %v2727 = vld [vmem:[%s317 + $0x4888] sm:$0xff]
        %v2728 = vld [vmem:[%s317 + $0x4890] sm:$0xff]
        %v2729 = vld [vmem:[%s317 + $0x4898] sm:$0xff]
        %v2730 = vld [vmem:[%s317 + $0x48a0] sm:$0xff]
        %v2731 = vld [vmem:[%s317 + $0x48a8] sm:$0xff]
        %v2732 = vld [vmem:[%s317 + $0x48b0] sm:$0xff]
        %v2733 = vld [vmem:[%s317 + $0x48b8] sm:$0xff]
        %v2734 = vld [vmem:[%s317 + $0x48c0] sm:$0xff]
        %v2735 = vld [vmem:[%s317 + $0x48c8] sm:$0xff]
        %v2736 = vld [vmem:[%s317 + $0x48d0] sm:$0xff]
        %v2737 = vld [vmem:[%s317 + $0x48d8] sm:$0xff]
        %v2738 = vld [vmem:[%s317 + $0x48e0] sm:$0xff]
        %v2739 = vld [vmem:[%s317 + $0x48e8] sm:$0xff]
        %v2740 = vld [vmem:[%s317 + $0x48f0] sm:$0xff]
        %v2741 = vld [vmem:[%s317 + $0x48f8] sm:$0xff]
        %v2742 = vld [vmem:[%s317 + $0x4900] sm:$0xff]
        %v2743 = vld [vmem:[%s317 + $0x4908] sm:$0xff]
        %v2744 = vld [vmem:[%s317 + $0x4910] sm:$0xff]
        %v2745 = vld [vmem:[%s317 + $0x4918] sm:$0xff]
        %v2746 = vld [vmem:[%s317 + $0x4920] sm:$0xff]
        %v2747 = vld [vmem:[%s317 + $0x4928] sm:$0xff]
        %v2748 = vld [vmem:[%s317 + $0x4930] sm:$0xff]
        %v2749 = vld [vmem:[%s317 + $0x4938] sm:$0xff]
        %v2750 = vld [vmem:[%s317 + $0x4940] sm:$0xff]
        %v2751 = vld [vmem:[%s317 + $0x4948] sm:$0xff]
        %v2752 = vld [vmem:[%s317 + $0x4950] sm:$0xff]
        %v2753 = vld [vmem:[%s317 + $0x4958] sm:$0xff]
        %v2754 = vld [vmem:[%s317 + $0x4960] sm:$0xff]
        %v2755 = vld [vmem:[%s317 + $0x4968] sm:$0xff]
        %v2756 = vld [vmem:[%s317 + $0x4970] sm:$0xff]
        %v2757 = vld [vmem:[%s317 + $0x4978] sm:$0xff]
        %v2758 = vld [vmem:[%s317 + $0x4980] sm:$0xff]
        %v2759 = vld [vmem:[%s317 + $0x4988] sm:$0xff]
        %v2760 = vld [vmem:[%s317 + $0x4990] sm:$0xff]
        %v2761 = vld [vmem:[%s317 + $0x4998] sm:$0xff]
        %v2762 = vld [vmem:[%s317 + $0x49a0] sm:$0xff]
        %v2763 = vld [vmem:[%s317 + $0x49a8] sm:$0xff]
        %v2764 = vld [vmem:[%s317 + $0x49b0] sm:$0xff]
        %v2765 = vld [vmem:[%s317 + $0x49b8] sm:$0xff]
        %v2766 = vld [vmem:[%s317 + $0x49c0] sm:$0xff]
        %v2767 = vld [vmem:[%s317 + $0x49c8] sm:$0xff]
        %v2768 = vld [vmem:[%s317 + $0x49d0] sm:$0xff]
        %v2769 = vld [vmem:[%s317 + $0x49d8] sm:$0xff]
        %v2770 = vld [vmem:[%s317 + $0x49e0] sm:$0xff]
        %v2771 = vld [vmem:[%s317 + $0x49e8] sm:$0xff]
        %v2772 = vld [vmem:[%s317 + $0x49f0] sm:$0xff]
        %v2773 = vld [vmem:[%s317 + $0x49f8] sm:$0xff]
        %v2774 = vld [vmem:[%s317 + $0x4a00] sm:$0xff]
        %v2775 = vld [vmem:[%s317 + $0x4a08] sm:$0xff]
        %v2776 = vld [vmem:[%s317 + $0x4a10] sm:$0xff]
        %v2777 = vld [vmem:[%s317 + $0x4a18] sm:$0xff]
        %v2778 = vld [vmem:[%s317 + $0x4a20] sm:$0xff]
        %v2779 = vld [vmem:[%s317 + $0x4a28] sm:$0xff]
        %v2780 = vld [vmem:[%s317 + $0x4a30] sm:$0xff]
        %v2781 = vld [vmem:[%s317 + $0x4a38] sm:$0xff]
        %v2782 = vld [vmem:[%s317 + $0x4a40] sm:$0xff]
        %v2783 = vld [vmem:[%s317 + $0x4a48] sm:$0xff]
        %v2784 = vld [vmem:[%s317 + $0x4a50] sm:$0xff]
        %v2785 = vld [vmem:[%s317 + $0x4a58] sm:$0xff]
        %v2786 = vld [vmem:[%s317 + $0x4a60] sm:$0xff]
        %v2787 = vld [vmem:[%s317 + $0x4a68] sm:$0xff]
        %v2788 = vld [vmem:[%s317 + $0x4a70] sm:$0xff]
        %v2789 = vld [vmem:[%s317 + $0x4a78] sm:$0xff]
        %v2790 = vld [vmem:[%s317 + $0x4a80] sm:$0xff]
        %v2791 = vld [vmem:[%s317 + $0x4a88] sm:$0xff]
        %v2792 = vld [vmem:[%s317 + $0x4a90] sm:$0xff]
        %v2793 = vld [vmem:[%s317 + $0x4a98] sm:$0xff]
        %v2794 = vld [vmem:[%s317 + $0x4aa0] sm:$0xff]
        %v2795 = vld [vmem:[%s317 + $0x4aa8] sm:$0xff]
        %v2796 = vld [vmem:[%s317 + $0x4ab0] sm:$0xff]
        %v2797 = vld [vmem:[%s317 + $0x4ab8] sm:$0xff]
        %v2798 = vld [vmem:[%s317 + $0x4ac0] sm:$0xff]
        %v2799 = vld [vmem:[%s317 + $0x4ac8] sm:$0xff]
        %v2800 = vld [vmem:[%s317 + $0x4ad0] sm:$0xff]
        %v2801 = vld [vmem:[%s317 + $0x4ad8] sm:$0xff]
        %v2802 = vld [vmem:[%s317 + $0x4ae0] sm:$0xff]
        %v2803 = vld [vmem:[%s317 + $0x4ae8] sm:$0xff]
        %v2804 = vld [vmem:[%s317 + $0x4af0] sm:$0xff]
        %v2805 = vld [vmem:[%s317 + $0x4af8] sm:$0xff]
        %v2806 = vld [vmem:[%s317 + $0x4b00] sm:$0xff]
        %v2807 = vld [vmem:[%s317 + $0x4b08] sm:$0xff]
        %v2808 = vld [vmem:[%s317 + $0x4b10] sm:$0xff]
        %v2809 = vld [vmem:[%s317 + $0x4b18] sm:$0xff]
        %v2810 = vld [vmem:[%s317 + $0x4b20] sm:$0xff]
        %v2811 = vld [vmem:[%s317 + $0x4b28] sm:$0xff]
        %v2812 = vld [vmem:[%s317 + $0x4b30] sm:$0xff]
        %v2813 = vld [vmem:[%s317 + $0x4b38] sm:$0xff]
        %v2814 = vld [vmem:[%s317 + $0x4b40] sm:$0xff]
        %v2815 = vld [vmem:[%s317 + $0x4b48] sm:$0xff]
        %v2816 = vld [vmem:[%s317 + $0x4b50] sm:$0xff]
        %v2817 = vld [vmem:[%s317 + $0x4b58] sm:$0xff]
        %v2818 = vld [vmem:[%s317 + $0x4b60] sm:$0xff]
        %v2819 = vld [vmem:[%s317 + $0x4b68] sm:$0xff]
        %v2820 = vld [vmem:[%s317 + $0x4b70] sm:$0xff]
        %v2821 = vld [vmem:[%s317 + $0x4b78] sm:$0xff]
        %v2822 = vld [vmem:[%s317 + $0x4b80] sm:$0xff]
        %v2823 = vld [vmem:[%s317 + $0x4b88] sm:$0xff]
        %v2824 = vld [vmem:[%s317 + $0x4b90] sm:$0xff]
        %v2825 = vld [vmem:[%s317 + $0x4b98] sm:$0xff]
        %v2826 = vld [vmem:[%s317 + $0x4ba0] sm:$0xff]
        %v2827 = vld [vmem:[%s317 + $0x4ba8] sm:$0xff]
        %v2828 = vld [vmem:[%s317 + $0x4bb0] sm:$0xff]
        %v2829 = vld [vmem:[%s317 + $0x4bb8] sm:$0xff]
        %v2830 = vld [vmem:[%s317 + $0x4bc0] sm:$0xff]
        %v2831 = vld [vmem:[%s317 + $0x4bc8] sm:$0xff]
        %v2832 = vld [vmem:[%s317 + $0x4bd0] sm:$0xff]
        %v2833 = vld [vmem:[%s317 + $0x4bd8] sm:$0xff]
        %v2834 = vld [vmem:[%s317 + $0x4be0] sm:$0xff]
        %v2835 = vld [vmem:[%s317 + $0x4be8] sm:$0xff]
        %v2836 = vld [vmem:[%s317 + $0x4bf0] sm:$0xff]
        %v2837 = vld [vmem:[%s317 + $0x4bf8] sm:$0xff]
        %v2838 = vld [vmem:[%s317 + $0x4c00] sm:$0xff]
        %v2839 = vld [vmem:[%s317 + $0x4c08] sm:$0xff]
        %v2840 = vld [vmem:[%s317 + $0x4c10] sm:$0xff]
        %v2841 = vld [vmem:[%s317 + $0x4c18] sm:$0xff]
        %v2842 = vld [vmem:[%s317 + $0x4c20] sm:$0xff]
        %v2843 = vld [vmem:[%s317 + $0x4c28] sm:$0xff]
        %v2844 = vld [vmem:[%s317 + $0x4c30] sm:$0xff]
        %v2845 = vld [vmem:[%s317 + $0x4c38] sm:$0xff]
        %v2846 = vld [vmem:[%s317 + $0x4c40] sm:$0xff]
        %v2847 = vld [vmem:[%s317 + $0x4c48] sm:$0xff]
        %v2848 = vld [vmem:[%s317 + $0x4c50] sm:$0xff]
        %v2849 = vld [vmem:[%s317 + $0x4c58] sm:$0xff]
        %v2850 = vld [vmem:[%s317 + $0x4c60] sm:$0xff]
        %v2851 = vld [vmem:[%s317 + $0x4c68] sm:$0xff]
        %v2852 = vld [vmem:[%s317 + $0x4c70] sm:$0xff]
        %v2853 = vld [vmem:[%s317 + $0x4c78] sm:$0xff]
        %v2854 = vld [vmem:[%s317 + $0x4c80] sm:$0xff]
        %v2855 = vld [vmem:[%s317 + $0x4c88] sm:$0xff]
        %v2856 = vld [vmem:[%s317 + $0x4c90] sm:$0xff]
        %v2857 = vld [vmem:[%s317 + $0x4c98] sm:$0xff]
        %v2858 = vld [vmem:[%s317 + $0x4ca0] sm:$0xff]
        %v2859 = vld [vmem:[%s317 + $0x4ca8] sm:$0xff]
        %v2860 = vld [vmem:[%s317 + $0x4cb0] sm:$0xff]
        %v2861 = vld [vmem:[%s317 + $0x4cb8] sm:$0xff]
        %v2862 = vld [vmem:[%s317 + $0x4cc0] sm:$0xff]
        %v2863 = vld [vmem:[%s317 + $0x4cc8] sm:$0xff]
        %v2864 = vld [vmem:[%s317 + $0x4cd0] sm:$0xff]
        %v2865 = vld [vmem:[%s317 + $0x4cd8] sm:$0xff]
        %v2866 = vld [vmem:[%s317 + $0x4ce0] sm:$0xff]
        %v2867 = vld [vmem:[%s317 + $0x4ce8] sm:$0xff]
        %v2868 = vld [vmem:[%s317 + $0x4cf0] sm:$0xff]
        %v2869 = vld [vmem:[%s317 + $0x4cf8] sm:$0xff]
        %v2870 = vld [vmem:[%s317 + $0x4d00] sm:$0xff]
        %v2871 = vld [vmem:[%s317 + $0x4d08] sm:$0xff]
        %v2872 = vld [vmem:[%s317 + $0x4d10] sm:$0xff]
        %v2873 = vld [vmem:[%s317 + $0x4d18] sm:$0xff]
        %v2874 = vld [vmem:[%s317 + $0x4d20] sm:$0xff]
        %v2875 = vld [vmem:[%s317 + $0x4d28] sm:$0xff]
        %v2876 = vld [vmem:[%s317 + $0x4d30] sm:$0xff]
        %v2877 = vld [vmem:[%s317 + $0x4d38] sm:$0xff]
        %v2878 = vld [vmem:[%s317 + $0x4d40] sm:$0xff]
        %v2879 = vld [vmem:[%s317 + $0x4d48] sm:$0xff]
        %v2880 = vld [vmem:[%s317 + $0x4d50] sm:$0xff]
        %v2881 = vld [vmem:[%s317 + $0x4d58] sm:$0xff]
        %v2882 = vld [vmem:[%s317 + $0x4d60] sm:$0xff]
        %v2883 = vld [vmem:[%s317 + $0x4d68] sm:$0xff]
        %v2884 = vld [vmem:[%s317 + $0x4d70] sm:$0xff]
        %v2885 = vld [vmem:[%s317 + $0x4d78] sm:$0xff]
        %v2886 = vld [vmem:[%s317 + $0x4d80] sm:$0xff]
        %v2887 = vld [vmem:[%s317 + $0x4d88] sm:$0xff]
        %v2888 = vld [vmem:[%s317 + $0x4d90] sm:$0xff]
        %v2889 = vld [vmem:[%s317 + $0x4d98] sm:$0xff]
        %v2890 = vld [vmem:[%s317 + $0x4da0] sm:$0xff]
        %v2891 = vld [vmem:[%s317 + $0x4da8] sm:$0xff]
        %v2892 = vld [vmem:[%s317 + $0x4db0] sm:$0xff]
        %v2893 = vld [vmem:[%s317 + $0x4db8] sm:$0xff]
        %v2894 = vld [vmem:[%s317 + $0x4dc0] sm:$0xff]
        %v2895 = vld [vmem:[%s317 + $0x4dc8] sm:$0xff]
        %v2896 = vld [vmem:[%s317 + $0x4dd0] sm:$0xff]
        %v2897 = vld [vmem:[%s317 + $0x4dd8] sm:$0xff]
        %v2898 = vld [vmem:[%s317 + $0x4de0] sm:$0xff]
        %v2899 = vld [vmem:[%s317 + $0x4de8] sm:$0xff]
        %v2900 = vld [vmem:[%s317 + $0x4df0] sm:$0xff]
        %v2901 = vld [vmem:[%s317 + $0x4df8] sm:$0xff]
        %v2902 = vld [vmem:[%s317 + $0x4e00] sm:$0xff]
        %v2903 = vld [vmem:[%s317 + $0x4e08] sm:$0xff]
        %v2904 = vld [vmem:[%s317 + $0x4e10] sm:$0xff]
        %v2905 = vld [vmem:[%s317 + $0x4e18] sm:$0xff]
        %v2906 = vld [vmem:[%s317 + $0x4e20] sm:$0xff]
        %v2907 = vld [vmem:[%s317 + $0x4e28] sm:$0xff]
        %v2908 = vld [vmem:[%s317 + $0x4e30] sm:$0xff]
        %v2909 = vld [vmem:[%s317 + $0x4e38] sm:$0xff]
        %v2910 = vld [vmem:[%s317 + $0x4e40] sm:$0xff]
        %v2911 = vld [vmem:[%s317 + $0x4e48] sm:$0xff]
        %v2912 = vld [vmem:[%s317 + $0x4e50] sm:$0xff]
        %v2913 = vld [vmem:[%s317 + $0x4e58] sm:$0xff]
        %v2914 = vld [vmem:[%s317 + $0x4e60] sm:$0xff]
        %v2915 = vld [vmem:[%s317 + $0x4e68] sm:$0xff]
        %v2916 = vld [vmem:[%s317 + $0x4e70] sm:$0xff]
        %v2917 = vld [vmem:[%s317 + $0x4e78] sm:$0xff]
        %v2918 = vld [vmem:[%s317 + $0x4e80] sm:$0xff]
        %v2919 = vld [vmem:[%s317 + $0x4e88] sm:$0xff]
        %v2920 = vld [vmem:[%s317 + $0x4e90] sm:$0xff]
        %v2921 = vld [vmem:[%s317 + $0x4e98] sm:$0xff]
        %v2922 = vld [vmem:[%s317 + $0x4ea0] sm:$0xff]
        %v2923 = vld [vmem:[%s317 + $0x4ea8] sm:$0xff]
        %v2924 = vld [vmem:[%s317 + $0x4eb0] sm:$0xff]
        %v2925 = vld [vmem:[%s317 + $0x4eb8] sm:$0xff]
        %v2926 = vld [vmem:[%s317 + $0x4ec0] sm:$0xff]
        %v2927 = vld [vmem:[%s317 + $0x4ec8] sm:$0xff]
        %v2928 = vld [vmem:[%s317 + $0x4ed0] sm:$0xff]
        %v2929 = vld [vmem:[%s317 + $0x4ed8] sm:$0xff]
        %v2930 = vld [vmem:[%s317 + $0x4ee0] sm:$0xff]
        %v2931 = vld [vmem:[%s317 + $0x4ee8] sm:$0xff]
        %v2932 = vld [vmem:[%s317 + $0x4ef0] sm:$0xff]
        %v2933 = vld [vmem:[%s317 + $0x4ef8] sm:$0xff]
        %v2934 = vld [vmem:[%s317 + $0x4f00] sm:$0xff]
        %v2935 = vld [vmem:[%s317 + $0x4f08] sm:$0xff]
        %v2936 = vld [vmem:[%s317 + $0x4f10] sm:$0xff]
        %v2937 = vld [vmem:[%s317 + $0x4f18] sm:$0xff]
        %v2938 = vld [vmem:[%s317 + $0x4f20] sm:$0xff]
        %v2939 = vld [vmem:[%s317 + $0x4f28] sm:$0xff]
        %v2940 = vld [vmem:[%s317 + $0x4f30] sm:$0xff]
        %v2941 = vld [vmem:[%s317 + $0x4f38] sm:$0xff]
        %v2942 = vld [vmem:[%s317 + $0x4f40] sm:$0xff]
        %v2943 = vld [vmem:[%s317 + $0x4f48] sm:$0xff]
        %v2944 = vld [vmem:[%s317 + $0x4f50] sm:$0xff]
        %v2945 = vld [vmem:[%s317 + $0x4f58] sm:$0xff]
        %v2946 = vld [vmem:[%s317 + $0x4f60] sm:$0xff]
        %v2947 = vld [vmem:[%s317 + $0x4f68] sm:$0xff]
        %v2948 = vld [vmem:[%s317 + $0x4f70] sm:$0xff]
        %v2949 = vld [vmem:[%s317 + $0x4f78] sm:$0xff]
        %v2950 = vld [vmem:[%s317 + $0x4f80] sm:$0xff]
        %v2951 = vld [vmem:[%s317 + $0x4f88] sm:$0xff]
        %v2952 = vld [vmem:[%s317 + $0x4f90] sm:$0xff]
        %v2953 = vld [vmem:[%s317 + $0x4f98] sm:$0xff]
        %v2954 = vld [vmem:[%s317 + $0x4fa0] sm:$0xff]
        %v2955 = vld [vmem:[%s317 + $0x4fa8] sm:$0xff]
        %v2956 = vld [vmem:[%s317 + $0x4fb0] sm:$0xff]
        %v2957 = vld [vmem:[%s317 + $0x4fb8] sm:$0xff]
        %v2958 = vld [vmem:[%s317 + $0x4fc0] sm:$0xff]
        %v2959 = vld [vmem:[%s317 + $0x4fc8] sm:$0xff]
        %v2960 = vld [vmem:[%s317 + $0x4fd0] sm:$0xff]
        %v2961 = vld [vmem:[%s317 + $0x4fd8] sm:$0xff]
        %v2962 = vld [vmem:[%s317 + $0x4fe0] sm:$0xff]
        %v2963 = vld [vmem:[%s317 + $0x4fe8] sm:$0xff]
        %v2964 = vld [vmem:[%s317 + $0x4ff0] sm:$0xff]
        %v2965 = vld [vmem:[%s317 + $0x4ff8] sm:$0xff]
        %v2966 = vld [vmem:[%s317 + $0x5000] sm:$0xff]
        %v2967 = vld [vmem:[%s317 + $0x5008] sm:$0xff]
        %v2968 = vld [vmem:[%s317 + $0x5010] sm:$0xff]
        %v2969 = vld [vmem:[%s317 + $0x5018] sm:$0xff]
        %v2970 = vld [vmem:[%s317 + $0x5020] sm:$0xff]
        %v2971 = vld [vmem:[%s317 + $0x5028] sm:$0xff]
        %v2972 = vld [vmem:[%s317 + $0x5030] sm:$0xff]
        %v2973 = vld [vmem:[%s317 + $0x5038] sm:$0xff]
        %v2974 = vld [vmem:[%s317 + $0x5040] sm:$0xff]
        %v2975 = vld [vmem:[%s317 + $0x5048] sm:$0xff]
        %v2976 = vld [vmem:[%s317 + $0x5050] sm:$0xff]
        %v2977 = vld [vmem:[%s317 + $0x5058] sm:$0xff]
        %v2978 = vld [vmem:[%s317 + $0x5060] sm:$0xff]
        %v2979 = vld [vmem:[%s317 + $0x5068] sm:$0xff]
        %v2980 = vld [vmem:[%s317 + $0x5070] sm:$0xff]
        %v2981 = vld [vmem:[%s317 + $0x5078] sm:$0xff]
        %v2982 = vld [vmem:[%s317 + $0x5080] sm:$0xff]
        %v2983 = vld [vmem:[%s317 + $0x5088] sm:$0xff]
        %v2984 = vld [vmem:[%s317 + $0x5090] sm:$0xff]
        %v2985 = vld [vmem:[%s317 + $0x5098] sm:$0xff]
        %v2986 = vld [vmem:[%s317 + $0x50a0] sm:$0xff]
        %v2987 = vld [vmem:[%s317 + $0x50a8] sm:$0xff]
        %v2988 = vld [vmem:[%s317 + $0x50b0] sm:$0xff]
        %v2989 = vld [vmem:[%s317 + $0x50b8] sm:$0xff]
        %v2990 = vld [vmem:[%s317 + $0x50c0] sm:$0xff]
        %v2991 = vld [vmem:[%s317 + $0x50c8] sm:$0xff]
        %v2992 = vld [vmem:[%s317 + $0x50d0] sm:$0xff]
        %v2993 = vld [vmem:[%s317 + $0x50d8] sm:$0xff]
        %v2994 = vld [vmem:[%s317 + $0x50e0] sm:$0xff]
        %v2995 = vld [vmem:[%s317 + $0x50e8] sm:$0xff]
        %v2996 = vld [vmem:[%s317 + $0x50f0] sm:$0xff]
        %v2997 = vld [vmem:[%s317 + $0x50f8] sm:$0xff]
        %v2998 = vld [vmem:[%s317 + $0x5100] sm:$0xff]
        %v2999 = vld [vmem:[%s317 + $0x5108] sm:$0xff]
        %v3000 = vld [vmem:[%s317 + $0x5110] sm:$0xff]
        %v3001 = vld [vmem:[%s317 + $0x5118] sm:$0xff]
        %v3002 = vld [vmem:[%s317 + $0x5120] sm:$0xff]
        %v3003 = vld [vmem:[%s317 + $0x5128] sm:$0xff]
        %v3004 = vld [vmem:[%s317 + $0x5130] sm:$0xff]
        %v3005 = vld [vmem:[%s317 + $0x5138] sm:$0xff]
        %v3006 = vld [vmem:[%s317 + $0x5140] sm:$0xff]
        %v3007 = vld [vmem:[%s317 + $0x5148] sm:$0xff]
        %v3008 = vld [vmem:[%s317 + $0x5150] sm:$0xff]
        %v3009 = vld [vmem:[%s317 + $0x5158] sm:$0xff]
        %v3010 = vld [vmem:[%s317 + $0x5160] sm:$0xff]
        %v3011 = vld [vmem:[%s317 + $0x5168] sm:$0xff]
        %v3012 = vld [vmem:[%s317 + $0x5170] sm:$0xff]
        %v3013 = vld [vmem:[%s317 + $0x5178] sm:$0xff]
        %v3014 = vld [vmem:[%s317 + $0x5180] sm:$0xff]
        %v3015 = vld [vmem:[%s317 + $0x5188] sm:$0xff]
        %v3016 = vld [vmem:[%s317 + $0x5190] sm:$0xff]
        %v3017 = vld [vmem:[%s317 + $0x5198] sm:$0xff]
        %v3018 = vld [vmem:[%s317 + $0x51a0] sm:$0xff]
        %v3019 = vld [vmem:[%s317 + $0x51a8] sm:$0xff]
        %v3020 = vld [vmem:[%s317 + $0x51b0] sm:$0xff]
        %v3021 = vld [vmem:[%s317 + $0x51b8] sm:$0xff]
        %v3022 = vld [vmem:[%s317 + $0x51c0] sm:$0xff]
        %v3023 = vld [vmem:[%s317 + $0x51c8] sm:$0xff]
        %v3024 = vld [vmem:[%s317 + $0x51d0] sm:$0xff]
        %v3025 = vld [vmem:[%s317 + $0x51d8] sm:$0xff]
        %v3026 = vld [vmem:[%s317 + $0x51e0] sm:$0xff]
        %v3027 = vld [vmem:[%s317 + $0x51e8] sm:$0xff]
        %v3028 = vld [vmem:[%s317 + $0x51f0] sm:$0xff]
        %v3029 = vld [vmem:[%s317 + $0x51f8] sm:$0xff]
        %v3030 = vld [vmem:[%s317 + $0x5200] sm:$0xff]
        %v3031 = vld [vmem:[%s317 + $0x5208] sm:$0xff]
        %v3032 = vld [vmem:[%s317 + $0x5210] sm:$0xff]
        %v3033 = vld [vmem:[%s317 + $0x5218] sm:$0xff]
        %v3034 = vld [vmem:[%s317 + $0x5220] sm:$0xff]
        %v3035 = vld [vmem:[%s317 + $0x5228] sm:$0xff]
        %v3036 = vld [vmem:[%s317 + $0x5230] sm:$0xff]
        %v3037 = vld [vmem:[%s317 + $0x5238] sm:$0xff]
        %v3038 = vld [vmem:[%s317 + $0x5240] sm:$0xff]
        %v3039 = vld [vmem:[%s317 + $0x5248] sm:$0xff]
        %v3040 = vld [vmem:[%s317 + $0x5250] sm:$0xff]
        %v3041 = vld [vmem:[%s317 + $0x5258] sm:$0xff]
        %v3042 = vld [vmem:[%s317 + $0x5260] sm:$0xff]
        %v3043 = vld [vmem:[%s317 + $0x5268] sm:$0xff]
        %v3044 = vld [vmem:[%s317 + $0x5270] sm:$0xff]
        %v3045 = vld [vmem:[%s317 + $0x5278] sm:$0xff]
        %v3046 = vld [vmem:[%s317 + $0x5280] sm:$0xff]
        %v3047 = vld [vmem:[%s317 + $0x5288] sm:$0xff]
        %v3048 = vld [vmem:[%s317 + $0x5290] sm:$0xff]
        %v3049 = vld [vmem:[%s317 + $0x5298] sm:$0xff]
        %v3050 = vld [vmem:[%s317 + $0x52a0] sm:$0xff]
        %v3051 = vld [vmem:[%s317 + $0x52a8] sm:$0xff]
        %v3052 = vld [vmem:[%s317 + $0x52b0] sm:$0xff]
        %v3053 = vld [vmem:[%s317 + $0x52b8] sm:$0xff]
        %v3054 = vld [vmem:[%s317 + $0x52c0] sm:$0xff]
        %v3055 = vld [vmem:[%s317 + $0x52c8] sm:$0xff]
        %v3056 = vld [vmem:[%s317 + $0x52d0] sm:$0xff]
        %v3057 = vld [vmem:[%s317 + $0x52d8] sm:$0xff]
        %v3058 = vld [vmem:[%s317 + $0x52e0] sm:$0xff]
        %v3059 = vld [vmem:[%s317 + $0x52e8] sm:$0xff]
        %v3060 = vld [vmem:[%s317 + $0x52f0] sm:$0xff]
        %v3061 = vld [vmem:[%s317 + $0x52f8] sm:$0xff]
        %v3062 = vld [vmem:[%s317 + $0x5300] sm:$0xff]
        %v3063 = vld [vmem:[%s317 + $0x5308] sm:$0xff]
        %v3064 = vld [vmem:[%s317 + $0x5310] sm:$0xff]
        %v3065 = vld [vmem:[%s317 + $0x5318] sm:$0xff]
        %v3066 = vld [vmem:[%s317 + $0x5320] sm:$0xff]
        %v3067 = vld [vmem:[%s317 + $0x5328] sm:$0xff]
        %v3068 = vld [vmem:[%s317 + $0x5330] sm:$0xff]
        %v3069 = vld [vmem:[%s317 + $0x5338] sm:$0xff]
        %v3070 = vld [vmem:[%s317 + $0x5340] sm:$0xff]
        %v3071 = vld [vmem:[%s317 + $0x5348] sm:$0xff]
        %v3072 = vld [vmem:[%s317 + $0x5350] sm:$0xff]
        %v3073 = vld [vmem:[%s317 + $0x5358] sm:$0xff]
        %v3074 = vld [vmem:[%s317 + $0x5360] sm:$0xff]
        %v3075 = vld [vmem:[%s317 + $0x5368] sm:$0xff]
        %v3076 = vld [vmem:[%s317 + $0x5370] sm:$0xff]
        %v3077 = vld [vmem:[%s317 + $0x5378] sm:$0xff]
        %v3078 = vld [vmem:[%s317 + $0x5380] sm:$0xff]
        %v3079 = vld [vmem:[%s317 + $0x5388] sm:$0xff]
        %v3080 = vld [vmem:[%s317 + $0x5390] sm:$0xff]
        %v3081 = vld [vmem:[%s317 + $0x5398] sm:$0xff]
        %v3082 = vld [vmem:[%s317 + $0x53a0] sm:$0xff]
        %v3083 = vld [vmem:[%s317 + $0x53a8] sm:$0xff]
        %v3084 = vld [vmem:[%s317 + $0x53b0] sm:$0xff]
        %v3085 = vld [vmem:[%s317 + $0x53b8] sm:$0xff]
        %v3086 = vld [vmem:[%s317 + $0x53c0] sm:$0xff]
        %v3087 = vld [vmem:[%s317 + $0x53c8] sm:$0xff]
        %v3088 = vld [vmem:[%s317 + $0x53d0] sm:$0xff]
        %v3089 = vld [vmem:[%s317 + $0x53d8] sm:$0xff]
        %v3090 = vld [vmem:[%s317 + $0x53e0] sm:$0xff]
        %v3091 = vld [vmem:[%s317 + $0x53e8] sm:$0xff]
        %v3092 = vld [vmem:[%s317 + $0x53f0] sm:$0xff]
        %v3093 = vld [vmem:[%s317 + $0x53f8] sm:$0xff]
        %v3094 = vld [vmem:[%s317 + $0x5400] sm:$0xff]
        %v3095 = vld [vmem:[%s317 + $0x5408] sm:$0xff]
        %v3096 = vld [vmem:[%s317 + $0x5410] sm:$0xff]
        %v3097 = vld [vmem:[%s317 + $0x5418] sm:$0xff]
        %v3098 = vld [vmem:[%s317 + $0x5420] sm:$0xff]
        %v3099 = vld [vmem:[%s317 + $0x5428] sm:$0xff]
        %v3100 = vld [vmem:[%s317 + $0x5430] sm:$0xff]
        %v3101 = vld [vmem:[%s317 + $0x5438] sm:$0xff]
        %v3102 = vld [vmem:[%s317 + $0x5440] sm:$0xff]
        %v3103 = vld [vmem:[%s317 + $0x5448] sm:$0xff]
        %v3104 = vld [vmem:[%s317 + $0x5450] sm:$0xff]
        %v3105 = vld [vmem:[%s317 + $0x5458] sm:$0xff]
        %v3106 = vld [vmem:[%s317 + $0x5460] sm:$0xff]
        %v3107 = vld [vmem:[%s317 + $0x5468] sm:$0xff]
        %v3108 = vld [vmem:[%s317 + $0x5470] sm:$0xff]
        %v3109 = vld [vmem:[%s317 + $0x5478] sm:$0xff]
        %v3110 = vld [vmem:[%s317 + $0x5480] sm:$0xff]
        %v3111 = vld [vmem:[%s317 + $0x5488] sm:$0xff]
        %v3112 = vld [vmem:[%s317 + $0x5490] sm:$0xff]
        %v3113 = vld [vmem:[%s317 + $0x5498] sm:$0xff]
        %v3114 = vld [vmem:[%s317 + $0x54a0] sm:$0xff]
        %v3115 = vld [vmem:[%s317 + $0x54a8] sm:$0xff]
        %v3116 = vld [vmem:[%s317 + $0x54b0] sm:$0xff]
        %v3117 = vld [vmem:[%s317 + $0x54b8] sm:$0xff]
        %v3118 = vld [vmem:[%s317 + $0x54c0] sm:$0xff]
        %v3119 = vld [vmem:[%s317 + $0x54c8] sm:$0xff]
        %v3120 = vld [vmem:[%s317 + $0x54d0] sm:$0xff]
        %v3121 = vld [vmem:[%s317 + $0x54d8] sm:$0xff]
        %v3122 = vld [vmem:[%s317 + $0x54e0] sm:$0xff]
        %v3123 = vld [vmem:[%s317 + $0x54e8] sm:$0xff]
        %v3124 = vld [vmem:[%s317 + $0x54f0] sm:$0xff]
        %v3125 = vld [vmem:[%s317 + $0x54f8] sm:$0xff]
        %v3126 = vld [vmem:[%s317 + $0x5500] sm:$0xff]
        %v3127 = vld [vmem:[%s317 + $0x5508] sm:$0xff]
        %v3128 = vld [vmem:[%s317 + $0x5510] sm:$0xff]
        %v3129 = vld [vmem:[%s317 + $0x5518] sm:$0xff]
        %v3130 = vld [vmem:[%s317 + $0x5520] sm:$0xff]
        %v3131 = vld [vmem:[%s317 + $0x5528] sm:$0xff]
        %v3132 = vld [vmem:[%s317 + $0x5530] sm:$0xff]
        %v3133 = vld [vmem:[%s317 + $0x5538] sm:$0xff]
        %v3134 = vld [vmem:[%s317 + $0x5540] sm:$0xff]
        %v3135 = vld [vmem:[%s317 + $0x5548] sm:$0xff]
        %v3136 = vld [vmem:[%s317 + $0x5550] sm:$0xff]
        %v3137 = vld [vmem:[%s317 + $0x5558] sm:$0xff]
        %v3138 = vld [vmem:[%s317 + $0x5560] sm:$0xff]
        %v3139 = vld [vmem:[%s317 + $0x5568] sm:$0xff]
        %v3140 = vld [vmem:[%s317 + $0x5570] sm:$0xff]
        %v3141 = vld [vmem:[%s317 + $0x5578] sm:$0xff]
        %v3142 = vld [vmem:[%s317 + $0x5580] sm:$0xff]
        %v3143 = vld [vmem:[%s317 + $0x5588] sm:$0xff]
        %v3144 = vld [vmem:[%s317 + $0x5590] sm:$0xff]
        %v3145 = vld [vmem:[%s317 + $0x5598] sm:$0xff]
        %v3146 = vld [vmem:[%s317 + $0x55a0] sm:$0xff]
        %v3147 = vld [vmem:[%s317 + $0x55a8] sm:$0xff]
        %v3148 = vld [vmem:[%s317 + $0x55b0] sm:$0xff]
        %v3149 = vld [vmem:[%s317 + $0x55b8] sm:$0xff]
        %v3150 = vld [vmem:[%s317 + $0x55c0] sm:$0xff]
        %v3151 = vld [vmem:[%s317 + $0x55c8] sm:$0xff]
        %v3152 = vld [vmem:[%s317 + $0x55d0] sm:$0xff]
        %v3153 = vld [vmem:[%s317 + $0x55d8] sm:$0xff]
        %v3154 = vld [vmem:[%s317 + $0x55e0] sm:$0xff]
        %v3155 = vld [vmem:[%s317 + $0x55e8] sm:$0xff]
        %v3156 = vld [vmem:[%s317 + $0x55f0] sm:$0xff]
        %v3157 = vld [vmem:[%s317 + $0x55f8] sm:$0xff]
        %v3158 = vld [vmem:[%s317 + $0x5600] sm:$0xff]
        %v3159 = vld [vmem:[%s317 + $0x5608] sm:$0xff]
        %v3160 = vld [vmem:[%s317 + $0x5610] sm:$0xff]
        %v3161 = vld [vmem:[%s317 + $0x5618] sm:$0xff]
        %v3162 = vld [vmem:[%s317 + $0x5620] sm:$0xff]
        %v3163 = vld [vmem:[%s317 + $0x5628] sm:$0xff]
        %v3164 = vld [vmem:[%s317 + $0x5630] sm:$0xff]
        %v3165 = vld [vmem:[%s317 + $0x5638] sm:$0xff]
        %v3166 = vld [vmem:[%s317 + $0x5640] sm:$0xff]
        %v3167 = vld [vmem:[%s317 + $0x5648] sm:$0xff]
        %v3168 = vld [vmem:[%s317 + $0x5650] sm:$0xff]
        %v3169 = vld [vmem:[%s317 + $0x5658] sm:$0xff]
        %v3170 = vld [vmem:[%s317 + $0x5660] sm:$0xff]
        %v3171 = vld [vmem:[%s317 + $0x5668] sm:$0xff]
        %v3172 = vld [vmem:[%s317 + $0x5670] sm:$0xff]
        %v3173 = vld [vmem:[%s317 + $0x5678] sm:$0xff]
        %v3174 = vld [vmem:[%s317 + $0x5680] sm:$0xff]
        %v3175 = vld [vmem:[%s317 + $0x5688] sm:$0xff]
        %v3176 = vld [vmem:[%s317 + $0x5690] sm:$0xff]
        %v3177 = vld [vmem:[%s317 + $0x5698] sm:$0xff]
        %v3178 = vld [vmem:[%s317 + $0x56a0] sm:$0xff]
        %v3179 = vld [vmem:[%s317 + $0x56a8] sm:$0xff]
        %v3180 = vld [vmem:[%s317 + $0x56b0] sm:$0xff]
        %v3181 = vld [vmem:[%s317 + $0x56b8] sm:$0xff]
        %v3182 = vld [vmem:[%s317 + $0x56c0] sm:$0xff]
        %v3183 = vld [vmem:[%s317 + $0x56c8] sm:$0xff]
        %v3184 = vld [vmem:[%s317 + $0x56d0] sm:$0xff]
        %v3185 = vld [vmem:[%s317 + $0x56d8] sm:$0xff]
        %v3186 = vld [vmem:[%s317 + $0x56e0] sm:$0xff]
        %v3187 = vld [vmem:[%s317 + $0x56e8] sm:$0xff]
        %v3188 = vld [vmem:[%s317 + $0x56f0] sm:$0xff]
        %v3189 = vld [vmem:[%s317 + $0x56f8] sm:$0xff]
        %v3190 = vld [vmem:[%s317 + $0x5700] sm:$0xff]
        %v3191 = vld [vmem:[%s317 + $0x5708] sm:$0xff]
        %v3192 = vld [vmem:[%s317 + $0x5710] sm:$0xff]
        %v3193 = vld [vmem:[%s317 + $0x5718] sm:$0xff]
        %v3194 = vld [vmem:[%s317 + $0x5720] sm:$0xff]
        %v3195 = vld [vmem:[%s317 + $0x5728] sm:$0xff]
        %v3196 = vld [vmem:[%s317 + $0x5730] sm:$0xff]
        %v3197 = vld [vmem:[%s317 + $0x5738] sm:$0xff]
        %v3198 = vld [vmem:[%s317 + $0x5740] sm:$0xff]
        %v3199 = vld [vmem:[%s317 + $0x5748] sm:$0xff]
        %v3200 = vld [vmem:[%s317 + $0x5750] sm:$0xff]
        %v3201 = vld [vmem:[%s317 + $0x5758] sm:$0xff]
        %v3202 = vld [vmem:[%s317 + $0x5760] sm:$0xff]
        %v3203 = vld [vmem:[%s317 + $0x5768] sm:$0xff]
        %v3204 = vld [vmem:[%s317 + $0x5770] sm:$0xff]
        %v3205 = vld [vmem:[%s317 + $0x5778] sm:$0xff]
        %v3206 = vld [vmem:[%s317 + $0x5780] sm:$0xff]
        %v3207 = vld [vmem:[%s317 + $0x5788] sm:$0xff]
        %v3208 = vld [vmem:[%s317 + $0x5790] sm:$0xff]
        %v3209 = vld [vmem:[%s317 + $0x5798] sm:$0xff]
        %v3210 = vld [vmem:[%s317 + $0x57a0] sm:$0xff]
        %v3211 = vld [vmem:[%s317 + $0x57a8] sm:$0xff]
        %v3212 = vld [vmem:[%s317 + $0x57b0] sm:$0xff]
        %v3213 = vld [vmem:[%s317 + $0x57b8] sm:$0xff]
        %v3214 = vld [vmem:[%s317 + $0x57c0] sm:$0xff]
        %v3215 = vld [vmem:[%s317 + $0x57c8] sm:$0xff]
        %v3216 = vld [vmem:[%s317 + $0x57d0] sm:$0xff]
        %v3217 = vld [vmem:[%s317 + $0x57d8] sm:$0xff]
        %v3218 = vld [vmem:[%s317 + $0x57e0] sm:$0xff]
        %v3219 = vld [vmem:[%s317 + $0x57e8] sm:$0xff]
        %v3220 = vld [vmem:[%s317 + $0x57f0] sm:$0xff]
        %v3221 = vld [vmem:[%s317 + $0x57f8] sm:$0xff]
        %v3222 = vld [vmem:[%s317 + $0x5800] sm:$0xff]
        %v3223 = vld [vmem:[%s317 + $0x5808] sm:$0xff]
        %v3224 = vld [vmem:[%s317 + $0x5810] sm:$0xff]
        %v3225 = vld [vmem:[%s317 + $0x5818] sm:$0xff]
        %v3226 = vld [vmem:[%s317 + $0x5820] sm:$0xff]
        %v3227 = vld [vmem:[%s317 + $0x5828] sm:$0xff]
        %v3228 = vld [vmem:[%s317 + $0x5830] sm:$0xff]
        %v3229 = vld [vmem:[%s317 + $0x5838] sm:$0xff]
        %v3230 = vld [vmem:[%s317 + $0x5840] sm:$0xff]
        %v3231 = vld [vmem:[%s317 + $0x5848] sm:$0xff]
        %v3232 = vld [vmem:[%s317 + $0x5850] sm:$0xff]
        %v3233 = vld [vmem:[%s317 + $0x5858] sm:$0xff]
        %v3234 = vld [vmem:[%s317 + $0x5860] sm:$0xff]
        %v3235 = vld [vmem:[%s317 + $0x5868] sm:$0xff]
        %v3236 = vld [vmem:[%s317 + $0x5870] sm:$0xff]
        %v3237 = vld [vmem:[%s317 + $0x5878] sm:$0xff]
        %v3238 = vld [vmem:[%s317 + $0x5880] sm:$0xff]
        %v3239 = vld [vmem:[%s317 + $0x5888] sm:$0xff]
        %v3240 = vld [vmem:[%s317 + $0x5890] sm:$0xff]
        %v3241 = vld [vmem:[%s317 + $0x5898] sm:$0xff]
        %v3242 = vld [vmem:[%s317 + $0x58a0] sm:$0xff]
        %v3243 = vld [vmem:[%s317 + $0x58a8] sm:$0xff]
        %v3244 = vld [vmem:[%s317 + $0x58b0] sm:$0xff]
        %v3245 = vld [vmem:[%s317 + $0x58b8] sm:$0xff]
        %v3246 = vld [vmem:[%s317 + $0x58c0] sm:$0xff]
        %v3247 = vld [vmem:[%s317 + $0x58c8] sm:$0xff]
        %v3248 = vld [vmem:[%s317 + $0x58d0] sm:$0xff]
        %v3249 = vld [vmem:[%s317 + $0x58d8] sm:$0xff]
        %v3250 = vld [vmem:[%s317 + $0x58e0] sm:$0xff]
        %v3251 = vld [vmem:[%s317 + $0x58e8] sm:$0xff]
        %v3252 = vld [vmem:[%s317 + $0x58f0] sm:$0xff]
        %v3253 = vld [vmem:[%s317 + $0x58f8] sm:$0xff]
        %v3254 = vld [vmem:[%s317 + $0x5900] sm:$0xff]
        %v3255 = vld [vmem:[%s317 + $0x5908] sm:$0xff]
        %v3256 = vld [vmem:[%s317 + $0x5910] sm:$0xff]
        %v3257 = vld [vmem:[%s317 + $0x5918] sm:$0xff]
        %v3258 = vld [vmem:[%s317 + $0x5920] sm:$0xff]
        %v3259 = vld [vmem:[%s317 + $0x5928] sm:$0xff]
        %v3260 = vld [vmem:[%s317 + $0x5930] sm:$0xff]
        %v3261 = vld [vmem:[%s317 + $0x5938] sm:$0xff]
        %v3262 = vld [vmem:[%s317 + $0x5940] sm:$0xff]
        %v3263 = vld [vmem:[%s317 + $0x5948] sm:$0xff]
        %v3264 = vld [vmem:[%s317 + $0x5950] sm:$0xff]
        %v3265 = vld [vmem:[%s317 + $0x5958] sm:$0xff]
        %v3266 = vld [vmem:[%s317 + $0x5960] sm:$0xff]
        %v3267 = vld [vmem:[%s317 + $0x5968] sm:$0xff]
        %v3268 = vld [vmem:[%s317 + $0x5970] sm:$0xff]
        %v3269 = vld [vmem:[%s317 + $0x5978] sm:$0xff]
        %v3270 = vld [vmem:[%s317 + $0x5980] sm:$0xff]
        %v3271 = vld [vmem:[%s317 + $0x5988] sm:$0xff]
        %v3272 = vld [vmem:[%s317 + $0x5990] sm:$0xff]
        %v3273 = vld [vmem:[%s317 + $0x5998] sm:$0xff]
        %v3274 = vld [vmem:[%s317 + $0x59a0] sm:$0xff]
        %v3275 = vld [vmem:[%s317 + $0x59a8] sm:$0xff]
        %v3276 = vld [vmem:[%s317 + $0x59b0] sm:$0xff]
        %v3277 = vld [vmem:[%s317 + $0x59b8] sm:$0xff]
        %v3278 = vld [vmem:[%s317 + $0x59c0] sm:$0xff]
        %v3279 = vld [vmem:[%s317 + $0x59c8] sm:$0xff]
        %v3280 = vld [vmem:[%s317 + $0x59d0] sm:$0xff]
        %v3281 = vld [vmem:[%s317 + $0x59d8] sm:$0xff]
        %v3282 = vld [vmem:[%s317 + $0x59e0] sm:$0xff]
        %v3283 = vld [vmem:[%s317 + $0x59e8] sm:$0xff]
        %v3284 = vld [vmem:[%s317 + $0x59f0] sm:$0xff]
        %v3285 = vld [vmem:[%s317 + $0x59f8] sm:$0xff]
        %v3286 = vld [vmem:[%s317 + $0x5a00] sm:$0xff]
        %v3287 = vld [vmem:[%s317 + $0x5a08] sm:$0xff]
        %v3288 = vld [vmem:[%s317 + $0x5a10] sm:$0xff]
        %v3289 = vld [vmem:[%s317 + $0x5a18] sm:$0xff]
        %v3290 = vld [vmem:[%s317 + $0x5a20] sm:$0xff]
        %v3291 = vld [vmem:[%s317 + $0x5a28] sm:$0xff]
        %v3292 = vld [vmem:[%s317 + $0x5a30] sm:$0xff]
        %v3293 = vld [vmem:[%s317 + $0x5a38] sm:$0xff]
        %v3294 = vld [vmem:[%s317 + $0x5a40] sm:$0xff]
        %v3295 = vld [vmem:[%s317 + $0x5a48] sm:$0xff]
        %v3296 = vld [vmem:[%s317 + $0x5a50] sm:$0xff]
        %v3297 = vld [vmem:[%s317 + $0x5a58] sm:$0xff]
        %v3298 = vld [vmem:[%s317 + $0x5a60] sm:$0xff]
        %v3299 = vld [vmem:[%s317 + $0x5a68] sm:$0xff]
        %v3300 = vld [vmem:[%s317 + $0x5a70] sm:$0xff]
        %v3301 = vld [vmem:[%s317 + $0x5a78] sm:$0xff]
        %v3302 = vld [vmem:[%s317 + $0x5a80] sm:$0xff]
        %v3303 = vld [vmem:[%s317 + $0x5a88] sm:$0xff]
        %v3304 = vld [vmem:[%s317 + $0x5a90] sm:$0xff]
        %v3305 = vld [vmem:[%s317 + $0x5a98] sm:$0xff]
        %v3306 = vld [vmem:[%s317 + $0x5aa0] sm:$0xff]
        %v3307 = vld [vmem:[%s317 + $0x5aa8] sm:$0xff]
        %v3308 = vld [vmem:[%s317 + $0x5ab0] sm:$0xff]
        %v3309 = vld [vmem:[%s317 + $0x5ab8] sm:$0xff]
        %v3310 = vld [vmem:[%s317 + $0x5ac0] sm:$0xff]
        %v3311 = vld [vmem:[%s317 + $0x5ac8] sm:$0xff]
        %v3312 = vld [vmem:[%s317 + $0x5ad0] sm:$0xff]
        %v3313 = vld [vmem:[%s317 + $0x5ad8] sm:$0xff]
        %v3314 = vld [vmem:[%s317 + $0x5ae0] sm:$0xff]
        %v3315 = vld [vmem:[%s317 + $0x5ae8] sm:$0xff]
        %v3316 = vld [vmem:[%s317 + $0x5af0] sm:$0xff]
        %v3317 = vld [vmem:[%s317 + $0x5af8] sm:$0xff]
        %v3318 = vld [vmem:[%s317 + $0x5b00] sm:$0xff]
        %v3319 = vld [vmem:[%s317 + $0x5b08] sm:$0xff]
        %v3320 = vld [vmem:[%s317 + $0x5b10] sm:$0xff]
        %v3321 = vld [vmem:[%s317 + $0x5b18] sm:$0xff]
        %v3322 = vld [vmem:[%s317 + $0x5b20] sm:$0xff]
        %v3323 = vld [vmem:[%s317 + $0x5b28] sm:$0xff]
        %v3324 = vld [vmem:[%s317 + $0x5b30] sm:$0xff]
        %v3325 = vld [vmem:[%s317 + $0x5b38] sm:$0xff]
        %v3326 = vld [vmem:[%s317 + $0x5b40] sm:$0xff]
        %v3327 = vld [vmem:[%s317 + $0x5b48] sm:$0xff]
        %v3328 = vld [vmem:[%s317 + $0x5b50] sm:$0xff]
        %v3329 = vld [vmem:[%s317 + $0x5b58] sm:$0xff]
        %v3330 = vld [vmem:[%s317 + $0x5b60] sm:$0xff]
        %v3331 = vld [vmem:[%s317 + $0x5b68] sm:$0xff]
        %v3332 = vld [vmem:[%s317 + $0x5b70] sm:$0xff]
        %v3333 = vld [vmem:[%s317 + $0x5b78] sm:$0xff]
        %v3334 = vld [vmem:[%s317 + $0x5b80] sm:$0xff]
        %v3335 = vld [vmem:[%s317 + $0x5b88] sm:$0xff]
        %v3336 = vld [vmem:[%s317 + $0x5b90] sm:$0xff]
        %v3337 = vld [vmem:[%s317 + $0x5b98] sm:$0xff]
        %v3338 = vld [vmem:[%s317 + $0x5ba0] sm:$0xff]
        %v3339 = vld [vmem:[%s317 + $0x5ba8] sm:$0xff]
        %v3340 = vld [vmem:[%s317 + $0x5bb0] sm:$0xff]
        %v3341 = vld [vmem:[%s317 + $0x5bb8] sm:$0xff]
        %v3342 = vld [vmem:[%s317 + $0x5bc0] sm:$0xff]
        %v3343 = vld [vmem:[%s317 + $0x5bc8] sm:$0xff]
        %v3344 = vld [vmem:[%s317 + $0x5bd0] sm:$0xff]
        %v3345 = vld [vmem:[%s317 + $0x5bd8] sm:$0xff]
        %v3346 = vld [vmem:[%s317 + $0x5be0] sm:$0xff]
        %v3347 = vld [vmem:[%s317 + $0x5be8] sm:$0xff]
        %v3348 = vld [vmem:[%s317 + $0x5bf0] sm:$0xff]
        %v3349 = vld [vmem:[%s317 + $0x5bf8] sm:$0xff]
        %v3350 = vld [vmem:[%s317 + $0x5c00] sm:$0xff]
        %v3351 = vld [vmem:[%s317 + $0x5c08] sm:$0xff]
        %v3352 = vld [vmem:[%s317 + $0x5c10] sm:$0xff]
        %v3353 = vld [vmem:[%s317 + $0x5c18] sm:$0xff]
        %v3354 = vld [vmem:[%s317 + $0x5c20] sm:$0xff]
        %v3355 = vld [vmem:[%s317 + $0x5c28] sm:$0xff]
        %v3356 = vld [vmem:[%s317 + $0x5c30] sm:$0xff]
        %v3357 = vld [vmem:[%s317 + $0x5c38] sm:$0xff]
        %v3358 = vld [vmem:[%s317 + $0x5c40] sm:$0xff]
        %v3359 = vld [vmem:[%s317 + $0x5c48] sm:$0xff]
        %v3360 = vld [vmem:[%s317 + $0x5c50] sm:$0xff]
        %v3361 = vld [vmem:[%s317 + $0x5c58] sm:$0xff]
        %v3362 = vld [vmem:[%s317 + $0x5c60] sm:$0xff]
        %v3363 = vld [vmem:[%s317 + $0x5c68] sm:$0xff]
        %v3364 = vld [vmem:[%s317 + $0x5c70] sm:$0xff]
        %v3365 = vld [vmem:[%s317 + $0x5c78] sm:$0xff]
        %v3366 = vld [vmem:[%s317 + $0x5c80] sm:$0xff]
        %v3367 = vld [vmem:[%s317 + $0x5c88] sm:$0xff]
        %v3368 = vld [vmem:[%s317 + $0x5c90] sm:$0xff]
        %v3369 = vld [vmem:[%s317 + $0x5c98] sm:$0xff]
        %v3370 = vld [vmem:[%s317 + $0x5ca0] sm:$0xff]
        %v3371 = vld [vmem:[%s317 + $0x5ca8] sm:$0xff]
        %v3372 = vld [vmem:[%s317 + $0x5cb0] sm:$0xff]
        %v3373 = vld [vmem:[%s317 + $0x5cb8] sm:$0xff]
        %v3374 = vld [vmem:[%s317 + $0x5cc0] sm:$0xff]
        %v3375 = vld [vmem:[%s317 + $0x5cc8] sm:$0xff]
        %v3376 = vld [vmem:[%s317 + $0x5cd0] sm:$0xff]
        %v3377 = vld [vmem:[%s317 + $0x5cd8] sm:$0xff]
        %v3378 = vld [vmem:[%s317 + $0x5ce0] sm:$0xff]
        %v3379 = vld [vmem:[%s317 + $0x5ce8] sm:$0xff]
        %v3380 = vld [vmem:[%s317 + $0x5cf0] sm:$0xff]
        %v3381 = vld [vmem:[%s317 + $0x5cf8] sm:$0xff]
        %v3382 = vld [vmem:[%s317 + $0x5d00] sm:$0xff]
        %v3383 = vld [vmem:[%s317 + $0x5d08] sm:$0xff]
        %v3384 = vld [vmem:[%s317 + $0x5d10] sm:$0xff]
        %v3385 = vld [vmem:[%s317 + $0x5d18] sm:$0xff]
        %v3386 = vld [vmem:[%s317 + $0x5d20] sm:$0xff]
        %v3387 = vld [vmem:[%s317 + $0x5d28] sm:$0xff]
        %v3388 = vld [vmem:[%s317 + $0x5d30] sm:$0xff]
        %v3389 = vld [vmem:[%s317 + $0x5d38] sm:$0xff]
        %v3390 = vld [vmem:[%s317 + $0x5d40] sm:$0xff]
        %v3391 = vld [vmem:[%s317 + $0x5d48] sm:$0xff]
        %v3392 = vld [vmem:[%s317 + $0x5d50] sm:$0xff]
        %v3393 = vld [vmem:[%s317 + $0x5d58] sm:$0xff]
        %v3394 = vld [vmem:[%s317 + $0x5d60] sm:$0xff]
        %v3395 = vld [vmem:[%s317 + $0x5d68] sm:$0xff]
        %v3396 = vld [vmem:[%s317 + $0x5d70] sm:$0xff]
        %v3397 = vld [vmem:[%s317 + $0x5d78] sm:$0xff]
        %v3398 = vld [vmem:[%s317 + $0x5d80] sm:$0xff]
        %v3399 = vld [vmem:[%s317 + $0x5d88] sm:$0xff]
        %v3400 = vld [vmem:[%s317 + $0x5d90] sm:$0xff]
        %v3401 = vld [vmem:[%s317 + $0x5d98] sm:$0xff]
        %v3402 = vld [vmem:[%s317 + $0x5da0] sm:$0xff]
        %v3403 = vld [vmem:[%s317 + $0x5da8] sm:$0xff]
        %v3404 = vld [vmem:[%s317 + $0x5db0] sm:$0xff]
        %v3405 = vld [vmem:[%s317 + $0x5db8] sm:$0xff]
        %v3406 = vld [vmem:[%s317 + $0x5dc0] sm:$0xff]
        %v3407 = vld [vmem:[%s317 + $0x5dc8] sm:$0xff]
        %v3408 = vld [vmem:[%s317 + $0x5dd0] sm:$0xff]
        %v3409 = vld [vmem:[%s317 + $0x5dd8] sm:$0xff]
        %v3410 = vld [vmem:[%s317 + $0x5de0] sm:$0xff]
        %v3411 = vld [vmem:[%s317 + $0x5de8] sm:$0xff]
        %v3412 = vld [vmem:[%s317 + $0x5df0] sm:$0xff]
        %v3413 = vld [vmem:[%s317 + $0x5df8] sm:$0xff]
        %v3414 = vld [vmem:[%s317 + $0x5e00] sm:$0xff]
        %v3415 = vld [vmem:[%s317 + $0x5e08] sm:$0xff]
        %v3416 = vld [vmem:[%s317 + $0x5e10] sm:$0xff]
        %v3417 = vld [vmem:[%s317 + $0x5e18] sm:$0xff]
        %v3418 = vld [vmem:[%s317 + $0x5e20] sm:$0xff]
        %v3419 = vld [vmem:[%s317 + $0x5e28] sm:$0xff]
        %v3420 = vld [vmem:[%s317 + $0x5e30] sm:$0xff]
        %v3421 = vld [vmem:[%s317 + $0x5e38] sm:$0xff]
        %v3422 = vld [vmem:[%s317 + $0x5e40] sm:$0xff]
        %v3423 = vld [vmem:[%s317 + $0x5e48] sm:$0xff]
        %v3424 = vld [vmem:[%s317 + $0x5e50] sm:$0xff]
        %v3425 = vld [vmem:[%s317 + $0x5e58] sm:$0xff]
        %v3426 = vld [vmem:[%s317 + $0x5e60] sm:$0xff]
        %v3427 = vld [vmem:[%s317 + $0x5e68] sm:$0xff]
        %v3428 = vld [vmem:[%s317 + $0x5e70] sm:$0xff]
        %v3429 = vld [vmem:[%s317 + $0x5e78] sm:$0xff]
        %v3430 = vld [vmem:[%s317 + $0x5e80] sm:$0xff]
        %v3431 = vld [vmem:[%s317 + $0x5e88] sm:$0xff]
        %v3432 = vld [vmem:[%s317 + $0x5e90] sm:$0xff]
        %v3433 = vld [vmem:[%s317 + $0x5e98] sm:$0xff]
        %v3434 = vld [vmem:[%s317 + $0x5ea0] sm:$0xff]
        %v3435 = vld [vmem:[%s317 + $0x5ea8] sm:$0xff]
        %v3436 = vld [vmem:[%s317 + $0x5eb0] sm:$0xff]
        %v3437 = vld [vmem:[%s317 + $0x5eb8] sm:$0xff]
        %v3438 = vld [vmem:[%s317 + $0x5ec0] sm:$0xff]
        %v3439 = vld [vmem:[%s317 + $0x5ec8] sm:$0xff]
        %v3440 = vld [vmem:[%s317 + $0x5ed0] sm:$0xff]
        %v3441 = vld [vmem:[%s317 + $0x5ed8] sm:$0xff]
        %v3442 = vld [vmem:[%s317 + $0x5ee0] sm:$0xff]
        %v3443 = vld [vmem:[%s317 + $0x5ee8] sm:$0xff]
        %v3444 = vld [vmem:[%s317 + $0x5ef0] sm:$0xff]
        %v3445 = vld [vmem:[%s317 + $0x5ef8] sm:$0xff]
        %v3446 = vld [vmem:[%s317 + $0x5f00] sm:$0xff]
        %v3447 = vld [vmem:[%s317 + $0x5f08] sm:$0xff]
        %v3448 = vld [vmem:[%s317 + $0x5f10] sm:$0xff]
        %v3449 = vld [vmem:[%s317 + $0x5f18] sm:$0xff]
        %v3450 = vld [vmem:[%s317 + $0x5f20] sm:$0xff]
        %v3451 = vld [vmem:[%s317 + $0x5f28] sm:$0xff]
        %v3452 = vld [vmem:[%s317 + $0x5f30] sm:$0xff]
        %v3453 = vld [vmem:[%s317 + $0x5f38] sm:$0xff]
        %v3454 = vld [vmem:[%s317 + $0x5f40] sm:$0xff]
        %v3455 = vld [vmem:[%s317 + $0x5f48] sm:$0xff]
        %v3456 = vld [vmem:[%s317 + $0x5f50] sm:$0xff]
        %v3457 = vld [vmem:[%s317 + $0x5f58] sm:$0xff]
        %v3458 = vld [vmem:[%s317 + $0x5f60] sm:$0xff]
        %v3459 = vld [vmem:[%s317 + $0x5f68] sm:$0xff]
        %v3460 = vld [vmem:[%s317 + $0x5f70] sm:$0xff]
        %v3461 = vld [vmem:[%s317 + $0x5f78] sm:$0xff]
        %v3462 = vld [vmem:[%s317 + $0x5f80] sm:$0xff]
        %v3463 = vld [vmem:[%s317 + $0x5f88] sm:$0xff]
        %v3464 = vld [vmem:[%s317 + $0x5f90] sm:$0xff]
        %v3465 = vld [vmem:[%s317 + $0x5f98] sm:$0xff]
        %v3466 = vld [vmem:[%s317 + $0x5fa0] sm:$0xff]
        %v3467 = vld [vmem:[%s317 + $0x5fa8] sm:$0xff]
        %v3468 = vld [vmem:[%s317 + $0x5fb0] sm:$0xff]
        %v3469 = vld [vmem:[%s317 + $0x5fb8] sm:$0xff]
        %v3470 = vld [vmem:[%s317 + $0x5fc0] sm:$0xff]
        %v3471 = vld [vmem:[%s317 + $0x5fc8] sm:$0xff]
        %v3472 = vld [vmem:[%s317 + $0x5fd0] sm:$0xff]
        %v3473 = vld [vmem:[%s317 + $0x5fd8] sm:$0xff]
        %v3474 = vld [vmem:[%s317 + $0x5fe0] sm:$0xff]
        %v3475 = vld [vmem:[%s317 + $0x5fe8] sm:$0xff]
        %v3476 = vld [vmem:[%s317 + $0x5ff0] sm:$0xff]
        %v3477 = vld [vmem:[%s317 + $0x5ff8] sm:$0xff]
        %v3478 = vld [vmem:[%s317 + $0x6000] sm:$0xff]
        %v3479 = vld [vmem:[%s317 + $0x6008] sm:$0xff]
        %v3480 = vld [vmem:[%s317 + $0x6010] sm:$0xff]
        %v3481 = vld [vmem:[%s317 + $0x6018] sm:$0xff]
        %v3482 = vld [vmem:[%s317 + $0x6020] sm:$0xff]
        %v3483 = vld [vmem:[%s317 + $0x6028] sm:$0xff]
        %v3484 = vld [vmem:[%s317 + $0x6030] sm:$0xff]
        %v3485 = vld [vmem:[%s317 + $0x6038] sm:$0xff]
        %v3486 = vld [vmem:[%s317 + $0x6040] sm:$0xff]
        %v3487 = vld [vmem:[%s317 + $0x6048] sm:$0xff]
        %v3488 = vld [vmem:[%s317 + $0x6050] sm:$0xff]
        %v3489 = vld [vmem:[%s317 + $0x6058] sm:$0xff]
        %v3490 = vld [vmem:[%s317 + $0x6060] sm:$0xff]
        %v3491 = vld [vmem:[%s317 + $0x6068] sm:$0xff]
        %v3492 = vld [vmem:[%s317 + $0x6070] sm:$0xff]
        %v3493 = vld [vmem:[%s317 + $0x6078] sm:$0xff]
        %v3494 = vld [vmem:[%s317 + $0x6080] sm:$0xff]
        %v3495 = vld [vmem:[%s317 + $0x6088] sm:$0xff]
        %v3496 = vld [vmem:[%s317 + $0x6090] sm:$0xff]
        %v3497 = vld [vmem:[%s317 + $0x6098] sm:$0xff]
        %v3498 = vld [vmem:[%s317 + $0x60a0] sm:$0xff]
        %v3499 = vld [vmem:[%s317 + $0x60a8] sm:$0xff]
        %v3500 = vld [vmem:[%s317 + $0x60b0] sm:$0xff]
        %v3501 = vld [vmem:[%s317 + $0x60b8] sm:$0xff]
        %v3502 = vld [vmem:[%s317 + $0x60c0] sm:$0xff]
        %v3503 = vld [vmem:[%s317 + $0x60c8] sm:$0xff]
        %v3504 = vld [vmem:[%s317 + $0x60d0] sm:$0xff]
        %v3505 = vld [vmem:[%s317 + $0x60d8] sm:$0xff]
        %v3506 = vld [vmem:[%s317 + $0x60e0] sm:$0xff]
        %v3507 = vld [vmem:[%s317 + $0x60e8] sm:$0xff]
        %v3508 = vld [vmem:[%s317 + $0x60f0] sm:$0xff]
        %v3509 = vld [vmem:[%s317 + $0x60f8] sm:$0xff]
        %v3510 = vld [vmem:[%s317 + $0x6100] sm:$0xff]
        %v3511 = vld [vmem:[%s317 + $0x6108] sm:$0xff]
        %v3512 = vld [vmem:[%s317 + $0x6110] sm:$0xff]
        %v3513 = vld [vmem:[%s317 + $0x6118] sm:$0xff]
        %v3514 = vld [vmem:[%s317 + $0x6120] sm:$0xff]
        %v3515 = vld [vmem:[%s317 + $0x6128] sm:$0xff]
        %v3516 = vld [vmem:[%s317 + $0x6130] sm:$0xff]
        %v3517 = vld [vmem:[%s317 + $0x6138] sm:$0xff]
        %v3518 = vld [vmem:[%s317 + $0x6140] sm:$0xff]
        %v3519 = vld [vmem:[%s317 + $0x6148] sm:$0xff]
        %v3520 = vld [vmem:[%s317 + $0x6150] sm:$0xff]
        %v3521 = vld [vmem:[%s317 + $0x6158] sm:$0xff]
        %v3522 = vld [vmem:[%s317 + $0x6160] sm:$0xff]
        %v3523 = vld [vmem:[%s317 + $0x6168] sm:$0xff]
        %v3524 = vld [vmem:[%s317 + $0x6170] sm:$0xff]
        %v3525 = vld [vmem:[%s317 + $0x6178] sm:$0xff]
        %v3526 = vld [vmem:[%s317 + $0x6180] sm:$0xff]
        %v3527 = vld [vmem:[%s317 + $0x6188] sm:$0xff]
        %v3528 = vld [vmem:[%s317 + $0x6190] sm:$0xff]
        %v3529 = vld [vmem:[%s317 + $0x6198] sm:$0xff]
        %v3530 = vld [vmem:[%s317 + $0x61a0] sm:$0xff]
        %v3531 = vld [vmem:[%s317 + $0x61a8] sm:$0xff]
        %v3532 = vld [vmem:[%s317 + $0x61b0] sm:$0xff]
        %v3533 = vld [vmem:[%s317 + $0x61b8] sm:$0xff]
        %v3534 = vld [vmem:[%s317 + $0x61c0] sm:$0xff]
        %v3535 = vld [vmem:[%s317 + $0x61c8] sm:$0xff]
        %v3536 = vld [vmem:[%s317 + $0x61d0] sm:$0xff]
        %v3537 = vld [vmem:[%s317 + $0x61d8] sm:$0xff]
        %v3538 = vld [vmem:[%s317 + $0x61e0] sm:$0xff]
        %v3539 = vld [vmem:[%s317 + $0x61e8] sm:$0xff]
        %v3540 = vld [vmem:[%s317 + $0x61f0] sm:$0xff]
        %v3541 = vld [vmem:[%s317 + $0x61f8] sm:$0xff]
        %v3567 = vcombine.high %v381, %v381
        %v3569 = vunpack.c.l.s4 1983009808
        %v3570 = vunpack.c.0.s8 %v3569
        %v3571 = vlaneseq
        %v3572 = vshrl.u32 %v3571, 7
        %v3573 = vsub.s32 %v3570, %v3572
        %v3574 = vrot.slane %v381, %v3573
        %v3576 = vunpack.c.l.s4 1983009808
        %v3577 = vunpack.c.0.s8 %v3576
        %v3578 = vlaneseq
        %v3579 = vshrl.u32 %v3578, 7
        %v3580 = vsub.s32 %v3577, %v3579
        %v3581 = vrot.slane %v3567, %v3580
        %v3582 = vcombine.high %v3574, %v3574
        %v3583 = vcombine.high %v3581, %v3581
        %v3584 = vcombine.high %v382, %v382
        %v3586 = vunpack.c.l.s4 1983009808
        %v3587 = vunpack.c.0.s8 %v3586
        %v3588 = vlaneseq
        %v3589 = vshrl.u32 %v3588, 7
        %v3590 = vsub.s32 %v3587, %v3589
        %v3591 = vrot.slane %v382, %v3590
        %v3593 = vunpack.c.l.s4 1983009808
        %v3594 = vunpack.c.0.s8 %v3593
        %v3595 = vlaneseq
        %v3596 = vshrl.u32 %v3595, 7
        %v3597 = vsub.s32 %v3594, %v3596
        %v3598 = vrot.slane %v3584, %v3597
        %v3599 = vcombine.high %v3591, %v3591
        %v3600 = vcombine.high %v3598, %v3598
        %v3601 = vcombine.high %v383, %v383
        %v3603 = vunpack.c.l.s4 1983009808
        %v3604 = vunpack.c.0.s8 %v3603
        %v3605 = vlaneseq
        %v3606 = vshrl.u32 %v3605, 7
        %v3607 = vsub.s32 %v3604, %v3606
        %v3608 = vrot.slane %v383, %v3607
        %v3610 = vunpack.c.l.s4 1983009808
        %v3611 = vunpack.c.0.s8 %v3610
        %v3612 = vlaneseq
        %v3613 = vshrl.u32 %v3612, 7
        %v3614 = vsub.s32 %v3611, %v3613
        %v3615 = vrot.slane %v3601, %v3614
        %v3616 = vcombine.high %v3608, %v3608
        %v3617 = vcombine.high %v3615, %v3615
        %v3618 = vcombine.high %v384, %v384
        %v3620 = vunpack.c.l.s4 1983009808
        %v3621 = vunpack.c.0.s8 %v3620
        %v3622 = vlaneseq
        %v3623 = vshrl.u32 %v3622, 7
        %v3624 = vsub.s32 %v3621, %v3623
        %v3625 = vrot.slane %v384, %v3624
        %v3627 = vunpack.c.l.s4 1983009808
        %v3628 = vunpack.c.0.s8 %v3627
        %v3629 = vlaneseq
        %v3630 = vshrl.u32 %v3629, 7
        %v3631 = vsub.s32 %v3628, %v3630
        %v3632 = vrot.slane %v3618, %v3631
        %v3633 = vcombine.high %v3625, %v3625
        %v3634 = vcombine.high %v3632, %v3632
        %v3635 = vcombine.high %v385, %v385
        %v3637 = vunpack.c.l.s4 1983009808
        %v3638 = vunpack.c.0.s8 %v3637
        %v3639 = vlaneseq
        %v3640 = vshrl.u32 %v3639, 7
        %v3641 = vsub.s32 %v3638, %v3640
        %v3642 = vrot.slane %v385, %v3641
        %v3644 = vunpack.c.l.s4 1983009808
        %v3645 = vunpack.c.0.s8 %v3644
        %v3646 = vlaneseq
        %v3647 = vshrl.u32 %v3646, 7
        %v3648 = vsub.s32 %v3645, %v3647
        %v3649 = vrot.slane %v3635, %v3648
        %v3650 = vcombine.high %v3642, %v3642
        %v3651 = vcombine.high %v3649, %v3649
        %v3652 = vcombine.high %v386, %v386
        %v3654 = vunpack.c.l.s4 1983009808
        %v3655 = vunpack.c.0.s8 %v3654
        %v3656 = vlaneseq
        %v3657 = vshrl.u32 %v3656, 7
        %v3658 = vsub.s32 %v3655, %v3657
        %v3659 = vrot.slane %v386, %v3658
        %v3661 = vunpack.c.l.s4 1983009808
        %v3662 = vunpack.c.0.s8 %v3661
        %v3663 = vlaneseq
        %v3664 = vshrl.u32 %v3663, 7
        %v3665 = vsub.s32 %v3662, %v3664
        %v3666 = vrot.slane %v3652, %v3665
        %v3667 = vcombine.high %v3659, %v3659
        %v3668 = vcombine.high %v3666, %v3666
        %v3669 = vcombine.high %v387, %v387
        %v3671 = vunpack.c.l.s4 1983009808
        %v3672 = vunpack.c.0.s8 %v3671
        %v3673 = vlaneseq
        %v3674 = vshrl.u32 %v3673, 7
        %v3675 = vsub.s32 %v3672, %v3674
        %v3676 = vrot.slane %v387, %v3675
        %v3678 = vunpack.c.l.s4 1983009808
        %v3679 = vunpack.c.0.s8 %v3678
        %v3680 = vlaneseq
        %v3681 = vshrl.u32 %v3680, 7
        %v3682 = vsub.s32 %v3679, %v3681
        %v3683 = vrot.slane %v3669, %v3682
        %v3684 = vcombine.high %v3676, %v3676
        %v3685 = vcombine.high %v3683, %v3683
        %v3686 = vcombine.high %v388, %v388
        %v3688 = vunpack.c.l.s4 1983009808
        %v3689 = vunpack.c.0.s8 %v3688
        %v3690 = vlaneseq
        %v3691 = vshrl.u32 %v3690, 7
        %v3692 = vsub.s32 %v3689, %v3691
        %v3693 = vrot.slane %v388, %v3692
        %v3695 = vunpack.c.l.s4 1983009808
        %v3696 = vunpack.c.0.s8 %v3695
        %v3697 = vlaneseq
        %v3698 = vshrl.u32 %v3697, 7
        %v3699 = vsub.s32 %v3696, %v3698
        %v3700 = vrot.slane %v3686, %v3699
        %v3701 = vcombine.high %v3693, %v3693
        %v3702 = vcombine.high %v3700, %v3700
        %v3703 = vcombine.high %v389, %v389
        %v3705 = vunpack.c.l.s4 1983009808
        %v3706 = vunpack.c.0.s8 %v3705
        %v3707 = vlaneseq
        %v3708 = vshrl.u32 %v3707, 7
        %v3709 = vsub.s32 %v3706, %v3708
        %v3710 = vrot.slane %v389, %v3709
        %v3712 = vunpack.c.l.s4 1983009808
        %v3713 = vunpack.c.0.s8 %v3712
        %v3714 = vlaneseq
        %v3715 = vshrl.u32 %v3714, 7
        %v3716 = vsub.s32 %v3713, %v3715
        %v3717 = vrot.slane %v3703, %v3716
        %v3718 = vcombine.high %v3710, %v3710
        %v3719 = vcombine.high %v3717, %v3717
        %v3720 = vcombine.high %v390, %v390
        %v3722 = vunpack.c.l.s4 1983009808
        %v3723 = vunpack.c.0.s8 %v3722
        %v3724 = vlaneseq
        %v3725 = vshrl.u32 %v3724, 7
        %v3726 = vsub.s32 %v3723, %v3725
        %v3727 = vrot.slane %v390, %v3726
        %v3729 = vunpack.c.l.s4 1983009808
        %v3730 = vunpack.c.0.s8 %v3729
        %v3731 = vlaneseq
        %v3732 = vshrl.u32 %v3731, 7
        %v3733 = vsub.s32 %v3730, %v3732
        %v3734 = vrot.slane %v3720, %v3733
        %v3735 = vcombine.high %v3727, %v3727
        %v3736 = vcombine.high %v3734, %v3734
        %v3737 = vcombine.high %v391, %v391
        %v3739 = vunpack.c.l.s4 1983009808
        %v3740 = vunpack.c.0.s8 %v3739
        %v3741 = vlaneseq
        %v3742 = vshrl.u32 %v3741, 7
        %v3743 = vsub.s32 %v3740, %v3742
        %v3744 = vrot.slane %v391, %v3743
        %v3746 = vunpack.c.l.s4 1983009808
        %v3747 = vunpack.c.0.s8 %v3746
        %v3748 = vlaneseq
        %v3749 = vshrl.u32 %v3748, 7
        %v3750 = vsub.s32 %v3747, %v3749
        %v3751 = vrot.slane %v3737, %v3750
        %v3752 = vcombine.high %v3744, %v3744
        %v3753 = vcombine.high %v3751, %v3751
        %v3754 = vcombine.high %v392, %v392
        %v3756 = vunpack.c.l.s4 1983009808
        %v3757 = vunpack.c.0.s8 %v3756
        %v3758 = vlaneseq
        %v3759 = vshrl.u32 %v3758, 7
        %v3760 = vsub.s32 %v3757, %v3759
        %v3761 = vrot.slane %v392, %v3760
        %v3763 = vunpack.c.l.s4 1983009808
        %v3764 = vunpack.c.0.s8 %v3763
        %v3765 = vlaneseq
        %v3766 = vshrl.u32 %v3765, 7
        %v3767 = vsub.s32 %v3764, %v3766
        %v3768 = vrot.slane %v3754, %v3767
        %v3769 = vcombine.high %v3761, %v3761
        %v3770 = vcombine.high %v3768, %v3768
        %v3771 = vcombine.high %v393, %v393
        %v3773 = vunpack.c.l.s4 1983009808
        %v3774 = vunpack.c.0.s8 %v3773
        %v3775 = vlaneseq
        %v3776 = vshrl.u32 %v3775, 7
        %v3777 = vsub.s32 %v3774, %v3776
        %v3778 = vrot.slane %v393, %v3777
        %v3780 = vunpack.c.l.s4 1983009808
        %v3781 = vunpack.c.0.s8 %v3780
        %v3782 = vlaneseq
        %v3783 = vshrl.u32 %v3782, 7
        %v3784 = vsub.s32 %v3781, %v3783
        %v3785 = vrot.slane %v3771, %v3784
        %v3786 = vcombine.high %v3778, %v3778
        %v3787 = vcombine.high %v3785, %v3785
        %v3788 = vcombine.high %v394, %v394
        %v3790 = vunpack.c.l.s4 1983009808
        %v3791 = vunpack.c.0.s8 %v3790
        %v3792 = vlaneseq
        %v3793 = vshrl.u32 %v3792, 7
        %v3794 = vsub.s32 %v3791, %v3793
        %v3795 = vrot.slane %v394, %v3794
        %v3797 = vunpack.c.l.s4 1983009808
        %v3798 = vunpack.c.0.s8 %v3797
        %v3799 = vlaneseq
        %v3800 = vshrl.u32 %v3799, 7
        %v3801 = vsub.s32 %v3798, %v3800
        %v3802 = vrot.slane %v3788, %v3801
        %v3803 = vcombine.high %v3795, %v3795
        %v3804 = vcombine.high %v3802, %v3802
        %v3805 = vcombine.high %v395, %v395
        %v3807 = vunpack.c.l.s4 1983009808
        %v3808 = vunpack.c.0.s8 %v3807
        %v3809 = vlaneseq
        %v3810 = vshrl.u32 %v3809, 7
        %v3811 = vsub.s32 %v3808, %v3810
        %v3812 = vrot.slane %v395, %v3811
        %v3814 = vunpack.c.l.s4 1983009808
        %v3815 = vunpack.c.0.s8 %v3814
        %v3816 = vlaneseq
        %v3817 = vshrl.u32 %v3816, 7
        %v3818 = vsub.s32 %v3815, %v3817
        %v3819 = vrot.slane %v3805, %v3818
        %v3820 = vcombine.high %v3812, %v3812
        %v3821 = vcombine.high %v3819, %v3819
        %v3822 = vcombine.high %v396, %v396
        %v3824 = vunpack.c.l.s4 1983009808
        %v3825 = vunpack.c.0.s8 %v3824
        %v3826 = vlaneseq
        %v3827 = vshrl.u32 %v3826, 7
        %v3828 = vsub.s32 %v3825, %v3827
        %v3829 = vrot.slane %v396, %v3828
        %v3831 = vunpack.c.l.s4 1983009808
        %v3832 = vunpack.c.0.s8 %v3831
        %v3833 = vlaneseq
        %v3834 = vshrl.u32 %v3833, 7
        %v3835 = vsub.s32 %v3832, %v3834
        %v3836 = vrot.slane %v3822, %v3835
        %v3837 = vcombine.high %v3829, %v3829
        %v3838 = vcombine.high %v3836, %v3836
        %v3839 = vcombine.high %v397, %v397
        %v3841 = vunpack.c.l.s4 1983009808
        %v3842 = vunpack.c.0.s8 %v3841
        %v3843 = vlaneseq
        %v3844 = vshrl.u32 %v3843, 7
        %v3845 = vsub.s32 %v3842, %v3844
        %v3846 = vrot.slane %v397, %v3845
        %v3848 = vunpack.c.l.s4 1983009808
        %v3849 = vunpack.c.0.s8 %v3848
        %v3850 = vlaneseq
        %v3851 = vshrl.u32 %v3850, 7
        %v3852 = vsub.s32 %v3849, %v3851
        %v3853 = vrot.slane %v3839, %v3852
        %v3854 = vcombine.high %v3846, %v3846
        %v3855 = vcombine.high %v3853, %v3853
        %v3856 = vcombine.high %v398, %v398
        %v3858 = vunpack.c.l.s4 1983009808
        %v3859 = vunpack.c.0.s8 %v3858
        %v3860 = vlaneseq
        %v3861 = vshrl.u32 %v3860, 7
        %v3862 = vsub.s32 %v3859, %v3861
        %v3863 = vrot.slane %v398, %v3862
        %v3865 = vunpack.c.l.s4 1983009808
        %v3866 = vunpack.c.0.s8 %v3865
        %v3867 = vlaneseq
        %v3868 = vshrl.u32 %v3867, 7
        %v3869 = vsub.s32 %v3866, %v3868
        %v3870 = vrot.slane %v3856, %v3869
        %v3871 = vcombine.high %v3863, %v3863
        %v3872 = vcombine.high %v3870, %v3870
        %v3873 = vcombine.high %v399, %v399
        %v3875 = vunpack.c.l.s4 1983009808
        %v3876 = vunpack.c.0.s8 %v3875
        %v3877 = vlaneseq
        %v3878 = vshrl.u32 %v3877, 7
        %v3879 = vsub.s32 %v3876, %v3878
        %v3880 = vrot.slane %v399, %v3879
        %v3882 = vunpack.c.l.s4 1983009808
        %v3883 = vunpack.c.0.s8 %v3882
        %v3884 = vlaneseq
        %v3885 = vshrl.u32 %v3884, 7
        %v3886 = vsub.s32 %v3883, %v3885
        %v3887 = vrot.slane %v3873, %v3886
        %v3888 = vcombine.high %v3880, %v3880
        %v3889 = vcombine.high %v3887, %v3887
        %v3890 = vcombine.high %v400, %v400
        %v3892 = vunpack.c.l.s4 1983009808
        %v3893 = vunpack.c.0.s8 %v3892
        %v3894 = vlaneseq
        %v3895 = vshrl.u32 %v3894, 7
        %v3896 = vsub.s32 %v3893, %v3895
        %v3897 = vrot.slane %v400, %v3896
        %v3899 = vunpack.c.l.s4 1983009808
        %v3900 = vunpack.c.0.s8 %v3899
        %v3901 = vlaneseq
        %v3902 = vshrl.u32 %v3901, 7
        %v3903 = vsub.s32 %v3900, %v3902
        %v3904 = vrot.slane %v3890, %v3903
        %v3905 = vcombine.high %v3897, %v3897
        %v3906 = vcombine.high %v3904, %v3904
        %v3907 = vcombine.high %v401, %v401
        %v3909 = vunpack.c.l.s4 1983009808
        %v3910 = vunpack.c.0.s8 %v3909
        %v3911 = vlaneseq
        %v3912 = vshrl.u32 %v3911, 7
        %v3913 = vsub.s32 %v3910, %v3912
        %v3914 = vrot.slane %v401, %v3913
        %v3916 = vunpack.c.l.s4 1983009808
        %v3917 = vunpack.c.0.s8 %v3916
        %v3918 = vlaneseq
        %v3919 = vshrl.u32 %v3918, 7
        %v3920 = vsub.s32 %v3917, %v3919
        %v3921 = vrot.slane %v3907, %v3920
        %v3922 = vcombine.high %v3914, %v3914
        %v3923 = vcombine.high %v3921, %v3921
        %v3924 = vcombine.high %v402, %v402
        %v3926 = vunpack.c.l.s4 1983009808
        %v3927 = vunpack.c.0.s8 %v3926
        %v3928 = vlaneseq
        %v3929 = vshrl.u32 %v3928, 7
        %v3930 = vsub.s32 %v3927, %v3929
        %v3931 = vrot.slane %v402, %v3930
        %v3933 = vunpack.c.l.s4 1983009808
        %v3934 = vunpack.c.0.s8 %v3933
        %v3935 = vlaneseq
        %v3936 = vshrl.u32 %v3935, 7
        %v3937 = vsub.s32 %v3934, %v3936
        %v3938 = vrot.slane %v3924, %v3937
        %v3939 = vcombine.high %v3931, %v3931
        %v3940 = vcombine.high %v3938, %v3938
        %v3941 = vcombine.high %v403, %v403
        %v3943 = vunpack.c.l.s4 1983009808
        %v3944 = vunpack.c.0.s8 %v3943
        %v3945 = vlaneseq
        %v3946 = vshrl.u32 %v3945, 7
        %v3947 = vsub.s32 %v3944, %v3946
        %v3948 = vrot.slane %v403, %v3947
        %v3950 = vunpack.c.l.s4 1983009808
        %v3951 = vunpack.c.0.s8 %v3950
        %v3952 = vlaneseq
        %v3953 = vshrl.u32 %v3952, 7
        %v3954 = vsub.s32 %v3951, %v3953
        %v3955 = vrot.slane %v3941, %v3954
        %v3956 = vcombine.high %v3948, %v3948
        %v3957 = vcombine.high %v3955, %v3955
        %v3958 = vcombine.high %v404, %v404
        %v3960 = vunpack.c.l.s4 1983009808
        %v3961 = vunpack.c.0.s8 %v3960
        %v3962 = vlaneseq
        %v3963 = vshrl.u32 %v3962, 7
        %v3964 = vsub.s32 %v3961, %v3963
        %v3965 = vrot.slane %v404, %v3964
        %v3967 = vunpack.c.l.s4 1983009808
        %v3968 = vunpack.c.0.s8 %v3967
        %v3969 = vlaneseq
        %v3970 = vshrl.u32 %v3969, 7
        %v3971 = vsub.s32 %v3968, %v3970
        %v3972 = vrot.slane %v3958, %v3971
        %v3973 = vcombine.high %v3965, %v3965
        %v3974 = vcombine.high %v3972, %v3972
        %v3976 = vunpack.c.l.s4 1983009808
        %v3977 = vunpack.c.0.s8 %v3976
        %v3978 = vlaneseq
        %v3979 = vshrl.u32 %v3978, 7
        %v3980 = vsub.s32 %v3977, %v3979
        %v3981 = vrot.slane %v405, %v3980
        %v3982 = vcombine.high %v3981, %v3981
        %4081 = vmatprep.subr.mxu0 %v437
        %4082 = vmatpush1.msra.mxu0 %v436
        %4083 = vmatprep.subr.mxu0 %v435
        %4084 = vmatpush1.msra.mxu0 %v434
        %4085 = vmatprep.subr.mxu0 %v433
        %4086 = vmatpush1.msra.mxu0 %v432
        %4087 = vmatprep.subr.mxu0 %v431
        %4088 = vmatpush1.msra.mxu0 %v430
        %4089 = vmatprep.subr.mxu0 %v429
        %4090 = vmatpush1.msra.mxu0 %v428
        %4091 = vmatprep.subr.mxu0 %v427
        %4092 = vmatpush1.msra.mxu0 %v426
        %4093 = vmatprep.subr.mxu0 %v425
        %4094 = vmatpush1.msra.mxu0 %v424
        %4095 = vmatprep.subr.mxu0 %v423
        %4096 = vmatpush1.msra.mxu0 %v422
        %4097 = vmatprep.subr.mxu0 %v421
        %4098 = vmatpush1.msra.mxu0 %v420
        %4099 = vmatprep.subr.mxu0 %v419
        %4100 = vmatpush1.msra.mxu0 %v418
        %4101 = vmatprep.subr.mxu0 %v417
        %4102 = vmatpush1.msra.mxu0 %v416
        %4103 = vmatprep.subr.mxu0 %v415
        %4104 = vmatpush1.msra.mxu0 %v414
        %4105 = vmatprep.subr.mxu0 %v413
        %4106 = vmatpush1.msra.mxu0 %v412
        %4107 = vmatprep.subr.mxu0 %v411
        %4108 = vmatpush1.msra.mxu0 %v410
        %4109 = vmatprep.subr.mxu0 %v409
        %4110 = vmatpush1.msra.mxu0 %v408
        %4111 = vmatprep.subr.mxu0 %v407
        %4112 = vmatpush1.msra.mxu0 %v406
        %4113 = vmatprep.subr.mxu0 %v469
        %4114 = vmatpush2.msra.mxu0 %v468
        %4115 = vmatprep.subr.mxu0 %v467
        %4116 = vmatpush2.msra.mxu0 %v466
        %4117 = vmatprep.subr.mxu0 %v465
        %4118 = vmatpush2.msra.mxu0 %v464
        %4119 = vmatprep.subr.mxu0 %v463
        %4120 = vmatpush2.msra.mxu0 %v462
        %4121 = vmatprep.subr.mxu0 %v461
        %4122 = vmatpush2.msra.mxu0 %v460
        %4123 = vmatprep.subr.mxu0 %v459
        %4124 = vmatpush2.msra.mxu0 %v458
        %4125 = vmatprep.subr.mxu0 %v457
        %4126 = vmatpush2.msra.mxu0 %v456
        %4127 = vmatprep.subr.mxu0 %v455
        %4128 = vmatpush2.msra.mxu0 %v454
        %4129 = vmatprep.subr.mxu0 %v453
        %4130 = vmatpush2.msra.mxu0 %v452
        %4131 = vmatprep.subr.mxu0 %v451
        %4132 = vmatpush2.msra.mxu0 %v450
        %4133 = vmatprep.subr.mxu0 %v449
        %4134 = vmatpush2.msra.mxu0 %v448
        %4135 = vmatprep.subr.mxu0 %v447
        %4136 = vmatpush2.msra.mxu0 %v446
        %4137 = vmatprep.subr.mxu0 %v445
        %4138 = vmatpush2.msra.mxu0 %v444
        %4139 = vmatprep.subr.mxu0 %v443
        %4140 = vmatpush2.msra.mxu0 %v442
        %4141 = vmatprep.subr.mxu0 %v441
        %4142 = vmatpush2.msra.mxu0 %v440
        %4143 = vmatprep.subr.mxu0 %v439
        %4144 = vmatpush2.msra.mxu0 %v438
        %4145 = vmatprep.mubr.f32.mxu0 %v3582
        %4146 = vmatmul.mubr.f32.gmra.mxu0 %v3574
        %v4147 = vpop.f32.mrf.mxu0
        %v4148 = vadd.f32 0.0, %v4147
        %v4149 = vpop.f32.mrf.mxu0
        %v4150 = vadd.f32 0.0, %v4149
        %4151 = vdwg.mxu0
        %4152 = vmatprep.subr.mxu0 %v501
        %4153 = vmatpush1.msra.mxu0 %v500
        %4154 = vmatprep.subr.mxu0 %v499
        %4155 = vmatpush1.msra.mxu0 %v498
        %4156 = vmatprep.subr.mxu0 %v497
        %4157 = vmatpush1.msra.mxu0 %v496
        %4158 = vmatprep.subr.mxu0 %v495
        %4159 = vmatpush1.msra.mxu0 %v494
        %4160 = vmatprep.subr.mxu0 %v493
        %4161 = vmatpush1.msra.mxu0 %v492
        %4162 = vmatprep.subr.mxu0 %v491
        %4163 = vmatpush1.msra.mxu0 %v490
        %4164 = vmatprep.subr.mxu0 %v489
        %4165 = vmatpush1.msra.mxu0 %v488
        %4166 = vmatprep.subr.mxu0 %v487
        %4167 = vmatpush1.msra.mxu0 %v486
        %4168 = vmatprep.subr.mxu0 %v485
        %4169 = vmatpush1.msra.mxu0 %v484
        %4170 = vmatprep.subr.mxu0 %v483
        %4171 = vmatpush1.msra.mxu0 %v482
        %4172 = vmatprep.subr.mxu0 %v481
        %4173 = vmatpush1.msra.mxu0 %v480
        %4174 = vmatprep.subr.mxu0 %v479
        %4175 = vmatpush1.msra.mxu0 %v478
        %4176 = vmatprep.subr.mxu0 %v477
        %4177 = vmatpush1.msra.mxu0 %v476
        %4178 = vmatprep.subr.mxu0 %v475
        %4179 = vmatpush1.msra.mxu0 %v474
        %4180 = vmatprep.subr.mxu0 %v473
        %4181 = vmatpush1.msra.mxu0 %v472
        %4182 = vmatprep.subr.mxu0 %v471
        %4183 = vmatpush1.msra.mxu0 %v470
        %4184 = vmatprep.subr.mxu0 %v533
        %4185 = vmatpush2.msra.mxu0 %v532
        %4186 = vmatprep.subr.mxu0 %v531
        %4187 = vmatpush2.msra.mxu0 %v530
        %4188 = vmatprep.subr.mxu0 %v529
        %4189 = vmatpush2.msra.mxu0 %v528
        %4190 = vmatprep.subr.mxu0 %v527
        %4191 = vmatpush2.msra.mxu0 %v526
        %4192 = vmatprep.subr.mxu0 %v525
        %4193 = vmatpush2.msra.mxu0 %v524
        %4194 = vmatprep.subr.mxu0 %v523
        %4195 = vmatpush2.msra.mxu0 %v522
        %4196 = vmatprep.subr.mxu0 %v521
        %4197 = vmatpush2.msra.mxu0 %v520
        %4198 = vmatprep.subr.mxu0 %v519
        %4199 = vmatpush2.msra.mxu0 %v518
        %4200 = vmatprep.subr.mxu0 %v517
        %4201 = vmatpush2.msra.mxu0 %v516
        %4202 = vmatprep.subr.mxu0 %v515
        %4203 = vmatpush2.msra.mxu0 %v514
        %4204 = vmatprep.subr.mxu0 %v513
        %4205 = vmatpush2.msra.mxu0 %v512
        %4206 = vmatprep.subr.mxu0 %v511
        %4207 = vmatpush2.msra.mxu0 %v510
        %4208 = vmatprep.subr.mxu0 %v509
        %4209 = vmatpush2.msra.mxu0 %v508
        %4210 = vmatprep.subr.mxu0 %v507
        %4211 = vmatpush2.msra.mxu0 %v506
        %4212 = vmatprep.subr.mxu0 %v505
        %4213 = vmatpush2.msra.mxu0 %v504
        %4214 = vmatprep.subr.mxu0 %v503
        %4215 = vmatpush2.msra.mxu0 %v502
        %4216 = vmatprep.mubr.f32.mxu0 %v3583
        %4217 = vmatmul.mubr.f32.gmra.mxu0 %v3581
        %v4218 = vpop.f32.mrf.mxu0
        %v4219 = vadd.f32 %v4148, %v4218
        %v4220 = vpop.f32.mrf.mxu0
        %v4221 = vadd.f32 %v4150, %v4220
        %4222 = vdwg.mxu0
        %4223 = vmatprep.subr.mxu0 %v565
        %4224 = vmatpush1.msra.mxu0 %v564
        %4225 = vmatprep.subr.mxu0 %v563
        %4226 = vmatpush1.msra.mxu0 %v562
        %4227 = vmatprep.subr.mxu0 %v561
        %4228 = vmatpush1.msra.mxu0 %v560
        %4229 = vmatprep.subr.mxu0 %v559
        %4230 = vmatpush1.msra.mxu0 %v558
        %4231 = vmatprep.subr.mxu0 %v557
        %4232 = vmatpush1.msra.mxu0 %v556
        %4233 = vmatprep.subr.mxu0 %v555
        %4234 = vmatpush1.msra.mxu0 %v554
        %4235 = vmatprep.subr.mxu0 %v553
        %4236 = vmatpush1.msra.mxu0 %v552
        %4237 = vmatprep.subr.mxu0 %v551
        %4238 = vmatpush1.msra.mxu0 %v550
        %4239 = vmatprep.subr.mxu0 %v549
        %4240 = vmatpush1.msra.mxu0 %v548
        %4241 = vmatprep.subr.mxu0 %v547
        %4242 = vmatpush1.msra.mxu0 %v546
        %4243 = vmatprep.subr.mxu0 %v545
        %4244 = vmatpush1.msra.mxu0 %v544
        %4245 = vmatprep.subr.mxu0 %v543
        %4246 = vmatpush1.msra.mxu0 %v542
        %4247 = vmatprep.subr.mxu0 %v541
        %4248 = vmatpush1.msra.mxu0 %v540
        %4249 = vmatprep.subr.mxu0 %v539
        %4250 = vmatpush1.msra.mxu0 %v538
        %4251 = vmatprep.subr.mxu0 %v537
        %4252 = vmatpush1.msra.mxu0 %v536
        %4253 = vmatprep.subr.mxu0 %v535
        %4254 = vmatpush1.msra.mxu0 %v534
        %4255 = vmatprep.subr.mxu0 %v597
        %4256 = vmatpush2.msra.mxu0 %v596
        %4257 = vmatprep.subr.mxu0 %v595
        %4258 = vmatpush2.msra.mxu0 %v594
        %4259 = vmatprep.subr.mxu0 %v593
        %4260 = vmatpush2.msra.mxu0 %v592
        %4261 = vmatprep.subr.mxu0 %v591
        %4262 = vmatpush2.msra.mxu0 %v590
        %4263 = vmatprep.subr.mxu0 %v589
        %4264 = vmatpush2.msra.mxu0 %v588
        %4265 = vmatprep.subr.mxu0 %v587
        %4266 = vmatpush2.msra.mxu0 %v586
        %4267 = vmatprep.subr.mxu0 %v585
        %4268 = vmatpush2.msra.mxu0 %v584
        %4269 = vmatprep.subr.mxu0 %v583
        %4270 = vmatpush2.msra.mxu0 %v582
        %4271 = vmatprep.subr.mxu0 %v581
        %4272 = vmatpush2.msra.mxu0 %v580
        %4273 = vmatprep.subr.mxu0 %v579
        %4274 = vmatpush2.msra.mxu0 %v578
        %4275 = vmatprep.subr.mxu0 %v577
        %4276 = vmatpush2.msra.mxu0 %v576
        %4277 = vmatprep.subr.mxu0 %v575
        %4278 = vmatpush2.msra.mxu0 %v574
        %4279 = vmatprep.subr.mxu0 %v573
        %4280 = vmatpush2.msra.mxu0 %v572
        %4281 = vmatprep.subr.mxu0 %v571
        %4282 = vmatpush2.msra.mxu0 %v570
        %4283 = vmatprep.subr.mxu0 %v569
        %4284 = vmatpush2.msra.mxu0 %v568
        %4285 = vmatprep.subr.mxu0 %v567
        %4286 = vmatpush2.msra.mxu0 %v566
        %4287 = vmatprep.mubr.f32.mxu0 %v3599
        %4288 = vmatmul.mubr.f32.gmra.mxu0 %v3591
        %v4289 = vpop.f32.mrf.mxu0
        %v4290 = vadd.f32 %v4219, %v4289
        %v4291 = vpop.f32.mrf.mxu0
        %v4292 = vadd.f32 %v4221, %v4291
        %4293 = vdwg.mxu0
        %4294 = vmatprep.subr.mxu0 %v629
        %4295 = vmatpush1.msra.mxu0 %v628
        %4296 = vmatprep.subr.mxu0 %v627
        %4297 = vmatpush1.msra.mxu0 %v626
        %4298 = vmatprep.subr.mxu0 %v625
        %4299 = vmatpush1.msra.mxu0 %v624
        %4300 = vmatprep.subr.mxu0 %v623
        %4301 = vmatpush1.msra.mxu0 %v622
        %4302 = vmatprep.subr.mxu0 %v621
        %4303 = vmatpush1.msra.mxu0 %v620
        %4304 = vmatprep.subr.mxu0 %v619
        %4305 = vmatpush1.msra.mxu0 %v618
        %4306 = vmatprep.subr.mxu0 %v617
        %4307 = vmatpush1.msra.mxu0 %v616
        %4308 = vmatprep.subr.mxu0 %v615
        %4309 = vmatpush1.msra.mxu0 %v614
        %4310 = vmatprep.subr.mxu0 %v613
        %4311 = vmatpush1.msra.mxu0 %v612
        %4312 = vmatprep.subr.mxu0 %v611
        %4313 = vmatpush1.msra.mxu0 %v610
        %4314 = vmatprep.subr.mxu0 %v609
        %4315 = vmatpush1.msra.mxu0 %v608
        %4316 = vmatprep.subr.mxu0 %v607
        %4317 = vmatpush1.msra.mxu0 %v606
        %4318 = vmatprep.subr.mxu0 %v605
        %4319 = vmatpush1.msra.mxu0 %v604
        %4320 = vmatprep.subr.mxu0 %v603
        %4321 = vmatpush1.msra.mxu0 %v602
        %4322 = vmatprep.subr.mxu0 %v601
        %4323 = vmatpush1.msra.mxu0 %v600
        %4324 = vmatprep.subr.mxu0 %v599
        %4325 = vmatpush1.msra.mxu0 %v598
        %4326 = vmatprep.subr.mxu0 %v661
        %4327 = vmatpush2.msra.mxu0 %v660
        %4328 = vmatprep.subr.mxu0 %v659
        %4329 = vmatpush2.msra.mxu0 %v658
        %4330 = vmatprep.subr.mxu0 %v657
        %4331 = vmatpush2.msra.mxu0 %v656
        %4332 = vmatprep.subr.mxu0 %v655
        %4333 = vmatpush2.msra.mxu0 %v654
        %4334 = vmatprep.subr.mxu0 %v653
        %4335 = vmatpush2.msra.mxu0 %v652
        %4336 = vmatprep.subr.mxu0 %v651
        %4337 = vmatpush2.msra.mxu0 %v650
        %4338 = vmatprep.subr.mxu0 %v649
        %4339 = vmatpush2.msra.mxu0 %v648
        %4340 = vmatprep.subr.mxu0 %v647
        %4341 = vmatpush2.msra.mxu0 %v646
        %4342 = vmatprep.subr.mxu0 %v645
        %4343 = vmatpush2.msra.mxu0 %v644
        %4344 = vmatprep.subr.mxu0 %v643
        %4345 = vmatpush2.msra.mxu0 %v642
        %4346 = vmatprep.subr.mxu0 %v641
        %4347 = vmatpush2.msra.mxu0 %v640
        %4348 = vmatprep.subr.mxu0 %v639
        %4349 = vmatpush2.msra.mxu0 %v638
        %4350 = vmatprep.subr.mxu0 %v637
        %4351 = vmatpush2.msra.mxu0 %v636
        %4352 = vmatprep.subr.mxu0 %v635
        %4353 = vmatpush2.msra.mxu0 %v634
        %4354 = vmatprep.subr.mxu0 %v633
        %4355 = vmatpush2.msra.mxu0 %v632
        %4356 = vmatprep.subr.mxu0 %v631
        %4357 = vmatpush2.msra.mxu0 %v630
        %4358 = vmatprep.mubr.f32.mxu0 %v3600
        %4359 = vmatmul.mubr.f32.gmra.mxu0 %v3598
        %v4360 = vpop.f32.mrf.mxu0
        %v4361 = vadd.f32 %v4290, %v4360
        %v4362 = vpop.f32.mrf.mxu0
        %v4363 = vadd.f32 %v4292, %v4362
        %4364 = vdwg.mxu0
        %4365 = vmatprep.subr.mxu0 %v693
        %4366 = vmatpush1.msra.mxu0 %v692
        %4367 = vmatprep.subr.mxu0 %v691
        %4368 = vmatpush1.msra.mxu0 %v690
        %4369 = vmatprep.subr.mxu0 %v689
        %4370 = vmatpush1.msra.mxu0 %v688
        %4371 = vmatprep.subr.mxu0 %v687
        %4372 = vmatpush1.msra.mxu0 %v686
        %4373 = vmatprep.subr.mxu0 %v685
        %4374 = vmatpush1.msra.mxu0 %v684
        %4375 = vmatprep.subr.mxu0 %v683
        %4376 = vmatpush1.msra.mxu0 %v682
        %4377 = vmatprep.subr.mxu0 %v681
        %4378 = vmatpush1.msra.mxu0 %v680
        %4379 = vmatprep.subr.mxu0 %v679
        %4380 = vmatpush1.msra.mxu0 %v678
        %4381 = vmatprep.subr.mxu0 %v677
        %4382 = vmatpush1.msra.mxu0 %v676
        %4383 = vmatprep.subr.mxu0 %v675
        %4384 = vmatpush1.msra.mxu0 %v674
        %4385 = vmatprep.subr.mxu0 %v673
        %4386 = vmatpush1.msra.mxu0 %v672
        %4387 = vmatprep.subr.mxu0 %v671
        %4388 = vmatpush1.msra.mxu0 %v670
        %4389 = vmatprep.subr.mxu0 %v669
        %4390 = vmatpush1.msra.mxu0 %v668
        %4391 = vmatprep.subr.mxu0 %v667
        %4392 = vmatpush1.msra.mxu0 %v666
        %4393 = vmatprep.subr.mxu0 %v665
        %4394 = vmatpush1.msra.mxu0 %v664
        %4395 = vmatprep.subr.mxu0 %v663
        %4396 = vmatpush1.msra.mxu0 %v662
        %4397 = vmatprep.subr.mxu0 %v725
        %4398 = vmatpush2.msra.mxu0 %v724
        %4399 = vmatprep.subr.mxu0 %v723
        %4400 = vmatpush2.msra.mxu0 %v722
        %4401 = vmatprep.subr.mxu0 %v721
        %4402 = vmatpush2.msra.mxu0 %v720
        %4403 = vmatprep.subr.mxu0 %v719
        %4404 = vmatpush2.msra.mxu0 %v718
        %4405 = vmatprep.subr.mxu0 %v717
        %4406 = vmatpush2.msra.mxu0 %v716
        %4407 = vmatprep.subr.mxu0 %v715
        %4408 = vmatpush2.msra.mxu0 %v714
        %4409 = vmatprep.subr.mxu0 %v713
        %4410 = vmatpush2.msra.mxu0 %v712
        %4411 = vmatprep.subr.mxu0 %v711
        %4412 = vmatpush2.msra.mxu0 %v710
        %4413 = vmatprep.subr.mxu0 %v709
        %4414 = vmatpush2.msra.mxu0 %v708
        %4415 = vmatprep.subr.mxu0 %v707
        %4416 = vmatpush2.msra.mxu0 %v706
        %4417 = vmatprep.subr.mxu0 %v705
        %4418 = vmatpush2.msra.mxu0 %v704
        %4419 = vmatprep.subr.mxu0 %v703
        %4420 = vmatpush2.msra.mxu0 %v702
        %4421 = vmatprep.subr.mxu0 %v701
        %4422 = vmatpush2.msra.mxu0 %v700
        %4423 = vmatprep.subr.mxu0 %v699
        %4424 = vmatpush2.msra.mxu0 %v698
        %4425 = vmatprep.subr.mxu0 %v697
        %4426 = vmatpush2.msra.mxu0 %v696
        %4427 = vmatprep.subr.mxu0 %v695
        %4428 = vmatpush2.msra.mxu0 %v694
        %4429 = vmatprep.mubr.f32.mxu0 %v3616
        %4430 = vmatmul.mubr.f32.gmra.mxu0 %v3608
        %v4431 = vpop.f32.mrf.mxu0
        %v4432 = vadd.f32 %v4361, %v4431
        %v4433 = vpop.f32.mrf.mxu0
        %v4434 = vadd.f32 %v4363, %v4433
        %4435 = vdwg.mxu0
        %4436 = vmatprep.subr.mxu0 %v757
        %4437 = vmatpush1.msra.mxu0 %v756
        %4438 = vmatprep.subr.mxu0 %v755
        %4439 = vmatpush1.msra.mxu0 %v754
        %4440 = vmatprep.subr.mxu0 %v753
        %4441 = vmatpush1.msra.mxu0 %v752
        %4442 = vmatprep.subr.mxu0 %v751
        %4443 = vmatpush1.msra.mxu0 %v750
        %4444 = vmatprep.subr.mxu0 %v749
        %4445 = vmatpush1.msra.mxu0 %v748
        %4446 = vmatprep.subr.mxu0 %v747
        %4447 = vmatpush1.msra.mxu0 %v746
        %4448 = vmatprep.subr.mxu0 %v745
        %4449 = vmatpush1.msra.mxu0 %v744
        %4450 = vmatprep.subr.mxu0 %v743
        %4451 = vmatpush1.msra.mxu0 %v742
        %4452 = vmatprep.subr.mxu0 %v741
        %4453 = vmatpush1.msra.mxu0 %v740
        %4454 = vmatprep.subr.mxu0 %v739
        %4455 = vmatpush1.msra.mxu0 %v738
        %4456 = vmatprep.subr.mxu0 %v737
        %4457 = vmatpush1.msra.mxu0 %v736
        %4458 = vmatprep.subr.mxu0 %v735
        %4459 = vmatpush1.msra.mxu0 %v734
        %4460 = vmatprep.subr.mxu0 %v733
        %4461 = vmatpush1.msra.mxu0 %v732
        %4462 = vmatprep.subr.mxu0 %v731
        %4463 = vmatpush1.msra.mxu0 %v730
        %4464 = vmatprep.subr.mxu0 %v729
        %4465 = vmatpush1.msra.mxu0 %v728
        %4466 = vmatprep.subr.mxu0 %v727
        %4467 = vmatpush1.msra.mxu0 %v726
        %4468 = vmatprep.subr.mxu0 %v789
        %4469 = vmatpush2.msra.mxu0 %v788
        %4470 = vmatprep.subr.mxu0 %v787
        %4471 = vmatpush2.msra.mxu0 %v786
        %4472 = vmatprep.subr.mxu0 %v785
        %4473 = vmatpush2.msra.mxu0 %v784
        %4474 = vmatprep.subr.mxu0 %v783
        %4475 = vmatpush2.msra.mxu0 %v782
        %4476 = vmatprep.subr.mxu0 %v781
        %4477 = vmatpush2.msra.mxu0 %v780
        %4478 = vmatprep.subr.mxu0 %v779
        %4479 = vmatpush2.msra.mxu0 %v778
        %4480 = vmatprep.subr.mxu0 %v777
        %4481 = vmatpush2.msra.mxu0 %v776
        %4482 = vmatprep.subr.mxu0 %v775
        %4483 = vmatpush2.msra.mxu0 %v774
        %4484 = vmatprep.subr.mxu0 %v773
        %4485 = vmatpush2.msra.mxu0 %v772
        %4486 = vmatprep.subr.mxu0 %v771
        %4487 = vmatpush2.msra.mxu0 %v770
        %4488 = vmatprep.subr.mxu0 %v769
        %4489 = vmatpush2.msra.mxu0 %v768
        %4490 = vmatprep.subr.mxu0 %v767
        %4491 = vmatpush2.msra.mxu0 %v766
        %4492 = vmatprep.subr.mxu0 %v765
        %4493 = vmatpush2.msra.mxu0 %v764
        %4494 = vmatprep.subr.mxu0 %v763
        %4495 = vmatpush2.msra.mxu0 %v762
        %4496 = vmatprep.subr.mxu0 %v761
        %4497 = vmatpush2.msra.mxu0 %v760
        %4498 = vmatprep.subr.mxu0 %v759
        %4499 = vmatpush2.msra.mxu0 %v758
        %4500 = vmatprep.mubr.f32.mxu0 %v3617
        %4501 = vmatmul.mubr.f32.gmra.mxu0 %v3615
        %v4502 = vpop.f32.mrf.mxu0
        %v4503 = vadd.f32 %v4432, %v4502
        %v4504 = vpop.f32.mrf.mxu0
        %v4505 = vadd.f32 %v4434, %v4504
        %4506 = vdwg.mxu0
        %4507 = vmatprep.subr.mxu0 %v821
        %4508 = vmatpush1.msra.mxu0 %v820
        %4509 = vmatprep.subr.mxu0 %v819
        %4510 = vmatpush1.msra.mxu0 %v818
        %4511 = vmatprep.subr.mxu0 %v817
        %4512 = vmatpush1.msra.mxu0 %v816
        %4513 = vmatprep.subr.mxu0 %v815
        %4514 = vmatpush1.msra.mxu0 %v814
        %4515 = vmatprep.subr.mxu0 %v813
        %4516 = vmatpush1.msra.mxu0 %v812
        %4517 = vmatprep.subr.mxu0 %v811
        %4518 = vmatpush1.msra.mxu0 %v810
        %4519 = vmatprep.subr.mxu0 %v809
        %4520 = vmatpush1.msra.mxu0 %v808
        %4521 = vmatprep.subr.mxu0 %v807
        %4522 = vmatpush1.msra.mxu0 %v806
        %4523 = vmatprep.subr.mxu0 %v805
        %4524 = vmatpush1.msra.mxu0 %v804
        %4525 = vmatprep.subr.mxu0 %v803
        %4526 = vmatpush1.msra.mxu0 %v802
        %4527 = vmatprep.subr.mxu0 %v801
        %4528 = vmatpush1.msra.mxu0 %v800
        %4529 = vmatprep.subr.mxu0 %v799
        %4530 = vmatpush1.msra.mxu0 %v798
        %4531 = vmatprep.subr.mxu0 %v797
        %4532 = vmatpush1.msra.mxu0 %v796
        %4533 = vmatprep.subr.mxu0 %v795
        %4534 = vmatpush1.msra.mxu0 %v794
        %4535 = vmatprep.subr.mxu0 %v793
        %4536 = vmatpush1.msra.mxu0 %v792
        %4537 = vmatprep.subr.mxu0 %v791
        %4538 = vmatpush1.msra.mxu0 %v790
        %4539 = vmatprep.subr.mxu0 %v853
        %4540 = vmatpush2.msra.mxu0 %v852
        %4541 = vmatprep.subr.mxu0 %v851
        %4542 = vmatpush2.msra.mxu0 %v850
        %4543 = vmatprep.subr.mxu0 %v849
        %4544 = vmatpush2.msra.mxu0 %v848
        %4545 = vmatprep.subr.mxu0 %v847
        %4546 = vmatpush2.msra.mxu0 %v846
        %4547 = vmatprep.subr.mxu0 %v845
        %4548 = vmatpush2.msra.mxu0 %v844
        %4549 = vmatprep.subr.mxu0 %v843
        %4550 = vmatpush2.msra.mxu0 %v842
        %4551 = vmatprep.subr.mxu0 %v841
        %4552 = vmatpush2.msra.mxu0 %v840
        %4553 = vmatprep.subr.mxu0 %v839
        %4554 = vmatpush2.msra.mxu0 %v838
        %4555 = vmatprep.subr.mxu0 %v837
        %4556 = vmatpush2.msra.mxu0 %v836
        %4557 = vmatprep.subr.mxu0 %v835
        %4558 = vmatpush2.msra.mxu0 %v834
        %4559 = vmatprep.subr.mxu0 %v833
        %4560 = vmatpush2.msra.mxu0 %v832
        %4561 = vmatprep.subr.mxu0 %v831
        %4562 = vmatpush2.msra.mxu0 %v830
        %4563 = vmatprep.subr.mxu0 %v829
        %4564 = vmatpush2.msra.mxu0 %v828
        %4565 = vmatprep.subr.mxu0 %v827
        %4566 = vmatpush2.msra.mxu0 %v826
        %4567 = vmatprep.subr.mxu0 %v825
        %4568 = vmatpush2.msra.mxu0 %v824
        %4569 = vmatprep.subr.mxu0 %v823
        %4570 = vmatpush2.msra.mxu0 %v822
        %4571 = vmatprep.mubr.f32.mxu0 %v3633
        %4572 = vmatmul.mubr.f32.gmra.mxu0 %v3625
        %v4573 = vpop.f32.mrf.mxu0
        %v4574 = vadd.f32 %v4503, %v4573
        %v4575 = vpop.f32.mrf.mxu0
        %v4576 = vadd.f32 %v4505, %v4575
        %4577 = vdwg.mxu0
        %4578 = vmatprep.subr.mxu0 %v885
        %4579 = vmatpush1.msra.mxu0 %v884
        %4580 = vmatprep.subr.mxu0 %v883
        %4581 = vmatpush1.msra.mxu0 %v882
        %4582 = vmatprep.subr.mxu0 %v881
        %4583 = vmatpush1.msra.mxu0 %v880
        %4584 = vmatprep.subr.mxu0 %v879
        %4585 = vmatpush1.msra.mxu0 %v878
        %4586 = vmatprep.subr.mxu0 %v877
        %4587 = vmatpush1.msra.mxu0 %v876
        %4588 = vmatprep.subr.mxu0 %v875
        %4589 = vmatpush1.msra.mxu0 %v874
        %4590 = vmatprep.subr.mxu0 %v873
        %4591 = vmatpush1.msra.mxu0 %v872
        %4592 = vmatprep.subr.mxu0 %v871
        %4593 = vmatpush1.msra.mxu0 %v870
        %4594 = vmatprep.subr.mxu0 %v869
        %4595 = vmatpush1.msra.mxu0 %v868
        %4596 = vmatprep.subr.mxu0 %v867
        %4597 = vmatpush1.msra.mxu0 %v866
        %4598 = vmatprep.subr.mxu0 %v865
        %4599 = vmatpush1.msra.mxu0 %v864
        %4600 = vmatprep.subr.mxu0 %v863
        %4601 = vmatpush1.msra.mxu0 %v862
        %4602 = vmatprep.subr.mxu0 %v861
        %4603 = vmatpush1.msra.mxu0 %v860
        %4604 = vmatprep.subr.mxu0 %v859
        %4605 = vmatpush1.msra.mxu0 %v858
        %4606 = vmatprep.subr.mxu0 %v857
        %4607 = vmatpush1.msra.mxu0 %v856
        %4608 = vmatprep.subr.mxu0 %v855
        %4609 = vmatpush1.msra.mxu0 %v854
        %4610 = vmatprep.subr.mxu0 %v917
        %4611 = vmatpush2.msra.mxu0 %v916
        %4612 = vmatprep.subr.mxu0 %v915
        %4613 = vmatpush2.msra.mxu0 %v914
        %4614 = vmatprep.subr.mxu0 %v913
        %4615 = vmatpush2.msra.mxu0 %v912
        %4616 = vmatprep.subr.mxu0 %v911
        %4617 = vmatpush2.msra.mxu0 %v910
        %4618 = vmatprep.subr.mxu0 %v909
        %4619 = vmatpush2.msra.mxu0 %v908
        %4620 = vmatprep.subr.mxu0 %v907
        %4621 = vmatpush2.msra.mxu0 %v906
        %4622 = vmatprep.subr.mxu0 %v905
        %4623 = vmatpush2.msra.mxu0 %v904
        %4624 = vmatprep.subr.mxu0 %v903
        %4625 = vmatpush2.msra.mxu0 %v902
        %4626 = vmatprep.subr.mxu0 %v901
        %4627 = vmatpush2.msra.mxu0 %v900
        %4628 = vmatprep.subr.mxu0 %v899
        %4629 = vmatpush2.msra.mxu0 %v898
        %4630 = vmatprep.subr.mxu0 %v897
        %4631 = vmatpush2.msra.mxu0 %v896
        %4632 = vmatprep.subr.mxu0 %v895
        %4633 = vmatpush2.msra.mxu0 %v894
        %4634 = vmatprep.subr.mxu0 %v893
        %4635 = vmatpush2.msra.mxu0 %v892
        %4636 = vmatprep.subr.mxu0 %v891
        %4637 = vmatpush2.msra.mxu0 %v890
        %4638 = vmatprep.subr.mxu0 %v889
        %4639 = vmatpush2.msra.mxu0 %v888
        %4640 = vmatprep.subr.mxu0 %v887
        %4641 = vmatpush2.msra.mxu0 %v886
        %4642 = vmatprep.mubr.f32.mxu0 %v3634
        %4643 = vmatmul.mubr.f32.gmra.mxu0 %v3632
        %v4644 = vpop.f32.mrf.mxu0
        %v4645 = vadd.f32 %v4574, %v4644
        %v4646 = vpop.f32.mrf.mxu0
        %v4647 = vadd.f32 %v4576, %v4646
        %4648 = vdwg.mxu0
        %4649 = vmatprep.subr.mxu0 %v949
        %4650 = vmatpush1.msra.mxu0 %v948
        %4651 = vmatprep.subr.mxu0 %v947
        %4652 = vmatpush1.msra.mxu0 %v946
        %4653 = vmatprep.subr.mxu0 %v945
        %4654 = vmatpush1.msra.mxu0 %v944
        %4655 = vmatprep.subr.mxu0 %v943
        %4656 = vmatpush1.msra.mxu0 %v942
        %4657 = vmatprep.subr.mxu0 %v941
        %4658 = vmatpush1.msra.mxu0 %v940
        %4659 = vmatprep.subr.mxu0 %v939
        %4660 = vmatpush1.msra.mxu0 %v938
        %4661 = vmatprep.subr.mxu0 %v937
        %4662 = vmatpush1.msra.mxu0 %v936
        %4663 = vmatprep.subr.mxu0 %v935
        %4664 = vmatpush1.msra.mxu0 %v934
        %4665 = vmatprep.subr.mxu0 %v933
        %4666 = vmatpush1.msra.mxu0 %v932
        %4667 = vmatprep.subr.mxu0 %v931
        %4668 = vmatpush1.msra.mxu0 %v930
        %4669 = vmatprep.subr.mxu0 %v929
        %4670 = vmatpush1.msra.mxu0 %v928
        %4671 = vmatprep.subr.mxu0 %v927
        %4672 = vmatpush1.msra.mxu0 %v926
        %4673 = vmatprep.subr.mxu0 %v925
        %4674 = vmatpush1.msra.mxu0 %v924
        %4675 = vmatprep.subr.mxu0 %v923
        %4676 = vmatpush1.msra.mxu0 %v922
        %4677 = vmatprep.subr.mxu0 %v921
        %4678 = vmatpush1.msra.mxu0 %v920
        %4679 = vmatprep.subr.mxu0 %v919
        %4680 = vmatpush1.msra.mxu0 %v918
        %4681 = vmatprep.subr.mxu0 %v981
        %4682 = vmatpush2.msra.mxu0 %v980
        %4683 = vmatprep.subr.mxu0 %v979
        %4684 = vmatpush2.msra.mxu0 %v978
        %4685 = vmatprep.subr.mxu0 %v977
        %4686 = vmatpush2.msra.mxu0 %v976
        %4687 = vmatprep.subr.mxu0 %v975
        %4688 = vmatpush2.msra.mxu0 %v974
        %4689 = vmatprep.subr.mxu0 %v973
        %4690 = vmatpush2.msra.mxu0 %v972
        %4691 = vmatprep.subr.mxu0 %v971
        %4692 = vmatpush2.msra.mxu0 %v970
        %4693 = vmatprep.subr.mxu0 %v969
        %4694 = vmatpush2.msra.mxu0 %v968
        %4695 = vmatprep.subr.mxu0 %v967
        %4696 = vmatpush2.msra.mxu0 %v966
        %4697 = vmatprep.subr.mxu0 %v965
        %4698 = vmatpush2.msra.mxu0 %v964
        %4699 = vmatprep.subr.mxu0 %v963
        %4700 = vmatpush2.msra.mxu0 %v962
        %4701 = vmatprep.subr.mxu0 %v961
        %4702 = vmatpush2.msra.mxu0 %v960
        %4703 = vmatprep.subr.mxu0 %v959
        %4704 = vmatpush2.msra.mxu0 %v958
        %4705 = vmatprep.subr.mxu0 %v957
        %4706 = vmatpush2.msra.mxu0 %v956
        %4707 = vmatprep.subr.mxu0 %v955
        %4708 = vmatpush2.msra.mxu0 %v954
        %4709 = vmatprep.subr.mxu0 %v953
        %4710 = vmatpush2.msra.mxu0 %v952
        %4711 = vmatprep.subr.mxu0 %v951
        %4712 = vmatpush2.msra.mxu0 %v950
        %4713 = vmatprep.mubr.f32.mxu0 %v3650
        %4714 = vmatmul.mubr.f32.gmra.mxu0 %v3642
        %v4715 = vpop.f32.mrf.mxu0
        %v4716 = vadd.f32 %v4645, %v4715
        %v4717 = vpop.f32.mrf.mxu0
        %v4718 = vadd.f32 %v4647, %v4717
        %4719 = vdwg.mxu0
        %4720 = vmatprep.subr.mxu0 %v1013
        %4721 = vmatpush1.msra.mxu0 %v1012
        %4722 = vmatprep.subr.mxu0 %v1011
        %4723 = vmatpush1.msra.mxu0 %v1010
        %4724 = vmatprep.subr.mxu0 %v1009
        %4725 = vmatpush1.msra.mxu0 %v1008
        %4726 = vmatprep.subr.mxu0 %v1007
        %4727 = vmatpush1.msra.mxu0 %v1006
        %4728 = vmatprep.subr.mxu0 %v1005
        %4729 = vmatpush1.msra.mxu0 %v1004
        %4730 = vmatprep.subr.mxu0 %v1003
        %4731 = vmatpush1.msra.mxu0 %v1002
        %4732 = vmatprep.subr.mxu0 %v1001
        %4733 = vmatpush1.msra.mxu0 %v1000
        %4734 = vmatprep.subr.mxu0 %v999
        %4735 = vmatpush1.msra.mxu0 %v998
        %4736 = vmatprep.subr.mxu0 %v997
        %4737 = vmatpush1.msra.mxu0 %v996
        %4738 = vmatprep.subr.mxu0 %v995
        %4739 = vmatpush1.msra.mxu0 %v994
        %4740 = vmatprep.subr.mxu0 %v993
        %4741 = vmatpush1.msra.mxu0 %v992
        %4742 = vmatprep.subr.mxu0 %v991
        %4743 = vmatpush1.msra.mxu0 %v990
        %4744 = vmatprep.subr.mxu0 %v989
        %4745 = vmatpush1.msra.mxu0 %v988
        %4746 = vmatprep.subr.mxu0 %v987
        %4747 = vmatpush1.msra.mxu0 %v986
        %4748 = vmatprep.subr.mxu0 %v985
        %4749 = vmatpush1.msra.mxu0 %v984
        %4750 = vmatprep.subr.mxu0 %v983
        %4751 = vmatpush1.msra.mxu0 %v982
        %4752 = vmatprep.subr.mxu0 %v1045
        %4753 = vmatpush2.msra.mxu0 %v1044
        %4754 = vmatprep.subr.mxu0 %v1043
        %4755 = vmatpush2.msra.mxu0 %v1042
        %4756 = vmatprep.subr.mxu0 %v1041
        %4757 = vmatpush2.msra.mxu0 %v1040
        %4758 = vmatprep.subr.mxu0 %v1039
        %4759 = vmatpush2.msra.mxu0 %v1038
        %4760 = vmatprep.subr.mxu0 %v1037
        %4761 = vmatpush2.msra.mxu0 %v1036
        %4762 = vmatprep.subr.mxu0 %v1035
        %4763 = vmatpush2.msra.mxu0 %v1034
        %4764 = vmatprep.subr.mxu0 %v1033
        %4765 = vmatpush2.msra.mxu0 %v1032
        %4766 = vmatprep.subr.mxu0 %v1031
        %4767 = vmatpush2.msra.mxu0 %v1030
        %4768 = vmatprep.subr.mxu0 %v1029
        %4769 = vmatpush2.msra.mxu0 %v1028
        %4770 = vmatprep.subr.mxu0 %v1027
        %4771 = vmatpush2.msra.mxu0 %v1026
        %4772 = vmatprep.subr.mxu0 %v1025
        %4773 = vmatpush2.msra.mxu0 %v1024
        %4774 = vmatprep.subr.mxu0 %v1023
        %4775 = vmatpush2.msra.mxu0 %v1022
        %4776 = vmatprep.subr.mxu0 %v1021
        %4777 = vmatpush2.msra.mxu0 %v1020
        %4778 = vmatprep.subr.mxu0 %v1019
        %4779 = vmatpush2.msra.mxu0 %v1018
        %4780 = vmatprep.subr.mxu0 %v1017
        %4781 = vmatpush2.msra.mxu0 %v1016
        %4782 = vmatprep.subr.mxu0 %v1015
        %4783 = vmatpush2.msra.mxu0 %v1014
        %4784 = vmatprep.mubr.f32.mxu0 %v3651
        %4785 = vmatmul.mubr.f32.gmra.mxu0 %v3649
        %v4786 = vpop.f32.mrf.mxu0
        %v4787 = vadd.f32 %v4716, %v4786
        %v4788 = vpop.f32.mrf.mxu0
        %v4789 = vadd.f32 %v4718, %v4788
        %4790 = vdwg.mxu0
        %4791 = vmatprep.subr.mxu0 %v1077
        %4792 = vmatpush1.msra.mxu0 %v1076
        %4793 = vmatprep.subr.mxu0 %v1075
        %4794 = vmatpush1.msra.mxu0 %v1074
        %4795 = vmatprep.subr.mxu0 %v1073
        %4796 = vmatpush1.msra.mxu0 %v1072
        %4797 = vmatprep.subr.mxu0 %v1071
        %4798 = vmatpush1.msra.mxu0 %v1070
        %4799 = vmatprep.subr.mxu0 %v1069
        %4800 = vmatpush1.msra.mxu0 %v1068
        %4801 = vmatprep.subr.mxu0 %v1067
        %4802 = vmatpush1.msra.mxu0 %v1066
        %4803 = vmatprep.subr.mxu0 %v1065
        %4804 = vmatpush1.msra.mxu0 %v1064
        %4805 = vmatprep.subr.mxu0 %v1063
        %4806 = vmatpush1.msra.mxu0 %v1062
        %4807 = vmatprep.subr.mxu0 %v1061
        %4808 = vmatpush1.msra.mxu0 %v1060
        %4809 = vmatprep.subr.mxu0 %v1059
        %4810 = vmatpush1.msra.mxu0 %v1058
        %4811 = vmatprep.subr.mxu0 %v1057
        %4812 = vmatpush1.msra.mxu0 %v1056
        %4813 = vmatprep.subr.mxu0 %v1055
        %4814 = vmatpush1.msra.mxu0 %v1054
        %4815 = vmatprep.subr.mxu0 %v1053
        %4816 = vmatpush1.msra.mxu0 %v1052
        %4817 = vmatprep.subr.mxu0 %v1051
        %4818 = vmatpush1.msra.mxu0 %v1050
        %4819 = vmatprep.subr.mxu0 %v1049
        %4820 = vmatpush1.msra.mxu0 %v1048
        %4821 = vmatprep.subr.mxu0 %v1047
        %4822 = vmatpush1.msra.mxu0 %v1046
        %4823 = vmatprep.subr.mxu0 %v1109
        %4824 = vmatpush2.msra.mxu0 %v1108
        %4825 = vmatprep.subr.mxu0 %v1107
        %4826 = vmatpush2.msra.mxu0 %v1106
        %4827 = vmatprep.subr.mxu0 %v1105
        %4828 = vmatpush2.msra.mxu0 %v1104
        %4829 = vmatprep.subr.mxu0 %v1103
        %4830 = vmatpush2.msra.mxu0 %v1102
        %4831 = vmatprep.subr.mxu0 %v1101
        %4832 = vmatpush2.msra.mxu0 %v1100
        %4833 = vmatprep.subr.mxu0 %v1099
        %4834 = vmatpush2.msra.mxu0 %v1098
        %4835 = vmatprep.subr.mxu0 %v1097
        %4836 = vmatpush2.msra.mxu0 %v1096
        %4837 = vmatprep.subr.mxu0 %v1095
        %4838 = vmatpush2.msra.mxu0 %v1094
        %4839 = vmatprep.subr.mxu0 %v1093
        %4840 = vmatpush2.msra.mxu0 %v1092
        %4841 = vmatprep.subr.mxu0 %v1091
        %4842 = vmatpush2.msra.mxu0 %v1090
        %4843 = vmatprep.subr.mxu0 %v1089
        %4844 = vmatpush2.msra.mxu0 %v1088
        %4845 = vmatprep.subr.mxu0 %v1087
        %4846 = vmatpush2.msra.mxu0 %v1086
        %4847 = vmatprep.subr.mxu0 %v1085
        %4848 = vmatpush2.msra.mxu0 %v1084
        %4849 = vmatprep.subr.mxu0 %v1083
        %4850 = vmatpush2.msra.mxu0 %v1082
        %4851 = vmatprep.subr.mxu0 %v1081
        %4852 = vmatpush2.msra.mxu0 %v1080
        %4853 = vmatprep.subr.mxu0 %v1079
        %4854 = vmatpush2.msra.mxu0 %v1078
        %4855 = vmatprep.mubr.f32.mxu0 %v3667
        %4856 = vmatmul.mubr.f32.gmra.mxu0 %v3659
        %v4857 = vpop.f32.mrf.mxu0
        %v4858 = vadd.f32 %v4787, %v4857
        %v4859 = vpop.f32.mrf.mxu0
        %v4860 = vadd.f32 %v4789, %v4859
        %4861 = vdwg.mxu0
        %4862 = vmatprep.subr.mxu0 %v1141
        %4863 = vmatpush1.msra.mxu0 %v1140
        %4864 = vmatprep.subr.mxu0 %v1139
        %4865 = vmatpush1.msra.mxu0 %v1138
        %4866 = vmatprep.subr.mxu0 %v1137
        %4867 = vmatpush1.msra.mxu0 %v1136
        %4868 = vmatprep.subr.mxu0 %v1135
        %4869 = vmatpush1.msra.mxu0 %v1134
        %4870 = vmatprep.subr.mxu0 %v1133
        %4871 = vmatpush1.msra.mxu0 %v1132
        %4872 = vmatprep.subr.mxu0 %v1131
        %4873 = vmatpush1.msra.mxu0 %v1130
        %4874 = vmatprep.subr.mxu0 %v1129
        %4875 = vmatpush1.msra.mxu0 %v1128
        %4876 = vmatprep.subr.mxu0 %v1127
        %4877 = vmatpush1.msra.mxu0 %v1126
        %4878 = vmatprep.subr.mxu0 %v1125
        %4879 = vmatpush1.msra.mxu0 %v1124
        %4880 = vmatprep.subr.mxu0 %v1123
        %4881 = vmatpush1.msra.mxu0 %v1122
        %4882 = vmatprep.subr.mxu0 %v1121
        %4883 = vmatpush1.msra.mxu0 %v1120
        %4884 = vmatprep.subr.mxu0 %v1119
        %4885 = vmatpush1.msra.mxu0 %v1118
        %4886 = vmatprep.subr.mxu0 %v1117
        %4887 = vmatpush1.msra.mxu0 %v1116
        %4888 = vmatprep.subr.mxu0 %v1115
        %4889 = vmatpush1.msra.mxu0 %v1114
        %4890 = vmatprep.subr.mxu0 %v1113
        %4891 = vmatpush1.msra.mxu0 %v1112
        %4892 = vmatprep.subr.mxu0 %v1111
        %4893 = vmatpush1.msra.mxu0 %v1110
        %4894 = vmatprep.subr.mxu0 %v1173
        %4895 = vmatpush2.msra.mxu0 %v1172
        %4896 = vmatprep.subr.mxu0 %v1171
        %4897 = vmatpush2.msra.mxu0 %v1170
        %4898 = vmatprep.subr.mxu0 %v1169
        %4899 = vmatpush2.msra.mxu0 %v1168
        %4900 = vmatprep.subr.mxu0 %v1167
        %4901 = vmatpush2.msra.mxu0 %v1166
        %4902 = vmatprep.subr.mxu0 %v1165
        %4903 = vmatpush2.msra.mxu0 %v1164
        %4904 = vmatprep.subr.mxu0 %v1163
        %4905 = vmatpush2.msra.mxu0 %v1162
        %4906 = vmatprep.subr.mxu0 %v1161
        %4907 = vmatpush2.msra.mxu0 %v1160
        %4908 = vmatprep.subr.mxu0 %v1159
        %4909 = vmatpush2.msra.mxu0 %v1158
        %4910 = vmatprep.subr.mxu0 %v1157
        %4911 = vmatpush2.msra.mxu0 %v1156
        %4912 = vmatprep.subr.mxu0 %v1155
        %4913 = vmatpush2.msra.mxu0 %v1154
        %4914 = vmatprep.subr.mxu0 %v1153
        %4915 = vmatpush2.msra.mxu0 %v1152
        %4916 = vmatprep.subr.mxu0 %v1151
        %4917 = vmatpush2.msra.mxu0 %v1150
        %4918 = vmatprep.subr.mxu0 %v1149
        %4919 = vmatpush2.msra.mxu0 %v1148
        %4920 = vmatprep.subr.mxu0 %v1147
        %4921 = vmatpush2.msra.mxu0 %v1146
        %4922 = vmatprep.subr.mxu0 %v1145
        %4923 = vmatpush2.msra.mxu0 %v1144
        %4924 = vmatprep.subr.mxu0 %v1143
        %4925 = vmatpush2.msra.mxu0 %v1142
        %4926 = vmatprep.mubr.f32.mxu0 %v3668
        %4927 = vmatmul.mubr.f32.gmra.mxu0 %v3666
        %v4928 = vpop.f32.mrf.mxu0
        %v4929 = vadd.f32 %v4858, %v4928
        %v4930 = vpop.f32.mrf.mxu0
        %v4931 = vadd.f32 %v4860, %v4930
        %4932 = vdwg.mxu0
        %4933 = vmatprep.subr.mxu0 %v1205
        %4934 = vmatpush1.msra.mxu0 %v1204
        %4935 = vmatprep.subr.mxu0 %v1203
        %4936 = vmatpush1.msra.mxu0 %v1202
        %4937 = vmatprep.subr.mxu0 %v1201
        %4938 = vmatpush1.msra.mxu0 %v1200
        %4939 = vmatprep.subr.mxu0 %v1199
        %4940 = vmatpush1.msra.mxu0 %v1198
        %4941 = vmatprep.subr.mxu0 %v1197
        %4942 = vmatpush1.msra.mxu0 %v1196
        %4943 = vmatprep.subr.mxu0 %v1195
        %4944 = vmatpush1.msra.mxu0 %v1194
        %4945 = vmatprep.subr.mxu0 %v1193
        %4946 = vmatpush1.msra.mxu0 %v1192
        %4947 = vmatprep.subr.mxu0 %v1191
        %4948 = vmatpush1.msra.mxu0 %v1190
        %4949 = vmatprep.subr.mxu0 %v1189
        %4950 = vmatpush1.msra.mxu0 %v1188
        %4951 = vmatprep.subr.mxu0 %v1187
        %4952 = vmatpush1.msra.mxu0 %v1186
        %4953 = vmatprep.subr.mxu0 %v1185
        %4954 = vmatpush1.msra.mxu0 %v1184
        %4955 = vmatprep.subr.mxu0 %v1183
        %4956 = vmatpush1.msra.mxu0 %v1182
        %4957 = vmatprep.subr.mxu0 %v1181
        %4958 = vmatpush1.msra.mxu0 %v1180
        %4959 = vmatprep.subr.mxu0 %v1179
        %4960 = vmatpush1.msra.mxu0 %v1178
        %4961 = vmatprep.subr.mxu0 %v1177
        %4962 = vmatpush1.msra.mxu0 %v1176
        %4963 = vmatprep.subr.mxu0 %v1175
        %4964 = vmatpush1.msra.mxu0 %v1174
        %4965 = vmatprep.subr.mxu0 %v1237
        %4966 = vmatpush2.msra.mxu0 %v1236
        %4967 = vmatprep.subr.mxu0 %v1235
        %4968 = vmatpush2.msra.mxu0 %v1234
        %4969 = vmatprep.subr.mxu0 %v1233
        %4970 = vmatpush2.msra.mxu0 %v1232
        %4971 = vmatprep.subr.mxu0 %v1231
        %4972 = vmatpush2.msra.mxu0 %v1230
        %4973 = vmatprep.subr.mxu0 %v1229
        %4974 = vmatpush2.msra.mxu0 %v1228
        %4975 = vmatprep.subr.mxu0 %v1227
        %4976 = vmatpush2.msra.mxu0 %v1226
        %4977 = vmatprep.subr.mxu0 %v1225
        %4978 = vmatpush2.msra.mxu0 %v1224
        %4979 = vmatprep.subr.mxu0 %v1223
        %4980 = vmatpush2.msra.mxu0 %v1222
        %4981 = vmatprep.subr.mxu0 %v1221
        %4982 = vmatpush2.msra.mxu0 %v1220
        %4983 = vmatprep.subr.mxu0 %v1219
        %4984 = vmatpush2.msra.mxu0 %v1218
        %4985 = vmatprep.subr.mxu0 %v1217
        %4986 = vmatpush2.msra.mxu0 %v1216
        %4987 = vmatprep.subr.mxu0 %v1215
        %4988 = vmatpush2.msra.mxu0 %v1214
        %4989 = vmatprep.subr.mxu0 %v1213
        %4990 = vmatpush2.msra.mxu0 %v1212
        %4991 = vmatprep.subr.mxu0 %v1211
        %4992 = vmatpush2.msra.mxu0 %v1210
        %4993 = vmatprep.subr.mxu0 %v1209
        %4994 = vmatpush2.msra.mxu0 %v1208
        %4995 = vmatprep.subr.mxu0 %v1207
        %4996 = vmatpush2.msra.mxu0 %v1206
        %4997 = vmatprep.mubr.f32.mxu0 %v3684
        %4998 = vmatmul.mubr.f32.gmra.mxu0 %v3676
        %v4999 = vpop.f32.mrf.mxu0
        %v5000 = vadd.f32 %v4929, %v4999
        %v5001 = vpop.f32.mrf.mxu0
        %v5002 = vadd.f32 %v4931, %v5001
        %5003 = vdwg.mxu0
        %5004 = vmatprep.subr.mxu0 %v1269
        %5005 = vmatpush1.msra.mxu0 %v1268
        %5006 = vmatprep.subr.mxu0 %v1267
        %5007 = vmatpush1.msra.mxu0 %v1266
        %5008 = vmatprep.subr.mxu0 %v1265
        %5009 = vmatpush1.msra.mxu0 %v1264
        %5010 = vmatprep.subr.mxu0 %v1263
        %5011 = vmatpush1.msra.mxu0 %v1262
        %5012 = vmatprep.subr.mxu0 %v1261
        %5013 = vmatpush1.msra.mxu0 %v1260
        %5014 = vmatprep.subr.mxu0 %v1259
        %5015 = vmatpush1.msra.mxu0 %v1258
        %5016 = vmatprep.subr.mxu0 %v1257
        %5017 = vmatpush1.msra.mxu0 %v1256
        %5018 = vmatprep.subr.mxu0 %v1255
        %5019 = vmatpush1.msra.mxu0 %v1254
        %5020 = vmatprep.subr.mxu0 %v1253
        %5021 = vmatpush1.msra.mxu0 %v1252
        %5022 = vmatprep.subr.mxu0 %v1251
        %5023 = vmatpush1.msra.mxu0 %v1250
        %5024 = vmatprep.subr.mxu0 %v1249
        %5025 = vmatpush1.msra.mxu0 %v1248
        %5026 = vmatprep.subr.mxu0 %v1247
        %5027 = vmatpush1.msra.mxu0 %v1246
        %5028 = vmatprep.subr.mxu0 %v1245
        %5029 = vmatpush1.msra.mxu0 %v1244
        %5030 = vmatprep.subr.mxu0 %v1243
        %5031 = vmatpush1.msra.mxu0 %v1242
        %5032 = vmatprep.subr.mxu0 %v1241
        %5033 = vmatpush1.msra.mxu0 %v1240
        %5034 = vmatprep.subr.mxu0 %v1239
        %5035 = vmatpush1.msra.mxu0 %v1238
        %5036 = vmatprep.subr.mxu0 %v1301
        %5037 = vmatpush2.msra.mxu0 %v1300
        %5038 = vmatprep.subr.mxu0 %v1299
        %5039 = vmatpush2.msra.mxu0 %v1298
        %5040 = vmatprep.subr.mxu0 %v1297
        %5041 = vmatpush2.msra.mxu0 %v1296
        %5042 = vmatprep.subr.mxu0 %v1295
        %5043 = vmatpush2.msra.mxu0 %v1294
        %5044 = vmatprep.subr.mxu0 %v1293
        %5045 = vmatpush2.msra.mxu0 %v1292
        %5046 = vmatprep.subr.mxu0 %v1291
        %5047 = vmatpush2.msra.mxu0 %v1290
        %5048 = vmatprep.subr.mxu0 %v1289
        %5049 = vmatpush2.msra.mxu0 %v1288
        %5050 = vmatprep.subr.mxu0 %v1287
        %5051 = vmatpush2.msra.mxu0 %v1286
        %5052 = vmatprep.subr.mxu0 %v1285
        %5053 = vmatpush2.msra.mxu0 %v1284
        %5054 = vmatprep.subr.mxu0 %v1283
        %5055 = vmatpush2.msra.mxu0 %v1282
        %5056 = vmatprep.subr.mxu0 %v1281
        %5057 = vmatpush2.msra.mxu0 %v1280
        %5058 = vmatprep.subr.mxu0 %v1279
        %5059 = vmatpush2.msra.mxu0 %v1278
        %5060 = vmatprep.subr.mxu0 %v1277
        %5061 = vmatpush2.msra.mxu0 %v1276
        %5062 = vmatprep.subr.mxu0 %v1275
        %5063 = vmatpush2.msra.mxu0 %v1274
        %5064 = vmatprep.subr.mxu0 %v1273
        %5065 = vmatpush2.msra.mxu0 %v1272
        %5066 = vmatprep.subr.mxu0 %v1271
        %5067 = vmatpush2.msra.mxu0 %v1270
        %5068 = vmatprep.mubr.f32.mxu0 %v3685
        %5069 = vmatmul.mubr.f32.gmra.mxu0 %v3683
        %v5070 = vpop.f32.mrf.mxu0
        %v5071 = vadd.f32 %v5000, %v5070
        %v5072 = vpop.f32.mrf.mxu0
        %v5073 = vadd.f32 %v5002, %v5072
        %5074 = vdwg.mxu0
        %5075 = vmatprep.subr.mxu0 %v1333
        %5076 = vmatpush1.msra.mxu0 %v1332
        %5077 = vmatprep.subr.mxu0 %v1331
        %5078 = vmatpush1.msra.mxu0 %v1330
        %5079 = vmatprep.subr.mxu0 %v1329
        %5080 = vmatpush1.msra.mxu0 %v1328
        %5081 = vmatprep.subr.mxu0 %v1327
        %5082 = vmatpush1.msra.mxu0 %v1326
        %5083 = vmatprep.subr.mxu0 %v1325
        %5084 = vmatpush1.msra.mxu0 %v1324
        %5085 = vmatprep.subr.mxu0 %v1323
        %5086 = vmatpush1.msra.mxu0 %v1322
        %5087 = vmatprep.subr.mxu0 %v1321
        %5088 = vmatpush1.msra.mxu0 %v1320
        %5089 = vmatprep.subr.mxu0 %v1319
        %5090 = vmatpush1.msra.mxu0 %v1318
        %5091 = vmatprep.subr.mxu0 %v1317
        %5092 = vmatpush1.msra.mxu0 %v1316
        %5093 = vmatprep.subr.mxu0 %v1315
        %5094 = vmatpush1.msra.mxu0 %v1314
        %5095 = vmatprep.subr.mxu0 %v1313
        %5096 = vmatpush1.msra.mxu0 %v1312
        %5097 = vmatprep.subr.mxu0 %v1311
        %5098 = vmatpush1.msra.mxu0 %v1310
        %5099 = vmatprep.subr.mxu0 %v1309
        %5100 = vmatpush1.msra.mxu0 %v1308
        %5101 = vmatprep.subr.mxu0 %v1307
        %5102 = vmatpush1.msra.mxu0 %v1306
        %5103 = vmatprep.subr.mxu0 %v1305
        %5104 = vmatpush1.msra.mxu0 %v1304
        %5105 = vmatprep.subr.mxu0 %v1303
        %5106 = vmatpush1.msra.mxu0 %v1302
        %5107 = vmatprep.subr.mxu0 %v1365
        %5108 = vmatpush2.msra.mxu0 %v1364
        %5109 = vmatprep.subr.mxu0 %v1363
        %5110 = vmatpush2.msra.mxu0 %v1362
        %5111 = vmatprep.subr.mxu0 %v1361
        %5112 = vmatpush2.msra.mxu0 %v1360
        %5113 = vmatprep.subr.mxu0 %v1359
        %5114 = vmatpush2.msra.mxu0 %v1358
        %5115 = vmatprep.subr.mxu0 %v1357
        %5116 = vmatpush2.msra.mxu0 %v1356
        %5117 = vmatprep.subr.mxu0 %v1355
        %5118 = vmatpush2.msra.mxu0 %v1354
        %5119 = vmatprep.subr.mxu0 %v1353
        %5120 = vmatpush2.msra.mxu0 %v1352
        %5121 = vmatprep.subr.mxu0 %v1351
        %5122 = vmatpush2.msra.mxu0 %v1350
        %5123 = vmatprep.subr.mxu0 %v1349
        %5124 = vmatpush2.msra.mxu0 %v1348
        %5125 = vmatprep.subr.mxu0 %v1347
        %5126 = vmatpush2.msra.mxu0 %v1346
        %5127 = vmatprep.subr.mxu0 %v1345
        %5128 = vmatpush2.msra.mxu0 %v1344
        %5129 = vmatprep.subr.mxu0 %v1343
        %5130 = vmatpush2.msra.mxu0 %v1342
        %5131 = vmatprep.subr.mxu0 %v1341
        %5132 = vmatpush2.msra.mxu0 %v1340
        %5133 = vmatprep.subr.mxu0 %v1339
        %5134 = vmatpush2.msra.mxu0 %v1338
        %5135 = vmatprep.subr.mxu0 %v1337
        %5136 = vmatpush2.msra.mxu0 %v1336
        %5137 = vmatprep.subr.mxu0 %v1335
        %5138 = vmatpush2.msra.mxu0 %v1334
        %5139 = vmatprep.mubr.f32.mxu0 %v3701
        %5140 = vmatmul.mubr.f32.gmra.mxu0 %v3693
        %v5141 = vpop.f32.mrf.mxu0
        %v5142 = vadd.f32 %v5071, %v5141
        %v5143 = vpop.f32.mrf.mxu0
        %v5144 = vadd.f32 %v5073, %v5143
        %5145 = vdwg.mxu0
        %5146 = vmatprep.subr.mxu0 %v1397
        %5147 = vmatpush1.msra.mxu0 %v1396
        %5148 = vmatprep.subr.mxu0 %v1395
        %5149 = vmatpush1.msra.mxu0 %v1394
        %5150 = vmatprep.subr.mxu0 %v1393
        %5151 = vmatpush1.msra.mxu0 %v1392
        %5152 = vmatprep.subr.mxu0 %v1391
        %5153 = vmatpush1.msra.mxu0 %v1390
        %5154 = vmatprep.subr.mxu0 %v1389
        %5155 = vmatpush1.msra.mxu0 %v1388
        %5156 = vmatprep.subr.mxu0 %v1387
        %5157 = vmatpush1.msra.mxu0 %v1386
        %5158 = vmatprep.subr.mxu0 %v1385
        %5159 = vmatpush1.msra.mxu0 %v1384
        %5160 = vmatprep.subr.mxu0 %v1383
        %5161 = vmatpush1.msra.mxu0 %v1382
        %5162 = vmatprep.subr.mxu0 %v1381
        %5163 = vmatpush1.msra.mxu0 %v1380
        %5164 = vmatprep.subr.mxu0 %v1379
        %5165 = vmatpush1.msra.mxu0 %v1378
        %5166 = vmatprep.subr.mxu0 %v1377
        %5167 = vmatpush1.msra.mxu0 %v1376
        %5168 = vmatprep.subr.mxu0 %v1375
        %5169 = vmatpush1.msra.mxu0 %v1374
        %5170 = vmatprep.subr.mxu0 %v1373
        %5171 = vmatpush1.msra.mxu0 %v1372
        %5172 = vmatprep.subr.mxu0 %v1371
        %5173 = vmatpush1.msra.mxu0 %v1370
        %5174 = vmatprep.subr.mxu0 %v1369
        %5175 = vmatpush1.msra.mxu0 %v1368
        %5176 = vmatprep.subr.mxu0 %v1367
        %5177 = vmatpush1.msra.mxu0 %v1366
        %5178 = vmatprep.subr.mxu0 %v1429
        %5179 = vmatpush2.msra.mxu0 %v1428
        %5180 = vmatprep.subr.mxu0 %v1427
        %5181 = vmatpush2.msra.mxu0 %v1426
        %5182 = vmatprep.subr.mxu0 %v1425
        %5183 = vmatpush2.msra.mxu0 %v1424
        %5184 = vmatprep.subr.mxu0 %v1423
        %5185 = vmatpush2.msra.mxu0 %v1422
        %5186 = vmatprep.subr.mxu0 %v1421
        %5187 = vmatpush2.msra.mxu0 %v1420
        %5188 = vmatprep.subr.mxu0 %v1419
        %5189 = vmatpush2.msra.mxu0 %v1418
        %5190 = vmatprep.subr.mxu0 %v1417
        %5191 = vmatpush2.msra.mxu0 %v1416
        %5192 = vmatprep.subr.mxu0 %v1415
        %5193 = vmatpush2.msra.mxu0 %v1414
        %5194 = vmatprep.subr.mxu0 %v1413
        %5195 = vmatpush2.msra.mxu0 %v1412
        %5196 = vmatprep.subr.mxu0 %v1411
        %5197 = vmatpush2.msra.mxu0 %v1410
        %5198 = vmatprep.subr.mxu0 %v1409
        %5199 = vmatpush2.msra.mxu0 %v1408
        %5200 = vmatprep.subr.mxu0 %v1407
        %5201 = vmatpush2.msra.mxu0 %v1406
        %5202 = vmatprep.subr.mxu0 %v1405
        %5203 = vmatpush2.msra.mxu0 %v1404
        %5204 = vmatprep.subr.mxu0 %v1403
        %5205 = vmatpush2.msra.mxu0 %v1402
        %5206 = vmatprep.subr.mxu0 %v1401
        %5207 = vmatpush2.msra.mxu0 %v1400
        %5208 = vmatprep.subr.mxu0 %v1399
        %5209 = vmatpush2.msra.mxu0 %v1398
        %5210 = vmatprep.mubr.f32.mxu0 %v3702
        %5211 = vmatmul.mubr.f32.gmra.mxu0 %v3700
        %v5212 = vpop.f32.mrf.mxu0
        %v5213 = vadd.f32 %v5142, %v5212
        %v5214 = vpop.f32.mrf.mxu0
        %v5215 = vadd.f32 %v5144, %v5214
        %5216 = vdwg.mxu0
        %5217 = vmatprep.subr.mxu0 %v1461
        %5218 = vmatpush1.msra.mxu0 %v1460
        %5219 = vmatprep.subr.mxu0 %v1459
        %5220 = vmatpush1.msra.mxu0 %v1458
        %5221 = vmatprep.subr.mxu0 %v1457
        %5222 = vmatpush1.msra.mxu0 %v1456
        %5223 = vmatprep.subr.mxu0 %v1455
        %5224 = vmatpush1.msra.mxu0 %v1454
        %5225 = vmatprep.subr.mxu0 %v1453
        %5226 = vmatpush1.msra.mxu0 %v1452
        %5227 = vmatprep.subr.mxu0 %v1451
        %5228 = vmatpush1.msra.mxu0 %v1450
        %5229 = vmatprep.subr.mxu0 %v1449
        %5230 = vmatpush1.msra.mxu0 %v1448
        %5231 = vmatprep.subr.mxu0 %v1447
        %5232 = vmatpush1.msra.mxu0 %v1446
        %5233 = vmatprep.subr.mxu0 %v1445
        %5234 = vmatpush1.msra.mxu0 %v1444
        %5235 = vmatprep.subr.mxu0 %v1443
        %5236 = vmatpush1.msra.mxu0 %v1442
        %5237 = vmatprep.subr.mxu0 %v1441
        %5238 = vmatpush1.msra.mxu0 %v1440
        %5239 = vmatprep.subr.mxu0 %v1439
        %5240 = vmatpush1.msra.mxu0 %v1438
        %5241 = vmatprep.subr.mxu0 %v1437
        %5242 = vmatpush1.msra.mxu0 %v1436
        %5243 = vmatprep.subr.mxu0 %v1435
        %5244 = vmatpush1.msra.mxu0 %v1434
        %5245 = vmatprep.subr.mxu0 %v1433
        %5246 = vmatpush1.msra.mxu0 %v1432
        %5247 = vmatprep.subr.mxu0 %v1431
        %5248 = vmatpush1.msra.mxu0 %v1430
        %5249 = vmatprep.subr.mxu0 %v1493
        %5250 = vmatpush2.msra.mxu0 %v1492
        %5251 = vmatprep.subr.mxu0 %v1491
        %5252 = vmatpush2.msra.mxu0 %v1490
        %5253 = vmatprep.subr.mxu0 %v1489
        %5254 = vmatpush2.msra.mxu0 %v1488
        %5255 = vmatprep.subr.mxu0 %v1487
        %5256 = vmatpush2.msra.mxu0 %v1486
        %5257 = vmatprep.subr.mxu0 %v1485
        %5258 = vmatpush2.msra.mxu0 %v1484
        %5259 = vmatprep.subr.mxu0 %v1483
        %5260 = vmatpush2.msra.mxu0 %v1482
        %5261 = vmatprep.subr.mxu0 %v1481
        %5262 = vmatpush2.msra.mxu0 %v1480
        %5263 = vmatprep.subr.mxu0 %v1479
        %5264 = vmatpush2.msra.mxu0 %v1478
        %5265 = vmatprep.subr.mxu0 %v1477
        %5266 = vmatpush2.msra.mxu0 %v1476
        %5267 = vmatprep.subr.mxu0 %v1475
        %5268 = vmatpush2.msra.mxu0 %v1474
        %5269 = vmatprep.subr.mxu0 %v1473
        %5270 = vmatpush2.msra.mxu0 %v1472
        %5271 = vmatprep.subr.mxu0 %v1471
        %5272 = vmatpush2.msra.mxu0 %v1470
        %5273 = vmatprep.subr.mxu0 %v1469
        %5274 = vmatpush2.msra.mxu0 %v1468
        %5275 = vmatprep.subr.mxu0 %v1467
        %5276 = vmatpush2.msra.mxu0 %v1466
        %5277 = vmatprep.subr.mxu0 %v1465
        %5278 = vmatpush2.msra.mxu0 %v1464
        %5279 = vmatprep.subr.mxu0 %v1463
        %5280 = vmatpush2.msra.mxu0 %v1462
        %5281 = vmatprep.mubr.f32.mxu0 %v3718
        %5282 = vmatmul.mubr.f32.gmra.mxu0 %v3710
        %v5283 = vpop.f32.mrf.mxu0
        %v5284 = vadd.f32 %v5213, %v5283
        %v5285 = vpop.f32.mrf.mxu0
        %v5286 = vadd.f32 %v5215, %v5285
        %5287 = vdwg.mxu0
        %5288 = vmatprep.subr.mxu0 %v1525
        %5289 = vmatpush1.msra.mxu0 %v1524
        %5290 = vmatprep.subr.mxu0 %v1523
        %5291 = vmatpush1.msra.mxu0 %v1522
        %5292 = vmatprep.subr.mxu0 %v1521
        %5293 = vmatpush1.msra.mxu0 %v1520
        %5294 = vmatprep.subr.mxu0 %v1519
        %5295 = vmatpush1.msra.mxu0 %v1518
        %5296 = vmatprep.subr.mxu0 %v1517
        %5297 = vmatpush1.msra.mxu0 %v1516
        %5298 = vmatprep.subr.mxu0 %v1515
        %5299 = vmatpush1.msra.mxu0 %v1514
        %5300 = vmatprep.subr.mxu0 %v1513
        %5301 = vmatpush1.msra.mxu0 %v1512
        %5302 = vmatprep.subr.mxu0 %v1511
        %5303 = vmatpush1.msra.mxu0 %v1510
        %5304 = vmatprep.subr.mxu0 %v1509
        %5305 = vmatpush1.msra.mxu0 %v1508
        %5306 = vmatprep.subr.mxu0 %v1507
        %5307 = vmatpush1.msra.mxu0 %v1506
        %5308 = vmatprep.subr.mxu0 %v1505
        %5309 = vmatpush1.msra.mxu0 %v1504
        %5310 = vmatprep.subr.mxu0 %v1503
        %5311 = vmatpush1.msra.mxu0 %v1502
        %5312 = vmatprep.subr.mxu0 %v1501
        %5313 = vmatpush1.msra.mxu0 %v1500
        %5314 = vmatprep.subr.mxu0 %v1499
        %5315 = vmatpush1.msra.mxu0 %v1498
        %5316 = vmatprep.subr.mxu0 %v1497
        %5317 = vmatpush1.msra.mxu0 %v1496
        %5318 = vmatprep.subr.mxu0 %v1495
        %5319 = vmatpush1.msra.mxu0 %v1494
        %5320 = vmatprep.subr.mxu0 %v1557
        %5321 = vmatpush2.msra.mxu0 %v1556
        %5322 = vmatprep.subr.mxu0 %v1555
        %5323 = vmatpush2.msra.mxu0 %v1554
        %5324 = vmatprep.subr.mxu0 %v1553
        %5325 = vmatpush2.msra.mxu0 %v1552
        %5326 = vmatprep.subr.mxu0 %v1551
        %5327 = vmatpush2.msra.mxu0 %v1550
        %5328 = vmatprep.subr.mxu0 %v1549
        %5329 = vmatpush2.msra.mxu0 %v1548
        %5330 = vmatprep.subr.mxu0 %v1547
        %5331 = vmatpush2.msra.mxu0 %v1546
        %5332 = vmatprep.subr.mxu0 %v1545
        %5333 = vmatpush2.msra.mxu0 %v1544
        %5334 = vmatprep.subr.mxu0 %v1543
        %5335 = vmatpush2.msra.mxu0 %v1542
        %5336 = vmatprep.subr.mxu0 %v1541
        %5337 = vmatpush2.msra.mxu0 %v1540
        %5338 = vmatprep.subr.mxu0 %v1539
        %5339 = vmatpush2.msra.mxu0 %v1538
        %5340 = vmatprep.subr.mxu0 %v1537
        %5341 = vmatpush2.msra.mxu0 %v1536
        %5342 = vmatprep.subr.mxu0 %v1535
        %5343 = vmatpush2.msra.mxu0 %v1534
        %5344 = vmatprep.subr.mxu0 %v1533
        %5345 = vmatpush2.msra.mxu0 %v1532
        %5346 = vmatprep.subr.mxu0 %v1531
        %5347 = vmatpush2.msra.mxu0 %v1530
        %5348 = vmatprep.subr.mxu0 %v1529
        %5349 = vmatpush2.msra.mxu0 %v1528
        %5350 = vmatprep.subr.mxu0 %v1527
        %5351 = vmatpush2.msra.mxu0 %v1526
        %5352 = vmatprep.mubr.f32.mxu0 %v3719
        %5353 = vmatmul.mubr.f32.gmra.mxu0 %v3717
        %v5354 = vpop.f32.mrf.mxu0
        %v5355 = vadd.f32 %v5284, %v5354
        %v5356 = vpop.f32.mrf.mxu0
        %v5357 = vadd.f32 %v5286, %v5356
        %5358 = vdwg.mxu0
        %5359 = vmatprep.subr.mxu0 %v1589
        %5360 = vmatpush1.msra.mxu0 %v1588
        %5361 = vmatprep.subr.mxu0 %v1587
        %5362 = vmatpush1.msra.mxu0 %v1586
        %5363 = vmatprep.subr.mxu0 %v1585
        %5364 = vmatpush1.msra.mxu0 %v1584
        %5365 = vmatprep.subr.mxu0 %v1583
        %5366 = vmatpush1.msra.mxu0 %v1582
        %5367 = vmatprep.subr.mxu0 %v1581
        %5368 = vmatpush1.msra.mxu0 %v1580
        %5369 = vmatprep.subr.mxu0 %v1579
        %5370 = vmatpush1.msra.mxu0 %v1578
        %5371 = vmatprep.subr.mxu0 %v1577
        %5372 = vmatpush1.msra.mxu0 %v1576
        %5373 = vmatprep.subr.mxu0 %v1575
        %5374 = vmatpush1.msra.mxu0 %v1574
        %5375 = vmatprep.subr.mxu0 %v1573
        %5376 = vmatpush1.msra.mxu0 %v1572
        %5377 = vmatprep.subr.mxu0 %v1571
        %5378 = vmatpush1.msra.mxu0 %v1570
        %5379 = vmatprep.subr.mxu0 %v1569
        %5380 = vmatpush1.msra.mxu0 %v1568
        %5381 = vmatprep.subr.mxu0 %v1567
        %5382 = vmatpush1.msra.mxu0 %v1566
        %5383 = vmatprep.subr.mxu0 %v1565
        %5384 = vmatpush1.msra.mxu0 %v1564
        %5385 = vmatprep.subr.mxu0 %v1563
        %5386 = vmatpush1.msra.mxu0 %v1562
        %5387 = vmatprep.subr.mxu0 %v1561
        %5388 = vmatpush1.msra.mxu0 %v1560
        %5389 = vmatprep.subr.mxu0 %v1559
        %5390 = vmatpush1.msra.mxu0 %v1558
        %5391 = vmatprep.subr.mxu0 %v1621
        %5392 = vmatpush2.msra.mxu0 %v1620
        %5393 = vmatprep.subr.mxu0 %v1619
        %5394 = vmatpush2.msra.mxu0 %v1618
        %5395 = vmatprep.subr.mxu0 %v1617
        %5396 = vmatpush2.msra.mxu0 %v1616
        %5397 = vmatprep.subr.mxu0 %v1615
        %5398 = vmatpush2.msra.mxu0 %v1614
        %5399 = vmatprep.subr.mxu0 %v1613
        %5400 = vmatpush2.msra.mxu0 %v1612
        %5401 = vmatprep.subr.mxu0 %v1611
        %5402 = vmatpush2.msra.mxu0 %v1610
        %5403 = vmatprep.subr.mxu0 %v1609
        %5404 = vmatpush2.msra.mxu0 %v1608
        %5405 = vmatprep.subr.mxu0 %v1607
        %5406 = vmatpush2.msra.mxu0 %v1606
        %5407 = vmatprep.subr.mxu0 %v1605
        %5408 = vmatpush2.msra.mxu0 %v1604
        %5409 = vmatprep.subr.mxu0 %v1603
        %5410 = vmatpush2.msra.mxu0 %v1602
        %5411 = vmatprep.subr.mxu0 %v1601
        %5412 = vmatpush2.msra.mxu0 %v1600
        %5413 = vmatprep.subr.mxu0 %v1599
        %5414 = vmatpush2.msra.mxu0 %v1598
        %5415 = vmatprep.subr.mxu0 %v1597
        %5416 = vmatpush2.msra.mxu0 %v1596
        %5417 = vmatprep.subr.mxu0 %v1595
        %5418 = vmatpush2.msra.mxu0 %v1594
        %5419 = vmatprep.subr.mxu0 %v1593
        %5420 = vmatpush2.msra.mxu0 %v1592
        %5421 = vmatprep.subr.mxu0 %v1591
        %5422 = vmatpush2.msra.mxu0 %v1590
        %5423 = vmatprep.mubr.f32.mxu0 %v3735
        %5424 = vmatmul.mubr.f32.gmra.mxu0 %v3727
        %v5425 = vpop.f32.mrf.mxu0
        %v5426 = vadd.f32 %v5355, %v5425
        %v5427 = vpop.f32.mrf.mxu0
        %v5428 = vadd.f32 %v5357, %v5427
        %5429 = vdwg.mxu0
        %5430 = vmatprep.subr.mxu0 %v1653
        %5431 = vmatpush1.msra.mxu0 %v1652
        %5432 = vmatprep.subr.mxu0 %v1651
        %5433 = vmatpush1.msra.mxu0 %v1650
        %5434 = vmatprep.subr.mxu0 %v1649
        %5435 = vmatpush1.msra.mxu0 %v1648
        %5436 = vmatprep.subr.mxu0 %v1647
        %5437 = vmatpush1.msra.mxu0 %v1646
        %5438 = vmatprep.subr.mxu0 %v1645
        %5439 = vmatpush1.msra.mxu0 %v1644
        %5440 = vmatprep.subr.mxu0 %v1643
        %5441 = vmatpush1.msra.mxu0 %v1642
        %5442 = vmatprep.subr.mxu0 %v1641
        %5443 = vmatpush1.msra.mxu0 %v1640
        %5444 = vmatprep.subr.mxu0 %v1639
        %5445 = vmatpush1.msra.mxu0 %v1638
        %5446 = vmatprep.subr.mxu0 %v1637
        %5447 = vmatpush1.msra.mxu0 %v1636
        %5448 = vmatprep.subr.mxu0 %v1635
        %5449 = vmatpush1.msra.mxu0 %v1634
        %5450 = vmatprep.subr.mxu0 %v1633
        %5451 = vmatpush1.msra.mxu0 %v1632
        %5452 = vmatprep.subr.mxu0 %v1631
        %5453 = vmatpush1.msra.mxu0 %v1630
        %5454 = vmatprep.subr.mxu0 %v1629
        %5455 = vmatpush1.msra.mxu0 %v1628
        %5456 = vmatprep.subr.mxu0 %v1627
        %5457 = vmatpush1.msra.mxu0 %v1626
        %5458 = vmatprep.subr.mxu0 %v1625
        %5459 = vmatpush1.msra.mxu0 %v1624
        %5460 = vmatprep.subr.mxu0 %v1623
        %5461 = vmatpush1.msra.mxu0 %v1622
        %5462 = vmatprep.subr.mxu0 %v1685
        %5463 = vmatpush2.msra.mxu0 %v1684
        %5464 = vmatprep.subr.mxu0 %v1683
        %5465 = vmatpush2.msra.mxu0 %v1682
        %5466 = vmatprep.subr.mxu0 %v1681
        %5467 = vmatpush2.msra.mxu0 %v1680
        %5468 = vmatprep.subr.mxu0 %v1679
        %5469 = vmatpush2.msra.mxu0 %v1678
        %5470 = vmatprep.subr.mxu0 %v1677
        %5471 = vmatpush2.msra.mxu0 %v1676
        %5472 = vmatprep.subr.mxu0 %v1675
        %5473 = vmatpush2.msra.mxu0 %v1674
        %5474 = vmatprep.subr.mxu0 %v1673
        %5475 = vmatpush2.msra.mxu0 %v1672
        %5476 = vmatprep.subr.mxu0 %v1671
        %5477 = vmatpush2.msra.mxu0 %v1670
        %5478 = vmatprep.subr.mxu0 %v1669
        %5479 = vmatpush2.msra.mxu0 %v1668
        %5480 = vmatprep.subr.mxu0 %v1667
        %5481 = vmatpush2.msra.mxu0 %v1666
        %5482 = vmatprep.subr.mxu0 %v1665
        %5483 = vmatpush2.msra.mxu0 %v1664
        %5484 = vmatprep.subr.mxu0 %v1663
        %5485 = vmatpush2.msra.mxu0 %v1662
        %5486 = vmatprep.subr.mxu0 %v1661
        %5487 = vmatpush2.msra.mxu0 %v1660
        %5488 = vmatprep.subr.mxu0 %v1659
        %5489 = vmatpush2.msra.mxu0 %v1658
        %5490 = vmatprep.subr.mxu0 %v1657
        %5491 = vmatpush2.msra.mxu0 %v1656
        %5492 = vmatprep.subr.mxu0 %v1655
        %5493 = vmatpush2.msra.mxu0 %v1654
        %5494 = vmatprep.mubr.f32.mxu0 %v3736
        %5495 = vmatmul.mubr.f32.gmra.mxu0 %v3734
        %v5496 = vpop.f32.mrf.mxu0
        %v5497 = vadd.f32 %v5426, %v5496
        %v5498 = vpop.f32.mrf.mxu0
        %v5499 = vadd.f32 %v5428, %v5498
        %5500 = vdwg.mxu0
        %5501 = vmatprep.subr.mxu0 %v1717
        %5502 = vmatpush1.msra.mxu0 %v1716
        %5503 = vmatprep.subr.mxu0 %v1715
        %5504 = vmatpush1.msra.mxu0 %v1714
        %5505 = vmatprep.subr.mxu0 %v1713
        %5506 = vmatpush1.msra.mxu0 %v1712
        %5507 = vmatprep.subr.mxu0 %v1711
        %5508 = vmatpush1.msra.mxu0 %v1710
        %5509 = vmatprep.subr.mxu0 %v1709
        %5510 = vmatpush1.msra.mxu0 %v1708
        %5511 = vmatprep.subr.mxu0 %v1707
        %5512 = vmatpush1.msra.mxu0 %v1706
        %5513 = vmatprep.subr.mxu0 %v1705
        %5514 = vmatpush1.msra.mxu0 %v1704
        %5515 = vmatprep.subr.mxu0 %v1703
        %5516 = vmatpush1.msra.mxu0 %v1702
        %5517 = vmatprep.subr.mxu0 %v1701
        %5518 = vmatpush1.msra.mxu0 %v1700
        %5519 = vmatprep.subr.mxu0 %v1699
        %5520 = vmatpush1.msra.mxu0 %v1698
        %5521 = vmatprep.subr.mxu0 %v1697
        %5522 = vmatpush1.msra.mxu0 %v1696
        %5523 = vmatprep.subr.mxu0 %v1695
        %5524 = vmatpush1.msra.mxu0 %v1694
        %5525 = vmatprep.subr.mxu0 %v1693
        %5526 = vmatpush1.msra.mxu0 %v1692
        %5527 = vmatprep.subr.mxu0 %v1691
        %5528 = vmatpush1.msra.mxu0 %v1690
        %5529 = vmatprep.subr.mxu0 %v1689
        %5530 = vmatpush1.msra.mxu0 %v1688
        %5531 = vmatprep.subr.mxu0 %v1687
        %5532 = vmatpush1.msra.mxu0 %v1686
        %5533 = vmatprep.subr.mxu0 %v1749
        %5534 = vmatpush2.msra.mxu0 %v1748
        %5535 = vmatprep.subr.mxu0 %v1747
        %5536 = vmatpush2.msra.mxu0 %v1746
        %5537 = vmatprep.subr.mxu0 %v1745
        %5538 = vmatpush2.msra.mxu0 %v1744
        %5539 = vmatprep.subr.mxu0 %v1743
        %5540 = vmatpush2.msra.mxu0 %v1742
        %5541 = vmatprep.subr.mxu0 %v1741
        %5542 = vmatpush2.msra.mxu0 %v1740
        %5543 = vmatprep.subr.mxu0 %v1739
        %5544 = vmatpush2.msra.mxu0 %v1738
        %5545 = vmatprep.subr.mxu0 %v1737
        %5546 = vmatpush2.msra.mxu0 %v1736
        %5547 = vmatprep.subr.mxu0 %v1735
        %5548 = vmatpush2.msra.mxu0 %v1734
        %5549 = vmatprep.subr.mxu0 %v1733
        %5550 = vmatpush2.msra.mxu0 %v1732
        %5551 = vmatprep.subr.mxu0 %v1731
        %5552 = vmatpush2.msra.mxu0 %v1730
        %5553 = vmatprep.subr.mxu0 %v1729
        %5554 = vmatpush2.msra.mxu0 %v1728
        %5555 = vmatprep.subr.mxu0 %v1727
        %5556 = vmatpush2.msra.mxu0 %v1726
        %5557 = vmatprep.subr.mxu0 %v1725
        %5558 = vmatpush2.msra.mxu0 %v1724
        %5559 = vmatprep.subr.mxu0 %v1723
        %5560 = vmatpush2.msra.mxu0 %v1722
        %5561 = vmatprep.subr.mxu0 %v1721
        %5562 = vmatpush2.msra.mxu0 %v1720
        %5563 = vmatprep.subr.mxu0 %v1719
        %5564 = vmatpush2.msra.mxu0 %v1718
        %5565 = vmatprep.mubr.f32.mxu0 %v3752
        %5566 = vmatmul.mubr.f32.gmra.mxu0 %v3744
        %v5567 = vpop.f32.mrf.mxu0
        %v5568 = vadd.f32 %v5497, %v5567
        %v5569 = vpop.f32.mrf.mxu0
        %v5570 = vadd.f32 %v5499, %v5569
        %5571 = vdwg.mxu0
        %5572 = vmatprep.subr.mxu0 %v1781
        %5573 = vmatpush1.msra.mxu0 %v1780
        %5574 = vmatprep.subr.mxu0 %v1779
        %5575 = vmatpush1.msra.mxu0 %v1778
        %5576 = vmatprep.subr.mxu0 %v1777
        %5577 = vmatpush1.msra.mxu0 %v1776
        %5578 = vmatprep.subr.mxu0 %v1775
        %5579 = vmatpush1.msra.mxu0 %v1774
        %5580 = vmatprep.subr.mxu0 %v1773
        %5581 = vmatpush1.msra.mxu0 %v1772
        %5582 = vmatprep.subr.mxu0 %v1771
        %5583 = vmatpush1.msra.mxu0 %v1770
        %5584 = vmatprep.subr.mxu0 %v1769
        %5585 = vmatpush1.msra.mxu0 %v1768
        %5586 = vmatprep.subr.mxu0 %v1767
        %5587 = vmatpush1.msra.mxu0 %v1766
        %5588 = vmatprep.subr.mxu0 %v1765
        %5589 = vmatpush1.msra.mxu0 %v1764
        %5590 = vmatprep.subr.mxu0 %v1763
        %5591 = vmatpush1.msra.mxu0 %v1762
        %5592 = vmatprep.subr.mxu0 %v1761
        %5593 = vmatpush1.msra.mxu0 %v1760
        %5594 = vmatprep.subr.mxu0 %v1759
        %5595 = vmatpush1.msra.mxu0 %v1758
        %5596 = vmatprep.subr.mxu0 %v1757
        %5597 = vmatpush1.msra.mxu0 %v1756
        %5598 = vmatprep.subr.mxu0 %v1755
        %5599 = vmatpush1.msra.mxu0 %v1754
        %5600 = vmatprep.subr.mxu0 %v1753
        %5601 = vmatpush1.msra.mxu0 %v1752
        %5602 = vmatprep.subr.mxu0 %v1751
        %5603 = vmatpush1.msra.mxu0 %v1750
        %5604 = vmatprep.subr.mxu0 %v1813
        %5605 = vmatpush2.msra.mxu0 %v1812
        %5606 = vmatprep.subr.mxu0 %v1811
        %5607 = vmatpush2.msra.mxu0 %v1810
        %5608 = vmatprep.subr.mxu0 %v1809
        %5609 = vmatpush2.msra.mxu0 %v1808
        %5610 = vmatprep.subr.mxu0 %v1807
        %5611 = vmatpush2.msra.mxu0 %v1806
        %5612 = vmatprep.subr.mxu0 %v1805
        %5613 = vmatpush2.msra.mxu0 %v1804
        %5614 = vmatprep.subr.mxu0 %v1803
        %5615 = vmatpush2.msra.mxu0 %v1802
        %5616 = vmatprep.subr.mxu0 %v1801
        %5617 = vmatpush2.msra.mxu0 %v1800
        %5618 = vmatprep.subr.mxu0 %v1799
        %5619 = vmatpush2.msra.mxu0 %v1798
        %5620 = vmatprep.subr.mxu0 %v1797
        %5621 = vmatpush2.msra.mxu0 %v1796
        %5622 = vmatprep.subr.mxu0 %v1795
        %5623 = vmatpush2.msra.mxu0 %v1794
        %5624 = vmatprep.subr.mxu0 %v1793
        %5625 = vmatpush2.msra.mxu0 %v1792
        %5626 = vmatprep.subr.mxu0 %v1791
        %5627 = vmatpush2.msra.mxu0 %v1790
        %5628 = vmatprep.subr.mxu0 %v1789
        %5629 = vmatpush2.msra.mxu0 %v1788
        %5630 = vmatprep.subr.mxu0 %v1787
        %5631 = vmatpush2.msra.mxu0 %v1786
        %5632 = vmatprep.subr.mxu0 %v1785
        %5633 = vmatpush2.msra.mxu0 %v1784
        %5634 = vmatprep.subr.mxu0 %v1783
        %5635 = vmatpush2.msra.mxu0 %v1782
        %5636 = vmatprep.mubr.f32.mxu0 %v3753
        %5637 = vmatmul.mubr.f32.gmra.mxu0 %v3751
        %v5638 = vpop.f32.mrf.mxu0
        %v5639 = vadd.f32 %v5568, %v5638
        %v5640 = vpop.f32.mrf.mxu0
        %v5641 = vadd.f32 %v5570, %v5640
        %5642 = vdwg.mxu0
        %5643 = vmatprep.subr.mxu0 %v1845
        %5644 = vmatpush1.msra.mxu0 %v1844
        %5645 = vmatprep.subr.mxu0 %v1843
        %5646 = vmatpush1.msra.mxu0 %v1842
        %5647 = vmatprep.subr.mxu0 %v1841
        %5648 = vmatpush1.msra.mxu0 %v1840
        %5649 = vmatprep.subr.mxu0 %v1839
        %5650 = vmatpush1.msra.mxu0 %v1838
        %5651 = vmatprep.subr.mxu0 %v1837
        %5652 = vmatpush1.msra.mxu0 %v1836
        %5653 = vmatprep.subr.mxu0 %v1835
        %5654 = vmatpush1.msra.mxu0 %v1834
        %5655 = vmatprep.subr.mxu0 %v1833
        %5656 = vmatpush1.msra.mxu0 %v1832
        %5657 = vmatprep.subr.mxu0 %v1831
        %5658 = vmatpush1.msra.mxu0 %v1830
        %5659 = vmatprep.subr.mxu0 %v1829
        %5660 = vmatpush1.msra.mxu0 %v1828
        %5661 = vmatprep.subr.mxu0 %v1827
        %5662 = vmatpush1.msra.mxu0 %v1826
        %5663 = vmatprep.subr.mxu0 %v1825
        %5664 = vmatpush1.msra.mxu0 %v1824
        %5665 = vmatprep.subr.mxu0 %v1823
        %5666 = vmatpush1.msra.mxu0 %v1822
        %5667 = vmatprep.subr.mxu0 %v1821
        %5668 = vmatpush1.msra.mxu0 %v1820
        %5669 = vmatprep.subr.mxu0 %v1819
        %5670 = vmatpush1.msra.mxu0 %v1818
        %5671 = vmatprep.subr.mxu0 %v1817
        %5672 = vmatpush1.msra.mxu0 %v1816
        %5673 = vmatprep.subr.mxu0 %v1815
        %5674 = vmatpush1.msra.mxu0 %v1814
        %5675 = vmatprep.subr.mxu0 %v1877
        %5676 = vmatpush2.msra.mxu0 %v1876
        %5677 = vmatprep.subr.mxu0 %v1875
        %5678 = vmatpush2.msra.mxu0 %v1874
        %5679 = vmatprep.subr.mxu0 %v1873
        %5680 = vmatpush2.msra.mxu0 %v1872
        %5681 = vmatprep.subr.mxu0 %v1871
        %5682 = vmatpush2.msra.mxu0 %v1870
        %5683 = vmatprep.subr.mxu0 %v1869
        %5684 = vmatpush2.msra.mxu0 %v1868
        %5685 = vmatprep.subr.mxu0 %v1867
        %5686 = vmatpush2.msra.mxu0 %v1866
        %5687 = vmatprep.subr.mxu0 %v1865
        %5688 = vmatpush2.msra.mxu0 %v1864
        %5689 = vmatprep.subr.mxu0 %v1863
        %5690 = vmatpush2.msra.mxu0 %v1862
        %5691 = vmatprep.subr.mxu0 %v1861
        %5692 = vmatpush2.msra.mxu0 %v1860
        %5693 = vmatprep.subr.mxu0 %v1859
        %5694 = vmatpush2.msra.mxu0 %v1858
        %5695 = vmatprep.subr.mxu0 %v1857
        %5696 = vmatpush2.msra.mxu0 %v1856
        %5697 = vmatprep.subr.mxu0 %v1855
        %5698 = vmatpush2.msra.mxu0 %v1854
        %5699 = vmatprep.subr.mxu0 %v1853
        %5700 = vmatpush2.msra.mxu0 %v1852
        %5701 = vmatprep.subr.mxu0 %v1851
        %5702 = vmatpush2.msra.mxu0 %v1850
        %5703 = vmatprep.subr.mxu0 %v1849
        %5704 = vmatpush2.msra.mxu0 %v1848
        %5705 = vmatprep.subr.mxu0 %v1847
        %5706 = vmatpush2.msra.mxu0 %v1846
        %5707 = vmatprep.mubr.f32.mxu0 %v3769
        %5708 = vmatmul.mubr.f32.gmra.mxu0 %v3761
        %v5709 = vpop.f32.mrf.mxu0
        %v5710 = vadd.f32 %v5639, %v5709
        %v5711 = vpop.f32.mrf.mxu0
        %v5712 = vadd.f32 %v5641, %v5711
        %5713 = vdwg.mxu0
        %5714 = vmatprep.subr.mxu0 %v1909
        %5715 = vmatpush1.msra.mxu0 %v1908
        %5716 = vmatprep.subr.mxu0 %v1907
        %5717 = vmatpush1.msra.mxu0 %v1906
        %5718 = vmatprep.subr.mxu0 %v1905
        %5719 = vmatpush1.msra.mxu0 %v1904
        %5720 = vmatprep.subr.mxu0 %v1903
        %5721 = vmatpush1.msra.mxu0 %v1902
        %5722 = vmatprep.subr.mxu0 %v1901
        %5723 = vmatpush1.msra.mxu0 %v1900
        %5724 = vmatprep.subr.mxu0 %v1899
        %5725 = vmatpush1.msra.mxu0 %v1898
        %5726 = vmatprep.subr.mxu0 %v1897
        %5727 = vmatpush1.msra.mxu0 %v1896
        %5728 = vmatprep.subr.mxu0 %v1895
        %5729 = vmatpush1.msra.mxu0 %v1894
        %5730 = vmatprep.subr.mxu0 %v1893
        %5731 = vmatpush1.msra.mxu0 %v1892
        %5732 = vmatprep.subr.mxu0 %v1891
        %5733 = vmatpush1.msra.mxu0 %v1890
        %5734 = vmatprep.subr.mxu0 %v1889
        %5735 = vmatpush1.msra.mxu0 %v1888
        %5736 = vmatprep.subr.mxu0 %v1887
        %5737 = vmatpush1.msra.mxu0 %v1886
        %5738 = vmatprep.subr.mxu0 %v1885
        %5739 = vmatpush1.msra.mxu0 %v1884
        %5740 = vmatprep.subr.mxu0 %v1883
        %5741 = vmatpush1.msra.mxu0 %v1882
        %5742 = vmatprep.subr.mxu0 %v1881
        %5743 = vmatpush1.msra.mxu0 %v1880
        %5744 = vmatprep.subr.mxu0 %v1879
        %5745 = vmatpush1.msra.mxu0 %v1878
        %5746 = vmatprep.subr.mxu0 %v1941
        %5747 = vmatpush2.msra.mxu0 %v1940
        %5748 = vmatprep.subr.mxu0 %v1939
        %5749 = vmatpush2.msra.mxu0 %v1938
        %5750 = vmatprep.subr.mxu0 %v1937
        %5751 = vmatpush2.msra.mxu0 %v1936
        %5752 = vmatprep.subr.mxu0 %v1935
        %5753 = vmatpush2.msra.mxu0 %v1934
        %5754 = vmatprep.subr.mxu0 %v1933
        %5755 = vmatpush2.msra.mxu0 %v1932
        %5756 = vmatprep.subr.mxu0 %v1931
        %5757 = vmatpush2.msra.mxu0 %v1930
        %5758 = vmatprep.subr.mxu0 %v1929
        %5759 = vmatpush2.msra.mxu0 %v1928
        %5760 = vmatprep.subr.mxu0 %v1927
        %5761 = vmatpush2.msra.mxu0 %v1926
        %5762 = vmatprep.subr.mxu0 %v1925
        %5763 = vmatpush2.msra.mxu0 %v1924
        %5764 = vmatprep.subr.mxu0 %v1923
        %5765 = vmatpush2.msra.mxu0 %v1922
        %5766 = vmatprep.subr.mxu0 %v1921
        %5767 = vmatpush2.msra.mxu0 %v1920
        %5768 = vmatprep.subr.mxu0 %v1919
        %5769 = vmatpush2.msra.mxu0 %v1918
        %5770 = vmatprep.subr.mxu0 %v1917
        %5771 = vmatpush2.msra.mxu0 %v1916
        %5772 = vmatprep.subr.mxu0 %v1915
        %5773 = vmatpush2.msra.mxu0 %v1914
        %5774 = vmatprep.subr.mxu0 %v1913
        %5775 = vmatpush2.msra.mxu0 %v1912
        %5776 = vmatprep.subr.mxu0 %v1911
        %5777 = vmatpush2.msra.mxu0 %v1910
        %5778 = vmatprep.mubr.f32.mxu0 %v3770
        %5779 = vmatmul.mubr.f32.gmra.mxu0 %v3768
        %v5780 = vpop.f32.mrf.mxu0
        %v5781 = vadd.f32 %v5710, %v5780
        %v5782 = vpop.f32.mrf.mxu0
        %v5783 = vadd.f32 %v5712, %v5782
        %5784 = vdwg.mxu0
        %5785 = vmatprep.subr.mxu0 %v1973
        %5786 = vmatpush1.msra.mxu0 %v1972
        %5787 = vmatprep.subr.mxu0 %v1971
        %5788 = vmatpush1.msra.mxu0 %v1970
        %5789 = vmatprep.subr.mxu0 %v1969
        %5790 = vmatpush1.msra.mxu0 %v1968
        %5791 = vmatprep.subr.mxu0 %v1967
        %5792 = vmatpush1.msra.mxu0 %v1966
        %5793 = vmatprep.subr.mxu0 %v1965
        %5794 = vmatpush1.msra.mxu0 %v1964
        %5795 = vmatprep.subr.mxu0 %v1963
        %5796 = vmatpush1.msra.mxu0 %v1962
        %5797 = vmatprep.subr.mxu0 %v1961
        %5798 = vmatpush1.msra.mxu0 %v1960
        %5799 = vmatprep.subr.mxu0 %v1959
        %5800 = vmatpush1.msra.mxu0 %v1958
        %5801 = vmatprep.subr.mxu0 %v1957
        %5802 = vmatpush1.msra.mxu0 %v1956
        %5803 = vmatprep.subr.mxu0 %v1955
        %5804 = vmatpush1.msra.mxu0 %v1954
        %5805 = vmatprep.subr.mxu0 %v1953
        %5806 = vmatpush1.msra.mxu0 %v1952
        %5807 = vmatprep.subr.mxu0 %v1951
        %5808 = vmatpush1.msra.mxu0 %v1950
        %5809 = vmatprep.subr.mxu0 %v1949
        %5810 = vmatpush1.msra.mxu0 %v1948
        %5811 = vmatprep.subr.mxu0 %v1947
        %5812 = vmatpush1.msra.mxu0 %v1946
        %5813 = vmatprep.subr.mxu0 %v1945
        %5814 = vmatpush1.msra.mxu0 %v1944
        %5815 = vmatprep.subr.mxu0 %v1943
        %5816 = vmatpush1.msra.mxu0 %v1942
        %5817 = vmatprep.subr.mxu0 %v2005
        %5818 = vmatpush2.msra.mxu0 %v2004
        %5819 = vmatprep.subr.mxu0 %v2003
        %5820 = vmatpush2.msra.mxu0 %v2002
        %5821 = vmatprep.subr.mxu0 %v2001
        %5822 = vmatpush2.msra.mxu0 %v2000
        %5823 = vmatprep.subr.mxu0 %v1999
        %5824 = vmatpush2.msra.mxu0 %v1998
        %5825 = vmatprep.subr.mxu0 %v1997
        %5826 = vmatpush2.msra.mxu0 %v1996
        %5827 = vmatprep.subr.mxu0 %v1995
        %5828 = vmatpush2.msra.mxu0 %v1994
        %5829 = vmatprep.subr.mxu0 %v1993
        %5830 = vmatpush2.msra.mxu0 %v1992
        %5831 = vmatprep.subr.mxu0 %v1991
        %5832 = vmatpush2.msra.mxu0 %v1990
        %5833 = vmatprep.subr.mxu0 %v1989
        %5834 = vmatpush2.msra.mxu0 %v1988
        %5835 = vmatprep.subr.mxu0 %v1987
        %5836 = vmatpush2.msra.mxu0 %v1986
        %5837 = vmatprep.subr.mxu0 %v1985
        %5838 = vmatpush2.msra.mxu0 %v1984
        %5839 = vmatprep.subr.mxu0 %v1983
        %5840 = vmatpush2.msra.mxu0 %v1982
        %5841 = vmatprep.subr.mxu0 %v1981
        %5842 = vmatpush2.msra.mxu0 %v1980
        %5843 = vmatprep.subr.mxu0 %v1979
        %5844 = vmatpush2.msra.mxu0 %v1978
        %5845 = vmatprep.subr.mxu0 %v1977
        %5846 = vmatpush2.msra.mxu0 %v1976
        %5847 = vmatprep.subr.mxu0 %v1975
        %5848 = vmatpush2.msra.mxu0 %v1974
        %5849 = vmatprep.mubr.f32.mxu0 %v3786
        %5850 = vmatmul.mubr.f32.gmra.mxu0 %v3778
        %v5851 = vpop.f32.mrf.mxu0
        %v5852 = vadd.f32 %v5781, %v5851
        %v5853 = vpop.f32.mrf.mxu0
        %v5854 = vadd.f32 %v5783, %v5853
        %5855 = vdwg.mxu0
        %5856 = vmatprep.subr.mxu0 %v2037
        %5857 = vmatpush1.msra.mxu0 %v2036
        %5858 = vmatprep.subr.mxu0 %v2035
        %5859 = vmatpush1.msra.mxu0 %v2034
        %5860 = vmatprep.subr.mxu0 %v2033
        %5861 = vmatpush1.msra.mxu0 %v2032
        %5862 = vmatprep.subr.mxu0 %v2031
        %5863 = vmatpush1.msra.mxu0 %v2030
        %5864 = vmatprep.subr.mxu0 %v2029
        %5865 = vmatpush1.msra.mxu0 %v2028
        %5866 = vmatprep.subr.mxu0 %v2027
        %5867 = vmatpush1.msra.mxu0 %v2026
        %5868 = vmatprep.subr.mxu0 %v2025
        %5869 = vmatpush1.msra.mxu0 %v2024
        %5870 = vmatprep.subr.mxu0 %v2023
        %5871 = vmatpush1.msra.mxu0 %v2022
        %5872 = vmatprep.subr.mxu0 %v2021
        %5873 = vmatpush1.msra.mxu0 %v2020
        %5874 = vmatprep.subr.mxu0 %v2019
        %5875 = vmatpush1.msra.mxu0 %v2018
        %5876 = vmatprep.subr.mxu0 %v2017
        %5877 = vmatpush1.msra.mxu0 %v2016
        %5878 = vmatprep.subr.mxu0 %v2015
        %5879 = vmatpush1.msra.mxu0 %v2014
        %5880 = vmatprep.subr.mxu0 %v2013
        %5881 = vmatpush1.msra.mxu0 %v2012
        %5882 = vmatprep.subr.mxu0 %v2011
        %5883 = vmatpush1.msra.mxu0 %v2010
        %5884 = vmatprep.subr.mxu0 %v2009
        %5885 = vmatpush1.msra.mxu0 %v2008
        %5886 = vmatprep.subr.mxu0 %v2007
        %5887 = vmatpush1.msra.mxu0 %v2006
        %5888 = vmatprep.subr.mxu0 %v2069
        %5889 = vmatpush2.msra.mxu0 %v2068
        %5890 = vmatprep.subr.mxu0 %v2067
        %5891 = vmatpush2.msra.mxu0 %v2066
        %5892 = vmatprep.subr.mxu0 %v2065
        %5893 = vmatpush2.msra.mxu0 %v2064
        %5894 = vmatprep.subr.mxu0 %v2063
        %5895 = vmatpush2.msra.mxu0 %v2062
        %5896 = vmatprep.subr.mxu0 %v2061
        %5897 = vmatpush2.msra.mxu0 %v2060
        %5898 = vmatprep.subr.mxu0 %v2059
        %5899 = vmatpush2.msra.mxu0 %v2058
        %5900 = vmatprep.subr.mxu0 %v2057
        %5901 = vmatpush2.msra.mxu0 %v2056
        %5902 = vmatprep.subr.mxu0 %v2055
        %5903 = vmatpush2.msra.mxu0 %v2054
        %5904 = vmatprep.subr.mxu0 %v2053
        %5905 = vmatpush2.msra.mxu0 %v2052
        %5906 = vmatprep.subr.mxu0 %v2051
        %5907 = vmatpush2.msra.mxu0 %v2050
        %5908 = vmatprep.subr.mxu0 %v2049
        %5909 = vmatpush2.msra.mxu0 %v2048
        %5910 = vmatprep.subr.mxu0 %v2047
        %5911 = vmatpush2.msra.mxu0 %v2046
        %5912 = vmatprep.subr.mxu0 %v2045
        %5913 = vmatpush2.msra.mxu0 %v2044
        %5914 = vmatprep.subr.mxu0 %v2043
        %5915 = vmatpush2.msra.mxu0 %v2042
        %5916 = vmatprep.subr.mxu0 %v2041
        %5917 = vmatpush2.msra.mxu0 %v2040
        %5918 = vmatprep.subr.mxu0 %v2039
        %5919 = vmatpush2.msra.mxu0 %v2038
        %5920 = vmatprep.mubr.f32.mxu0 %v3787
        %5921 = vmatmul.mubr.f32.gmra.mxu0 %v3785
        %v5922 = vpop.f32.mrf.mxu0
        %v5923 = vadd.f32 %v5852, %v5922
        %v5924 = vpop.f32.mrf.mxu0
        %v5925 = vadd.f32 %v5854, %v5924
        %5926 = vdwg.mxu0
        %5927 = vmatprep.subr.mxu0 %v2101
        %5928 = vmatpush1.msra.mxu0 %v2100
        %5929 = vmatprep.subr.mxu0 %v2099
        %5930 = vmatpush1.msra.mxu0 %v2098
        %5931 = vmatprep.subr.mxu0 %v2097
        %5932 = vmatpush1.msra.mxu0 %v2096
        %5933 = vmatprep.subr.mxu0 %v2095
        %5934 = vmatpush1.msra.mxu0 %v2094
        %5935 = vmatprep.subr.mxu0 %v2093
        %5936 = vmatpush1.msra.mxu0 %v2092
        %5937 = vmatprep.subr.mxu0 %v2091
        %5938 = vmatpush1.msra.mxu0 %v2090
        %5939 = vmatprep.subr.mxu0 %v2089
        %5940 = vmatpush1.msra.mxu0 %v2088
        %5941 = vmatprep.subr.mxu0 %v2087
        %5942 = vmatpush1.msra.mxu0 %v2086
        %5943 = vmatprep.subr.mxu0 %v2085
        %5944 = vmatpush1.msra.mxu0 %v2084
        %5945 = vmatprep.subr.mxu0 %v2083
        %5946 = vmatpush1.msra.mxu0 %v2082
        %5947 = vmatprep.subr.mxu0 %v2081
        %5948 = vmatpush1.msra.mxu0 %v2080
        %5949 = vmatprep.subr.mxu0 %v2079
        %5950 = vmatpush1.msra.mxu0 %v2078
        %5951 = vmatprep.subr.mxu0 %v2077
        %5952 = vmatpush1.msra.mxu0 %v2076
        %5953 = vmatprep.subr.mxu0 %v2075
        %5954 = vmatpush1.msra.mxu0 %v2074
        %5955 = vmatprep.subr.mxu0 %v2073
        %5956 = vmatpush1.msra.mxu0 %v2072
        %5957 = vmatprep.subr.mxu0 %v2071
        %5958 = vmatpush1.msra.mxu0 %v2070
        %5959 = vmatprep.subr.mxu0 %v2133
        %5960 = vmatpush2.msra.mxu0 %v2132
        %5961 = vmatprep.subr.mxu0 %v2131
        %5962 = vmatpush2.msra.mxu0 %v2130
        %5963 = vmatprep.subr.mxu0 %v2129
        %5964 = vmatpush2.msra.mxu0 %v2128
        %5965 = vmatprep.subr.mxu0 %v2127
        %5966 = vmatpush2.msra.mxu0 %v2126
        %5967 = vmatprep.subr.mxu0 %v2125
        %5968 = vmatpush2.msra.mxu0 %v2124
        %5969 = vmatprep.subr.mxu0 %v2123
        %5970 = vmatpush2.msra.mxu0 %v2122
        %5971 = vmatprep.subr.mxu0 %v2121
        %5972 = vmatpush2.msra.mxu0 %v2120
        %5973 = vmatprep.subr.mxu0 %v2119
        %5974 = vmatpush2.msra.mxu0 %v2118
        %5975 = vmatprep.subr.mxu0 %v2117
        %5976 = vmatpush2.msra.mxu0 %v2116
        %5977 = vmatprep.subr.mxu0 %v2115
        %5978 = vmatpush2.msra.mxu0 %v2114
        %5979 = vmatprep.subr.mxu0 %v2113
        %5980 = vmatpush2.msra.mxu0 %v2112
        %5981 = vmatprep.subr.mxu0 %v2111
        %5982 = vmatpush2.msra.mxu0 %v2110
        %5983 = vmatprep.subr.mxu0 %v2109
        %5984 = vmatpush2.msra.mxu0 %v2108
        %5985 = vmatprep.subr.mxu0 %v2107
        %5986 = vmatpush2.msra.mxu0 %v2106
        %5987 = vmatprep.subr.mxu0 %v2105
        %5988 = vmatpush2.msra.mxu0 %v2104
        %5989 = vmatprep.subr.mxu0 %v2103
        %5990 = vmatpush2.msra.mxu0 %v2102
        %5991 = vmatprep.mubr.f32.mxu0 %v3803
        %5992 = vmatmul.mubr.f32.gmra.mxu0 %v3795
        %v5993 = vpop.f32.mrf.mxu0
        %v5994 = vadd.f32 %v5923, %v5993
        %v5995 = vpop.f32.mrf.mxu0
        %v5996 = vadd.f32 %v5925, %v5995
        %5997 = vdwg.mxu0
        %5998 = vmatprep.subr.mxu0 %v2165
        %5999 = vmatpush1.msra.mxu0 %v2164
        %6000 = vmatprep.subr.mxu0 %v2163
        %6001 = vmatpush1.msra.mxu0 %v2162
        %6002 = vmatprep.subr.mxu0 %v2161
        %6003 = vmatpush1.msra.mxu0 %v2160
        %6004 = vmatprep.subr.mxu0 %v2159
        %6005 = vmatpush1.msra.mxu0 %v2158
        %6006 = vmatprep.subr.mxu0 %v2157
        %6007 = vmatpush1.msra.mxu0 %v2156
        %6008 = vmatprep.subr.mxu0 %v2155
        %6009 = vmatpush1.msra.mxu0 %v2154
        %6010 = vmatprep.subr.mxu0 %v2153
        %6011 = vmatpush1.msra.mxu0 %v2152
        %6012 = vmatprep.subr.mxu0 %v2151
        %6013 = vmatpush1.msra.mxu0 %v2150
        %6014 = vmatprep.subr.mxu0 %v2149
        %6015 = vmatpush1.msra.mxu0 %v2148
        %6016 = vmatprep.subr.mxu0 %v2147
        %6017 = vmatpush1.msra.mxu0 %v2146
        %6018 = vmatprep.subr.mxu0 %v2145
        %6019 = vmatpush1.msra.mxu0 %v2144
        %6020 = vmatprep.subr.mxu0 %v2143
        %6021 = vmatpush1.msra.mxu0 %v2142
        %6022 = vmatprep.subr.mxu0 %v2141
        %6023 = vmatpush1.msra.mxu0 %v2140
        %6024 = vmatprep.subr.mxu0 %v2139
        %6025 = vmatpush1.msra.mxu0 %v2138
        %6026 = vmatprep.subr.mxu0 %v2137
        %6027 = vmatpush1.msra.mxu0 %v2136
        %6028 = vmatprep.subr.mxu0 %v2135
        %6029 = vmatpush1.msra.mxu0 %v2134
        %6030 = vmatprep.subr.mxu0 %v2197
        %6031 = vmatpush2.msra.mxu0 %v2196
        %6032 = vmatprep.subr.mxu0 %v2195
        %6033 = vmatpush2.msra.mxu0 %v2194
        %6034 = vmatprep.subr.mxu0 %v2193
        %6035 = vmatpush2.msra.mxu0 %v2192
        %6036 = vmatprep.subr.mxu0 %v2191
        %6037 = vmatpush2.msra.mxu0 %v2190
        %6038 = vmatprep.subr.mxu0 %v2189
        %6039 = vmatpush2.msra.mxu0 %v2188
        %6040 = vmatprep.subr.mxu0 %v2187
        %6041 = vmatpush2.msra.mxu0 %v2186
        %6042 = vmatprep.subr.mxu0 %v2185
        %6043 = vmatpush2.msra.mxu0 %v2184
        %6044 = vmatprep.subr.mxu0 %v2183
        %6045 = vmatpush2.msra.mxu0 %v2182
        %6046 = vmatprep.subr.mxu0 %v2181
        %6047 = vmatpush2.msra.mxu0 %v2180
        %6048 = vmatprep.subr.mxu0 %v2179
        %6049 = vmatpush2.msra.mxu0 %v2178
        %6050 = vmatprep.subr.mxu0 %v2177
        %6051 = vmatpush2.msra.mxu0 %v2176
        %6052 = vmatprep.subr.mxu0 %v2175
        %6053 = vmatpush2.msra.mxu0 %v2174
        %6054 = vmatprep.subr.mxu0 %v2173
        %6055 = vmatpush2.msra.mxu0 %v2172
        %6056 = vmatprep.subr.mxu0 %v2171
        %6057 = vmatpush2.msra.mxu0 %v2170
        %6058 = vmatprep.subr.mxu0 %v2169
        %6059 = vmatpush2.msra.mxu0 %v2168
        %6060 = vmatprep.subr.mxu0 %v2167
        %6061 = vmatpush2.msra.mxu0 %v2166
        %6062 = vmatprep.mubr.f32.mxu0 %v3804
        %6063 = vmatmul.mubr.f32.gmra.mxu0 %v3802
        %v6064 = vpop.f32.mrf.mxu0
        %v6065 = vadd.f32 %v5994, %v6064
        %v6066 = vpop.f32.mrf.mxu0
        %v6067 = vadd.f32 %v5996, %v6066
        %6068 = vdwg.mxu0
        %6069 = vmatprep.subr.mxu0 %v2229
        %6070 = vmatpush1.msra.mxu0 %v2228
        %6071 = vmatprep.subr.mxu0 %v2227
        %6072 = vmatpush1.msra.mxu0 %v2226
        %6073 = vmatprep.subr.mxu0 %v2225
        %6074 = vmatpush1.msra.mxu0 %v2224
        %6075 = vmatprep.subr.mxu0 %v2223
        %6076 = vmatpush1.msra.mxu0 %v2222
        %6077 = vmatprep.subr.mxu0 %v2221
        %6078 = vmatpush1.msra.mxu0 %v2220
        %6079 = vmatprep.subr.mxu0 %v2219
        %6080 = vmatpush1.msra.mxu0 %v2218
        %6081 = vmatprep.subr.mxu0 %v2217
        %6082 = vmatpush1.msra.mxu0 %v2216
        %6083 = vmatprep.subr.mxu0 %v2215
        %6084 = vmatpush1.msra.mxu0 %v2214
        %6085 = vmatprep.subr.mxu0 %v2213
        %6086 = vmatpush1.msra.mxu0 %v2212
        %6087 = vmatprep.subr.mxu0 %v2211
        %6088 = vmatpush1.msra.mxu0 %v2210
        %6089 = vmatprep.subr.mxu0 %v2209
        %6090 = vmatpush1.msra.mxu0 %v2208
        %6091 = vmatprep.subr.mxu0 %v2207
        %6092 = vmatpush1.msra.mxu0 %v2206
        %6093 = vmatprep.subr.mxu0 %v2205
        %6094 = vmatpush1.msra.mxu0 %v2204
        %6095 = vmatprep.subr.mxu0 %v2203
        %6096 = vmatpush1.msra.mxu0 %v2202
        %6097 = vmatprep.subr.mxu0 %v2201
        %6098 = vmatpush1.msra.mxu0 %v2200
        %6099 = vmatprep.subr.mxu0 %v2199
        %6100 = vmatpush1.msra.mxu0 %v2198
        %6101 = vmatprep.subr.mxu0 %v2261
        %6102 = vmatpush2.msra.mxu0 %v2260
        %6103 = vmatprep.subr.mxu0 %v2259
        %6104 = vmatpush2.msra.mxu0 %v2258
        %6105 = vmatprep.subr.mxu0 %v2257
        %6106 = vmatpush2.msra.mxu0 %v2256
        %6107 = vmatprep.subr.mxu0 %v2255
        %6108 = vmatpush2.msra.mxu0 %v2254
        %6109 = vmatprep.subr.mxu0 %v2253
        %6110 = vmatpush2.msra.mxu0 %v2252
        %6111 = vmatprep.subr.mxu0 %v2251
        %6112 = vmatpush2.msra.mxu0 %v2250
        %6113 = vmatprep.subr.mxu0 %v2249
        %6114 = vmatpush2.msra.mxu0 %v2248
        %6115 = vmatprep.subr.mxu0 %v2247
        %6116 = vmatpush2.msra.mxu0 %v2246
        %6117 = vmatprep.subr.mxu0 %v2245
        %6118 = vmatpush2.msra.mxu0 %v2244
        %6119 = vmatprep.subr.mxu0 %v2243
        %6120 = vmatpush2.msra.mxu0 %v2242
        %6121 = vmatprep.subr.mxu0 %v2241
        %6122 = vmatpush2.msra.mxu0 %v2240
        %6123 = vmatprep.subr.mxu0 %v2239
        %6124 = vmatpush2.msra.mxu0 %v2238
        %6125 = vmatprep.subr.mxu0 %v2237
        %6126 = vmatpush2.msra.mxu0 %v2236
        %6127 = vmatprep.subr.mxu0 %v2235
        %6128 = vmatpush2.msra.mxu0 %v2234
        %6129 = vmatprep.subr.mxu0 %v2233
        %6130 = vmatpush2.msra.mxu0 %v2232
        %6131 = vmatprep.subr.mxu0 %v2231
        %6132 = vmatpush2.msra.mxu0 %v2230
        %6133 = vmatprep.mubr.f32.mxu0 %v3820
        %6134 = vmatmul.mubr.f32.gmra.mxu0 %v3812
        %v6135 = vpop.f32.mrf.mxu0
        %v6136 = vadd.f32 %v6065, %v6135
        %v6137 = vpop.f32.mrf.mxu0
        %v6138 = vadd.f32 %v6067, %v6137
        %6139 = vdwg.mxu0
        %6140 = vmatprep.subr.mxu0 %v2293
        %6141 = vmatpush1.msra.mxu0 %v2292
        %6142 = vmatprep.subr.mxu0 %v2291
        %6143 = vmatpush1.msra.mxu0 %v2290
        %6144 = vmatprep.subr.mxu0 %v2289
        %6145 = vmatpush1.msra.mxu0 %v2288
        %6146 = vmatprep.subr.mxu0 %v2287
        %6147 = vmatpush1.msra.mxu0 %v2286
        %6148 = vmatprep.subr.mxu0 %v2285
        %6149 = vmatpush1.msra.mxu0 %v2284
        %6150 = vmatprep.subr.mxu0 %v2283
        %6151 = vmatpush1.msra.mxu0 %v2282
        %6152 = vmatprep.subr.mxu0 %v2281
        %6153 = vmatpush1.msra.mxu0 %v2280
        %6154 = vmatprep.subr.mxu0 %v2279
        %6155 = vmatpush1.msra.mxu0 %v2278
        %6156 = vmatprep.subr.mxu0 %v2277
        %6157 = vmatpush1.msra.mxu0 %v2276
        %6158 = vmatprep.subr.mxu0 %v2275
        %6159 = vmatpush1.msra.mxu0 %v2274
        %6160 = vmatprep.subr.mxu0 %v2273
        %6161 = vmatpush1.msra.mxu0 %v2272
        %6162 = vmatprep.subr.mxu0 %v2271
        %6163 = vmatpush1.msra.mxu0 %v2270
        %6164 = vmatprep.subr.mxu0 %v2269
        %6165 = vmatpush1.msra.mxu0 %v2268
        %6166 = vmatprep.subr.mxu0 %v2267
        %6167 = vmatpush1.msra.mxu0 %v2266
        %6168 = vmatprep.subr.mxu0 %v2265
        %6169 = vmatpush1.msra.mxu0 %v2264
        %6170 = vmatprep.subr.mxu0 %v2263
        %6171 = vmatpush1.msra.mxu0 %v2262
        %6172 = vmatprep.subr.mxu0 %v2325
        %6173 = vmatpush2.msra.mxu0 %v2324
        %6174 = vmatprep.subr.mxu0 %v2323
        %6175 = vmatpush2.msra.mxu0 %v2322
        %6176 = vmatprep.subr.mxu0 %v2321
        %6177 = vmatpush2.msra.mxu0 %v2320
        %6178 = vmatprep.subr.mxu0 %v2319
        %6179 = vmatpush2.msra.mxu0 %v2318
        %6180 = vmatprep.subr.mxu0 %v2317
        %6181 = vmatpush2.msra.mxu0 %v2316
        %6182 = vmatprep.subr.mxu0 %v2315
        %6183 = vmatpush2.msra.mxu0 %v2314
        %6184 = vmatprep.subr.mxu0 %v2313
        %6185 = vmatpush2.msra.mxu0 %v2312
        %6186 = vmatprep.subr.mxu0 %v2311
        %6187 = vmatpush2.msra.mxu0 %v2310
        %6188 = vmatprep.subr.mxu0 %v2309
        %6189 = vmatpush2.msra.mxu0 %v2308
        %6190 = vmatprep.subr.mxu0 %v2307
        %6191 = vmatpush2.msra.mxu0 %v2306
        %6192 = vmatprep.subr.mxu0 %v2305
        %6193 = vmatpush2.msra.mxu0 %v2304
        %6194 = vmatprep.subr.mxu0 %v2303
        %6195 = vmatpush2.msra.mxu0 %v2302
        %6196 = vmatprep.subr.mxu0 %v2301
        %6197 = vmatpush2.msra.mxu0 %v2300
        %6198 = vmatprep.subr.mxu0 %v2299
        %6199 = vmatpush2.msra.mxu0 %v2298
        %6200 = vmatprep.subr.mxu0 %v2297
        %6201 = vmatpush2.msra.mxu0 %v2296
        %6202 = vmatprep.subr.mxu0 %v2295
        %6203 = vmatpush2.msra.mxu0 %v2294
        %6204 = vmatprep.mubr.f32.mxu0 %v3821
        %6205 = vmatmul.mubr.f32.gmra.mxu0 %v3819
        %v6206 = vpop.f32.mrf.mxu0
        %v6207 = vadd.f32 %v6136, %v6206
        %v6208 = vpop.f32.mrf.mxu0
        %v6209 = vadd.f32 %v6138, %v6208
        %6210 = vdwg.mxu0
        %6211 = vmatprep.subr.mxu0 %v2357
        %6212 = vmatpush1.msra.mxu0 %v2356
        %6213 = vmatprep.subr.mxu0 %v2355
        %6214 = vmatpush1.msra.mxu0 %v2354
        %6215 = vmatprep.subr.mxu0 %v2353
        %6216 = vmatpush1.msra.mxu0 %v2352
        %6217 = vmatprep.subr.mxu0 %v2351
        %6218 = vmatpush1.msra.mxu0 %v2350
        %6219 = vmatprep.subr.mxu0 %v2349
        %6220 = vmatpush1.msra.mxu0 %v2348
        %6221 = vmatprep.subr.mxu0 %v2347
        %6222 = vmatpush1.msra.mxu0 %v2346
        %6223 = vmatprep.subr.mxu0 %v2345
        %6224 = vmatpush1.msra.mxu0 %v2344
        %6225 = vmatprep.subr.mxu0 %v2343
        %6226 = vmatpush1.msra.mxu0 %v2342
        %6227 = vmatprep.subr.mxu0 %v2341
        %6228 = vmatpush1.msra.mxu0 %v2340
        %6229 = vmatprep.subr.mxu0 %v2339
        %6230 = vmatpush1.msra.mxu0 %v2338
        %6231 = vmatprep.subr.mxu0 %v2337
        %6232 = vmatpush1.msra.mxu0 %v2336
        %6233 = vmatprep.subr.mxu0 %v2335
        %6234 = vmatpush1.msra.mxu0 %v2334
        %6235 = vmatprep.subr.mxu0 %v2333
        %6236 = vmatpush1.msra.mxu0 %v2332
        %6237 = vmatprep.subr.mxu0 %v2331
        %6238 = vmatpush1.msra.mxu0 %v2330
        %6239 = vmatprep.subr.mxu0 %v2329
        %6240 = vmatpush1.msra.mxu0 %v2328
        %6241 = vmatprep.subr.mxu0 %v2327
        %6242 = vmatpush1.msra.mxu0 %v2326
        %6243 = vmatprep.subr.mxu0 %v2389
        %6244 = vmatpush2.msra.mxu0 %v2388
        %6245 = vmatprep.subr.mxu0 %v2387
        %6246 = vmatpush2.msra.mxu0 %v2386
        %6247 = vmatprep.subr.mxu0 %v2385
        %6248 = vmatpush2.msra.mxu0 %v2384
        %6249 = vmatprep.subr.mxu0 %v2383
        %6250 = vmatpush2.msra.mxu0 %v2382
        %6251 = vmatprep.subr.mxu0 %v2381
        %6252 = vmatpush2.msra.mxu0 %v2380
        %6253 = vmatprep.subr.mxu0 %v2379
        %6254 = vmatpush2.msra.mxu0 %v2378
        %6255 = vmatprep.subr.mxu0 %v2377
        %6256 = vmatpush2.msra.mxu0 %v2376
        %6257 = vmatprep.subr.mxu0 %v2375
        %6258 = vmatpush2.msra.mxu0 %v2374
        %6259 = vmatprep.subr.mxu0 %v2373
        %6260 = vmatpush2.msra.mxu0 %v2372
        %6261 = vmatprep.subr.mxu0 %v2371
        %6262 = vmatpush2.msra.mxu0 %v2370
        %6263 = vmatprep.subr.mxu0 %v2369
        %6264 = vmatpush2.msra.mxu0 %v2368
        %6265 = vmatprep.subr.mxu0 %v2367
        %6266 = vmatpush2.msra.mxu0 %v2366
        %6267 = vmatprep.subr.mxu0 %v2365
        %6268 = vmatpush2.msra.mxu0 %v2364
        %6269 = vmatprep.subr.mxu0 %v2363
        %6270 = vmatpush2.msra.mxu0 %v2362
        %6271 = vmatprep.subr.mxu0 %v2361
        %6272 = vmatpush2.msra.mxu0 %v2360
        %6273 = vmatprep.subr.mxu0 %v2359
        %6274 = vmatpush2.msra.mxu0 %v2358
        %6275 = vmatprep.mubr.f32.mxu0 %v3837
        %6276 = vmatmul.mubr.f32.gmra.mxu0 %v3829
        %v6277 = vpop.f32.mrf.mxu0
        %v6278 = vadd.f32 %v6207, %v6277
        %v6279 = vpop.f32.mrf.mxu0
        %v6280 = vadd.f32 %v6209, %v6279
        %6281 = vdwg.mxu0
        %6282 = vmatprep.subr.mxu0 %v2421
        %6283 = vmatpush1.msra.mxu0 %v2420
        %6284 = vmatprep.subr.mxu0 %v2419
        %6285 = vmatpush1.msra.mxu0 %v2418
        %6286 = vmatprep.subr.mxu0 %v2417
        %6287 = vmatpush1.msra.mxu0 %v2416
        %6288 = vmatprep.subr.mxu0 %v2415
        %6289 = vmatpush1.msra.mxu0 %v2414
        %6290 = vmatprep.subr.mxu0 %v2413
        %6291 = vmatpush1.msra.mxu0 %v2412
        %6292 = vmatprep.subr.mxu0 %v2411
        %6293 = vmatpush1.msra.mxu0 %v2410
        %6294 = vmatprep.subr.mxu0 %v2409
        %6295 = vmatpush1.msra.mxu0 %v2408
        %6296 = vmatprep.subr.mxu0 %v2407
        %6297 = vmatpush1.msra.mxu0 %v2406
        %6298 = vmatprep.subr.mxu0 %v2405
        %6299 = vmatpush1.msra.mxu0 %v2404
        %6300 = vmatprep.subr.mxu0 %v2403
        %6301 = vmatpush1.msra.mxu0 %v2402
        %6302 = vmatprep.subr.mxu0 %v2401
        %6303 = vmatpush1.msra.mxu0 %v2400
        %6304 = vmatprep.subr.mxu0 %v2399
        %6305 = vmatpush1.msra.mxu0 %v2398
        %6306 = vmatprep.subr.mxu0 %v2397
        %6307 = vmatpush1.msra.mxu0 %v2396
        %6308 = vmatprep.subr.mxu0 %v2395
        %6309 = vmatpush1.msra.mxu0 %v2394
        %6310 = vmatprep.subr.mxu0 %v2393
        %6311 = vmatpush1.msra.mxu0 %v2392
        %6312 = vmatprep.subr.mxu0 %v2391
        %6313 = vmatpush1.msra.mxu0 %v2390
        %6314 = vmatprep.subr.mxu0 %v2453
        %6315 = vmatpush2.msra.mxu0 %v2452
        %6316 = vmatprep.subr.mxu0 %v2451
        %6317 = vmatpush2.msra.mxu0 %v2450
        %6318 = vmatprep.subr.mxu0 %v2449
        %6319 = vmatpush2.msra.mxu0 %v2448
        %6320 = vmatprep.subr.mxu0 %v2447
        %6321 = vmatpush2.msra.mxu0 %v2446
        %6322 = vmatprep.subr.mxu0 %v2445
        %6323 = vmatpush2.msra.mxu0 %v2444
        %6324 = vmatprep.subr.mxu0 %v2443
        %6325 = vmatpush2.msra.mxu0 %v2442
        %6326 = vmatprep.subr.mxu0 %v2441
        %6327 = vmatpush2.msra.mxu0 %v2440
        %6328 = vmatprep.subr.mxu0 %v2439
        %6329 = vmatpush2.msra.mxu0 %v2438
        %6330 = vmatprep.subr.mxu0 %v2437
        %6331 = vmatpush2.msra.mxu0 %v2436
        %6332 = vmatprep.subr.mxu0 %v2435
        %6333 = vmatpush2.msra.mxu0 %v2434
        %6334 = vmatprep.subr.mxu0 %v2433
        %6335 = vmatpush2.msra.mxu0 %v2432
        %6336 = vmatprep.subr.mxu0 %v2431
        %6337 = vmatpush2.msra.mxu0 %v2430
        %6338 = vmatprep.subr.mxu0 %v2429
        %6339 = vmatpush2.msra.mxu0 %v2428
        %6340 = vmatprep.subr.mxu0 %v2427
        %6341 = vmatpush2.msra.mxu0 %v2426
        %6342 = vmatprep.subr.mxu0 %v2425
        %6343 = vmatpush2.msra.mxu0 %v2424
        %6344 = vmatprep.subr.mxu0 %v2423
        %6345 = vmatpush2.msra.mxu0 %v2422
        %6346 = vmatprep.mubr.f32.mxu0 %v3838
        %6347 = vmatmul.mubr.f32.gmra.mxu0 %v3836
        %v6348 = vpop.f32.mrf.mxu0
        %v6349 = vadd.f32 %v6278, %v6348
        %v6350 = vpop.f32.mrf.mxu0
        %v6351 = vadd.f32 %v6280, %v6350
        %6352 = vdwg.mxu0
        %6353 = vmatprep.subr.mxu0 %v2485
        %6354 = vmatpush1.msra.mxu0 %v2484
        %6355 = vmatprep.subr.mxu0 %v2483
        %6356 = vmatpush1.msra.mxu0 %v2482
        %6357 = vmatprep.subr.mxu0 %v2481
        %6358 = vmatpush1.msra.mxu0 %v2480
        %6359 = vmatprep.subr.mxu0 %v2479
        %6360 = vmatpush1.msra.mxu0 %v2478
        %6361 = vmatprep.subr.mxu0 %v2477
        %6362 = vmatpush1.msra.mxu0 %v2476
        %6363 = vmatprep.subr.mxu0 %v2475
        %6364 = vmatpush1.msra.mxu0 %v2474
        %6365 = vmatprep.subr.mxu0 %v2473
        %6366 = vmatpush1.msra.mxu0 %v2472
        %6367 = vmatprep.subr.mxu0 %v2471
        %6368 = vmatpush1.msra.mxu0 %v2470
        %6369 = vmatprep.subr.mxu0 %v2469
        %6370 = vmatpush1.msra.mxu0 %v2468
        %6371 = vmatprep.subr.mxu0 %v2467
        %6372 = vmatpush1.msra.mxu0 %v2466
        %6373 = vmatprep.subr.mxu0 %v2465
        %6374 = vmatpush1.msra.mxu0 %v2464
        %6375 = vmatprep.subr.mxu0 %v2463
        %6376 = vmatpush1.msra.mxu0 %v2462
        %6377 = vmatprep.subr.mxu0 %v2461
        %6378 = vmatpush1.msra.mxu0 %v2460
        %6379 = vmatprep.subr.mxu0 %v2459
        %6380 = vmatpush1.msra.mxu0 %v2458
        %6381 = vmatprep.subr.mxu0 %v2457
        %6382 = vmatpush1.msra.mxu0 %v2456
        %6383 = vmatprep.subr.mxu0 %v2455
        %6384 = vmatpush1.msra.mxu0 %v2454
        %6385 = vmatprep.subr.mxu0 %v2517
        %6386 = vmatpush2.msra.mxu0 %v2516
        %6387 = vmatprep.subr.mxu0 %v2515
        %6388 = vmatpush2.msra.mxu0 %v2514
        %6389 = vmatprep.subr.mxu0 %v2513
        %6390 = vmatpush2.msra.mxu0 %v2512
        %6391 = vmatprep.subr.mxu0 %v2511
        %6392 = vmatpush2.msra.mxu0 %v2510
        %6393 = vmatprep.subr.mxu0 %v2509
        %6394 = vmatpush2.msra.mxu0 %v2508
        %6395 = vmatprep.subr.mxu0 %v2507
        %6396 = vmatpush2.msra.mxu0 %v2506
        %6397 = vmatprep.subr.mxu0 %v2505
        %6398 = vmatpush2.msra.mxu0 %v2504
        %6399 = vmatprep.subr.mxu0 %v2503
        %6400 = vmatpush2.msra.mxu0 %v2502
        %6401 = vmatprep.subr.mxu0 %v2501
        %6402 = vmatpush2.msra.mxu0 %v2500
        %6403 = vmatprep.subr.mxu0 %v2499
        %6404 = vmatpush2.msra.mxu0 %v2498
        %6405 = vmatprep.subr.mxu0 %v2497
        %6406 = vmatpush2.msra.mxu0 %v2496
        %6407 = vmatprep.subr.mxu0 %v2495
        %6408 = vmatpush2.msra.mxu0 %v2494
        %6409 = vmatprep.subr.mxu0 %v2493
        %6410 = vmatpush2.msra.mxu0 %v2492
        %6411 = vmatprep.subr.mxu0 %v2491
        %6412 = vmatpush2.msra.mxu0 %v2490
        %6413 = vmatprep.subr.mxu0 %v2489
        %6414 = vmatpush2.msra.mxu0 %v2488
        %6415 = vmatprep.subr.mxu0 %v2487
        %6416 = vmatpush2.msra.mxu0 %v2486
        %6417 = vmatprep.mubr.f32.mxu0 %v3854
        %6418 = vmatmul.mubr.f32.gmra.mxu0 %v3846
        %v6419 = vpop.f32.mrf.mxu0
        %v6420 = vadd.f32 %v6349, %v6419
        %v6421 = vpop.f32.mrf.mxu0
        %v6422 = vadd.f32 %v6351, %v6421
        %6423 = vdwg.mxu0
        %6424 = vmatprep.subr.mxu0 %v2549
        %6425 = vmatpush1.msra.mxu0 %v2548
        %6426 = vmatprep.subr.mxu0 %v2547
        %6427 = vmatpush1.msra.mxu0 %v2546
        %6428 = vmatprep.subr.mxu0 %v2545
        %6429 = vmatpush1.msra.mxu0 %v2544
        %6430 = vmatprep.subr.mxu0 %v2543
        %6431 = vmatpush1.msra.mxu0 %v2542
        %6432 = vmatprep.subr.mxu0 %v2541
        %6433 = vmatpush1.msra.mxu0 %v2540
        %6434 = vmatprep.subr.mxu0 %v2539
        %6435 = vmatpush1.msra.mxu0 %v2538
        %6436 = vmatprep.subr.mxu0 %v2537
        %6437 = vmatpush1.msra.mxu0 %v2536
        %6438 = vmatprep.subr.mxu0 %v2535
        %6439 = vmatpush1.msra.mxu0 %v2534
        %6440 = vmatprep.subr.mxu0 %v2533
        %6441 = vmatpush1.msra.mxu0 %v2532
        %6442 = vmatprep.subr.mxu0 %v2531
        %6443 = vmatpush1.msra.mxu0 %v2530
        %6444 = vmatprep.subr.mxu0 %v2529
        %6445 = vmatpush1.msra.mxu0 %v2528
        %6446 = vmatprep.subr.mxu0 %v2527
        %6447 = vmatpush1.msra.mxu0 %v2526
        %6448 = vmatprep.subr.mxu0 %v2525
        %6449 = vmatpush1.msra.mxu0 %v2524
        %6450 = vmatprep.subr.mxu0 %v2523
        %6451 = vmatpush1.msra.mxu0 %v2522
        %6452 = vmatprep.subr.mxu0 %v2521
        %6453 = vmatpush1.msra.mxu0 %v2520
        %6454 = vmatprep.subr.mxu0 %v2519
        %6455 = vmatpush1.msra.mxu0 %v2518
        %6456 = vmatprep.subr.mxu0 %v2581
        %6457 = vmatpush2.msra.mxu0 %v2580
        %6458 = vmatprep.subr.mxu0 %v2579
        %6459 = vmatpush2.msra.mxu0 %v2578
        %6460 = vmatprep.subr.mxu0 %v2577
        %6461 = vmatpush2.msra.mxu0 %v2576
        %6462 = vmatprep.subr.mxu0 %v2575
        %6463 = vmatpush2.msra.mxu0 %v2574
        %6464 = vmatprep.subr.mxu0 %v2573
        %6465 = vmatpush2.msra.mxu0 %v2572
        %6466 = vmatprep.subr.mxu0 %v2571
        %6467 = vmatpush2.msra.mxu0 %v2570
        %6468 = vmatprep.subr.mxu0 %v2569
        %6469 = vmatpush2.msra.mxu0 %v2568
        %6470 = vmatprep.subr.mxu0 %v2567
        %6471 = vmatpush2.msra.mxu0 %v2566
        %6472 = vmatprep.subr.mxu0 %v2565
        %6473 = vmatpush2.msra.mxu0 %v2564
        %6474 = vmatprep.subr.mxu0 %v2563
        %6475 = vmatpush2.msra.mxu0 %v2562
        %6476 = vmatprep.subr.mxu0 %v2561
        %6477 = vmatpush2.msra.mxu0 %v2560
        %6478 = vmatprep.subr.mxu0 %v2559
        %6479 = vmatpush2.msra.mxu0 %v2558
        %6480 = vmatprep.subr.mxu0 %v2557
        %6481 = vmatpush2.msra.mxu0 %v2556
        %6482 = vmatprep.subr.mxu0 %v2555
        %6483 = vmatpush2.msra.mxu0 %v2554
        %6484 = vmatprep.subr.mxu0 %v2553
        %6485 = vmatpush2.msra.mxu0 %v2552
        %6486 = vmatprep.subr.mxu0 %v2551
        %6487 = vmatpush2.msra.mxu0 %v2550
        %6488 = vmatprep.mubr.f32.mxu0 %v3855
        %6489 = vmatmul.mubr.f32.gmra.mxu0 %v3853
        %v6490 = vpop.f32.mrf.mxu0
        %v6491 = vadd.f32 %v6420, %v6490
        %v6492 = vpop.f32.mrf.mxu0
        %v6493 = vadd.f32 %v6422, %v6492
        %6494 = vdwg.mxu0
        %6495 = vmatprep.subr.mxu0 %v2613
        %6496 = vmatpush1.msra.mxu0 %v2612
        %6497 = vmatprep.subr.mxu0 %v2611
        %6498 = vmatpush1.msra.mxu0 %v2610
        %6499 = vmatprep.subr.mxu0 %v2609
        %6500 = vmatpush1.msra.mxu0 %v2608
        %6501 = vmatprep.subr.mxu0 %v2607
        %6502 = vmatpush1.msra.mxu0 %v2606
        %6503 = vmatprep.subr.mxu0 %v2605
        %6504 = vmatpush1.msra.mxu0 %v2604
        %6505 = vmatprep.subr.mxu0 %v2603
        %6506 = vmatpush1.msra.mxu0 %v2602
        %6507 = vmatprep.subr.mxu0 %v2601
        %6508 = vmatpush1.msra.mxu0 %v2600
        %6509 = vmatprep.subr.mxu0 %v2599
        %6510 = vmatpush1.msra.mxu0 %v2598
        %6511 = vmatprep.subr.mxu0 %v2597
        %6512 = vmatpush1.msra.mxu0 %v2596
        %6513 = vmatprep.subr.mxu0 %v2595
        %6514 = vmatpush1.msra.mxu0 %v2594
        %6515 = vmatprep.subr.mxu0 %v2593
        %6516 = vmatpush1.msra.mxu0 %v2592
        %6517 = vmatprep.subr.mxu0 %v2591
        %6518 = vmatpush1.msra.mxu0 %v2590
        %6519 = vmatprep.subr.mxu0 %v2589
        %6520 = vmatpush1.msra.mxu0 %v2588
        %6521 = vmatprep.subr.mxu0 %v2587
        %6522 = vmatpush1.msra.mxu0 %v2586
        %6523 = vmatprep.subr.mxu0 %v2585
        %6524 = vmatpush1.msra.mxu0 %v2584
        %6525 = vmatprep.subr.mxu0 %v2583
        %6526 = vmatpush1.msra.mxu0 %v2582
        %6527 = vmatprep.subr.mxu0 %v2645
        %6528 = vmatpush2.msra.mxu0 %v2644
        %6529 = vmatprep.subr.mxu0 %v2643
        %6530 = vmatpush2.msra.mxu0 %v2642
        %6531 = vmatprep.subr.mxu0 %v2641
        %6532 = vmatpush2.msra.mxu0 %v2640
        %6533 = vmatprep.subr.mxu0 %v2639
        %6534 = vmatpush2.msra.mxu0 %v2638
        %6535 = vmatprep.subr.mxu0 %v2637
        %6536 = vmatpush2.msra.mxu0 %v2636
        %6537 = vmatprep.subr.mxu0 %v2635
        %6538 = vmatpush2.msra.mxu0 %v2634
        %6539 = vmatprep.subr.mxu0 %v2633
        %6540 = vmatpush2.msra.mxu0 %v2632
        %6541 = vmatprep.subr.mxu0 %v2631
        %6542 = vmatpush2.msra.mxu0 %v2630
        %6543 = vmatprep.subr.mxu0 %v2629
        %6544 = vmatpush2.msra.mxu0 %v2628
        %6545 = vmatprep.subr.mxu0 %v2627
        %6546 = vmatpush2.msra.mxu0 %v2626
        %6547 = vmatprep.subr.mxu0 %v2625
        %6548 = vmatpush2.msra.mxu0 %v2624
        %6549 = vmatprep.subr.mxu0 %v2623
        %6550 = vmatpush2.msra.mxu0 %v2622
        %6551 = vmatprep.subr.mxu0 %v2621
        %6552 = vmatpush2.msra.mxu0 %v2620
        %6553 = vmatprep.subr.mxu0 %v2619
        %6554 = vmatpush2.msra.mxu0 %v2618
        %6555 = vmatprep.subr.mxu0 %v2617
        %6556 = vmatpush2.msra.mxu0 %v2616
        %6557 = vmatprep.subr.mxu0 %v2615
        %6558 = vmatpush2.msra.mxu0 %v2614
        %6559 = vmatprep.mubr.f32.mxu0 %v3871
        %6560 = vmatmul.mubr.f32.gmra.mxu0 %v3863
        %v6561 = vpop.f32.mrf.mxu0
        %v6562 = vadd.f32 %v6491, %v6561
        %v6563 = vpop.f32.mrf.mxu0
        %v6564 = vadd.f32 %v6493, %v6563
        %6565 = vdwg.mxu0
        %6566 = vmatprep.subr.mxu0 %v2677
        %6567 = vmatpush1.msra.mxu0 %v2676
        %6568 = vmatprep.subr.mxu0 %v2675
        %6569 = vmatpush1.msra.mxu0 %v2674
        %6570 = vmatprep.subr.mxu0 %v2673
        %6571 = vmatpush1.msra.mxu0 %v2672
        %6572 = vmatprep.subr.mxu0 %v2671
        %6573 = vmatpush1.msra.mxu0 %v2670
        %6574 = vmatprep.subr.mxu0 %v2669
        %6575 = vmatpush1.msra.mxu0 %v2668
        %6576 = vmatprep.subr.mxu0 %v2667
        %6577 = vmatpush1.msra.mxu0 %v2666
        %6578 = vmatprep.subr.mxu0 %v2665
        %6579 = vmatpush1.msra.mxu0 %v2664
        %6580 = vmatprep.subr.mxu0 %v2663
        %6581 = vmatpush1.msra.mxu0 %v2662
        %6582 = vmatprep.subr.mxu0 %v2661
        %6583 = vmatpush1.msra.mxu0 %v2660
        %6584 = vmatprep.subr.mxu0 %v2659
        %6585 = vmatpush1.msra.mxu0 %v2658
        %6586 = vmatprep.subr.mxu0 %v2657
        %6587 = vmatpush1.msra.mxu0 %v2656
        %6588 = vmatprep.subr.mxu0 %v2655
        %6589 = vmatpush1.msra.mxu0 %v2654
        %6590 = vmatprep.subr.mxu0 %v2653
        %6591 = vmatpush1.msra.mxu0 %v2652
        %6592 = vmatprep.subr.mxu0 %v2651
        %6593 = vmatpush1.msra.mxu0 %v2650
        %6594 = vmatprep.subr.mxu0 %v2649
        %6595 = vmatpush1.msra.mxu0 %v2648
        %6596 = vmatprep.subr.mxu0 %v2647
        %6597 = vmatpush1.msra.mxu0 %v2646
        %6598 = vmatprep.subr.mxu0 %v2709
        %6599 = vmatpush2.msra.mxu0 %v2708
        %6600 = vmatprep.subr.mxu0 %v2707
        %6601 = vmatpush2.msra.mxu0 %v2706
        %6602 = vmatprep.subr.mxu0 %v2705
        %6603 = vmatpush2.msra.mxu0 %v2704
        %6604 = vmatprep.subr.mxu0 %v2703
        %6605 = vmatpush2.msra.mxu0 %v2702
        %6606 = vmatprep.subr.mxu0 %v2701
        %6607 = vmatpush2.msra.mxu0 %v2700
        %6608 = vmatprep.subr.mxu0 %v2699
        %6609 = vmatpush2.msra.mxu0 %v2698
        %6610 = vmatprep.subr.mxu0 %v2697
        %6611 = vmatpush2.msra.mxu0 %v2696
        %6612 = vmatprep.subr.mxu0 %v2695
        %6613 = vmatpush2.msra.mxu0 %v2694
        %6614 = vmatprep.subr.mxu0 %v2693
        %6615 = vmatpush2.msra.mxu0 %v2692
        %6616 = vmatprep.subr.mxu0 %v2691
        %6617 = vmatpush2.msra.mxu0 %v2690
        %6618 = vmatprep.subr.mxu0 %v2689
        %6619 = vmatpush2.msra.mxu0 %v2688
        %6620 = vmatprep.subr.mxu0 %v2687
        %6621 = vmatpush2.msra.mxu0 %v2686
        %6622 = vmatprep.subr.mxu0 %v2685
        %6623 = vmatpush2.msra.mxu0 %v2684
        %6624 = vmatprep.subr.mxu0 %v2683
        %6625 = vmatpush2.msra.mxu0 %v2682
        %6626 = vmatprep.subr.mxu0 %v2681
        %6627 = vmatpush2.msra.mxu0 %v2680
        %6628 = vmatprep.subr.mxu0 %v2679
        %6629 = vmatpush2.msra.mxu0 %v2678
        %6630 = vmatprep.mubr.f32.mxu0 %v3872
        %6631 = vmatmul.mubr.f32.gmra.mxu0 %v3870
        %v6632 = vpop.f32.mrf.mxu0
        %v6633 = vadd.f32 %v6562, %v6632
        %v6634 = vpop.f32.mrf.mxu0
        %v6635 = vadd.f32 %v6564, %v6634
        %6636 = vdwg.mxu0
        %6637 = vmatprep.subr.mxu0 %v2741
        %6638 = vmatpush1.msra.mxu0 %v2740
        %6639 = vmatprep.subr.mxu0 %v2739
        %6640 = vmatpush1.msra.mxu0 %v2738
        %6641 = vmatprep.subr.mxu0 %v2737
        %6642 = vmatpush1.msra.mxu0 %v2736
        %6643 = vmatprep.subr.mxu0 %v2735
        %6644 = vmatpush1.msra.mxu0 %v2734
        %6645 = vmatprep.subr.mxu0 %v2733
        %6646 = vmatpush1.msra.mxu0 %v2732
        %6647 = vmatprep.subr.mxu0 %v2731
        %6648 = vmatpush1.msra.mxu0 %v2730
        %6649 = vmatprep.subr.mxu0 %v2729
        %6650 = vmatpush1.msra.mxu0 %v2728
        %6651 = vmatprep.subr.mxu0 %v2727
        %6652 = vmatpush1.msra.mxu0 %v2726
        %6653 = vmatprep.subr.mxu0 %v2725
        %6654 = vmatpush1.msra.mxu0 %v2724
        %6655 = vmatprep.subr.mxu0 %v2723
        %6656 = vmatpush1.msra.mxu0 %v2722
        %6657 = vmatprep.subr.mxu0 %v2721
        %6658 = vmatpush1.msra.mxu0 %v2720
        %6659 = vmatprep.subr.mxu0 %v2719
        %6660 = vmatpush1.msra.mxu0 %v2718
        %6661 = vmatprep.subr.mxu0 %v2717
        %6662 = vmatpush1.msra.mxu0 %v2716
        %6663 = vmatprep.subr.mxu0 %v2715
        %6664 = vmatpush1.msra.mxu0 %v2714
        %6665 = vmatprep.subr.mxu0 %v2713
        %6666 = vmatpush1.msra.mxu0 %v2712
        %6667 = vmatprep.subr.mxu0 %v2711
        %6668 = vmatpush1.msra.mxu0 %v2710
        %6669 = vmatprep.subr.mxu0 %v2773
        %6670 = vmatpush2.msra.mxu0 %v2772
        %6671 = vmatprep.subr.mxu0 %v2771
        %6672 = vmatpush2.msra.mxu0 %v2770
        %6673 = vmatprep.subr.mxu0 %v2769
        %6674 = vmatpush2.msra.mxu0 %v2768
        %6675 = vmatprep.subr.mxu0 %v2767
        %6676 = vmatpush2.msra.mxu0 %v2766
        %6677 = vmatprep.subr.mxu0 %v2765
        %6678 = vmatpush2.msra.mxu0 %v2764
        %6679 = vmatprep.subr.mxu0 %v2763
        %6680 = vmatpush2.msra.mxu0 %v2762
        %6681 = vmatprep.subr.mxu0 %v2761
        %6682 = vmatpush2.msra.mxu0 %v2760
        %6683 = vmatprep.subr.mxu0 %v2759
        %6684 = vmatpush2.msra.mxu0 %v2758
        %6685 = vmatprep.subr.mxu0 %v2757
        %6686 = vmatpush2.msra.mxu0 %v2756
        %6687 = vmatprep.subr.mxu0 %v2755
        %6688 = vmatpush2.msra.mxu0 %v2754
        %6689 = vmatprep.subr.mxu0 %v2753
        %6690 = vmatpush2.msra.mxu0 %v2752
        %6691 = vmatprep.subr.mxu0 %v2751
        %6692 = vmatpush2.msra.mxu0 %v2750
        %6693 = vmatprep.subr.mxu0 %v2749
        %6694 = vmatpush2.msra.mxu0 %v2748
        %6695 = vmatprep.subr.mxu0 %v2747
        %6696 = vmatpush2.msra.mxu0 %v2746
        %6697 = vmatprep.subr.mxu0 %v2745
        %6698 = vmatpush2.msra.mxu0 %v2744
        %6699 = vmatprep.subr.mxu0 %v2743
        %6700 = vmatpush2.msra.mxu0 %v2742
        %6701 = vmatprep.mubr.f32.mxu0 %v3888
        %6702 = vmatmul.mubr.f32.gmra.mxu0 %v3880
        %v6703 = vpop.f32.mrf.mxu0
        %v6704 = vadd.f32 %v6633, %v6703
        %v6705 = vpop.f32.mrf.mxu0
        %v6706 = vadd.f32 %v6635, %v6705
        %6707 = vdwg.mxu0
        %6708 = vmatprep.subr.mxu0 %v2805
        %6709 = vmatpush1.msra.mxu0 %v2804
        %6710 = vmatprep.subr.mxu0 %v2803
        %6711 = vmatpush1.msra.mxu0 %v2802
        %6712 = vmatprep.subr.mxu0 %v2801
        %6713 = vmatpush1.msra.mxu0 %v2800
        %6714 = vmatprep.subr.mxu0 %v2799
        %6715 = vmatpush1.msra.mxu0 %v2798
        %6716 = vmatprep.subr.mxu0 %v2797
        %6717 = vmatpush1.msra.mxu0 %v2796
        %6718 = vmatprep.subr.mxu0 %v2795
        %6719 = vmatpush1.msra.mxu0 %v2794
        %6720 = vmatprep.subr.mxu0 %v2793
        %6721 = vmatpush1.msra.mxu0 %v2792
        %6722 = vmatprep.subr.mxu0 %v2791
        %6723 = vmatpush1.msra.mxu0 %v2790
        %6724 = vmatprep.subr.mxu0 %v2789
        %6725 = vmatpush1.msra.mxu0 %v2788
        %6726 = vmatprep.subr.mxu0 %v2787
        %6727 = vmatpush1.msra.mxu0 %v2786
        %6728 = vmatprep.subr.mxu0 %v2785
        %6729 = vmatpush1.msra.mxu0 %v2784
        %6730 = vmatprep.subr.mxu0 %v2783
        %6731 = vmatpush1.msra.mxu0 %v2782
        %6732 = vmatprep.subr.mxu0 %v2781
        %6733 = vmatpush1.msra.mxu0 %v2780
        %6734 = vmatprep.subr.mxu0 %v2779
        %6735 = vmatpush1.msra.mxu0 %v2778
        %6736 = vmatprep.subr.mxu0 %v2777
        %6737 = vmatpush1.msra.mxu0 %v2776
        %6738 = vmatprep.subr.mxu0 %v2775
        %6739 = vmatpush1.msra.mxu0 %v2774
        %6740 = vmatprep.subr.mxu0 %v2837
        %6741 = vmatpush2.msra.mxu0 %v2836
        %6742 = vmatprep.subr.mxu0 %v2835
        %6743 = vmatpush2.msra.mxu0 %v2834
        %6744 = vmatprep.subr.mxu0 %v2833
        %6745 = vmatpush2.msra.mxu0 %v2832
        %6746 = vmatprep.subr.mxu0 %v2831
        %6747 = vmatpush2.msra.mxu0 %v2830
        %6748 = vmatprep.subr.mxu0 %v2829
        %6749 = vmatpush2.msra.mxu0 %v2828
        %6750 = vmatprep.subr.mxu0 %v2827
        %6751 = vmatpush2.msra.mxu0 %v2826
        %6752 = vmatprep.subr.mxu0 %v2825
        %6753 = vmatpush2.msra.mxu0 %v2824
        %6754 = vmatprep.subr.mxu0 %v2823
        %6755 = vmatpush2.msra.mxu0 %v2822
        %6756 = vmatprep.subr.mxu0 %v2821
        %6757 = vmatpush2.msra.mxu0 %v2820
        %6758 = vmatprep.subr.mxu0 %v2819
        %6759 = vmatpush2.msra.mxu0 %v2818
        %6760 = vmatprep.subr.mxu0 %v2817
        %6761 = vmatpush2.msra.mxu0 %v2816
        %6762 = vmatprep.subr.mxu0 %v2815
        %6763 = vmatpush2.msra.mxu0 %v2814
        %6764 = vmatprep.subr.mxu0 %v2813
        %6765 = vmatpush2.msra.mxu0 %v2812
        %6766 = vmatprep.subr.mxu0 %v2811
        %6767 = vmatpush2.msra.mxu0 %v2810
        %6768 = vmatprep.subr.mxu0 %v2809
        %6769 = vmatpush2.msra.mxu0 %v2808
        %6770 = vmatprep.subr.mxu0 %v2807
        %6771 = vmatpush2.msra.mxu0 %v2806
        %6772 = vmatprep.mubr.f32.mxu0 %v3889
        %6773 = vmatmul.mubr.f32.gmra.mxu0 %v3887
        %v6774 = vpop.f32.mrf.mxu0
        %v6775 = vadd.f32 %v6704, %v6774
        %v6776 = vpop.f32.mrf.mxu0
        %v6777 = vadd.f32 %v6706, %v6776
        %6778 = vdwg.mxu0
        %6779 = vmatprep.subr.mxu0 %v2869
        %6780 = vmatpush1.msra.mxu0 %v2868
        %6781 = vmatprep.subr.mxu0 %v2867
        %6782 = vmatpush1.msra.mxu0 %v2866
        %6783 = vmatprep.subr.mxu0 %v2865
        %6784 = vmatpush1.msra.mxu0 %v2864
        %6785 = vmatprep.subr.mxu0 %v2863
        %6786 = vmatpush1.msra.mxu0 %v2862
        %6787 = vmatprep.subr.mxu0 %v2861
        %6788 = vmatpush1.msra.mxu0 %v2860
        %6789 = vmatprep.subr.mxu0 %v2859
        %6790 = vmatpush1.msra.mxu0 %v2858
        %6791 = vmatprep.subr.mxu0 %v2857
        %6792 = vmatpush1.msra.mxu0 %v2856
        %6793 = vmatprep.subr.mxu0 %v2855
        %6794 = vmatpush1.msra.mxu0 %v2854
        %6795 = vmatprep.subr.mxu0 %v2853
        %6796 = vmatpush1.msra.mxu0 %v2852
        %6797 = vmatprep.subr.mxu0 %v2851
        %6798 = vmatpush1.msra.mxu0 %v2850
        %6799 = vmatprep.subr.mxu0 %v2849
        %6800 = vmatpush1.msra.mxu0 %v2848
        %6801 = vmatprep.subr.mxu0 %v2847
        %6802 = vmatpush1.msra.mxu0 %v2846
        %6803 = vmatprep.subr.mxu0 %v2845
        %6804 = vmatpush1.msra.mxu0 %v2844
        %6805 = vmatprep.subr.mxu0 %v2843
        %6806 = vmatpush1.msra.mxu0 %v2842
        %6807 = vmatprep.subr.mxu0 %v2841
        %6808 = vmatpush1.msra.mxu0 %v2840
        %6809 = vmatprep.subr.mxu0 %v2839
        %6810 = vmatpush1.msra.mxu0 %v2838
        %6811 = vmatprep.subr.mxu0 %v2901
        %6812 = vmatpush2.msra.mxu0 %v2900
        %6813 = vmatprep.subr.mxu0 %v2899
        %6814 = vmatpush2.msra.mxu0 %v2898
        %6815 = vmatprep.subr.mxu0 %v2897
        %6816 = vmatpush2.msra.mxu0 %v2896
        %6817 = vmatprep.subr.mxu0 %v2895
        %6818 = vmatpush2.msra.mxu0 %v2894
        %6819 = vmatprep.subr.mxu0 %v2893
        %6820 = vmatpush2.msra.mxu0 %v2892
        %6821 = vmatprep.subr.mxu0 %v2891
        %6822 = vmatpush2.msra.mxu0 %v2890
        %6823 = vmatprep.subr.mxu0 %v2889
        %6824 = vmatpush2.msra.mxu0 %v2888
        %6825 = vmatprep.subr.mxu0 %v2887
        %6826 = vmatpush2.msra.mxu0 %v2886
        %6827 = vmatprep.subr.mxu0 %v2885
        %6828 = vmatpush2.msra.mxu0 %v2884
        %6829 = vmatprep.subr.mxu0 %v2883
        %6830 = vmatpush2.msra.mxu0 %v2882
        %6831 = vmatprep.subr.mxu0 %v2881
        %6832 = vmatpush2.msra.mxu0 %v2880
        %6833 = vmatprep.subr.mxu0 %v2879
        %6834 = vmatpush2.msra.mxu0 %v2878
        %6835 = vmatprep.subr.mxu0 %v2877
        %6836 = vmatpush2.msra.mxu0 %v2876
        %6837 = vmatprep.subr.mxu0 %v2875
        %6838 = vmatpush2.msra.mxu0 %v2874
        %6839 = vmatprep.subr.mxu0 %v2873
        %6840 = vmatpush2.msra.mxu0 %v2872
        %6841 = vmatprep.subr.mxu0 %v2871
        %6842 = vmatpush2.msra.mxu0 %v2870
        %6843 = vmatprep.mubr.f32.mxu0 %v3905
        %6844 = vmatmul.mubr.f32.gmra.mxu0 %v3897
        %v6845 = vpop.f32.mrf.mxu0
        %v6846 = vadd.f32 %v6775, %v6845
        %v6847 = vpop.f32.mrf.mxu0
        %v6848 = vadd.f32 %v6777, %v6847
        %6849 = vdwg.mxu0
        %6850 = vmatprep.subr.mxu0 %v2933
        %6851 = vmatpush1.msra.mxu0 %v2932
        %6852 = vmatprep.subr.mxu0 %v2931
        %6853 = vmatpush1.msra.mxu0 %v2930
        %6854 = vmatprep.subr.mxu0 %v2929
        %6855 = vmatpush1.msra.mxu0 %v2928
        %6856 = vmatprep.subr.mxu0 %v2927
        %6857 = vmatpush1.msra.mxu0 %v2926
        %6858 = vmatprep.subr.mxu0 %v2925
        %6859 = vmatpush1.msra.mxu0 %v2924
        %6860 = vmatprep.subr.mxu0 %v2923
        %6861 = vmatpush1.msra.mxu0 %v2922
        %6862 = vmatprep.subr.mxu0 %v2921
        %6863 = vmatpush1.msra.mxu0 %v2920
        %6864 = vmatprep.subr.mxu0 %v2919
        %6865 = vmatpush1.msra.mxu0 %v2918
        %6866 = vmatprep.subr.mxu0 %v2917
        %6867 = vmatpush1.msra.mxu0 %v2916
        %6868 = vmatprep.subr.mxu0 %v2915
        %6869 = vmatpush1.msra.mxu0 %v2914
        %6870 = vmatprep.subr.mxu0 %v2913
        %6871 = vmatpush1.msra.mxu0 %v2912
        %6872 = vmatprep.subr.mxu0 %v2911
        %6873 = vmatpush1.msra.mxu0 %v2910
        %6874 = vmatprep.subr.mxu0 %v2909
        %6875 = vmatpush1.msra.mxu0 %v2908
        %6876 = vmatprep.subr.mxu0 %v2907
        %6877 = vmatpush1.msra.mxu0 %v2906
        %6878 = vmatprep.subr.mxu0 %v2905
        %6879 = vmatpush1.msra.mxu0 %v2904
        %6880 = vmatprep.subr.mxu0 %v2903
        %6881 = vmatpush1.msra.mxu0 %v2902
        %6882 = vmatprep.subr.mxu0 %v2965
        %6883 = vmatpush2.msra.mxu0 %v2964
        %6884 = vmatprep.subr.mxu0 %v2963
        %6885 = vmatpush2.msra.mxu0 %v2962
        %6886 = vmatprep.subr.mxu0 %v2961
        %6887 = vmatpush2.msra.mxu0 %v2960
        %6888 = vmatprep.subr.mxu0 %v2959
        %6889 = vmatpush2.msra.mxu0 %v2958
        %6890 = vmatprep.subr.mxu0 %v2957
        %6891 = vmatpush2.msra.mxu0 %v2956
        %6892 = vmatprep.subr.mxu0 %v2955
        %6893 = vmatpush2.msra.mxu0 %v2954
        %6894 = vmatprep.subr.mxu0 %v2953
        %6895 = vmatpush2.msra.mxu0 %v2952
        %6896 = vmatprep.subr.mxu0 %v2951
        %6897 = vmatpush2.msra.mxu0 %v2950
        %6898 = vmatprep.subr.mxu0 %v2949
        %6899 = vmatpush2.msra.mxu0 %v2948
        %6900 = vmatprep.subr.mxu0 %v2947
        %6901 = vmatpush2.msra.mxu0 %v2946
        %6902 = vmatprep.subr.mxu0 %v2945
        %6903 = vmatpush2.msra.mxu0 %v2944
        %6904 = vmatprep.subr.mxu0 %v2943
        %6905 = vmatpush2.msra.mxu0 %v2942
        %6906 = vmatprep.subr.mxu0 %v2941
        %6907 = vmatpush2.msra.mxu0 %v2940
        %6908 = vmatprep.subr.mxu0 %v2939
        %6909 = vmatpush2.msra.mxu0 %v2938
        %6910 = vmatprep.subr.mxu0 %v2937
        %6911 = vmatpush2.msra.mxu0 %v2936
        %6912 = vmatprep.subr.mxu0 %v2935
        %6913 = vmatpush2.msra.mxu0 %v2934
        %6914 = vmatprep.mubr.f32.mxu0 %v3906
        %6915 = vmatmul.mubr.f32.gmra.mxu0 %v3904
        %v6916 = vpop.f32.mrf.mxu0
        %v6917 = vadd.f32 %v6846, %v6916
        %v6918 = vpop.f32.mrf.mxu0
        %v6919 = vadd.f32 %v6848, %v6918
        %6920 = vdwg.mxu0
        %6921 = vmatprep.subr.mxu0 %v2997
        %6922 = vmatpush1.msra.mxu0 %v2996
        %6923 = vmatprep.subr.mxu0 %v2995
        %6924 = vmatpush1.msra.mxu0 %v2994
        %6925 = vmatprep.subr.mxu0 %v2993
        %6926 = vmatpush1.msra.mxu0 %v2992
        %6927 = vmatprep.subr.mxu0 %v2991
        %6928 = vmatpush1.msra.mxu0 %v2990
        %6929 = vmatprep.subr.mxu0 %v2989
        %6930 = vmatpush1.msra.mxu0 %v2988
        %6931 = vmatprep.subr.mxu0 %v2987
        %6932 = vmatpush1.msra.mxu0 %v2986
        %6933 = vmatprep.subr.mxu0 %v2985
        %6934 = vmatpush1.msra.mxu0 %v2984
        %6935 = vmatprep.subr.mxu0 %v2983
        %6936 = vmatpush1.msra.mxu0 %v2982
        %6937 = vmatprep.subr.mxu0 %v2981
        %6938 = vmatpush1.msra.mxu0 %v2980
        %6939 = vmatprep.subr.mxu0 %v2979
        %6940 = vmatpush1.msra.mxu0 %v2978
        %6941 = vmatprep.subr.mxu0 %v2977
        %6942 = vmatpush1.msra.mxu0 %v2976
        %6943 = vmatprep.subr.mxu0 %v2975
        %6944 = vmatpush1.msra.mxu0 %v2974
        %6945 = vmatprep.subr.mxu0 %v2973
        %6946 = vmatpush1.msra.mxu0 %v2972
        %6947 = vmatprep.subr.mxu0 %v2971
        %6948 = vmatpush1.msra.mxu0 %v2970
        %6949 = vmatprep.subr.mxu0 %v2969
        %6950 = vmatpush1.msra.mxu0 %v2968
        %6951 = vmatprep.subr.mxu0 %v2967
        %6952 = vmatpush1.msra.mxu0 %v2966
        %6953 = vmatprep.subr.mxu0 %v3029
        %6954 = vmatpush2.msra.mxu0 %v3028
        %6955 = vmatprep.subr.mxu0 %v3027
        %6956 = vmatpush2.msra.mxu0 %v3026
        %6957 = vmatprep.subr.mxu0 %v3025
        %6958 = vmatpush2.msra.mxu0 %v3024
        %6959 = vmatprep.subr.mxu0 %v3023
        %6960 = vmatpush2.msra.mxu0 %v3022
        %6961 = vmatprep.subr.mxu0 %v3021
        %6962 = vmatpush2.msra.mxu0 %v3020
        %6963 = vmatprep.subr.mxu0 %v3019
        %6964 = vmatpush2.msra.mxu0 %v3018
        %6965 = vmatprep.subr.mxu0 %v3017
        %6966 = vmatpush2.msra.mxu0 %v3016
        %6967 = vmatprep.subr.mxu0 %v3015
        %6968 = vmatpush2.msra.mxu0 %v3014
        %6969 = vmatprep.subr.mxu0 %v3013
        %6970 = vmatpush2.msra.mxu0 %v3012
        %6971 = vmatprep.subr.mxu0 %v3011
        %6972 = vmatpush2.msra.mxu0 %v3010
        %6973 = vmatprep.subr.mxu0 %v3009
        %6974 = vmatpush2.msra.mxu0 %v3008
        %6975 = vmatprep.subr.mxu0 %v3007
        %6976 = vmatpush2.msra.mxu0 %v3006
        %6977 = vmatprep.subr.mxu0 %v3005
        %6978 = vmatpush2.msra.mxu0 %v3004
        %6979 = vmatprep.subr.mxu0 %v3003
        %6980 = vmatpush2.msra.mxu0 %v3002
        %6981 = vmatprep.subr.mxu0 %v3001
        %6982 = vmatpush2.msra.mxu0 %v3000
        %6983 = vmatprep.subr.mxu0 %v2999
        %6984 = vmatpush2.msra.mxu0 %v2998
        %6985 = vmatprep.mubr.f32.mxu0 %v3922
        %6986 = vmatmul.mubr.f32.gmra.mxu0 %v3914
        %v6987 = vpop.f32.mrf.mxu0
        %v6988 = vadd.f32 %v6917, %v6987
        %v6989 = vpop.f32.mrf.mxu0
        %v6990 = vadd.f32 %v6919, %v6989
        %6991 = vdwg.mxu0
        %6992 = vmatprep.subr.mxu0 %v3061
        %6993 = vmatpush1.msra.mxu0 %v3060
        %6994 = vmatprep.subr.mxu0 %v3059
        %6995 = vmatpush1.msra.mxu0 %v3058
        %6996 = vmatprep.subr.mxu0 %v3057
        %6997 = vmatpush1.msra.mxu0 %v3056
        %6998 = vmatprep.subr.mxu0 %v3055
        %6999 = vmatpush1.msra.mxu0 %v3054
        %7000 = vmatprep.subr.mxu0 %v3053
        %7001 = vmatpush1.msra.mxu0 %v3052
        %7002 = vmatprep.subr.mxu0 %v3051
        %7003 = vmatpush1.msra.mxu0 %v3050
        %7004 = vmatprep.subr.mxu0 %v3049
        %7005 = vmatpush1.msra.mxu0 %v3048
        %7006 = vmatprep.subr.mxu0 %v3047
        %7007 = vmatpush1.msra.mxu0 %v3046
        %7008 = vmatprep.subr.mxu0 %v3045
        %7009 = vmatpush1.msra.mxu0 %v3044
        %7010 = vmatprep.subr.mxu0 %v3043
        %7011 = vmatpush1.msra.mxu0 %v3042
        %7012 = vmatprep.subr.mxu0 %v3041
        %7013 = vmatpush1.msra.mxu0 %v3040
        %7014 = vmatprep.subr.mxu0 %v3039
        %7015 = vmatpush1.msra.mxu0 %v3038
        %7016 = vmatprep.subr.mxu0 %v3037
        %7017 = vmatpush1.msra.mxu0 %v3036
        %7018 = vmatprep.subr.mxu0 %v3035
        %7019 = vmatpush1.msra.mxu0 %v3034
        %7020 = vmatprep.subr.mxu0 %v3033
        %7021 = vmatpush1.msra.mxu0 %v3032
        %7022 = vmatprep.subr.mxu0 %v3031
        %7023 = vmatpush1.msra.mxu0 %v3030
        %7024 = vmatprep.subr.mxu0 %v3093
        %7025 = vmatpush2.msra.mxu0 %v3092
        %7026 = vmatprep.subr.mxu0 %v3091
        %7027 = vmatpush2.msra.mxu0 %v3090
        %7028 = vmatprep.subr.mxu0 %v3089
        %7029 = vmatpush2.msra.mxu0 %v3088
        %7030 = vmatprep.subr.mxu0 %v3087
        %7031 = vmatpush2.msra.mxu0 %v3086
        %7032 = vmatprep.subr.mxu0 %v3085
        %7033 = vmatpush2.msra.mxu0 %v3084
        %7034 = vmatprep.subr.mxu0 %v3083
        %7035 = vmatpush2.msra.mxu0 %v3082
        %7036 = vmatprep.subr.mxu0 %v3081
        %7037 = vmatpush2.msra.mxu0 %v3080
        %7038 = vmatprep.subr.mxu0 %v3079
        %7039 = vmatpush2.msra.mxu0 %v3078
        %7040 = vmatprep.subr.mxu0 %v3077
        %7041 = vmatpush2.msra.mxu0 %v3076
        %7042 = vmatprep.subr.mxu0 %v3075
        %7043 = vmatpush2.msra.mxu0 %v3074
        %7044 = vmatprep.subr.mxu0 %v3073
        %7045 = vmatpush2.msra.mxu0 %v3072
        %7046 = vmatprep.subr.mxu0 %v3071
        %7047 = vmatpush2.msra.mxu0 %v3070
        %7048 = vmatprep.subr.mxu0 %v3069
        %7049 = vmatpush2.msra.mxu0 %v3068
        %7050 = vmatprep.subr.mxu0 %v3067
        %7051 = vmatpush2.msra.mxu0 %v3066
        %7052 = vmatprep.subr.mxu0 %v3065
        %7053 = vmatpush2.msra.mxu0 %v3064
        %7054 = vmatprep.subr.mxu0 %v3063
        %7055 = vmatpush2.msra.mxu0 %v3062
        %7056 = vmatprep.mubr.f32.mxu0 %v3923
        %7057 = vmatmul.mubr.f32.gmra.mxu0 %v3921
        %v7058 = vpop.f32.mrf.mxu0
        %v7059 = vadd.f32 %v6988, %v7058
        %v7060 = vpop.f32.mrf.mxu0
        %v7061 = vadd.f32 %v6990, %v7060
        %7062 = vdwg.mxu0
        %7063 = vmatprep.subr.mxu0 %v3125
        %7064 = vmatpush1.msra.mxu0 %v3124
        %7065 = vmatprep.subr.mxu0 %v3123
        %7066 = vmatpush1.msra.mxu0 %v3122
        %7067 = vmatprep.subr.mxu0 %v3121
        %7068 = vmatpush1.msra.mxu0 %v3120
        %7069 = vmatprep.subr.mxu0 %v3119
        %7070 = vmatpush1.msra.mxu0 %v3118
        %7071 = vmatprep.subr.mxu0 %v3117
        %7072 = vmatpush1.msra.mxu0 %v3116
        %7073 = vmatprep.subr.mxu0 %v3115
        %7074 = vmatpush1.msra.mxu0 %v3114
        %7075 = vmatprep.subr.mxu0 %v3113
        %7076 = vmatpush1.msra.mxu0 %v3112
        %7077 = vmatprep.subr.mxu0 %v3111
        %7078 = vmatpush1.msra.mxu0 %v3110
        %7079 = vmatprep.subr.mxu0 %v3109
        %7080 = vmatpush1.msra.mxu0 %v3108
        %7081 = vmatprep.subr.mxu0 %v3107
        %7082 = vmatpush1.msra.mxu0 %v3106
        %7083 = vmatprep.subr.mxu0 %v3105
        %7084 = vmatpush1.msra.mxu0 %v3104
        %7085 = vmatprep.subr.mxu0 %v3103
        %7086 = vmatpush1.msra.mxu0 %v3102
        %7087 = vmatprep.subr.mxu0 %v3101
        %7088 = vmatpush1.msra.mxu0 %v3100
        %7089 = vmatprep.subr.mxu0 %v3099
        %7090 = vmatpush1.msra.mxu0 %v3098
        %7091 = vmatprep.subr.mxu0 %v3097
        %7092 = vmatpush1.msra.mxu0 %v3096
        %7093 = vmatprep.subr.mxu0 %v3095
        %7094 = vmatpush1.msra.mxu0 %v3094
        %7095 = vmatprep.subr.mxu0 %v3157
        %7096 = vmatpush2.msra.mxu0 %v3156
        %7097 = vmatprep.subr.mxu0 %v3155
        %7098 = vmatpush2.msra.mxu0 %v3154
        %7099 = vmatprep.subr.mxu0 %v3153
        %7100 = vmatpush2.msra.mxu0 %v3152
        %7101 = vmatprep.subr.mxu0 %v3151
        %7102 = vmatpush2.msra.mxu0 %v3150
        %7103 = vmatprep.subr.mxu0 %v3149
        %7104 = vmatpush2.msra.mxu0 %v3148
        %7105 = vmatprep.subr.mxu0 %v3147
        %7106 = vmatpush2.msra.mxu0 %v3146
        %7107 = vmatprep.subr.mxu0 %v3145
        %7108 = vmatpush2.msra.mxu0 %v3144
        %7109 = vmatprep.subr.mxu0 %v3143
        %7110 = vmatpush2.msra.mxu0 %v3142
        %7111 = vmatprep.subr.mxu0 %v3141
        %7112 = vmatpush2.msra.mxu0 %v3140
        %7113 = vmatprep.subr.mxu0 %v3139
        %7114 = vmatpush2.msra.mxu0 %v3138
        %7115 = vmatprep.subr.mxu0 %v3137
        %7116 = vmatpush2.msra.mxu0 %v3136
        %7117 = vmatprep.subr.mxu0 %v3135
        %7118 = vmatpush2.msra.mxu0 %v3134
        %7119 = vmatprep.subr.mxu0 %v3133
        %7120 = vmatpush2.msra.mxu0 %v3132
        %7121 = vmatprep.subr.mxu0 %v3131
        %7122 = vmatpush2.msra.mxu0 %v3130
        %7123 = vmatprep.subr.mxu0 %v3129
        %7124 = vmatpush2.msra.mxu0 %v3128
        %7125 = vmatprep.subr.mxu0 %v3127
        %7126 = vmatpush2.msra.mxu0 %v3126
        %7127 = vmatprep.mubr.f32.mxu0 %v3939
        %7128 = vmatmul.mubr.f32.gmra.mxu0 %v3931
        %v7129 = vpop.f32.mrf.mxu0
        %v7130 = vadd.f32 %v7059, %v7129
        %v7131 = vpop.f32.mrf.mxu0
        %v7132 = vadd.f32 %v7061, %v7131
        %7133 = vdwg.mxu0
        %7134 = vmatprep.subr.mxu0 %v3189
        %7135 = vmatpush1.msra.mxu0 %v3188
        %7136 = vmatprep.subr.mxu0 %v3187
        %7137 = vmatpush1.msra.mxu0 %v3186
        %7138 = vmatprep.subr.mxu0 %v3185
        %7139 = vmatpush1.msra.mxu0 %v3184
        %7140 = vmatprep.subr.mxu0 %v3183
        %7141 = vmatpush1.msra.mxu0 %v3182
        %7142 = vmatprep.subr.mxu0 %v3181
        %7143 = vmatpush1.msra.mxu0 %v3180
        %7144 = vmatprep.subr.mxu0 %v3179
        %7145 = vmatpush1.msra.mxu0 %v3178
        %7146 = vmatprep.subr.mxu0 %v3177
        %7147 = vmatpush1.msra.mxu0 %v3176
        %7148 = vmatprep.subr.mxu0 %v3175
        %7149 = vmatpush1.msra.mxu0 %v3174
        %7150 = vmatprep.subr.mxu0 %v3173
        %7151 = vmatpush1.msra.mxu0 %v3172
        %7152 = vmatprep.subr.mxu0 %v3171
        %7153 = vmatpush1.msra.mxu0 %v3170
        %7154 = vmatprep.subr.mxu0 %v3169
        %7155 = vmatpush1.msra.mxu0 %v3168
        %7156 = vmatprep.subr.mxu0 %v3167
        %7157 = vmatpush1.msra.mxu0 %v3166
        %7158 = vmatprep.subr.mxu0 %v3165
        %7159 = vmatpush1.msra.mxu0 %v3164
        %7160 = vmatprep.subr.mxu0 %v3163
        %7161 = vmatpush1.msra.mxu0 %v3162
        %7162 = vmatprep.subr.mxu0 %v3161
        %7163 = vmatpush1.msra.mxu0 %v3160
        %7164 = vmatprep.subr.mxu0 %v3159
        %7165 = vmatpush1.msra.mxu0 %v3158
        %7166 = vmatprep.subr.mxu0 %v3221
        %7167 = vmatpush2.msra.mxu0 %v3220
        %7168 = vmatprep.subr.mxu0 %v3219
        %7169 = vmatpush2.msra.mxu0 %v3218
        %7170 = vmatprep.subr.mxu0 %v3217
        %7171 = vmatpush2.msra.mxu0 %v3216
        %7172 = vmatprep.subr.mxu0 %v3215
        %7173 = vmatpush2.msra.mxu0 %v3214
        %7174 = vmatprep.subr.mxu0 %v3213
        %7175 = vmatpush2.msra.mxu0 %v3212
        %7176 = vmatprep.subr.mxu0 %v3211
        %7177 = vmatpush2.msra.mxu0 %v3210
        %7178 = vmatprep.subr.mxu0 %v3209
        %7179 = vmatpush2.msra.mxu0 %v3208
        %7180 = vmatprep.subr.mxu0 %v3207
        %7181 = vmatpush2.msra.mxu0 %v3206
        %7182 = vmatprep.subr.mxu0 %v3205
        %7183 = vmatpush2.msra.mxu0 %v3204
        %7184 = vmatprep.subr.mxu0 %v3203
        %7185 = vmatpush2.msra.mxu0 %v3202
        %7186 = vmatprep.subr.mxu0 %v3201
        %7187 = vmatpush2.msra.mxu0 %v3200
        %7188 = vmatprep.subr.mxu0 %v3199
        %7189 = vmatpush2.msra.mxu0 %v3198
        %7190 = vmatprep.subr.mxu0 %v3197
        %7191 = vmatpush2.msra.mxu0 %v3196
        %7192 = vmatprep.subr.mxu0 %v3195
        %7193 = vmatpush2.msra.mxu0 %v3194
        %7194 = vmatprep.subr.mxu0 %v3193
        %7195 = vmatpush2.msra.mxu0 %v3192
        %7196 = vmatprep.subr.mxu0 %v3191
        %7197 = vmatpush2.msra.mxu0 %v3190
        %7198 = vmatprep.mubr.f32.mxu0 %v3940
        %7199 = vmatmul.mubr.f32.gmra.mxu0 %v3938
        %v7200 = vpop.f32.mrf.mxu0
        %v7201 = vadd.f32 %v7130, %v7200
        %v7202 = vpop.f32.mrf.mxu0
        %v7203 = vadd.f32 %v7132, %v7202
        %7204 = vdwg.mxu0
        %7205 = vmatprep.subr.mxu0 %v3253
        %7206 = vmatpush1.msra.mxu0 %v3252
        %7207 = vmatprep.subr.mxu0 %v3251
        %7208 = vmatpush1.msra.mxu0 %v3250
        %7209 = vmatprep.subr.mxu0 %v3249
        %7210 = vmatpush1.msra.mxu0 %v3248
        %7211 = vmatprep.subr.mxu0 %v3247
        %7212 = vmatpush1.msra.mxu0 %v3246
        %7213 = vmatprep.subr.mxu0 %v3245
        %7214 = vmatpush1.msra.mxu0 %v3244
        %7215 = vmatprep.subr.mxu0 %v3243
        %7216 = vmatpush1.msra.mxu0 %v3242
        %7217 = vmatprep.subr.mxu0 %v3241
        %7218 = vmatpush1.msra.mxu0 %v3240
        %7219 = vmatprep.subr.mxu0 %v3239
        %7220 = vmatpush1.msra.mxu0 %v3238
        %7221 = vmatprep.subr.mxu0 %v3237
        %7222 = vmatpush1.msra.mxu0 %v3236
        %7223 = vmatprep.subr.mxu0 %v3235
        %7224 = vmatpush1.msra.mxu0 %v3234
        %7225 = vmatprep.subr.mxu0 %v3233
        %7226 = vmatpush1.msra.mxu0 %v3232
        %7227 = vmatprep.subr.mxu0 %v3231
        %7228 = vmatpush1.msra.mxu0 %v3230
        %7229 = vmatprep.subr.mxu0 %v3229
        %7230 = vmatpush1.msra.mxu0 %v3228
        %7231 = vmatprep.subr.mxu0 %v3227
        %7232 = vmatpush1.msra.mxu0 %v3226
        %7233 = vmatprep.subr.mxu0 %v3225
        %7234 = vmatpush1.msra.mxu0 %v3224
        %7235 = vmatprep.subr.mxu0 %v3223
        %7236 = vmatpush1.msra.mxu0 %v3222
        %7237 = vmatprep.subr.mxu0 %v3285
        %7238 = vmatpush2.msra.mxu0 %v3284
        %7239 = vmatprep.subr.mxu0 %v3283
        %7240 = vmatpush2.msra.mxu0 %v3282
        %7241 = vmatprep.subr.mxu0 %v3281
        %7242 = vmatpush2.msra.mxu0 %v3280
        %7243 = vmatprep.subr.mxu0 %v3279
        %7244 = vmatpush2.msra.mxu0 %v3278
        %7245 = vmatprep.subr.mxu0 %v3277
        %7246 = vmatpush2.msra.mxu0 %v3276
        %7247 = vmatprep.subr.mxu0 %v3275
        %7248 = vmatpush2.msra.mxu0 %v3274
        %7249 = vmatprep.subr.mxu0 %v3273
        %7250 = vmatpush2.msra.mxu0 %v3272
        %7251 = vmatprep.subr.mxu0 %v3271
        %7252 = vmatpush2.msra.mxu0 %v3270
        %7253 = vmatprep.subr.mxu0 %v3269
        %7254 = vmatpush2.msra.mxu0 %v3268
        %7255 = vmatprep.subr.mxu0 %v3267
        %7256 = vmatpush2.msra.mxu0 %v3266
        %7257 = vmatprep.subr.mxu0 %v3265
        %7258 = vmatpush2.msra.mxu0 %v3264
        %7259 = vmatprep.subr.mxu0 %v3263
        %7260 = vmatpush2.msra.mxu0 %v3262
        %7261 = vmatprep.subr.mxu0 %v3261
        %7262 = vmatpush2.msra.mxu0 %v3260
        %7263 = vmatprep.subr.mxu0 %v3259
        %7264 = vmatpush2.msra.mxu0 %v3258
        %7265 = vmatprep.subr.mxu0 %v3257
        %7266 = vmatpush2.msra.mxu0 %v3256
        %7267 = vmatprep.subr.mxu0 %v3255
        %7268 = vmatpush2.msra.mxu0 %v3254
        %7269 = vmatprep.mubr.f32.mxu0 %v3956
        %7270 = vmatmul.mubr.f32.gmra.mxu0 %v3948
        %v7271 = vpop.f32.mrf.mxu0
        %v7272 = vadd.f32 %v7201, %v7271
        %v7273 = vpop.f32.mrf.mxu0
        %v7274 = vadd.f32 %v7203, %v7273
        %7275 = vdwg.mxu0
        %7276 = vmatprep.subr.mxu0 %v3317
        %7277 = vmatpush1.msra.mxu0 %v3316
        %7278 = vmatprep.subr.mxu0 %v3315
        %7279 = vmatpush1.msra.mxu0 %v3314
        %7280 = vmatprep.subr.mxu0 %v3313
        %7281 = vmatpush1.msra.mxu0 %v3312
        %7282 = vmatprep.subr.mxu0 %v3311
        %7283 = vmatpush1.msra.mxu0 %v3310
        %7284 = vmatprep.subr.mxu0 %v3309
        %7285 = vmatpush1.msra.mxu0 %v3308
        %7286 = vmatprep.subr.mxu0 %v3307
        %7287 = vmatpush1.msra.mxu0 %v3306
        %7288 = vmatprep.subr.mxu0 %v3305
        %7289 = vmatpush1.msra.mxu0 %v3304
        %7290 = vmatprep.subr.mxu0 %v3303
        %7291 = vmatpush1.msra.mxu0 %v3302
        %7292 = vmatprep.subr.mxu0 %v3301
        %7293 = vmatpush1.msra.mxu0 %v3300
        %7294 = vmatprep.subr.mxu0 %v3299
        %7295 = vmatpush1.msra.mxu0 %v3298
        %7296 = vmatprep.subr.mxu0 %v3297
        %7297 = vmatpush1.msra.mxu0 %v3296
        %7298 = vmatprep.subr.mxu0 %v3295
        %7299 = vmatpush1.msra.mxu0 %v3294
        %7300 = vmatprep.subr.mxu0 %v3293
        %7301 = vmatpush1.msra.mxu0 %v3292
        %7302 = vmatprep.subr.mxu0 %v3291
        %7303 = vmatpush1.msra.mxu0 %v3290
        %7304 = vmatprep.subr.mxu0 %v3289
        %7305 = vmatpush1.msra.mxu0 %v3288
        %7306 = vmatprep.subr.mxu0 %v3287
        %7307 = vmatpush1.msra.mxu0 %v3286
        %7308 = vmatprep.subr.mxu0 %v3349
        %7309 = vmatpush2.msra.mxu0 %v3348
        %7310 = vmatprep.subr.mxu0 %v3347
        %7311 = vmatpush2.msra.mxu0 %v3346
        %7312 = vmatprep.subr.mxu0 %v3345
        %7313 = vmatpush2.msra.mxu0 %v3344
        %7314 = vmatprep.subr.mxu0 %v3343
        %7315 = vmatpush2.msra.mxu0 %v3342
        %7316 = vmatprep.subr.mxu0 %v3341
        %7317 = vmatpush2.msra.mxu0 %v3340
        %7318 = vmatprep.subr.mxu0 %v3339
        %7319 = vmatpush2.msra.mxu0 %v3338
        %7320 = vmatprep.subr.mxu0 %v3337
        %7321 = vmatpush2.msra.mxu0 %v3336
        %7322 = vmatprep.subr.mxu0 %v3335
        %7323 = vmatpush2.msra.mxu0 %v3334
        %7324 = vmatprep.subr.mxu0 %v3333
        %7325 = vmatpush2.msra.mxu0 %v3332
        %7326 = vmatprep.subr.mxu0 %v3331
        %7327 = vmatpush2.msra.mxu0 %v3330
        %7328 = vmatprep.subr.mxu0 %v3329
        %7329 = vmatpush2.msra.mxu0 %v3328
        %7330 = vmatprep.subr.mxu0 %v3327
        %7331 = vmatpush2.msra.mxu0 %v3326
        %7332 = vmatprep.subr.mxu0 %v3325
        %7333 = vmatpush2.msra.mxu0 %v3324
        %7334 = vmatprep.subr.mxu0 %v3323
        %7335 = vmatpush2.msra.mxu0 %v3322
        %7336 = vmatprep.subr.mxu0 %v3321
        %7337 = vmatpush2.msra.mxu0 %v3320
        %7338 = vmatprep.subr.mxu0 %v3319
        %7339 = vmatpush2.msra.mxu0 %v3318
        %7340 = vmatprep.mubr.f32.mxu0 %v3957
        %7341 = vmatmul.mubr.f32.gmra.mxu0 %v3955
        %v7342 = vpop.f32.mrf.mxu0
        %v7343 = vadd.f32 %v7272, %v7342
        %v7344 = vpop.f32.mrf.mxu0
        %v7345 = vadd.f32 %v7274, %v7344
        %7346 = vdwg.mxu0
        %7347 = vmatprep.subr.mxu0 %v3381
        %7348 = vmatpush1.msra.mxu0 %v3380
        %7349 = vmatprep.subr.mxu0 %v3379
        %7350 = vmatpush1.msra.mxu0 %v3378
        %7351 = vmatprep.subr.mxu0 %v3377
        %7352 = vmatpush1.msra.mxu0 %v3376
        %7353 = vmatprep.subr.mxu0 %v3375
        %7354 = vmatpush1.msra.mxu0 %v3374
        %7355 = vmatprep.subr.mxu0 %v3373
        %7356 = vmatpush1.msra.mxu0 %v3372
        %7357 = vmatprep.subr.mxu0 %v3371
        %7358 = vmatpush1.msra.mxu0 %v3370
        %7359 = vmatprep.subr.mxu0 %v3369
        %7360 = vmatpush1.msra.mxu0 %v3368
        %7361 = vmatprep.subr.mxu0 %v3367
        %7362 = vmatpush1.msra.mxu0 %v3366
        %7363 = vmatprep.subr.mxu0 %v3365
        %7364 = vmatpush1.msra.mxu0 %v3364
        %7365 = vmatprep.subr.mxu0 %v3363
        %7366 = vmatpush1.msra.mxu0 %v3362
        %7367 = vmatprep.subr.mxu0 %v3361
        %7368 = vmatpush1.msra.mxu0 %v3360
        %7369 = vmatprep.subr.mxu0 %v3359
        %7370 = vmatpush1.msra.mxu0 %v3358
        %7371 = vmatprep.subr.mxu0 %v3357
        %7372 = vmatpush1.msra.mxu0 %v3356
        %7373 = vmatprep.subr.mxu0 %v3355
        %7374 = vmatpush1.msra.mxu0 %v3354
        %7375 = vmatprep.subr.mxu0 %v3353
        %7376 = vmatpush1.msra.mxu0 %v3352
        %7377 = vmatprep.subr.mxu0 %v3351
        %7378 = vmatpush1.msra.mxu0 %v3350
        %7379 = vmatprep.subr.mxu0 %v3413
        %7380 = vmatpush2.msra.mxu0 %v3412
        %7381 = vmatprep.subr.mxu0 %v3411
        %7382 = vmatpush2.msra.mxu0 %v3410
        %7383 = vmatprep.subr.mxu0 %v3409
        %7384 = vmatpush2.msra.mxu0 %v3408
        %7385 = vmatprep.subr.mxu0 %v3407
        %7386 = vmatpush2.msra.mxu0 %v3406
        %7387 = vmatprep.subr.mxu0 %v3405
        %7388 = vmatpush2.msra.mxu0 %v3404
        %7389 = vmatprep.subr.mxu0 %v3403
        %7390 = vmatpush2.msra.mxu0 %v3402
        %7391 = vmatprep.subr.mxu0 %v3401
        %7392 = vmatpush2.msra.mxu0 %v3400
        %7393 = vmatprep.subr.mxu0 %v3399
        %7394 = vmatpush2.msra.mxu0 %v3398
        %7395 = vmatprep.subr.mxu0 %v3397
        %7396 = vmatpush2.msra.mxu0 %v3396
        %7397 = vmatprep.subr.mxu0 %v3395
        %7398 = vmatpush2.msra.mxu0 %v3394
        %7399 = vmatprep.subr.mxu0 %v3393
        %7400 = vmatpush2.msra.mxu0 %v3392
        %7401 = vmatprep.subr.mxu0 %v3391
        %7402 = vmatpush2.msra.mxu0 %v3390
        %7403 = vmatprep.subr.mxu0 %v3389
        %7404 = vmatpush2.msra.mxu0 %v3388
        %7405 = vmatprep.subr.mxu0 %v3387
        %7406 = vmatpush2.msra.mxu0 %v3386
        %7407 = vmatprep.subr.mxu0 %v3385
        %7408 = vmatpush2.msra.mxu0 %v3384
        %7409 = vmatprep.subr.mxu0 %v3383
        %7410 = vmatpush2.msra.mxu0 %v3382
        %7411 = vmatprep.mubr.f32.mxu0 %v3973
        %7412 = vmatmul.mubr.f32.gmra.mxu0 %v3965
        %v7413 = vpop.f32.mrf.mxu0
        %v7414 = vadd.f32 %v7343, %v7413
        %v7415 = vpop.f32.mrf.mxu0
        %v7416 = vadd.f32 %v7345, %v7415
        %7417 = vdwg.mxu0
        %7418 = vmatprep.subr.mxu0 %v3445
        %7419 = vmatpush1.msra.mxu0 %v3444
        %7420 = vmatprep.subr.mxu0 %v3443
        %7421 = vmatpush1.msra.mxu0 %v3442
        %7422 = vmatprep.subr.mxu0 %v3441
        %7423 = vmatpush1.msra.mxu0 %v3440
        %7424 = vmatprep.subr.mxu0 %v3439
        %7425 = vmatpush1.msra.mxu0 %v3438
        %7426 = vmatprep.subr.mxu0 %v3437
        %7427 = vmatpush1.msra.mxu0 %v3436
        %7428 = vmatprep.subr.mxu0 %v3435
        %7429 = vmatpush1.msra.mxu0 %v3434
        %7430 = vmatprep.subr.mxu0 %v3433
        %7431 = vmatpush1.msra.mxu0 %v3432
        %7432 = vmatprep.subr.mxu0 %v3431
        %7433 = vmatpush1.msra.mxu0 %v3430
        %7434 = vmatprep.subr.mxu0 %v3429
        %7435 = vmatpush1.msra.mxu0 %v3428
        %7436 = vmatprep.subr.mxu0 %v3427
        %7437 = vmatpush1.msra.mxu0 %v3426
        %7438 = vmatprep.subr.mxu0 %v3425
        %7439 = vmatpush1.msra.mxu0 %v3424
        %7440 = vmatprep.subr.mxu0 %v3423
        %7441 = vmatpush1.msra.mxu0 %v3422
        %7442 = vmatprep.subr.mxu0 %v3421
        %7443 = vmatpush1.msra.mxu0 %v3420
        %7444 = vmatprep.subr.mxu0 %v3419
        %7445 = vmatpush1.msra.mxu0 %v3418
        %7446 = vmatprep.subr.mxu0 %v3417
        %7447 = vmatpush1.msra.mxu0 %v3416
        %7448 = vmatprep.subr.mxu0 %v3415
        %7449 = vmatpush1.msra.mxu0 %v3414
        %7450 = vmatprep.subr.mxu0 %v3477
        %7451 = vmatpush2.msra.mxu0 %v3476
        %7452 = vmatprep.subr.mxu0 %v3475
        %7453 = vmatpush2.msra.mxu0 %v3474
        %7454 = vmatprep.subr.mxu0 %v3473
        %7455 = vmatpush2.msra.mxu0 %v3472
        %7456 = vmatprep.subr.mxu0 %v3471
        %7457 = vmatpush2.msra.mxu0 %v3470
        %7458 = vmatprep.subr.mxu0 %v3469
        %7459 = vmatpush2.msra.mxu0 %v3468
        %7460 = vmatprep.subr.mxu0 %v3467
        %7461 = vmatpush2.msra.mxu0 %v3466
        %7462 = vmatprep.subr.mxu0 %v3465
        %7463 = vmatpush2.msra.mxu0 %v3464
        %7464 = vmatprep.subr.mxu0 %v3463
        %7465 = vmatpush2.msra.mxu0 %v3462
        %7466 = vmatprep.subr.mxu0 %v3461
        %7467 = vmatpush2.msra.mxu0 %v3460
        %7468 = vmatprep.subr.mxu0 %v3459
        %7469 = vmatpush2.msra.mxu0 %v3458
        %7470 = vmatprep.subr.mxu0 %v3457
        %7471 = vmatpush2.msra.mxu0 %v3456
        %7472 = vmatprep.subr.mxu0 %v3455
        %7473 = vmatpush2.msra.mxu0 %v3454
        %7474 = vmatprep.subr.mxu0 %v3453
        %7475 = vmatpush2.msra.mxu0 %v3452
        %7476 = vmatprep.subr.mxu0 %v3451
        %7477 = vmatpush2.msra.mxu0 %v3450
        %7478 = vmatprep.subr.mxu0 %v3449
        %7479 = vmatpush2.msra.mxu0 %v3448
        %7480 = vmatprep.subr.mxu0 %v3447
        %7481 = vmatpush2.msra.mxu0 %v3446
        %7482 = vmatprep.mubr.f32.mxu0 %v3974
        %7483 = vmatmul.mubr.f32.gmra.mxu0 %v3972
        %v7484 = vpop.f32.mrf.mxu0
        %v7485 = vadd.f32 %v7414, %v7484
        %v7486 = vpop.f32.mrf.mxu0
        %v7487 = vadd.f32 %v7416, %v7486
        %7488 = vdwg.mxu0
        %7489 = vmatprep.subr.mxu0 %v3509
        %7490 = vmatpush1.msra.mxu0 %v3508
        %7491 = vmatprep.subr.mxu0 %v3507
        %7492 = vmatpush1.msra.mxu0 %v3506
        %7493 = vmatprep.subr.mxu0 %v3505
        %7494 = vmatpush1.msra.mxu0 %v3504
        %7495 = vmatprep.subr.mxu0 %v3503
        %7496 = vmatpush1.msra.mxu0 %v3502
        %7497 = vmatprep.subr.mxu0 %v3501
        %7498 = vmatpush1.msra.mxu0 %v3500
        %7499 = vmatprep.subr.mxu0 %v3499
        %7500 = vmatpush1.msra.mxu0 %v3498
        %7501 = vmatprep.subr.mxu0 %v3497
        %7502 = vmatpush1.msra.mxu0 %v3496
        %7503 = vmatprep.subr.mxu0 %v3495
        %7504 = vmatpush1.msra.mxu0 %v3494
        %7505 = vmatprep.subr.mxu0 %v3493
        %7506 = vmatpush1.msra.mxu0 %v3492
        %7507 = vmatprep.subr.mxu0 %v3491
        %7508 = vmatpush1.msra.mxu0 %v3490
        %7509 = vmatprep.subr.mxu0 %v3489
        %7510 = vmatpush1.msra.mxu0 %v3488
        %7511 = vmatprep.subr.mxu0 %v3487
        %7512 = vmatpush1.msra.mxu0 %v3486
        %7513 = vmatprep.subr.mxu0 %v3485
        %7514 = vmatpush1.msra.mxu0 %v3484
        %7515 = vmatprep.subr.mxu0 %v3483
        %7516 = vmatpush1.msra.mxu0 %v3482
        %7517 = vmatprep.subr.mxu0 %v3481
        %7518 = vmatpush1.msra.mxu0 %v3480
        %7519 = vmatprep.subr.mxu0 %v3479
        %7520 = vmatpush1.msra.mxu0 %v3478
        %7521 = vmatprep.subr.mxu0 %v3541
        %7522 = vmatpush2.msra.mxu0 %v3540
        %7523 = vmatprep.subr.mxu0 %v3539
        %7524 = vmatpush2.msra.mxu0 %v3538
        %7525 = vmatprep.subr.mxu0 %v3537
        %7526 = vmatpush2.msra.mxu0 %v3536
        %7527 = vmatprep.subr.mxu0 %v3535
        %7528 = vmatpush2.msra.mxu0 %v3534
        %7529 = vmatprep.subr.mxu0 %v3533
        %7530 = vmatpush2.msra.mxu0 %v3532
        %7531 = vmatprep.subr.mxu0 %v3531
        %7532 = vmatpush2.msra.mxu0 %v3530
        %7533 = vmatprep.subr.mxu0 %v3529
        %7534 = vmatpush2.msra.mxu0 %v3528
        %7535 = vmatprep.subr.mxu0 %v3527
        %7536 = vmatpush2.msra.mxu0 %v3526
        %7537 = vmatprep.subr.mxu0 %v3525
        %7538 = vmatpush2.msra.mxu0 %v3524
        %7539 = vmatprep.subr.mxu0 %v3523
        %7540 = vmatpush2.msra.mxu0 %v3522
        %7541 = vmatprep.subr.mxu0 %v3521
        %7542 = vmatpush2.msra.mxu0 %v3520
        %7543 = vmatprep.subr.mxu0 %v3519
        %7544 = vmatpush2.msra.mxu0 %v3518
        %7545 = vmatprep.subr.mxu0 %v3517
        %7546 = vmatpush2.msra.mxu0 %v3516
        %7547 = vmatprep.subr.mxu0 %v3515
        %7548 = vmatpush2.msra.mxu0 %v3514
        %7549 = vmatprep.subr.mxu0 %v3513
        %7550 = vmatpush2.msra.mxu0 %v3512
        %7551 = vmatprep.subr.mxu0 %v3511
        %7552 = vmatpush2.msra.mxu0 %v3510
        %7553 = vmatprep.mubr.f32.mxu0 %v3982
        %7554 = vmatmul.mubr.f32.gmra.mxu0 %v3981
        %v7555 = vpop.f32.mrf.mxu0
        %v7556 = vadd.f32 %v7485, %v7555
        %v7557 = vpop.f32.mrf.mxu0
        %v7558 = vadd.f32 %v7487, %v7557
        %7559 = vdwg.mxu0
        %v7562 = vcombine.low %v7556, %v7558
        %v7564 = vunpack.c.l.s4 1983009808
        %v7565 = vunpack.c.0.s8 %v7564
        %v7566 = vlaneseq
        %v7567 = vshrl.u32 %v7566, 7
        %v7568 = vsub.s32 %v7565, %v7567
        %v7569 = vrot.slane %v7562, %v7568
        %v7571 = vadd.f32 %v380, %v7569
        %7572 = vst [vmem:[%s7] sm:$0xf] %v7571
        %p7573 = scmp.eq.s32.totalorder %s24, 3
        // Predicated region
        $region77: #{equi_fnn_forward.1} parent=47 // pred_check
          %p7574 = pneg %p7573
        $region78: #{equi_fnn_forward.1} parent=47 // pred_check_branch
          %7576 = sbr.rel (%p7574) target = $region80
        $region79: #{equi_fnn_forward.1} parent=47 // pred_region
          %v7577 = vld [vmem:[%s7] sm:$0xf]
          %v7578 = vld [vmem:[#allocation4] sm:$0x3]
          %v7580 = vlaneseq
          %v7581 = vshrl.u32 %v7580, 7
          %v7582 = vsub.s32 0, %v7581
          %v7583 = vrot.slane %v7578, %v7582
          %v7584 = vlaneseq
          %v7585 = vshrl.u32 %v7584, 7
          %v7586 = vsub.s32 1, %v7585
          %v7587 = vrot.slane %v7578, %v7586
          %v7588 = vcombine.low %v7583, %v7587
          %v7590 = vunpack.c.l.s4 1983009808
          %v7591 = vunpack.c.0.s8 %v7590
          %v7592 = vlaneseq
          %v7593 = vshrl.u32 %v7592, 7
          %v7594 = vsub.s32 %v7591, %v7593
          %v7595 = vrot.slane %v7588, %v7594
          %v7597 = vadd.f32 %v7577, %v7595
          %v7598 = vld [vmem:[#allocation6] sm:$0xff]
          %v7599 = vld [vmem:[#allocation6 + $0x8] sm:$0xff]
          %v7600 = vld [vmem:[#allocation6 + $0x10] sm:$0xff]
          %v7601 = vld [vmem:[#allocation6 + $0x18] sm:$0xff]
          %v7602 = vld [vmem:[#allocation6 + $0x20] sm:$0xff]
          %v7603 = vld [vmem:[#allocation6 + $0x28] sm:$0xff]
          %v7604 = vld [vmem:[#allocation6 + $0x30] sm:$0xff]
          %v7605 = vld [vmem:[#allocation6 + $0x38] sm:$0xff]
          %v7606 = vld [vmem:[#allocation6 + $0x40] sm:$0xff]
          %v7607 = vld [vmem:[#allocation6 + $0x48] sm:$0xff]
          %v7608 = vld [vmem:[#allocation6 + $0x50] sm:$0xff]
          %v7609 = vld [vmem:[#allocation6 + $0x58] sm:$0xff]
          %v7610 = vld [vmem:[#allocation6 + $0x60] sm:$0xff]
          %v7611 = vld [vmem:[#allocation6 + $0x68] sm:$0xff]
          %v7612 = vld [vmem:[#allocation6 + $0x70] sm:$0xff]
          %v7613 = vld [vmem:[#allocation6 + $0x78] sm:$0xff]
          %v7614 = vld [vmem:[#allocation6 + $0x80] sm:$0xff]
          %v7615 = vld [vmem:[#allocation6 + $0x88] sm:$0xff]
          %v7616 = vld [vmem:[#allocation6 + $0x90] sm:$0xff]
          %v7617 = vld [vmem:[#allocation6 + $0x98] sm:$0xff]
          %v7618 = vld [vmem:[#allocation6 + $0xa0] sm:$0xff]
          %v7619 = vld [vmem:[#allocation6 + $0xa8] sm:$0xff]
          %v7620 = vld [vmem:[#allocation6 + $0xb0] sm:$0xff]
          %v7621 = vld [vmem:[#allocation6 + $0xb8] sm:$0xff]
          %v7622 = vld [vmem:[#allocation6 + $0xc0] sm:$0xff]
          %v7623 = vld [vmem:[#allocation6 + $0xc8] sm:$0xff]
          %v7624 = vld [vmem:[#allocation6 + $0xd0] sm:$0xff]
          %v7625 = vld [vmem:[#allocation6 + $0xd8] sm:$0xff]
          %v7626 = vld [vmem:[#allocation6 + $0xe0] sm:$0xff]
          %v7627 = vld [vmem:[#allocation6 + $0xe8] sm:$0xff]
          %v7628 = vld [vmem:[#allocation6 + $0xf0] sm:$0xff]
          %v7629 = vld [vmem:[#allocation6 + $0xf8] sm:$0xff]
          %v7630 = vld [vmem:[#allocation6 + $0x100] sm:$0xff]
          %v7631 = vld [vmem:[#allocation6 + $0x108] sm:$0xff]
          %v7632 = vld [vmem:[#allocation6 + $0x110] sm:$0xff]
          %v7633 = vld [vmem:[#allocation6 + $0x118] sm:$0xff]
          %v7634 = vld [vmem:[#allocation6 + $0x120] sm:$0xff]
          %v7635 = vld [vmem:[#allocation6 + $0x128] sm:$0xff]
          %v7636 = vld [vmem:[#allocation6 + $0x130] sm:$0xff]
          %v7637 = vld [vmem:[#allocation6 + $0x138] sm:$0xff]
          %v7638 = vld [vmem:[#allocation6 + $0x140] sm:$0xff]
          %v7639 = vld [vmem:[#allocation6 + $0x148] sm:$0xff]
          %v7640 = vld [vmem:[#allocation6 + $0x150] sm:$0xff]
          %v7641 = vld [vmem:[#allocation6 + $0x158] sm:$0xff]
          %v7642 = vld [vmem:[#allocation6 + $0x160] sm:$0xff]
          %v7643 = vld [vmem:[#allocation6 + $0x168] sm:$0xff]
          %v7644 = vld [vmem:[#allocation6 + $0x170] sm:$0xff]
          %v7645 = vld [vmem:[#allocation6 + $0x178] sm:$0xff]
          %v7646 = vld [vmem:[#allocation6 + $0x180] sm:$0xff]
          %v7647 = vld [vmem:[#allocation6 + $0x188] sm:$0xff]
          %v7648 = vld [vmem:[#allocation6 + $0x190] sm:$0xff]
          %v7649 = vld [vmem:[#allocation6 + $0x198] sm:$0xff]
          %v7650 = vld [vmem:[#allocation6 + $0x1a0] sm:$0xff]
          %v7651 = vld [vmem:[#allocation6 + $0x1a8] sm:$0xff]
          %v7652 = vld [vmem:[#allocation6 + $0x1b0] sm:$0xff]
          %v7653 = vld [vmem:[#allocation6 + $0x1b8] sm:$0xff]
          %v7654 = vld [vmem:[#allocation6 + $0x1c0] sm:$0xff]
          %v7655 = vld [vmem:[#allocation6 + $0x1c8] sm:$0xff]
          %v7656 = vld [vmem:[#allocation6 + $0x1d0] sm:$0xff]
          %v7657 = vld [vmem:[#allocation6 + $0x1d8] sm:$0xff]
          %v7658 = vld [vmem:[#allocation6 + $0x1e0] sm:$0xff]
          %v7659 = vld [vmem:[#allocation6 + $0x1e8] sm:$0xff]
          %v7660 = vld [vmem:[#allocation6 + $0x1f0] sm:$0xff]
          %v7661 = vld [vmem:[#allocation6 + $0x1f8] sm:$0xff]
          %v7662 = vld [vmem:[#allocation7] sm:$0x3]
          %v7664 = vlaneseq
          %v7665 = vshrl.u32 %v7664, 7
          %v7666 = vsub.s32 0, %v7665
          %v7667 = vrot.slane %v7662, %v7666
          %v7668 = vlaneseq
          %v7669 = vshrl.u32 %v7668, 7
          %v7670 = vsub.s32 1, %v7669
          %v7671 = vrot.slane %v7662, %v7670
          %v7676 = vunpack.c.l.s4 1983009808
          %v7677 = vunpack.c.0.s8 %v7676
          %v7678 = vlaneseq
          %v7679 = vshrl.u32 %v7678, 7
          %v7680 = vsub.s32 %v7677, %v7679
          %v7681 = vrot.slane %v7597, %v7680
          %v7682 = vcombine.high %v7681, %v7681
          %7685 = vmatprep.subr.mxu0 %v7629
          %7686 = vmatpush1.msra.mxu0 %v7628
          %7687 = vmatprep.subr.mxu0 %v7627
          %7688 = vmatpush1.msra.mxu0 %v7626
          %7689 = vmatprep.subr.mxu0 %v7625
          %7690 = vmatpush1.msra.mxu0 %v7624
          %7691 = vmatprep.subr.mxu0 %v7623
          %7692 = vmatpush1.msra.mxu0 %v7622
          %7693 = vmatprep.subr.mxu0 %v7621
          %7694 = vmatpush1.msra.mxu0 %v7620
          %7695 = vmatprep.subr.mxu0 %v7619
          %7696 = vmatpush1.msra.mxu0 %v7618
          %7697 = vmatprep.subr.mxu0 %v7617
          %7698 = vmatpush1.msra.mxu0 %v7616
          %7699 = vmatprep.subr.mxu0 %v7615
          %7700 = vmatpush1.msra.mxu0 %v7614
          %7701 = vmatprep.subr.mxu0 %v7613
          %7702 = vmatpush1.msra.mxu0 %v7612
          %7703 = vmatprep.subr.mxu0 %v7611
          %7704 = vmatpush1.msra.mxu0 %v7610
          %7705 = vmatprep.subr.mxu0 %v7609
          %7706 = vmatpush1.msra.mxu0 %v7608
          %7707 = vmatprep.subr.mxu0 %v7607
          %7708 = vmatpush1.msra.mxu0 %v7606
          %7709 = vmatprep.subr.mxu0 %v7605
          %7710 = vmatpush1.msra.mxu0 %v7604
          %7711 = vmatprep.subr.mxu0 %v7603
          %7712 = vmatpush1.msra.mxu0 %v7602
          %7713 = vmatprep.subr.mxu0 %v7601
          %7714 = vmatpush1.msra.mxu0 %v7600
          %7715 = vmatprep.subr.mxu0 %v7599
          %7716 = vmatpush1.msra.mxu0 %v7598
          %7717 = vmatprep.subr.mxu0 %v7661
          %7718 = vmatpush2.msra.mxu0 %v7660
          %7719 = vmatprep.subr.mxu0 %v7659
          %7720 = vmatpush2.msra.mxu0 %v7658
          %7721 = vmatprep.subr.mxu0 %v7657
          %7722 = vmatpush2.msra.mxu0 %v7656
          %7723 = vmatprep.subr.mxu0 %v7655
          %7724 = vmatpush2.msra.mxu0 %v7654
          %7725 = vmatprep.subr.mxu0 %v7653
          %7726 = vmatpush2.msra.mxu0 %v7652
          %7727 = vmatprep.subr.mxu0 %v7651
          %7728 = vmatpush2.msra.mxu0 %v7650
          %7729 = vmatprep.subr.mxu0 %v7649
          %7730 = vmatpush2.msra.mxu0 %v7648
          %7731 = vmatprep.subr.mxu0 %v7647
          %7732 = vmatpush2.msra.mxu0 %v7646
          %7733 = vmatprep.subr.mxu0 %v7645
          %7734 = vmatpush2.msra.mxu0 %v7644
          %7735 = vmatprep.subr.mxu0 %v7643
          %7736 = vmatpush2.msra.mxu0 %v7642
          %7737 = vmatprep.subr.mxu0 %v7641
          %7738 = vmatpush2.msra.mxu0 %v7640
          %7739 = vmatprep.subr.mxu0 %v7639
          %7740 = vmatpush2.msra.mxu0 %v7638
          %7741 = vmatprep.subr.mxu0 %v7637
          %7742 = vmatpush2.msra.mxu0 %v7636
          %7743 = vmatprep.subr.mxu0 %v7635
          %7744 = vmatpush2.msra.mxu0 %v7634
          %7745 = vmatprep.subr.mxu0 %v7633
          %7746 = vmatpush2.msra.mxu0 %v7632
          %7747 = vmatprep.subr.mxu0 %v7631
          %7748 = vmatpush2.msra.mxu0 %v7630
          %7749 = vmatprep.mubr.f32.mxu0 %v7682
          %7750 = vmatmul.mubr.f32.gmra.mxu0 %v7681
          %v7751 = vpop.f32.mrf.mxu0
          %v7752 = vadd.f32 %v7667, %v7751
          %v7753 = vpop.f32.mrf.mxu0
          %v7754 = vadd.f32 %v7671, %v7753
          %7755 = vdwg.mxu0
          %v7756 = vld [vmem:[#allocation9] sm:$0xff]
          %v7757 = vld [vmem:[#allocation9 + $0x8] sm:$0xff]
          %v7758 = vld [vmem:[#allocation9 + $0x10] sm:$0xff]
          %v7759 = vld [vmem:[#allocation9 + $0x18] sm:$0xff]
          %v7760 = vld [vmem:[#allocation9 + $0x20] sm:$0xff]
          %v7761 = vld [vmem:[#allocation9 + $0x28] sm:$0xff]
          %v7762 = vld [vmem:[#allocation9 + $0x30] sm:$0xff]
          %v7763 = vld [vmem:[#allocation9 + $0x38] sm:$0xff]
          %v7764 = vld [vmem:[#allocation9 + $0x40] sm:$0xff]
          %v7765 = vld [vmem:[#allocation9 + $0x48] sm:$0xff]
          %v7766 = vld [vmem:[#allocation9 + $0x50] sm:$0xff]
          %v7767 = vld [vmem:[#allocation9 + $0x58] sm:$0xff]
          %v7768 = vld [vmem:[#allocation9 + $0x60] sm:$0xff]
          %v7769 = vld [vmem:[#allocation9 + $0x68] sm:$0xff]
          %v7770 = vld [vmem:[#allocation9 + $0x70] sm:$0xff]
          %v7771 = vld [vmem:[#allocation9 + $0x78] sm:$0xff]
          %v7772 = vld [vmem:[#allocation9 + $0x80] sm:$0xff]
          %v7773 = vld [vmem:[#allocation9 + $0x88] sm:$0xff]
          %v7774 = vld [vmem:[#allocation9 + $0x90] sm:$0xff]
          %v7775 = vld [vmem:[#allocation9 + $0x98] sm:$0xff]
          %v7776 = vld [vmem:[#allocation9 + $0xa0] sm:$0xff]
          %v7777 = vld [vmem:[#allocation9 + $0xa8] sm:$0xff]
          %v7778 = vld [vmem:[#allocation9 + $0xb0] sm:$0xff]
          %v7779 = vld [vmem:[#allocation9 + $0xb8] sm:$0xff]
          %v7780 = vld [vmem:[#allocation9 + $0xc0] sm:$0xff]
          %v7781 = vld [vmem:[#allocation9 + $0xc8] sm:$0xff]
          %v7782 = vld [vmem:[#allocation9 + $0xd0] sm:$0xff]
          %v7783 = vld [vmem:[#allocation9 + $0xd8] sm:$0xff]
          %v7784 = vld [vmem:[#allocation9 + $0xe0] sm:$0xff]
          %v7785 = vld [vmem:[#allocation9 + $0xe8] sm:$0xff]
          %v7786 = vld [vmem:[#allocation9 + $0xf0] sm:$0xff]
          %v7787 = vld [vmem:[#allocation9 + $0xf8] sm:$0xff]
          %v7788 = vld [vmem:[#allocation9 + $0x100] sm:$0xff]
          %v7789 = vld [vmem:[#allocation9 + $0x108] sm:$0xff]
          %v7790 = vld [vmem:[#allocation9 + $0x110] sm:$0xff]
          %v7791 = vld [vmem:[#allocation9 + $0x118] sm:$0xff]
          %v7792 = vld [vmem:[#allocation9 + $0x120] sm:$0xff]
          %v7793 = vld [vmem:[#allocation9 + $0x128] sm:$0xff]
          %v7794 = vld [vmem:[#allocation9 + $0x130] sm:$0xff]
          %v7795 = vld [vmem:[#allocation9 + $0x138] sm:$0xff]
          %v7796 = vld [vmem:[#allocation9 + $0x140] sm:$0xff]
          %v7797 = vld [vmem:[#allocation9 + $0x148] sm:$0xff]
          %v7798 = vld [vmem:[#allocation9 + $0x150] sm:$0xff]
          %v7799 = vld [vmem:[#allocation9 + $0x158] sm:$0xff]
          %v7800 = vld [vmem:[#allocation9 + $0x160] sm:$0xff]
          %v7801 = vld [vmem:[#allocation9 + $0x168] sm:$0xff]
          %v7802 = vld [vmem:[#allocation9 + $0x170] sm:$0xff]
          %v7803 = vld [vmem:[#allocation9 + $0x178] sm:$0xff]
          %v7804 = vld [vmem:[#allocation9 + $0x180] sm:$0xff]
          %v7805 = vld [vmem:[#allocation9 + $0x188] sm:$0xff]
          %v7806 = vld [vmem:[#allocation9 + $0x190] sm:$0xff]
          %v7807 = vld [vmem:[#allocation9 + $0x198] sm:$0xff]
          %v7808 = vld [vmem:[#allocation9 + $0x1a0] sm:$0xff]
          %v7809 = vld [vmem:[#allocation9 + $0x1a8] sm:$0xff]
          %v7810 = vld [vmem:[#allocation9 + $0x1b0] sm:$0xff]
          %v7811 = vld [vmem:[#allocation9 + $0x1b8] sm:$0xff]
          %v7812 = vld [vmem:[#allocation9 + $0x1c0] sm:$0xff]
          %v7813 = vld [vmem:[#allocation9 + $0x1c8] sm:$0xff]
          %v7814 = vld [vmem:[#allocation9 + $0x1d0] sm:$0xff]
          %v7815 = vld [vmem:[#allocation9 + $0x1d8] sm:$0xff]
          %v7816 = vld [vmem:[#allocation9 + $0x1e0] sm:$0xff]
          %v7817 = vld [vmem:[#allocation9 + $0x1e8] sm:$0xff]
          %v7818 = vld [vmem:[#allocation9 + $0x1f0] sm:$0xff]
          %v7819 = vld [vmem:[#allocation9 + $0x1f8] sm:$0xff]
          %v7820 = vld [vmem:[#allocation10] sm:$0x3]
          %v7822 = vlaneseq
          %v7823 = vshrl.u32 %v7822, 7
          %v7824 = vsub.s32 0, %v7823
          %v7825 = vrot.slane %v7820, %v7824
          %v7826 = vlaneseq
          %v7827 = vshrl.u32 %v7826, 7
          %v7828 = vsub.s32 1, %v7827
          %v7829 = vrot.slane %v7820, %v7828
          %7832 = vmatprep.subr.mxu0 %v7787
          %7833 = vmatpush1.msra.mxu0 %v7786
          %7834 = vmatprep.subr.mxu0 %v7785
          %7835 = vmatpush1.msra.mxu0 %v7784
          %7836 = vmatprep.subr.mxu0 %v7783
          %7837 = vmatpush1.msra.mxu0 %v7782
          %7838 = vmatprep.subr.mxu0 %v7781
          %7839 = vmatpush1.msra.mxu0 %v7780
          %7840 = vmatprep.subr.mxu0 %v7779
          %7841 = vmatpush1.msra.mxu0 %v7778
          %7842 = vmatprep.subr.mxu0 %v7777
          %7843 = vmatpush1.msra.mxu0 %v7776
          %7844 = vmatprep.subr.mxu0 %v7775
          %7845 = vmatpush1.msra.mxu0 %v7774
          %7846 = vmatprep.subr.mxu0 %v7773
          %7847 = vmatpush1.msra.mxu0 %v7772
          %7848 = vmatprep.subr.mxu0 %v7771
          %7849 = vmatpush1.msra.mxu0 %v7770
          %7850 = vmatprep.subr.mxu0 %v7769
          %7851 = vmatpush1.msra.mxu0 %v7768
          %7852 = vmatprep.subr.mxu0 %v7767
          %7853 = vmatpush1.msra.mxu0 %v7766
          %7854 = vmatprep.subr.mxu0 %v7765
          %7855 = vmatpush1.msra.mxu0 %v7764
          %7856 = vmatprep.subr.mxu0 %v7763
          %7857 = vmatpush1.msra.mxu0 %v7762
          %7858 = vmatprep.subr.mxu0 %v7761
          %7859 = vmatpush1.msra.mxu0 %v7760
          %7860 = vmatprep.subr.mxu0 %v7759
          %7861 = vmatpush1.msra.mxu0 %v7758
          %7862 = vmatprep.subr.mxu0 %v7757
          %7863 = vmatpush1.msra.mxu0 %v7756
          %7864 = vmatprep.subr.mxu0 %v7819
          %7865 = vmatpush2.msra.mxu0 %v7818
          %7866 = vmatprep.subr.mxu0 %v7817
          %7867 = vmatpush2.msra.mxu0 %v7816
          %7868 = vmatprep.subr.mxu0 %v7815
          %7869 = vmatpush2.msra.mxu0 %v7814
          %7870 = vmatprep.subr.mxu0 %v7813
          %7871 = vmatpush2.msra.mxu0 %v7812
          %7872 = vmatprep.subr.mxu0 %v7811
          %7873 = vmatpush2.msra.mxu0 %v7810
          %7874 = vmatprep.subr.mxu0 %v7809
          %7875 = vmatpush2.msra.mxu0 %v7808
          %7876 = vmatprep.subr.mxu0 %v7807
          %7877 = vmatpush2.msra.mxu0 %v7806
          %7878 = vmatprep.subr.mxu0 %v7805
          %7879 = vmatpush2.msra.mxu0 %v7804
          %7880 = vmatprep.subr.mxu0 %v7803
          %7881 = vmatpush2.msra.mxu0 %v7802
          %7882 = vmatprep.subr.mxu0 %v7801
          %7883 = vmatpush2.msra.mxu0 %v7800
          %7884 = vmatprep.subr.mxu0 %v7799
          %7885 = vmatpush2.msra.mxu0 %v7798
          %7886 = vmatprep.subr.mxu0 %v7797
          %7887 = vmatpush2.msra.mxu0 %v7796
          %7888 = vmatprep.subr.mxu0 %v7795
          %7889 = vmatpush2.msra.mxu0 %v7794
          %7890 = vmatprep.subr.mxu0 %v7793
          %7891 = vmatpush2.msra.mxu0 %v7792
          %7892 = vmatprep.subr.mxu0 %v7791
          %7893 = vmatpush2.msra.mxu0 %v7790
          %7894 = vmatprep.subr.mxu0 %v7789
          %7895 = vmatpush2.msra.mxu0 %v7788
          %7896 = vmatprep.mubr.f32.mxu0 %v7754
          %7897 = vmatmul.mubr.f32.gmra.mxu0 %v7752
          %v7898 = vpop.f32.mrf.mxu0
          %v7899 = vadd.f32 %v7825, %v7898
          %v7900 = vpop.f32.mrf.mxu0
          %v7901 = vadd.f32 %v7829, %v7900
          %7902 = vdwg.mxu0
          %v7905 = vcombine.low %v7899, %v7901
          %v7907 = vunpack.c.l.s4 1983009808
          %v7908 = vunpack.c.0.s8 %v7907
          %v7909 = vlaneseq
          %v7910 = vshrl.u32 %v7909, 7
          %v7911 = vsub.s32 %v7908, %v7910
          %v7912 = vrot.slane %v7905, %v7911
          %7914 = vst [vmem:[%s7] sm:$0xf] %v7912
        $region80: #{equi_fnn_forward.1} parent=47 // pred_fallthru
          _
        // Predicated region
        $region81: #{equi_fnn_forward.1} parent=47 // pred_check
          %p7915 = pneg %p194
        $region82: #{equi_fnn_forward.1} parent=47 // pred_check_branch
          %7917 = sbr.rel (%p7915) target = $region84
        $region83: #{equi_fnn_forward.1} parent=47 // pred_region
          _
        $region84: #{equi_fnn_forward.1} parent=47 // pred_fallthru
          _
        // Predicated region
        $region85: #{equi_fnn_forward.1} parent=47 // pred_check
          %p7918 = pneg %p194
        $region86: #{equi_fnn_forward.1} parent=47 // pred_check_branch
          %7920 = sbr.rel (%p7918) target = $region88
        $region87: #{equi_fnn_forward.1} parent=47 // pred_region
          _
        $region88: #{equi_fnn_forward.1} parent=47 // pred_fallthru
          _
      $region48: #{equi_fnn_forward.1} parent=5 // pred_fallthru
        _
      %p7921 = scmp.le.s32.totalorder 2, %s19
      // Predicated region
      $region89: #{equi_fnn_forward.1} parent=5 // pred_check
        %p7922 = pneg %p7921
      $region90: #{equi_fnn_forward.1} parent=5 // pred_check_branch
        %7924 = sbr.rel (%p7922) target = $region92
      $region91: #{equi_fnn_forward.1} parent=5 // pred_region
        %s7925 = ssub.s32 %s19, 2
      $region92: #{equi_fnn_forward.1} parent=5 // pred_fallthru
        _
    $region6: #{equi_fnn_forward.1} parent=1 // loop_footer
      %s23 = sadd.s32 1, %s19
    $region7: #{equi_fnn_forward.1} parent=1 // loop_footer_branch
      %18 = sbr.rel target = $region3
    $region8: #{equi_fnn_forward.1} parent=1 // loop_exit
      _
    %7926 = vsyncpa [#allocation3], 1
    %s7927 = scalar_lea.sflag [#allocation3], 1
    %7928 = vsyncpa %s7927, 1
    %7929 = vsyncpa [#allocation5], 1
    %7930 = vsyncpa [#allocation8], 1
    %7931 = vsyncpa [#allocation11], 1

</llo_original>
